<compile_context>
chip_gen: v5e
topology: v5e:2x2
jax: 0.10.0
libtpu: 0.0.40
codegen_flags: <defaults>
</compile_context>

<pallas_src>
import functools

import jax
import jax.numpy as jnp
import numpy as np
from jax import lax
from jax.experimental import pallas as pl
from jax.experimental.pallas import tpu as pltpu

EPS = 1e-5  # PyTorch BatchNorm3d default eps


def _vmem_limit_bytes():
    """Generation-dependent scoped-VMEM limit with headroom."""
    cap = 64 * 1024 * 1024
    try:
        info = pltpu.get_tpu_info()
        cap = int(getattr(info, "vmem_capacity_bytes", cap))
    except Exception:
        pass
    return min((cap * 3) // 4, 100 * 1024 * 1024)


def _conv_stats_kernel(x_ref, scale_ref, shift_ref, w_ref, y_ref, stat_ref,
                       xw_ref, col_ref, *, D, H, W, C, Cout, pre_act):
    """One batch sample: [BN affine + ReLU] -> 3x3x3 conv -> partial BN sums.

    x_ref:     (1, D, H, W, C)     f32/bf16  activation tile for this sample
    scale_ref: (1, C)              f32       folded BN scale of the previous norm
    shift_ref: (1, C)              f32       folded BN shift (unused if pre_act=False)
    w_ref:     (3, 9C, Cout)       bf16      weights; K index = kh*3C + kw*C + ci
    y_ref:     (1, D, H, W, Cout)  bf16      conv output
    stat_ref:  (1, 2, Cout)        f32       [sum, sum-of-squares] for this sample
    xw_ref:    (D, H, W+2, C)      bf16      W-padded staging scratch
    col_ref:   ((D+2)*H*W, 9C)     bf16      im2col (kh,kw folded into K), D halo
    """
    HW = H * W
    DHW = D * H * W

    x = x_ref[...].reshape(D, H, W, C)
    if pre_act:
        # Fold of the previous BatchNorm (global batch stats) + ReLU, in f32.
        x = x.astype(jnp.float32)
        x = (x * scale_ref[...].reshape(1, 1, 1, C)
             + shift_ref[...].reshape(1, 1, 1, C))
        x = jnp.maximum(x, 0.0)
    xb = x.astype(jnp.bfloat16)

    # W-padded bf16 staging copy; zero only the two W halo faces (kept per-step
    # for megacore safety — scratch is private per core).
    xw_ref[:, :, 0:1, :] = jnp.zeros((D, H, 1, C), jnp.bfloat16)
    xw_ref[:, :, W + 1:W + 2, :] = jnp.zeros((D, H, 1, C), jnp.bfloat16)
    xw_ref[:, :, 1:W + 1, :] = xb

    # Fold kw into the contraction dim: (D, H, W, 3C).
    colw = jnp.concatenate(
        [xw_ref[:, :, kw:kw + W, :] for kw in range(3)], axis=-1)

    # Fold kh as well (H is a major axis, so shifted slices are cheap): (D,H,W,9C).
    zh = jnp.zeros((D, 1, W, 3 * C), jnp.bfloat16)
    colwh = jnp.concatenate([zh, colw, zh], axis=1)            # (D, H+2, W, 3C)
    col9 = jnp.concatenate(
        [colwh[:, kh:kh + H, :, :] for kh in range(3)], axis=-1)

    # Flat im2col buffer with a one-plane D halo on each side; dense stores.
    zplane = jnp.zeros((HW, 9 * C), jnp.bfloat16)
    col_ref[0:HW, :] = zplane
    col_ref[(D + 1) * HW:(D + 2) * HW, :] = zplane
    col_ref[HW:(D + 1) * HW, :] = col9.reshape(DHW, 9 * C)

    # 3 fat matmuls (K = 9C), bf16 operands, f32 accumulation held as a traced
    # value and written exactly once.  Per-kd LHS slices move only the leading
    # (row) axis of the flat buffer, so they are contiguous views.
    acc = jnp.dot(col_ref[0:DHW, :], w_ref[0],
                  preferred_element_type=jnp.float32)
    acc = acc + jnp.dot(col_ref[HW:HW + DHW, :], w_ref[1],
                        preferred_element_type=jnp.float32)
    acc = acc + jnp.dot(col_ref[2 * HW:2 * HW + DHW, :], w_ref[2],
                        preferred_element_type=jnp.float32)

    # Per-sample partial sums for the global batch-norm statistics (from the
    # f32 accumulator, so batch stats stay exact even with bf16 outputs).
    s = jnp.sum(acc, axis=0, keepdims=True)
    sq = jnp.sum(acc * acc, axis=0, keepdims=True)
    stat_ref[...] = jnp.concatenate([s, sq], axis=0).reshape(1, 2, Cout)

    y_ref[...] = acc.astype(jnp.bfloat16).reshape(1, D, H, W, Cout)


def _bn_add_relu_kernel(y_ref, x_ref, scale_ref, shift_ref, o_ref):
    """out = relu(y * scale + shift + identity), lane-dense (W*C folded) layout."""
    y = y_ref[...].astype(jnp.float32)
    o_ref[...] = jnp.maximum(y * scale_ref[...] + shift_ref[...] + x_ref[...], 0.0)


def _conv_bn_stats(x, scale, shift, w3, *, pre_act):
    """Gridded conv pass: returns (bf16 conv output, per-sample [sum, sumsq])."""
    N, D, H, W, C = x.shape
    Cout = w3.shape[-1]
    kernel = functools.partial(_conv_stats_kernel, D=D, H=H, W=W, C=C,
                               Cout=Cout, pre_act=pre_act)
    return pl.pallas_call(
        kernel,
        out_shape=(jax.ShapeDtypeStruct((N, D, H, W, Cout), jnp.bfloat16),
                   jax.ShapeDtypeStruct((N, 2, Cout), jnp.float32)),
        grid=(N,),
        in_specs=[pl.BlockSpec((1, D, H, W, C), lambda n: (n, 0, 0, 0, 0)),
                  pl.BlockSpec((1, C), lambda n: (0, 0)),
                  pl.BlockSpec((1, C), lambda n: (0, 0)),
                  pl.BlockSpec((3, 9 * C, Cout), lambda n: (0, 0, 0))],
        out_specs=[pl.BlockSpec((1, D, H, W, Cout), lambda n: (n, 0, 0, 0, 0)),
                   pl.BlockSpec((1, 2, Cout), lambda n: (n, 0, 0))],
        scratch_shapes=[pltpu.VMEM((D, H, W + 2, C), jnp.bfloat16),
                        pltpu.VMEM(((D + 2) * H * W, 9 * C), jnp.bfloat16)],
        compiler_params=pltpu.CompilerParams(
            dimension_semantics=("parallel",),
            vmem_limit_bytes=_vmem_limit_bytes()),
    )(x, scale, shift, w3)


def _bn_affine(stats, gamma, beta, count):
    """Fold training-mode BatchNorm (biased batch stats) into per-channel affine."""
    total = jnp.sum(stats[:, 0, :], axis=0)
    total_sq = jnp.sum(stats[:, 1, :], axis=0)
    mean = total / count
    var = jnp.maximum(total_sq / count - mean * mean, 0.0)
    scale = gamma * lax.rsqrt(var + EPS)
    shift = beta - mean * scale
    return (scale.reshape(1, -1).astype(jnp.float32),
            shift.reshape(1, -1).astype(jnp.float32))


def _row_tile(total_rows, row_bytes, budget=8 * 1024 * 1024):
    """Largest 8-aligned divisor of total_rows whose block stays under budget."""
    cap = max(8, budget // max(row_bytes, 1))
    if total_rows <= cap:
        return total_rows
    t = (min(cap, total_rows) // 8) * 8
    while t >= 8:
        if total_rows % t == 0:
            return t
        t -= 8
    return total_rows


@jax.jit
def basic_block(x, w1, g1, b1, w2, g2, b2):
    """x: (N, D, H, W, C); w1/w2: (3, 3, 3, C, C); g*/b*: (C,)."""
    N, D, H, W, C = x.shape
    Cout = w1.shape[-1]
    assert w1.shape[-2] == C and Cout == C, (
        "identity path requires inplanes == planes (stride=1, no downsample)")

    # bf16 MXU operands; f32 accumulation and BN math.
    # Weight K index = kh*3C + kw*C + ci, matching the im2col channel ordering.
    w1b = w1.reshape(3, 9 * C, C).astype(jnp.bfloat16)
    w2b = w2.reshape(3, 9 * C, C).astype(jnp.bfloat16)
    count = N * D * H * W

    ones = jnp.ones((1, C), jnp.float32)
    zeros = jnp.zeros((1, C), jnp.float32)

    # pass 1: conv1 + partial BN1 sums
    y1, st1 = _conv_bn_stats(x, ones, zeros, w1b, pre_act=False)
    scale1, shift1 = _bn_affine(st1, g1, b1, count)

    # pass 2: BN1 + ReLU + conv2 + partial BN2 sums
    y2, st2 = _conv_bn_stats(y1, scale1, shift1, w2b, pre_act=True)
    scale2, shift2 = _bn_affine(st2, g2, b2, count)

    # pass 3: BN2 + residual add + ReLU in a lane-dense (N, D*H, W*C) layout,
    # tiled over the D*H axis so blocks stay VMEM-resident at large shapes.
    DH, WC = D * H, W * C
    scale_wc = jnp.tile(scale2, (1, W)).reshape(1, 1, WC)
    shift_wc = jnp.tile(shift2, (1, W)).reshape(1, 1, WC)
    t_dh = _row_tile(DH, WC * (2 + 4 + 4) * 2)  # y2 bf16 + x f32 + out f32, dbuf
    out2d = pl.pallas_call(
        _bn_add_relu_kernel,
        out_shape=jax.ShapeDtypeStruct((N, DH, WC), jnp.float32),
        grid=(N, DH // t_dh),
        in_specs=[pl.BlockSpec((1, t_dh, WC), lambda n, t: (n, t, 0)),
                  pl.BlockSpec((1, t_dh, WC), lambda n, t: (n, t, 0)),
                  pl.BlockSpec((1, 1, WC), lambda n, t: (0, 0, 0)),
                  pl.BlockSpec((1, 1, WC), lambda n, t: (0, 0, 0))],
        out_specs=pl.BlockSpec((1, t_dh, WC), lambda n, t: (n, t, 0)),
        compiler_params=pltpu.CompilerParams(
            dimension_semantics=("parallel", "parallel"),
            vmem_limit_bytes=_vmem_limit_bytes()),
    )(y2.reshape(N, DH, WC), x.reshape(N, DH, WC), scale_wc, shift_wc)
    return out2d.reshape(N, D, H, W, C)


def _reference(x, w1, g1, b1, w2, g2, b2):
    """Pure-JAX f32 reference for the same forward pass (NDHWC)."""
    def conv(y, w):
        return lax.conv_general_dilated(
            y, w, window_strides=(1, 1, 1),
            padding=((1, 1), (1, 1), (1, 1)),
            dimension_numbers=("NDHWC", "DHWIO", "NDHWC"))

    def bn(y, g, b):
        m = y.mean(axis=(0, 1, 2, 3))
        v = ((y - m) ** 2).mean(axis=(0, 1, 2, 3))
        return (y - m) * lax.rsqrt(v + EPS) * g + b

    out = jax.nn.relu(bn(conv(x, w1), g1, b1))
    out = bn(conv(out, w2), g2, b2) + x
    return jax.nn.relu(out)


if __name__ == "__main__":
    # Small shapes consistent with the module: batch=2, channels=8, spatial=8^3.
    N, C, D, H, W = 2, 8, 8, 8, 8

    key = jax.random.PRNGKey(0)
    kx, kw1, kw2, kg1, kb1, kg2, kb2 = jax.random.split(key, 7)

    x = jax.random.normal(kx, (N, D, H, W, C), jnp.float32)
    w1 = 0.1 * jax.random.normal(kw1, (3, 3, 3, C, C), jnp.float32)
    w2 = 0.1 * jax.random.normal(kw2, (3, 3, 3, C, C), jnp.float32)
    g1 = 1.0 + 0.1 * jax.random.normal(kg1, (C,), jnp.float32)
    b1 = 0.1 * jax.random.normal(kb1, (C,), jnp.float32)
    g2 = 1.0 + 0.1 * jax.random.normal(kg2, (C,), jnp.float32)
    b2 = 0.1 * jax.random.normal(kb2, (C,), jnp.float32)

    out = basic_block(x, w1, g1, b1, w2, g2, b2)
    jax.block_until_ready(out)

    ref = _reference(x, w1, g1, b1, w2, g2, b2)
    # Tolerance reflects the intentional bf16 policy (bf16 MXU operands and
    # bf16 inter-pass tensors, f32 accumulation / BN statistics); the
    # reference runs its convolutions and intermediates entirely in f32.
    np.testing.assert_allclose(np.asarray(out), np.asarray(ref),
                               rtol=5e-2, atol=7e-2)

    print("KERNEL_OK")
</pallas_src>

<mosaic_0001>
module attributes {stable_mosaic.version = 11 : i64} {
  func.func @_conv_stats_kernel(%arg0: i32, %arg1: memref<1x8x8x8x8xf32, #tpu.memory_space<vmem>>, %arg2: memref<1x8xf32, #tpu.memory_space<vmem>>, %arg3: memref<1x8xf32, #tpu.memory_space<vmem>>, %arg4: memref<3x72x8xbf16, #tpu.memory_space<vmem>>, %arg5: memref<1x8x8x8x8xbf16, #tpu.memory_space<vmem>>, %arg6: memref<1x2x8xf32, #tpu.memory_space<vmem>>, %arg7: memref<8x8x10x8xbf16, #tpu.memory_space<vmem>>, %arg8: memref<640x72xbf16, #tpu.memory_space<vmem>>) attributes {dimension_semantics = [#tpu.dimension_semantics<parallel>], iteration_bounds = array<i64: 2>, scalar_prefetch = 0 : i64, scratch_operands = 2 : i64, tpu.core_type = #tpu.core_type<tc>, window_params = [{transform_indices = @transform_0, window_bounds = array<i64: 1, 8, 8, 8, 8>}, {pipeline_mode = #tpu.pipeline_mode<synchronous>, transform_indices = @transform_1, window_bounds = array<i64: 1, 8>}, {pipeline_mode = #tpu.pipeline_mode<synchronous>, transform_indices = @transform_2, window_bounds = array<i64: 1, 8>}, {pipeline_mode = #tpu.pipeline_mode<synchronous>, transform_indices = @transform_3, window_bounds = array<i64: 3, 72, 8>}, {transform_indices = @transform_4, window_bounds = array<i64: 1, 8, 8, 8, 8>}, {transform_indices = @transform_5, window_bounds = array<i64: 1, 2, 8>}]} {
    %c0 = arith.constant 0 : index
    %c0_0 = arith.constant 0 : index
    %c0_1 = arith.constant 0 : index
    %c0_2 = arith.constant 0 : index
    %c0_3 = arith.constant 0 : index
    %0 = vector.load %arg1[%c0, %c0_0, %c0_1, %c0_2, %c0_3] : memref<1x8x8x8x8xf32, #tpu.memory_space<vmem>>, vector<1x8x8x8x8xf32>
    %1 = vector.shape_cast %0 : vector<1x8x8x8x8xf32> to vector<8x8x8x8xf32>
    %2 = arith.truncf %1 : vector<8x8x8x8xf32> to vector<8x8x8x8xbf16>
    %cst = arith.constant 0.000000e+00 : bf16
    %3 = vector.broadcast %cst : bf16 to vector<8x8x1x8xbf16>
    %c0_4 = arith.constant 0 : index
    %c0_5 = arith.constant 0 : index
    %c0_6 = arith.constant 0 : index
    %c0_7 = arith.constant 0 : index
    %4 = vector.load %arg7[%c0_4, %c0_5, %c0_6, %c0_7] : memref<8x8x10x8xbf16, #tpu.memory_space<vmem>>, vector<8x8x1x8xbf16>
    tpu.vector_store %arg7[%c0_4, %c0_5, %c0_6, %c0_7], %3 {strides = array<i32>} : memref<8x8x10x8xbf16, #tpu.memory_space<vmem>>, vector<8x8x1x8xbf16>,
    %cst_8 = arith.constant 0.000000e+00 : bf16
    %5 = vector.broadcast %cst_8 : bf16 to vector<8x8x1x8xbf16>
    %c0_9 = arith.constant 0 : index
    %c0_10 = arith.constant 0 : index
    %c9 = arith.constant 9 : index
    %c0_11 = arith.constant 0 : index
    %6 = vector.load %arg7[%c0_9, %c0_10, %c9, %c0_11] : memref<8x8x10x8xbf16, #tpu.memory_space<vmem>>, vector<8x8x1x8xbf16>
    tpu.vector_store %arg7[%c0_9, %c0_10, %c9, %c0_11], %5 {strides = array<i32>} : memref<8x8x10x8xbf16, #tpu.memory_space<vmem>>, vector<8x8x1x8xbf16>,
    %c0_12 = arith.constant 0 : index
    %c0_13 = arith.constant 0 : index
    %c1 = arith.constant 1 : index
    %c0_14 = arith.constant 0 : index
    %7 = vector.load %arg7[%c0_12, %c0_13, %c1, %c0_14] : memref<8x8x10x8xbf16, #tpu.memory_space<vmem>>, vector<8x8x8x8xbf16>
    tpu.vector_store %arg7[%c0_12, %c0_13, %c1, %c0_14], %2 {strides = array<i32>} : memref<8x8x10x8xbf16, #tpu.memory_space<vmem>>, vector<8x8x8x8xbf16>,
    %c0_15 = arith.constant 0 : index
    %c0_16 = arith.constant 0 : index
    %c0_17 = arith.constant 0 : index
    %c0_18 = arith.constant 0 : index
    %8 = vector.load %arg7[%c0_15, %c0_16, %c0_17, %c0_18] : memref<8x8x10x8xbf16, #tpu.memory_space<vmem>>, vector<8x8x8x8xbf16>
    %c0_19 = arith.constant 0 : index
    %c0_20 = arith.constant 0 : index
    %c1_21 = arith.constant 1 : index
    %c0_22 = arith.constant 0 : index
    %9 = vector.load %arg7[%c0_19, %c0_20, %c1_21, %c0_22] : memref<8x8x10x8xbf16, #tpu.memory_space<vmem>>, vector<8x8x8x8xbf16>
    %c0_23 = arith.constant 0 : index
    %c0_24 = arith.constant 0 : index
    %c2 = arith.constant 2 : index
    %c0_25 = arith.constant 0 : index
    %10 = vector.load %arg7[%c0_23, %c0_24, %c2, %c0_25] : memref<8x8x10x8xbf16, #tpu.memory_space<vmem>>, vector<8x8x8x8xbf16>
    %11 = tpu.concatenate %8, %9, %10 in 3 : vector<8x8x8x8xbf16>, vector<8x8x8x8xbf16>, vector<8x8x8x8xbf16> -> vector<8x8x8x24xbf16>
    %cst_26 = arith.constant 0.000000e+00 : bf16
    %12 = vector.broadcast %cst_26 : bf16 to vector<8x1x8x24xbf16>
    %13 = tpu.concatenate %12, %11, %12 in 1 : vector<8x1x8x24xbf16>, vector<8x8x8x24xbf16>, vector<8x1x8x24xbf16> -> vector<8x10x8x24xbf16>
    %14 = vector.extract_strided_slice %13 {offsets = [0, 0, 0, 0], sizes = [8, 8, 8, 24], strides = [1, 1, 1, 1]} : vector<8x10x8x24xbf16> to vector<8x8x8x24xbf16>
    %15 = vector.extract_strided_slice %13 {offsets = [0, 1, 0, 0], sizes = [8, 8, 8, 24], strides = [1, 1, 1, 1]} : vector<8x10x8x24xbf16> to vector<8x8x8x24xbf16>
    %16 = vector.extract_strided_slice %13 {offsets = [0, 2, 0, 0], sizes = [8, 8, 8, 24], strides = [1, 1, 1, 1]} : vector<8x10x8x24xbf16> to vector<8x8x8x24xbf16>
    %17 = tpu.concatenate %14, %15, %16 in 3 : vector<8x8x8x24xbf16>, vector<8x8x8x24xbf16>, vector<8x8x8x24xbf16> -> vector<8x8x8x72xbf16>
    %cst_27 = arith.constant 0.000000e+00 : bf16
    %18 = vector.broadcast %cst_27 : bf16 to vector<64x72xbf16>
    %c0_28 = arith.constant 0 : index
    %c0_29 = arith.constant 0 : index
    %19 = vector.load %arg8[%c0_28, %c0_29] : memref<640x72xbf16, #tpu.memory_space<vmem>>, vector<64x72xbf16>
    tpu.vector_store %arg8[%c0_28, %c0_29], %18 {strides = array<i32>} : memref<640x72xbf16, #tpu.memory_space<vmem>>, vector<64x72xbf16>,
    %c576 = arith.constant 576 : index
    %c0_30 = arith.constant 0 : index
    %20 = vector.load %arg8[%c576, %c0_30] : memref<640x72xbf16, #tpu.memory_space<vmem>>, vector<64x72xbf16>
    tpu.vector_store %arg8[%c576, %c0_30], %18 {strides = array<i32>} : memref<640x72xbf16, #tpu.memory_space<vmem>>, vector<64x72xbf16>,
    %21 = vector.shape_cast %17 : vector<8x8x8x72xbf16> to vector<512x72xbf16>
    %c64 = arith.constant 64 : index
    %c0_31 = arith.constant 0 : index
    %22 = vector.load %arg8[%c64, %c0_31] : memref<640x72xbf16, #tpu.memory_space<vmem>>, vector<512x72xbf16>
    tpu.vector_store %arg8[%c64, %c0_31], %21 {strides = array<i32>} : memref<640x72xbf16, #tpu.memory_space<vmem>>, vector<512x72xbf16>,
    %c0_32 = arith.constant 0 : index
    %c0_33 = arith.constant 0 : index
    %23 = vector.load %arg8[%c0_32, %c0_33] : memref<640x72xbf16, #tpu.memory_space<vmem>>, vector<512x72xbf16>
    %c0_34 = arith.constant 0 : index
    %c0_35 = arith.constant 0 : index
    %c0_36 = arith.constant 0 : index
    %24 = vector.load %arg4[%c0_34, %c0_35, %c0_36] : memref<3x72x8xbf16, #tpu.memory_space<vmem>>, vector<1x72x8xbf16>
    %25 = vector.shape_cast %24 : vector<1x72x8xbf16> to vector<72x8xbf16>
    %cst_37 = arith.constant dense<0.000000e+00> : vector<512x8xf32>
    %26 = tpu.matmul %23, %25, %cst_37 {dimension_numbers = #tpu.dot_dimension_numbers<[1], [0], [0], [1], [0, 0, 1, 1], [], []>} : vector<512x72xbf16>, vector<72x8xbf16>, vector<512x8xf32> -> vector<512x8xf32>
    %c64_38 = arith.constant 64 : index
    %c0_39 = arith.constant 0 : index
    %27 = vector.load %arg8[%c64_38, %c0_39] : memref<640x72xbf16, #tpu.memory_space<vmem>>, vector<512x72xbf16>
    %c1_40 = arith.constant 1 : index
    %c0_41 = arith.constant 0 : index
    %c0_42 = arith.constant 0 : index
    %28 = vector.load %arg4[%c1_40, %c0_41, %c0_42] : memref<3x72x8xbf16, #tpu.memory_space<vmem>>, vector<1x72x8xbf16>
    %29 = vector.shape_cast %28 : vector<1x72x8xbf16> to vector<72x8xbf16>
    %cst_43 = arith.constant dense<0.000000e+00> : vector<512x8xf32>
    %30 = tpu.matmul %27, %29, %cst_43 {dimension_numbers = #tpu.dot_dimension_numbers<[1], [0], [0], [1], [0, 0, 1, 1], [], []>} : vector<512x72xbf16>, vector<72x8xbf16>, vector<512x8xf32> -> vector<512x8xf32>
    %31 = arith.addf %26, %30 : vector<512x8xf32>
    %c128 = arith.constant 128 : index
    %c0_44 = arith.constant 0 : index
    %32 = vector.load %arg8[%c128, %c0_44] : memref<640x72xbf16, #tpu.memory_space<vmem>>, vector<512x72xbf16>
    %c2_45 = arith.constant 2 : index
    %c0_46 = arith.constant 0 : index
    %c0_47 = arith.constant 0 : index
    %33 = vector.load %arg4[%c2_45, %c0_46, %c0_47] : memref<3x72x8xbf16, #tpu.memory_space<vmem>>, vector<1x72x8xbf16>
    %34 = vector.shape_cast %33 : vector<1x72x8xbf16> to vector<72x8xbf16>
    %cst_48 = arith.constant dense<0.000000e+00> : vector<512x8xf32>
    %35 = tpu.matmul %32, %34, %cst_48 {dimension_numbers = #tpu.dot_dimension_numbers<[1], [0], [0], [1], [0, 0, 1, 1], [], []>} : vector<512x72xbf16>, vector<72x8xbf16>, vector<512x8xf32> -> vector<512x8xf32>
    %36 = arith.addf %31, %35 : vector<512x8xf32>
    %cst_49 = arith.constant dense<0.000000e+00> : vector<8xf32>
    %37 = vector.multi_reduction <add>, %36, %cst_49 [0] : vector<512x8xf32> to vector<8xf32>
    %38 = vector.shape_cast %37 : vector<8xf32> to vector<1x8xf32>
    %39 = arith.mulf %36, %36 : vector<512x8xf32>
    %cst_50 = arith.constant dense<0.000000e+00> : vector<8xf32>
    %40 = vector.multi_reduction <add>, %39, %cst_50 [0] : vector<512x8xf32> to vector<8xf32>
    %41 = vector.shape_cast %40 : vector<8xf32> to vector<1x8xf32>
    %42 = tpu.concatenate %38, %41 in 0 : vector<1x8xf32>, vector<1x8xf32> -> vector<2x8xf32>
    %43 = vector.shape_cast %42 : vector<2x8xf32> to vector<1x2x8xf32>
    %c0_51 = arith.constant 0 : index
    %c0_52 = arith.constant 0 : index
    %c0_53 = arith.constant 0 : index
    %44 = vector.load %arg6[%c0_51, %c0_52, %c0_53] : memref<1x2x8xf32, #tpu.memory_space<vmem>>, vector<1x2x8xf32>
    tpu.vector_store %arg6[%c0_51, %c0_52, %c0_53], %43 {strides = array<i32>} : memref<1x2x8xf32, #tpu.memory_space<vmem>>, vector<1x2x8xf32>,
    %45 = arith.truncf %36 : vector<512x8xf32> to vector<512x8xbf16>
    %46 = vector.shape_cast %45 : vector<512x8xbf16> to vector<1x8x8x8x8xbf16>
    %c0_54 = arith.constant 0 : index
    %c0_55 = arith.constant 0 : index
    %c0_56 = arith.constant 0 : index
    %c0_57 = arith.constant 0 : index
    %c0_58 = arith.constant 0 : index
    %47 = vector.load %arg5[%c0_54, %c0_55, %c0_56, %c0_57, %c0_58] : memref<1x8x8x8x8xbf16, #tpu.memory_space<vmem>>, vector<1x8x8x8x8xbf16>
    tpu.vector_store %arg5[%c0_54, %c0_55, %c0_56, %c0_57, %c0_58], %46 {strides = array<i32>} : memref<1x8x8x8x8xbf16, #tpu.memory_space<vmem>>, vector<1x8x8x8x8xbf16>,
    return
  }
  func.func @transform_0(%arg0: i32) -> (i32, i32, i32, i32, i32) {
    %c0_i32 = arith.constant 0 : i32
    %c0_i32_0 = arith.constant 0 : i32
    %c0_i32_1 = arith.constant 0 : i32
    %c0_i32_2 = arith.constant 0 : i32
    %c0_i32_3 = arith.constant 0 : i32
    return %arg0, %c0_i32, %c0_i32_0, %c0_i32_1, %c0_i32_2 : i32, i32, i32, i32, i32
  }
  func.func @transform_1(%arg0: i32) -> (i32, i32) {
    %c0_i32 = arith.constant 0 : i32
    %c0_i32_0 = arith.constant 0 : i32
    %c0_i32_1 = arith.constant 0 : i32
    return %c0_i32, %c0_i32_0 : i32, i32
  }
  func.func @transform_2(%arg0: i32) -> (i32, i32) {
    %c0_i32 = arith.constant 0 : i32
    %c0_i32_0 = arith.constant 0 : i32
    %c0_i32_1 = arith.constant 0 : i32
    return %c0_i32, %c0_i32_0 : i32, i32
  }
  func.func @transform_3(%arg0: i32) -> (i32, i32, i32) {
    %c0_i32 = arith.constant 0 : i32
    %c0_i32_0 = arith.constant 0 : i32
    %c0_i32_1 = arith.constant 0 : i32
    %c0_i32_2 = arith.constant 0 : i32
    return %c0_i32, %c0_i32_0, %c0_i32_1 : i32, i32, i32
  }
  func.func @transform_4(%arg0: i32) -> (i32, i32, i32, i32, i32) {
    %c0_i32 = arith.constant 0 : i32
    %c0_i32_0 = arith.constant 0 : i32
    %c0_i32_1 = arith.constant 0 : i32
    %c0_i32_2 = arith.constant 0 : i32
    %c0_i32_3 = arith.constant 0 : i32
    return %arg0, %c0_i32, %c0_i32_0, %c0_i32_1, %c0_i32_2 : i32, i32, i32, i32, i32
  }
  func.func @transform_5(%arg0: i32) -> (i32, i32, i32) {
    %c0_i32 = arith.constant 0 : i32
    %c0_i32_0 = arith.constant 0 : i32
    %c0_i32_1 = arith.constant 0 : i32
    return %arg0, %c0_i32, %c0_i32_0 : i32, i32, i32
  }
}

module attributes {stable_mosaic.version = 11 : i64} {
  func.func @_conv_stats_kernel(%arg0: i32, %arg1: memref<1x8x8x8x8xbf16, #tpu.memory_space<vmem>>, %arg2: memref<1x8xf32, #tpu.memory_space<vmem>>, %arg3: memref<1x8xf32, #tpu.memory_space<vmem>>, %arg4: memref<3x72x8xbf16, #tpu.memory_space<vmem>>, %arg5: memref<1x8x8x8x8xbf16, #tpu.memory_space<vmem>>, %arg6: memref<1x2x8xf32, #tpu.memory_space<vmem>>, %arg7: memref<8x8x10x8xbf16, #tpu.memory_space<vmem>>, %arg8: memref<640x72xbf16, #tpu.memory_space<vmem>>) attributes {dimension_semantics = [#tpu.dimension_semantics<parallel>], iteration_bounds = array<i64: 2>, scalar_prefetch = 0 : i64, scratch_operands = 2 : i64, tpu.core_type = #tpu.core_type<tc>, window_params = [{transform_indices = @transform_0, window_bounds = array<i64: 1, 8, 8, 8, 8>}, {pipeline_mode = #tpu.pipeline_mode<synchronous>, transform_indices = @transform_1, window_bounds = array<i64: 1, 8>}, {pipeline_mode = #tpu.pipeline_mode<synchronous>, transform_indices = @transform_2, window_bounds = array<i64: 1, 8>}, {pipeline_mode = #tpu.pipeline_mode<synchronous>, transform_indices = @transform_3, window_bounds = array<i64: 3, 72, 8>}, {transform_indices = @transform_4, window_bounds = array<i64: 1, 8, 8, 8, 8>}, {transform_indices = @transform_5, window_bounds = array<i64: 1, 2, 8>}]} {
    %c0 = arith.constant 0 : index
    %c0_0 = arith.constant 0 : index
    %c0_1 = arith.constant 0 : index
    %c0_2 = arith.constant 0 : index
    %c0_3 = arith.constant 0 : index
    %0 = vector.load %arg1[%c0, %c0_0, %c0_1, %c0_2, %c0_3] : memref<1x8x8x8x8xbf16, #tpu.memory_space<vmem>>, vector<1x8x8x8x8xbf16>
    %1 = vector.shape_cast %0 : vector<1x8x8x8x8xbf16> to vector<8x8x8x8xbf16>
    %2 = arith.extf %1 : vector<8x8x8x8xbf16> to vector<8x8x8x8xf32>
    %c0_4 = arith.constant 0 : index
    %c0_5 = arith.constant 0 : index
    %3 = vector.load %arg2[%c0_4, %c0_5] : memref<1x8xf32, #tpu.memory_space<vmem>>, vector<1x8xf32>
    %4 = vector.shape_cast %3 : vector<1x8xf32> to vector<1x1x1x8xf32>
    %5 = vector.broadcast %4 : vector<1x1x1x8xf32> to vector<8x8x8x8xf32>
    %6 = arith.mulf %2, %5 : vector<8x8x8x8xf32>
    %c0_6 = arith.constant 0 : index
    %c0_7 = arith.constant 0 : index
    %7 = vector.load %arg3[%c0_6, %c0_7] : memref<1x8xf32, #tpu.memory_space<vmem>>, vector<1x8xf32>
    %8 = vector.shape_cast %7 : vector<1x8xf32> to vector<1x1x1x8xf32>
    %9 = vector.broadcast %8 : vector<1x1x1x8xf32> to vector<8x8x8x8xf32>
    %10 = arith.addf %6, %9 : vector<8x8x8x8xf32>
    %cst = arith.constant 0.000000e+00 : f32
    %11 = vector.broadcast %cst : f32 to vector<8x8x8x8xf32>
    %12 = arith.maximumf %10, %11 : vector<8x8x8x8xf32>
    %13 = arith.truncf %12 : vector<8x8x8x8xf32> to vector<8x8x8x8xbf16>
    %cst_8 = arith.constant 0.000000e+00 : bf16
    %14 = vector.broadcast %cst_8 : bf16 to vector<8x8x1x8xbf16>
    %c0_9 = arith.constant 0 : index
    %c0_10 = arith.constant 0 : index
    %c0_11 = arith.constant 0 : index
    %c0_12 = arith.constant 0 : index
    %15 = vector.load %arg7[%c0_9, %c0_10, %c0_11, %c0_12] : memref<8x8x10x8xbf16, #tpu.memory_space<vmem>>, vector<8x8x1x8xbf16>
    tpu.vector_store %arg7[%c0_9, %c0_10, %c0_11, %c0_12], %14 {strides = array<i32>} : memref<8x8x10x8xbf16, #tpu.memory_space<vmem>>, vector<8x8x1x8xbf16>,
    %cst_13 = arith.constant 0.000000e+00 : bf16
    %16 = vector.broadcast %cst_13 : bf16 to vector<8x8x1x8xbf16>
    %c0_14 = arith.constant 0 : index
    %c0_15 = arith.constant 0 : index
    %c9 = arith.constant 9 : index
    %c0_16 = arith.constant 0 : index
    %17 = vector.load %arg7[%c0_14, %c0_15, %c9, %c0_16] : memref<8x8x10x8xbf16, #tpu.memory_space<vmem>>, vector<8x8x1x8xbf16>
    tpu.vector_store %arg7[%c0_14, %c0_15, %c9, %c0_16], %16 {strides = array<i32>} : memref<8x8x10x8xbf16, #tpu.memory_space<vmem>>, vector<8x8x1x8xbf16>,
    %c0_17 = arith.constant 0 : index
    %c0_18 = arith.constant 0 : index
    %c1 = arith.constant 1 : index
    %c0_19 = arith.constant 0 : index
    %18 = vector.load %arg7[%c0_17, %c0_18, %c1, %c0_19] : memref<8x8x10x8xbf16, #tpu.memory_space<vmem>>, vector<8x8x8x8xbf16>
    tpu.vector_store %arg7[%c0_17, %c0_18, %c1, %c0_19], %13 {strides = array<i32>} : memref<8x8x10x8xbf16, #tpu.memory_space<vmem>>, vector<8x8x8x8xbf16>,
    %c0_20 = arith.constant 0 : index
    %c0_21 = arith.constant 0 : index
    %c0_22 = arith.constant 0 : index
    %c0_23 = arith.constant 0 : index
    %19 = vector.load %arg7[%c0_20, %c0_21, %c0_22, %c0_23] : memref<8x8x10x8xbf16, #tpu.memory_space<vmem>>, vector<8x8x8x8xbf16>
    %c0_24 = arith.constant 0 : index
    %c0_25 = arith.constant 0 : index
    %c1_26 = arith.constant 1 : index
    %c0_27 = arith.constant 0 : index
    %20 = vector.load %arg7[%c0_24, %c0_25, %c1_26, %c0_27] : memref<8x8x10x8xbf16, #tpu.memory_space<vmem>>, vector<8x8x8x8xbf16>
    %c0_28 = arith.constant 0 : index
    %c0_29 = arith.constant 0 : index
    %c2 = arith.constant 2 : index
    %c0_30 = arith.constant 0 : index
    %21 = vector.load %arg7[%c0_28, %c0_29, %c2, %c0_30] : memref<8x8x10x8xbf16, #tpu.memory_space<vmem>>, vector<8x8x8x8xbf16>
    %22 = tpu.concatenate %19, %20, %21 in 3 : vector<8x8x8x8xbf16>, vector<8x8x8x8xbf16>, vector<8x8x8x8xbf16> -> vector<8x8x8x24xbf16>
    %cst_31 = arith.constant 0.000000e+00 : bf16
    %23 = vector.broadcast %cst_31 : bf16 to vector<8x1x8x24xbf16>
    %24 = tpu.concatenate %23, %22, %23 in 1 : vector<8x1x8x24xbf16>, vector<8x8x8x24xbf16>, vector<8x1x8x24xbf16> -> vector<8x10x8x24xbf16>
    %25 = vector.extract_strided_slice %24 {offsets = [0, 0, 0, 0], sizes = [8, 8, 8, 24], strides = [1, 1, 1, 1]} : vector<8x10x8x24xbf16> to vector<8x8x8x24xbf16>
    %26 = vector.extract_strided_slice %24 {offsets = [0, 1, 0, 0], sizes = [8, 8, 8, 24], strides = [1, 1, 1, 1]} : vector<8x10x8x24xbf16> to vector<8x8x8x24xbf16>
    %27 = vector.extract_strided_slice %24 {offsets = [0, 2, 0, 0], sizes = [8, 8, 8, 24], strides = [1, 1, 1, 1]} : vector<8x10x8x24xbf16> to vector<8x8x8x24xbf16>
    %28 = tpu.concatenate %25, %26, %27 in 3 : vector<8x8x8x24xbf16>, vector<8x8x8x24xbf16>, vector<8x8x8x24xbf16> -> vector<8x8x8x72xbf16>
    %cst_32 = arith.constant 0.000000e+00 : bf16
    %29 = vector.broadcast %cst_32 : bf16 to vector<64x72xbf16>
    %c0_33 = arith.constant 0 : index
    %c0_34 = arith.constant 0 : index
    %30 = vector.load %arg8[%c0_33, %c0_34] : memref<640x72xbf16, #tpu.memory_space<vmem>>, vector<64x72xbf16>
    tpu.vector_store %arg8[%c0_33, %c0_34], %29 {strides = array<i32>} : memref<640x72xbf16, #tpu.memory_space<vmem>>, vector<64x72xbf16>,
    %c576 = arith.constant 576 : index
    %c0_35 = arith.constant 0 : index
    %31 = vector.load %arg8[%c576, %c0_35] : memref<640x72xbf16, #tpu.memory_space<vmem>>, vector<64x72xbf16>
    tpu.vector_store %arg8[%c576, %c0_35], %29 {strides = array<i32>} : memref<640x72xbf16, #tpu.memory_space<vmem>>, vector<64x72xbf16>,
    %32 = vector.shape_cast %28 : vector<8x8x8x72xbf16> to vector<512x72xbf16>
    %c64 = arith.constant 64 : index
    %c0_36 = arith.constant 0 : index
    %33 = vector.load %arg8[%c64, %c0_36] : memref<640x72xbf16, #tpu.memory_space<vmem>>, vector<512x72xbf16>
    tpu.vector_store %arg8[%c64, %c0_36], %32 {strides = array<i32>} : memref<640x72xbf16, #tpu.memory_space<vmem>>, vector<512x72xbf16>,
    %c0_37 = arith.constant 0 : index
    %c0_38 = arith.constant 0 : index
    %34 = vector.load %arg8[%c0_37, %c0_38] : memref<640x72xbf16, #tpu.memory_space<vmem>>, vector<512x72xbf16>
    %c0_39 = arith.constant 0 : index
    %c0_40 = arith.constant 0 : index
    %c0_41 = arith.constant 0 : index
    %35 = vector.load %arg4[%c0_39, %c0_40, %c0_41] : memref<3x72x8xbf16, #tpu.memory_space<vmem>>, vector<1x72x8xbf16>
    %36 = vector.shape_cast %35 : vector<1x72x8xbf16> to vector<72x8xbf16>
    %cst_42 = arith.constant dense<0.000000e+00> : vector<512x8xf32>
    %37 = tpu.matmul %34, %36, %cst_42 {dimension_numbers = #tpu.dot_dimension_numbers<[1], [0], [0], [1], [0, 0, 1, 1], [], []>} : vector<512x72xbf16>, vector<72x8xbf16>, vector<512x8xf32> -> vector<512x8xf32>
    %c64_43 = arith.constant 64 : index
    %c0_44 = arith.constant 0 : index
    %38 = vector.load %arg8[%c64_43, %c0_44] : memref<640x72xbf16, #tpu.memory_space<vmem>>, vector<512x72xbf16>
    %c1_45 = arith.constant 1 : index
    %c0_46 = arith.constant 0 : index
    %c0_47 = arith.constant 0 : index
    %39 = vector.load %arg4[%c1_45, %c0_46, %c0_47] : memref<3x72x8xbf16, #tpu.memory_space<vmem>>, vector<1x72x8xbf16>
    %40 = vector.shape_cast %39 : vector<1x72x8xbf16> to vector<72x8xbf16>
    %cst_48 = arith.constant dense<0.000000e+00> : vector<512x8xf32>
    %41 = tpu.matmul %38, %40, %cst_48 {dimension_numbers = #tpu.dot_dimension_numbers<[1], [0], [0], [1], [0, 0, 1, 1], [], []>} : vector<512x72xbf16>, vector<72x8xbf16>, vector<512x8xf32> -> vector<512x8xf32>
    %42 = arith.addf %37, %41 : vector<512x8xf32>
    %c128 = arith.constant 128 : index
    %c0_49 = arith.constant 0 : index
    %43 = vector.load %arg8[%c128, %c0_49] : memref<640x72xbf16, #tpu.memory_space<vmem>>, vector<512x72xbf16>
    %c2_50 = arith.constant 2 : index
    %c0_51 = arith.constant 0 : index
    %c0_52 = arith.constant 0 : index
    %44 = vector.load %arg4[%c2_50, %c0_51, %c0_52] : memref<3x72x8xbf16, #tpu.memory_space<vmem>>, vector<1x72x8xbf16>
    %45 = vector.shape_cast %44 : vector<1x72x8xbf16> to vector<72x8xbf16>
    %cst_53 = arith.constant dense<0.000000e+00> : vector<512x8xf32>
    %46 = tpu.matmul %43, %45, %cst_53 {dimension_numbers = #tpu.dot_dimension_numbers<[1], [0], [0], [1], [0, 0, 1, 1], [], []>} : vector<512x72xbf16>, vector<72x8xbf16>, vector<512x8xf32> -> vector<512x8xf32>
    %47 = arith.addf %42, %46 : vector<512x8xf32>
    %cst_54 = arith.constant dense<0.000000e+00> : vector<8xf32>
    %48 = vector.multi_reduction <add>, %47, %cst_54 [0] : vector<512x8xf32> to vector<8xf32>
    %49 = vector.shape_cast %48 : vector<8xf32> to vector<1x8xf32>
    %50 = arith.mulf %47, %47 : vector<512x8xf32>
    %cst_55 = arith.constant dense<0.000000e+00> : vector<8xf32>
    %51 = vector.multi_reduction <add>, %50, %cst_55 [0] : vector<512x8xf32> to vector<8xf32>
    %52 = vector.shape_cast %51 : vector<8xf32> to vector<1x8xf32>
    %53 = tpu.concatenate %49, %52 in 0 : vector<1x8xf32>, vector<1x8xf32> -> vector<2x8xf32>
    %54 = vector.shape_cast %53 : vector<2x8xf32> to vector<1x2x8xf32>
    %c0_56 = arith.constant 0 : index
    %c0_57 = arith.constant 0 : index
    %c0_58 = arith.constant 0 : index
    %55 = vector.load %arg6[%c0_56, %c0_57, %c0_58] : memref<1x2x8xf32, #tpu.memory_space<vmem>>, vector<1x2x8xf32>
    tpu.vector_store %arg6[%c0_56, %c0_57, %c0_58], %54 {strides = array<i32>} : memref<1x2x8xf32, #tpu.memory_space<vmem>>, vector<1x2x8xf32>,
    %56 = arith.truncf %47 : vector<512x8xf32> to vector<512x8xbf16>
    %57 = vector.shape_cast %56 : vector<512x8xbf16> to vector<1x8x8x8x8xbf16>
    %c0_59 = arith.constant 0 : index
    %c0_60 = arith.constant 0 : index
    %c0_61 = arith.constant 0 : index
    %c0_62 = arith.constant 0 : index
    %c0_63 = arith.constant 0 : index
    %58 = vector.load %arg5[%c0_59, %c0_60, %c0_61, %c0_62, %c0_63] : memref<1x8x8x8x8xbf16, #tpu.memory_space<vmem>>, vector<1x8x8x8x8xbf16>
    tpu.vector_store %arg5[%c0_59, %c0_60, %c0_61, %c0_62, %c0_63], %57 {strides = array<i32>} : memref<1x8x8x8x8xbf16, #tpu.memory_space<vmem>>, vector<1x8x8x8x8xbf16>,
    return
  }
  func.func @transform_0(%arg0: i32) -> (i32, i32, i32, i32, i32) {
    %c0_i32 = arith.constant 0 : i32
    %c0_i32_0 = arith.constant 0 : i32
    %c0_i32_1 = arith.constant 0 : i32
    %c0_i32_2 = arith.constant 0 : i32
    %c0_i32_3 = arith.constant 0 : i32
    return %arg0, %c0_i32, %c0_i32_0, %c0_i32_1, %c0_i32_2 : i32, i32, i32, i32, i32
  }
  func.func @transform_1(%arg0: i32) -> (i32, i32) {
    %c0_i32 = arith.constant 0 : i32
    %c0_i32_0 = arith.constant 0 : i32
    %c0_i32_1 = arith.constant 0 : i32
    return %c0_i32, %c0_i32_0 : i32, i32
  }
  func.func @transform_2(%arg0: i32) -> (i32, i32) {
    %c0_i32 = arith.constant 0 : i32
    %c0_i32_0 = arith.constant 0 : i32
    %c0_i32_1 = arith.constant 0 : i32
    return %c0_i32, %c0_i32_0 : i32, i32
  }
  func.func @transform_3(%arg0: i32) -> (i32, i32, i32) {
    %c0_i32 = arith.constant 0 : i32
    %c0_i32_0 = arith.constant 0 : i32
    %c0_i32_1 = arith.constant 0 : i32
    %c0_i32_2 = arith.constant 0 : i32
    return %c0_i32, %c0_i32_0, %c0_i32_1 : i32, i32, i32
  }
  func.func @transform_4(%arg0: i32) -> (i32, i32, i32, i32, i32) {
    %c0_i32 = arith.constant 0 : i32
    %c0_i32_0 = arith.constant 0 : i32
    %c0_i32_1 = arith.constant 0 : i32
    %c0_i32_2 = arith.constant 0 : i32
    %c0_i32_3 = arith.constant 0 : i32
    return %arg0, %c0_i32, %c0_i32_0, %c0_i32_1, %c0_i32_2 : i32, i32, i32, i32, i32
  }
  func.func @transform_5(%arg0: i32) -> (i32, i32, i32) {
    %c0_i32 = arith.constant 0 : i32
    %c0_i32_0 = arith.constant 0 : i32
    %c0_i32_1 = arith.constant 0 : i32
    return %arg0, %c0_i32, %c0_i32_0 : i32, i32, i32
  }
}

module attributes {stable_mosaic.version = 11 : i64} {
  func.func @_bn_add_relu_kernel(%arg0: i32, %arg1: i32, %arg2: memref<1x64x64xbf16, #tpu.memory_space<vmem>>, %arg3: memref<1x64x64xf32, #tpu.memory_space<vmem>>, %arg4: memref<1x1x64xf32, #tpu.memory_space<vmem>>, %arg5: memref<1x1x64xf32, #tpu.memory_space<vmem>>, %arg6: memref<1x64x64xf32, #tpu.memory_space<vmem>>) attributes {dimension_semantics = [#tpu.dimension_semantics<parallel>, #tpu.dimension_semantics<parallel>], iteration_bounds = array<i64: 2, 1>, scalar_prefetch = 0 : i64, scratch_operands = 0 : i64, tpu.core_type = #tpu.core_type<tc>, window_params = [{transform_indices = @transform_0, window_bounds = array<i64: 1, 64, 64>}, {transform_indices = @transform_1, window_bounds = array<i64: 1, 64, 64>}, {pipeline_mode = #tpu.pipeline_mode<synchronous>, transform_indices = @transform_2, window_bounds = array<i64: 1, 1, 64>}, {pipeline_mode = #tpu.pipeline_mode<synchronous>, transform_indices = @transform_3, window_bounds = array<i64: 1, 1, 64>}, {transform_indices = @transform_4, window_bounds = array<i64: 1, 64, 64>}]} {
    %c0 = arith.constant 0 : index
    %c0_0 = arith.constant 0 : index
    %c0_1 = arith.constant 0 : index
    %0 = vector.load %arg2[%c0, %c0_0, %c0_1] : memref<1x64x64xbf16, #tpu.memory_space<vmem>>, vector<1x64x64xbf16>
    %1 = arith.extf %0 : vector<1x64x64xbf16> to vector<1x64x64xf32>
    %c0_2 = arith.constant 0 : index
    %c0_3 = arith.constant 0 : index
    %c0_4 = arith.constant 0 : index
    %2 = vector.load %arg4[%c0_2, %c0_3, %c0_4] : memref<1x1x64xf32, #tpu.memory_space<vmem>>, vector<1x1x64xf32>
    %3 = vector.broadcast %2 : vector<1x1x64xf32> to vector<1x64x64xf32>
    %4 = arith.mulf %1, %3 : vector<1x64x64xf32>
    %c0_5 = arith.constant 0 : index
    %c0_6 = arith.constant 0 : index
    %c0_7 = arith.constant 0 : index
    %5 = vector.load %arg5[%c0_5, %c0_6, %c0_7] : memref<1x1x64xf32, #tpu.memory_space<vmem>>, vector<1x1x64xf32>
    %6 = vector.broadcast %5 : vector<1x1x64xf32> to vector<1x64x64xf32>
    %7 = arith.addf %4, %6 : vector<1x64x64xf32>
    %c0_8 = arith.constant 0 : index
    %c0_9 = arith.constant 0 : index
    %c0_10 = arith.constant 0 : index
    %8 = vector.load %arg3[%c0_8, %c0_9, %c0_10] : memref<1x64x64xf32, #tpu.memory_space<vmem>>, vector<1x64x64xf32>
    %9 = arith.addf %7, %8 : vector<1x64x64xf32>
    %cst = arith.constant 0.000000e+00 : f32
    %10 = vector.broadcast %cst : f32 to vector<1x64x64xf32>
    %11 = arith.maximumf %9, %10 : vector<1x64x64xf32>
    %c0_11 = arith.constant 0 : index
    %c0_12 = arith.constant 0 : index
    %c0_13 = arith.constant 0 : index
    %12 = vector.load %arg6[%c0_11, %c0_12, %c0_13] : memref<1x64x64xf32, #tpu.memory_space<vmem>>, vector<1x64x64xf32>
    tpu.vector_store %arg6[%c0_11, %c0_12, %c0_13], %11 {strides = array<i32>} : memref<1x64x64xf32, #tpu.memory_space<vmem>>, vector<1x64x64xf32>,
    return
  }
  func.func @transform_0(%arg0: i32, %arg1: i32) -> (i32, i32, i32) {
    %c0_i32 = arith.constant 0 : i32
    %c0_i32_0 = arith.constant 0 : i32
    return %arg0, %arg1, %c0_i32 : i32, i32, i32
  }
  func.func @transform_1(%arg0: i32, %arg1: i32) -> (i32, i32, i32) {
    %c0_i32 = arith.constant 0 : i32
    %c0_i32_0 = arith.constant 0 : i32
    return %arg0, %arg1, %c0_i32 : i32, i32, i32
  }
  func.func @transform_2(%arg0: i32, %arg1: i32) -> (i32, i32, i32) {
    %c0_i32 = arith.constant 0 : i32
    %c0_i32_0 = arith.constant 0 : i32
    %c0_i32_1 = arith.constant 0 : i32
    %c0_i32_2 = arith.constant 0 : i32
    return %c0_i32, %c0_i32_0, %c0_i32_1 : i32, i32, i32
  }
  func.func @transform_3(%arg0: i32, %arg1: i32) -> (i32, i32, i32) {
    %c0_i32 = arith.constant 0 : i32
    %c0_i32_0 = arith.constant 0 : i32
    %c0_i32_1 = arith.constant 0 : i32
    %c0_i32_2 = arith.constant 0 : i32
    return %c0_i32, %c0_i32_0, %c0_i32_1 : i32, i32, i32
  }
  func.func @transform_4(%arg0: i32, %arg1: i32) -> (i32, i32, i32) {
    %c0_i32 = arith.constant 0 : i32
    %c0_i32_0 = arith.constant 0 : i32
    return %arg0, %arg1, %c0_i32 : i32, i32, i32
  }
}

</mosaic_0001>

<llo_original>
// kernel: basic_block.5
$region0: #{basic_block.5}
  #allocation0 [shape = 'u32[]', space=smem, size = 0x4, offset = 0x4, fixed_abs, tag = 'smem constant byte address 0x4 - core index']
  #allocation1 [shape = 'u32[72,128]{1,0:T(1,128)}', space=vmem, size = 0x9000, scoped, tag = 'internal scratch']
  %s0 = inlined_call_operand.vmem [shape: bf16[2,64,64], index: 0, kind: input, shape index: {}]
  %s1 = inlined_call_operand.vmem [shape: f32[2,64,64], index: 1, kind: input, shape index: {}]
  %s2 = inlined_call_operand.vmem [shape: f32[1,1,64], index: 2, kind: input, shape index: {}]
  %s3 = inlined_call_operand.vmem [shape: f32[1,1,64], index: 3, kind: input, shape index: {}]
  %s4 = inlined_call_operand.vmem [shape: f32[2,64,64], index: 4, kind: output, shape index: {}]
  %s5 = sld [smem:[#allocation0]]
  $region49: #{basic_block.5} parent=0
    _
  %s7 = ssub.s32 1, %s5
  %s8 = scalar_select 0, %s7, %s5
  loop: start=0, step=1, limit=4
  $region2: #{basic_block.5} parent=0 // loop_pre_header
    _
  $region3: #{basic_block.5} parent=0 // loop_header
    %s10 = sphi 0, %s14
    %p11 = scmp.ge.s32.totalorder %s10, 4
    %s17 = sphi 0, %s29
    %s18 = sphi 0, %s25
    %s19 = sphi 0, %s17
    %s20 = sphi 0, %s18
    %s21 = sphi 0, %s19
    %s22 = sphi 0, %s20
    %s34 = sphi 0, %s36
    %s37 = sphi 0, %s34
    %s38 = sphi 0, %s37
    %s54 = sphi 0, %s38
    %s62 = sphi 0, %s64
    %s65 = sphi 0, %s62
    %s66 = sphi 0, %s65
    %s82 = sphi 0, %s66
    %s86 = sphi 0, %s86
    %s88 = sphi 0, %s86
    %s89 = sphi 0, %s88
    %s103 = sphi 0, %s89
    %s107 = sphi 0, %s107
    %s109 = sphi 0, %s107
    %s110 = sphi 0, %s109
    %s124 = sphi 0, %s110
    %s132 = sphi 0, %s134
    %s135 = sphi 0, %s132
    %s136 = sphi 0, %s135
    %s152 = sphi 0, %s136
  $region4: #{basic_block.5} parent=0 // loop_header_branch
    %13 = sbr.rel (%p11) target = $region8
  $region5: #{basic_block.5} parent=0 // loop_body
    %s15 = ssub.s32 %s10, 1
    %s16 = ssub.s32 %s10, 2
    %s23 = sadd.s32 1, %s18
    %p24 = scmp.ge.s32.totalorder %s23, 1
    %s25 = scalar_select %p24, 0, %s23
    %s26 = sadd.s32 1, %s17
    %s27 = scalar_select %p24, %s26, %s17
    %p28 = scmp.ge.s32.totalorder %s27, 2
    %s29 = scalar_select %p28, 0, %s27
    %s30 = ssub.s32 %s17, %s29
    %s31 = ssub.s32 %s18, %s25
    %s32 = sor.u32 %s30, %s31
    %p33 = scmp.eq.s32.totalorder %s32, 0
    %s35 = sadd.s32 %s34, 1
    %s36 = scalar_select %p33, %s34, %s35
    %p39 = pneg %p33
    %p40 = scmp.eq.s32.totalorder %s10, 1
    %p41 = por %p39, %p40
    %p42 = scmp.ne.s32.totalorder %s34, %s37
    %p43 = scmp.eq.s32.totalorder %s10, 0
    %p44 = por %p42, %p43
    %p45 = scmp.ne.s32.totalorder %s34, %s37
    %p46 = scmp.eq.s32.totalorder %s15, 1
    %p47 = por %p45, %p46
    %p48 = scmp.ne.s32.totalorder %s37, %s38
    %p49 = scmp.eq.s32.totalorder %s15, 0
    %p50 = por %p48, %p49
    %p51 = scmp.ne.s32.totalorder %s37, %s38
    %p52 = scmp.eq.s32.totalorder %s16, 1
    %p53 = por %p51, %p52
    %p55 = scmp.ne.s32.totalorder %s38, %s54
    %p56 = scmp.eq.s32.totalorder %s16, 0
    %p57 = por %p55, %p56
    %s58 = ssub.s32 %s17, %s29
    %s59 = ssub.s32 %s18, %s25
    %s60 = sor.u32 %s58, %s59
    %p61 = scmp.eq.s32.totalorder %s60, 0
    %s63 = sadd.s32 %s62, 1
    %s64 = scalar_select %p61, %s62, %s63
    %p67 = pneg %p61
    %p68 = scmp.eq.s32.totalorder %s10, 1
    %p69 = por %p67, %p68
    %p70 = scmp.ne.s32.totalorder %s62, %s65
    %p71 = scmp.eq.s32.totalorder %s10, 0
    %p72 = por %p70, %p71
    %p73 = scmp.ne.s32.totalorder %s62, %s65
    %p74 = scmp.eq.s32.totalorder %s15, 1
    %p75 = por %p73, %p74
    %p76 = scmp.ne.s32.totalorder %s65, %s66
    %p77 = scmp.eq.s32.totalorder %s15, 0
    %p78 = por %p76, %p77
    %p79 = scmp.ne.s32.totalorder %s65, %s66
    %p80 = scmp.eq.s32.totalorder %s16, 1
    %p81 = por %p79, %p80
    %p83 = scmp.ne.s32.totalorder %s66, %s82
    %p84 = scmp.eq.s32.totalorder %s16, 0
    %p85 = por %p83, %p84
    %s87 = sadd.s32 %s86, 1
    %p90 = scmp.eq.s32.totalorder %s10, 1
    %p91 = scmp.ne.s32.totalorder %s86, %s88
    %p92 = scmp.eq.s32.totalorder %s10, 0
    %p93 = por %p91, %p92
    %p94 = scmp.ne.s32.totalorder %s86, %s88
    %p95 = scmp.eq.s32.totalorder %s15, 1
    %p96 = por %p94, %p95
    %p97 = scmp.ne.s32.totalorder %s88, %s89
    %p98 = scmp.eq.s32.totalorder %s15, 0
    %p99 = por %p97, %p98
    %p100 = scmp.ne.s32.totalorder %s88, %s89
    %p101 = scmp.eq.s32.totalorder %s16, 1
    %p102 = por %p100, %p101
    %p104 = scmp.ne.s32.totalorder %s89, %s103
    %p105 = scmp.eq.s32.totalorder %s16, 0
    %p106 = por %p104, %p105
    %s108 = sadd.s32 %s107, 1
    %p111 = scmp.eq.s32.totalorder %s10, 1
    %p112 = scmp.ne.s32.totalorder %s107, %s109
    %p113 = scmp.eq.s32.totalorder %s10, 0
    %p114 = por %p112, %p113
    %p115 = scmp.ne.s32.totalorder %s107, %s109
    %p116 = scmp.eq.s32.totalorder %s15, 1
    %p117 = por %p115, %p116
    %p118 = scmp.ne.s32.totalorder %s109, %s110
    %p119 = scmp.eq.s32.totalorder %s15, 0
    %p120 = por %p118, %p119
    %p121 = scmp.ne.s32.totalorder %s109, %s110
    %p122 = scmp.eq.s32.totalorder %s16, 1
    %p123 = por %p121, %p122
    %p125 = scmp.ne.s32.totalorder %s110, %s124
    %p126 = scmp.eq.s32.totalorder %s16, 0
    %p127 = por %p125, %p126
    %s128 = ssub.s32 %s17, %s29
    %s129 = ssub.s32 %s18, %s25
    %s130 = sor.u32 %s128, %s129
    %p131 = scmp.eq.s32.totalorder %s130, 0
    %s133 = sadd.s32 %s132, 1
    %s134 = scalar_select %p131, %s132, %s133
    %p137 = pneg %p131
    %p138 = scmp.eq.s32.totalorder %s10, 1
    %p139 = por %p137, %p138
    %p140 = scmp.ne.s32.totalorder %s132, %s135
    %p141 = scmp.eq.s32.totalorder %s10, 0
    %p142 = por %p140, %p141
    %p143 = scmp.ne.s32.totalorder %s132, %s135
    %p144 = scmp.eq.s32.totalorder %s15, 1
    %p145 = por %p143, %p144
    %p146 = scmp.ne.s32.totalorder %s135, %s136
    %p147 = scmp.eq.s32.totalorder %s15, 0
    %p148 = por %p146, %p147
    %p149 = scmp.ne.s32.totalorder %s135, %s136
    %p150 = scmp.eq.s32.totalorder %s16, 1
    %p151 = por %p149, %p150
    %p153 = scmp.ne.s32.totalorder %s136, %s152
    %p154 = scmp.eq.s32.totalorder %s16, 0
    %p155 = por %p153, %p154
    %p156 = scmp.le.s32.totalorder 1, %s10
    %p157 = scmp.lt.s32.totalorder %s10, 3
    %p158 = pnand %p156, %p157
    %p159 = pneg %p158
    // Predicated region
    $region9: #{basic_block.5} parent=5 // pred_check
      _
    $region10: #{basic_block.5} parent=5 // pred_check_branch
      %161 = sbr.rel (%p158) target = $region12
    $region11: #{basic_block.5} parent=5 // pred_region
      %s162 = ssub.s32 %s10, 1
      // Predicated region
      $region13: #{basic_block.5} parent=11 // pred_check
        %p163 = pneg %p99
      $region14: #{basic_block.5} parent=11 // pred_check_branch
        %165 = sbr.rel (%p163) target = $region16
      $region15: #{basic_block.5} parent=11 // pred_region
        _
      $region16: #{basic_block.5} parent=11 // pred_fallthru
        _
      // Predicated region
      $region17: #{basic_block.5} parent=11 // pred_check
        %p166 = pneg %p120
      $region18: #{basic_block.5} parent=11 // pred_check_branch
        %168 = sbr.rel (%p166) target = $region20
      $region19: #{basic_block.5} parent=11 // pred_region
        _
      $region20: #{basic_block.5} parent=11 // pred_fallthru
        _
    $region12: #{basic_block.5} parent=5 // pred_fallthru
      _
    %p169 = scmp.lt.s32.totalorder %s10, 2
    // Predicated region
    $region21: #{basic_block.5} parent=5 // pred_check
      %p170 = pneg %p169
    $region22: #{basic_block.5} parent=5 // pred_check_branch
      %172 = sbr.rel (%p170) target = $region24
    $region23: #{basic_block.5} parent=5 // pred_region
      // Predicated region
      $region25: #{basic_block.5} parent=23 // pred_check
        %p173 = pneg %p44
      $region26: #{basic_block.5} parent=23 // pred_check_branch
        %175 = sbr.rel (%p173) target = $region28
      $region27: #{basic_block.5} parent=23 // pred_region
        %s176 = smul.u32 8, %s18
        %p177 = scmp.lt.s32.totalorder %s17, 1
        %s178 = scalar_select %p177, %s17, 1
        %p179 = scmp.lt.s32.totalorder %s176, 7
        %s180 = scalar_select %p179, %s176, 7
        %s181 = smul.addr %s178, 8
        %s182 = sadd.s32 %s180, %s181
        %s183 = smul.addr %s182, 4
        %s184 = scalar_lea.vmem %s0, %s183
        %s185 = smul.u32 8, %s18
      $region28: #{basic_block.5} parent=23 // pred_fallthru
        _
      // Predicated region
      $region29: #{basic_block.5} parent=23 // pred_check
        %p186 = pneg %p72
      $region30: #{basic_block.5} parent=23 // pred_check_branch
        %188 = sbr.rel (%p186) target = $region32
      $region31: #{basic_block.5} parent=23 // pred_region
        %s189 = smul.u32 8, %s18
        %p190 = scmp.lt.s32.totalorder %s17, 1
        %s191 = scalar_select %p190, %s17, 1
        %p192 = scmp.lt.s32.totalorder %s189, 7
        %s193 = scalar_select %p192, %s189, 7
        %s194 = smul.addr %s191, 8
        %s195 = sadd.s32 %s193, %s194
        %s196 = smul.addr %s195, 8
        %s197 = scalar_lea.vmem %s1, %s196
        %s198 = smul.u32 8, %s18
      $region32: #{basic_block.5} parent=23 // pred_fallthru
        _
    $region24: #{basic_block.5} parent=5 // pred_fallthru
      _
    %p199 = scmp.le.s32.totalorder 1, %s10
    %p200 = scmp.lt.s32.totalorder %s10, 3
    %p201 = pnand %p199, %p200
    %p202 = pneg %p201
    // Predicated region
    $region33: #{basic_block.5} parent=5 // pred_check
      _
    $region34: #{basic_block.5} parent=5 // pred_check_branch
      %204 = sbr.rel (%p201) target = $region36
    $region35: #{basic_block.5} parent=5 // pred_region
      %s205 = ssub.s32 %s10, 1
      %s206 = smul.u32 8, %s20
      %p207 = scmp.lt.s32.totalorder %s19, 1
      %s208 = scalar_select %p207, %s19, 1
      %p209 = scmp.lt.s32.totalorder %s206, 7
      %s210 = scalar_select %p209, %s206, 7
      %s211 = smul.addr %s208, 8
      %s212 = sadd.s32 %s210, %s211
      %s213 = smul.addr %s212, 4
      %s214 = scalar_lea.vmem %s0, %s213
      %p215 = pneg %p50
      %p216 = pneg %p47
      %s217 = smul.u32 8, %s20
      %p218 = scmp.lt.s32.totalorder %s19, 1
      %s219 = scalar_select %p218, %s19, 1
      %p220 = scmp.lt.s32.totalorder %s217, 7
      %s221 = scalar_select %p220, %s217, 7
      %s222 = smul.addr %s219, 8
      %s223 = sadd.s32 %s221, %s222
      %s224 = smul.addr %s223, 8
      %s225 = scalar_lea.vmem %s1, %s224
      %p226 = pneg %p78
      %p227 = pneg %p75
      %p228 = pneg %p99
      %p229 = pneg %p96
      %p230 = pneg %p120
      %p231 = pneg %p117
      %p232 = pneg %p148
      %p233 = pneg %p145
      %s234 = smul.u32 8, %s20
      %p235 = scmp.lt.s32.totalorder %s19, 1
      %s236 = scalar_select %p235, %s19, 1
      %p237 = scmp.lt.s32.totalorder %s234, 7
      %s238 = scalar_select %p237, %s234, 7
      %s239 = smul.addr %s236, 8
      %s240 = sadd.s32 %s238, %s239
      %s241 = smul.addr %s240, 8
      %s242 = scalar_lea.vmem %s4, %s241
      %s243 = smul.u32 8, %s20
      %p244 = scmp.lt.s32.totalorder %s19, 1
      %s245 = scalar_select %p244, %s19, 1
      %p246 = scmp.lt.s32.totalorder %s243, 7
      %s247 = scalar_select %p246, %s243, 7
      %s248 = smul.addr %s245, 8
      %s249 = sadd.s32 %s247, %s248
      %s250 = smul.addr %s249, 4
      %s251 = scalar_lea.vmem %s0, %s250
      %s252 = smul.u32 8, %s20
      %s253 = smul.u32 8, %s20
      %p254 = scmp.lt.s32.totalorder %s19, 1
      %s255 = scalar_select %p254, %s19, 1
      %p256 = scmp.lt.s32.totalorder %s253, 7
      %s257 = scalar_select %p256, %s253, 7
      %s258 = smul.addr %s255, 8
      %s259 = sadd.s32 %s257, %s258
      %s260 = smul.addr %s259, 8
      %s261 = scalar_lea.vmem %s1, %s260
      %s262 = smul.u32 8, %s20
      %s263 = smul.u32 8, %s20
      %p264 = scmp.lt.s32.totalorder %s19, 1
      %s265 = scalar_select %p264, %s19, 1
      %p266 = scmp.lt.s32.totalorder %s263, 7
      %s267 = scalar_select %p266, %s263, 7
      %s268 = smul.addr %s265, 8
      %s269 = sadd.s32 %s267, %s268
      %s270 = smul.addr %s269, 8
      %s271 = scalar_lea.vmem %s4, %s270
      %s272 = smul.u32 8, %s20
      %v273 = vld [vmem:[%s251] sm:$0xf]
      %v274 = vld [vmem:[%s251 + $0x4] sm:$0xf]
      %v275 = vld [vmem:[%s251 + $0x8] sm:$0xf]
      %v276 = vld [vmem:[%s251 + $0xc] sm:$0xf]
      %v277 = vld [vmem:[%s251 + $0x10] sm:$0xf]
      %v278 = vld [vmem:[%s251 + $0x14] sm:$0xf]
      %v279 = vld [vmem:[%s251 + $0x18] sm:$0xf]
      %v280 = vld [vmem:[%s251 + $0x1c] sm:$0xf]
      %v281 = vunpack.c.l.bf16 %v273
      %v282 = vunpack.c.l.bf16 %v274
      %v283 = vunpack.c.l.bf16 %v275
      %v284 = vunpack.c.l.bf16 %v276
      %v285 = vunpack.c.l.bf16 %v277
      %v286 = vunpack.c.l.bf16 %v278
      %v287 = vunpack.c.l.bf16 %v279
      %v288 = vunpack.c.l.bf16 %v280
      %v289 = vld [vmem:[%s2] sm:$0x1]
      %v291 = vperm.slane %v289, 0
      %v293 = vmul.f32 %v281, %v291
      %v294 = vmul.f32 %v282, %v291
      %v295 = vmul.f32 %v283, %v291
      %v296 = vmul.f32 %v284, %v291
      %v297 = vmul.f32 %v285, %v291
      %v298 = vmul.f32 %v286, %v291
      %v299 = vmul.f32 %v287, %v291
      %v300 = vmul.f32 %v288, %v291
      %v301 = vld [vmem:[%s3] sm:$0x1]
      %v303 = vperm.slane %v301, 0
      %v305 = vadd.f32 %v293, %v303
      %v306 = vadd.f32 %v294, %v303
      %v307 = vadd.f32 %v295, %v303
      %v308 = vadd.f32 %v296, %v303
      %v309 = vadd.f32 %v297, %v303
      %v310 = vadd.f32 %v298, %v303
      %v311 = vadd.f32 %v299, %v303
      %v312 = vadd.f32 %v300, %v303
      %v313 = vld [vmem:[%s261] sm:$0xff]
      %v314 = vld [vmem:[%s261 + $0x8] sm:$0xff]
      %v315 = vld [vmem:[%s261 + $0x10] sm:$0xff]
      %v316 = vld [vmem:[%s261 + $0x18] sm:$0xff]
      %v317 = vld [vmem:[%s261 + $0x20] sm:$0xff]
      %v318 = vld [vmem:[%s261 + $0x28] sm:$0xff]
      %v319 = vld [vmem:[%s261 + $0x30] sm:$0xff]
      %v320 = vld [vmem:[%s261 + $0x38] sm:$0xff]
      %v321 = vadd.f32 %v305, %v313
      %v322 = vadd.f32 %v306, %v314
      %v323 = vadd.f32 %v307, %v315
      %v324 = vadd.f32 %v308, %v316
      %v325 = vadd.f32 %v309, %v317
      %v326 = vadd.f32 %v310, %v318
      %v327 = vadd.f32 %v311, %v319
      %v328 = vadd.f32 %v312, %v320
      %v329 = vmax.f32 %v321, 0.0
      %v330 = vmax.f32 %v322, 0.0
      %v331 = vmax.f32 %v323, 0.0
      %v332 = vmax.f32 %v324, 0.0
      %v333 = vmax.f32 %v325, 0.0
      %v334 = vmax.f32 %v326, 0.0
      %v335 = vmax.f32 %v327, 0.0
      %v336 = vmax.f32 %v328, 0.0
      %vm337 = vcmask 523264
      %338 = vst.msk [vmem:[%s271] sm:$0xff] %vm337, %v329
      %339 = vst.msk [vmem:[%s271 + $0x8] sm:$0xff] %vm337, %v330
      %340 = vst.msk [vmem:[%s271 + $0x10] sm:$0xff] %vm337, %v331
      %341 = vst.msk [vmem:[%s271 + $0x18] sm:$0xff] %vm337, %v332
      %342 = vst.msk [vmem:[%s271 + $0x20] sm:$0xff] %vm337, %v333
      %343 = vst.msk [vmem:[%s271 + $0x28] sm:$0xff] %vm337, %v334
      %344 = vst.msk [vmem:[%s271 + $0x30] sm:$0xff] %vm337, %v335
      %345 = vst.msk [vmem:[%s271 + $0x38] sm:$0xff] %vm337, %v336
      %s346 = smul.u32 8, %s20
      %p347 = scmp.lt.s32.totalorder %s19, 1
      %s348 = scalar_select %p347, %s19, 1
      %p349 = scmp.lt.s32.totalorder %s346, 7
      %s350 = scalar_select %p349, %s346, 7
      %s351 = smul.addr %s348, 8
      %s352 = sadd.s32 %s350, %s351
      %s353 = smul.addr %s352, 8
      %s354 = scalar_lea.vmem %s4, %s353
      // Predicated region
      $region37: #{basic_block.5} parent=35 // pred_check
        %p355 = pneg %p145
      $region38: #{basic_block.5} parent=35 // pred_check_branch
        %357 = sbr.rel (%p355) target = $region40
      $region39: #{basic_block.5} parent=35 // pred_region
        %s358 = smul.u32 8, %s20
      $region40: #{basic_block.5} parent=35 // pred_fallthru
        _
    $region36: #{basic_block.5} parent=5 // pred_fallthru
      _
    %p359 = scmp.le.s32.totalorder 2, %s10
    // Predicated region
    $region41: #{basic_block.5} parent=5 // pred_check
      %p360 = pneg %p359
    $region42: #{basic_block.5} parent=5 // pred_check_branch
      %362 = sbr.rel (%p360) target = $region44
    $region43: #{basic_block.5} parent=5 // pred_region
      %s363 = ssub.s32 %s10, 2
      // Predicated region
      $region45: #{basic_block.5} parent=43 // pred_check
        %p364 = pneg %p151
      $region46: #{basic_block.5} parent=43 // pred_check_branch
        %366 = sbr.rel (%p364) target = $region48
      $region47: #{basic_block.5} parent=43 // pred_region
        %s367 = smul.u32 8, %s22
        %p368 = scmp.lt.s32.totalorder %s21, 1
        %s369 = scalar_select %p368, %s21, 1
        %p370 = scmp.lt.s32.totalorder %s367, 7
        %s371 = scalar_select %p370, %s367, 7
        %s372 = smul.addr %s369, 8
        %s373 = sadd.s32 %s371, %s372
        %s374 = smul.addr %s373, 8
        %s375 = scalar_lea.vmem %s4, %s374
      $region48: #{basic_block.5} parent=43 // pred_fallthru
        _
    $region44: #{basic_block.5} parent=5 // pred_fallthru
      _
  $region6: #{basic_block.5} parent=0 // loop_footer
    %s14 = sadd.s32 1, %s10
  $region7: #{basic_block.5} parent=0 // loop_footer_branch
    %9 = sbr.rel target = $region3
  $region8: #{basic_block.5} parent=0 // loop_exit
    _

// kernel: basic_block.3
$region0: #{basic_block.3}
  #allocation0 [shape = 'u32[]', space=smem, size = 0x4, offset = 0x4, fixed_abs, tag = 'smem constant byte address 0x4 - core index']
  #allocation1 [shape = 'u32[72,128]{1,0:T(1,128)}', space=vmem, size = 0x9000, scoped, tag = 'internal scratch']
  #allocation2 [shape = 'bf16[8,8,10,8]{3,2,1,0:T(8,128)(2,1)}', space=vmem, size = 0x40000, scoped, tag = 'scratch operand']
  #allocation3 [shape = 'bf16[640,72]{1,0:T(8,128)(2,1)}', space=vmem, size = 0x28000, scoped, tag = 'scratch operand']
  %s0 = inlined_call_operand.hbm [shape: f32[2,8,8,8,8], index: 0, kind: input, shape index: {}]
  %s1 = inlined_call_operand.vmem [shape: f32[1,8], index: 1, kind: input, shape index: {}]
  %s2 = inlined_call_operand.vmem [shape: f32[1,8], index: 2, kind: input, shape index: {}]
  %s3 = inlined_call_operand.vmem [shape: bf16[3,72,8], index: 3, kind: input, shape index: {}]
  %s4 = inlined_call_operand.vmem [shape: bf16[2,8,8,8,8], index: 4, kind: output, shape index: {0}]
  %s5 = inlined_call_operand.vmem [shape: f32[2,2,8], index: 5, kind: output, shape index: {1}]
  %6 = xla_tuple %s4, %s5
  %s7 = sld [smem:[#allocation0]]
  $region61: #{basic_block.3} parent=0
    _
  %s9 = ssub.s32 1, %s7
  %s10 = scalar_select 0, %s9, %s7
  $region1: #{basic_block.3} parent=0
    #allocation4 [shape = 'u8[524288]{0}', space=vmem, size = 0x80000, scoped, tag = 'input window, operand 0']
    #allocation5 [shape = 's32[2]{0}', space=sflag, size = 0x8, scoped, tag = 'scoped memory for basic_block.3']
    %11 = vsyncpa [#allocation5], 0
    %s12 = scalar_lea.sflag [#allocation5], 1
    %13 = vsyncpa %s12, 0
    loop: start=0, step=1, limit=4
    $region2: #{basic_block.3} parent=1 // loop_pre_header
      _
    $region3: #{basic_block.3} parent=1 // loop_header
      %s15 = sphi 0, %s19
      %p16 = scmp.ge.s32.totalorder %s15, 4
      %s25 = sphi 0, %s27
      %s28 = sphi 0, %s25
      %s29 = sphi 0, %s28
      %s45 = sphi 0, %s29
      %s49 = sphi 0, %s49
      %s51 = sphi 0, %s49
      %s52 = sphi 0, %s51
      %s66 = sphi 0, %s52
      %s70 = sphi 0, %s70
      %s72 = sphi 0, %s70
      %s73 = sphi 0, %s72
      %s87 = sphi 0, %s73
      %s91 = sphi 0, %s91
      %s93 = sphi 0, %s91
      %s94 = sphi 0, %s93
      %s108 = sphi 0, %s94
      %s114 = sphi 0, %s116
      %s117 = sphi 0, %s114
      %s118 = sphi 0, %s117
      %s134 = sphi 0, %s118
      %s140 = sphi 0, %s142
      %s143 = sphi 0, %s140
      %s144 = sphi 0, %s143
      %s160 = sphi 0, %s144
    $region4: #{basic_block.3} parent=1 // loop_header_branch
      %18 = sbr.rel (%p16) target = $region8
    $region5: #{basic_block.3} parent=1 // loop_body
      %s20 = ssub.s32 %s15, 1
      %s21 = ssub.s32 %s15, 2
      %s22 = sadd.s32 %s15, 1
      %s23 = ssub.s32 %s15, %s22
      %p24 = scmp.eq.s32.totalorder %s23, 0
      %s26 = sadd.s32 %s25, 1
      %s27 = scalar_select %p24, %s25, %s26
      %p30 = pneg %p24
      %p31 = scmp.eq.s32.totalorder %s15, 1
      %p32 = por %p30, %p31
      %p33 = scmp.ne.s32.totalorder %s25, %s28
      %p34 = scmp.eq.s32.totalorder %s15, 0
      %p35 = por %p33, %p34
      %p36 = scmp.ne.s32.totalorder %s25, %s28
      %p37 = scmp.eq.s32.totalorder %s20, 1
      %p38 = por %p36, %p37
      %p39 = scmp.ne.s32.totalorder %s28, %s29
      %p40 = scmp.eq.s32.totalorder %s20, 0
      %p41 = por %p39, %p40
      %p42 = scmp.ne.s32.totalorder %s28, %s29
      %p43 = scmp.eq.s32.totalorder %s21, 1
      %p44 = por %p42, %p43
      %p46 = scmp.ne.s32.totalorder %s29, %s45
      %p47 = scmp.eq.s32.totalorder %s21, 0
      %p48 = por %p46, %p47
      %s50 = sadd.s32 %s49, 1
      %p53 = scmp.eq.s32.totalorder %s15, 1
      %p54 = scmp.ne.s32.totalorder %s49, %s51
      %p55 = scmp.eq.s32.totalorder %s15, 0
      %p56 = por %p54, %p55
      %p57 = scmp.ne.s32.totalorder %s49, %s51
      %p58 = scmp.eq.s32.totalorder %s20, 1
      %p59 = por %p57, %p58
      %p60 = scmp.ne.s32.totalorder %s51, %s52
      %p61 = scmp.eq.s32.totalorder %s20, 0
      %p62 = por %p60, %p61
      %p63 = scmp.ne.s32.totalorder %s51, %s52
      %p64 = scmp.eq.s32.totalorder %s21, 1
      %p65 = por %p63, %p64
      %p67 = scmp.ne.s32.totalorder %s52, %s66
      %p68 = scmp.eq.s32.totalorder %s21, 0
      %p69 = por %p67, %p68
      %s71 = sadd.s32 %s70, 1
      %p74 = scmp.eq.s32.totalorder %s15, 1
      %p75 = scmp.ne.s32.totalorder %s70, %s72
      %p76 = scmp.eq.s32.totalorder %s15, 0
      %p77 = por %p75, %p76
      %p78 = scmp.ne.s32.totalorder %s70, %s72
      %p79 = scmp.eq.s32.totalorder %s20, 1
      %p80 = por %p78, %p79
      %p81 = scmp.ne.s32.totalorder %s72, %s73
      %p82 = scmp.eq.s32.totalorder %s20, 0
      %p83 = por %p81, %p82
      %p84 = scmp.ne.s32.totalorder %s72, %s73
      %p85 = scmp.eq.s32.totalorder %s21, 1
      %p86 = por %p84, %p85
      %p88 = scmp.ne.s32.totalorder %s73, %s87
      %p89 = scmp.eq.s32.totalorder %s21, 0
      %p90 = por %p88, %p89
      %s92 = sadd.s32 %s91, 1
      %p95 = scmp.eq.s32.totalorder %s15, 1
      %p96 = scmp.ne.s32.totalorder %s91, %s93
      %p97 = scmp.eq.s32.totalorder %s15, 0
      %p98 = por %p96, %p97
      %p99 = scmp.ne.s32.totalorder %s91, %s93
      %p100 = scmp.eq.s32.totalorder %s20, 1
      %p101 = por %p99, %p100
      %p102 = scmp.ne.s32.totalorder %s93, %s94
      %p103 = scmp.eq.s32.totalorder %s20, 0
      %p104 = por %p102, %p103
      %p105 = scmp.ne.s32.totalorder %s93, %s94
      %p106 = scmp.eq.s32.totalorder %s21, 1
      %p107 = por %p105, %p106
      %p109 = scmp.ne.s32.totalorder %s94, %s108
      %p110 = scmp.eq.s32.totalorder %s21, 0
      %p111 = por %p109, %p110
      %s112 = ssub.s32 %s15, %s22
      %p113 = scmp.eq.s32.totalorder %s112, 0
      %s115 = sadd.s32 %s114, 1
      %s116 = scalar_select %p113, %s114, %s115
      %p119 = pneg %p113
      %p120 = scmp.eq.s32.totalorder %s15, 1
      %p121 = por %p119, %p120
      %p122 = scmp.ne.s32.totalorder %s114, %s117
      %p123 = scmp.eq.s32.totalorder %s15, 0
      %p124 = por %p122, %p123
      %p125 = scmp.ne.s32.totalorder %s114, %s117
      %p126 = scmp.eq.s32.totalorder %s20, 1
      %p127 = por %p125, %p126
      %p128 = scmp.ne.s32.totalorder %s117, %s118
      %p129 = scmp.eq.s32.totalorder %s20, 0
      %p130 = por %p128, %p129
      %p131 = scmp.ne.s32.totalorder %s117, %s118
      %p132 = scmp.eq.s32.totalorder %s21, 1
      %p133 = por %p131, %p132
      %p135 = scmp.ne.s32.totalorder %s118, %s134
      %p136 = scmp.eq.s32.totalorder %s21, 0
      %p137 = por %p135, %p136
      %s138 = ssub.s32 %s15, %s22
      %p139 = scmp.eq.s32.totalorder %s138, 0
      %s141 = sadd.s32 %s140, 1
      %s142 = scalar_select %p139, %s140, %s141
      %p145 = pneg %p139
      %p146 = scmp.eq.s32.totalorder %s15, 1
      %p147 = por %p145, %p146
      %p148 = scmp.ne.s32.totalorder %s140, %s143
      %p149 = scmp.eq.s32.totalorder %s15, 0
      %p150 = por %p148, %p149
      %p151 = scmp.ne.s32.totalorder %s140, %s143
      %p152 = scmp.eq.s32.totalorder %s20, 1
      %p153 = por %p151, %p152
      %p154 = scmp.ne.s32.totalorder %s143, %s144
      %p155 = scmp.eq.s32.totalorder %s20, 0
      %p156 = por %p154, %p155
      %p157 = scmp.ne.s32.totalorder %s143, %s144
      %p158 = scmp.eq.s32.totalorder %s21, 1
      %p159 = por %p157, %p158
      %p161 = scmp.ne.s32.totalorder %s144, %s160
      %p162 = scmp.eq.s32.totalorder %s21, 0
      %p163 = por %p161, %p162
      %p164 = scmp.le.s32.totalorder 1, %s15
      %p165 = scmp.lt.s32.totalorder %s15, 3
      %p166 = pnand %p164, %p165
      %p167 = pneg %p166
      // Predicated region
      $region9: #{basic_block.3} parent=5 // pred_check
        _
      $region10: #{basic_block.3} parent=5 // pred_check_branch
        %169 = sbr.rel (%p166) target = $region12
      $region11: #{basic_block.3} parent=5 // pred_region
        %s170 = ssub.s32 %s15, 1
        // Predicated region
        $region13: #{basic_block.3} parent=11 // pred_check
          %p171 = pneg %p62
        $region14: #{basic_block.3} parent=11 // pred_check_branch
          %173 = sbr.rel (%p171) target = $region16
        $region15: #{basic_block.3} parent=11 // pred_region
          _
        $region16: #{basic_block.3} parent=11 // pred_fallthru
          _
        // Predicated region
        $region17: #{basic_block.3} parent=11 // pred_check
          %p174 = pneg %p83
        $region18: #{basic_block.3} parent=11 // pred_check_branch
          %176 = sbr.rel (%p174) target = $region20
        $region19: #{basic_block.3} parent=11 // pred_region
          _
        $region20: #{basic_block.3} parent=11 // pred_fallthru
          _
        // Predicated region
        $region21: #{basic_block.3} parent=11 // pred_check
          %p177 = pneg %p104
        $region22: #{basic_block.3} parent=11 // pred_check_branch
          %179 = sbr.rel (%p177) target = $region24
        $region23: #{basic_block.3} parent=11 // pred_region
          _
        $region24: #{basic_block.3} parent=11 // pred_fallthru
          _
      $region12: #{basic_block.3} parent=5 // pred_fallthru
        _
      %p180 = scmp.lt.s32.totalorder %s15, 2
      // Predicated region
      $region25: #{basic_block.3} parent=5 // pred_check
        %p181 = pneg %p180
      $region26: #{basic_block.3} parent=5 // pred_check_branch
        %183 = sbr.rel (%p181) target = $region28
      $region27: #{basic_block.3} parent=5 // pred_region
        // Predicated region
        $region29: #{basic_block.3} parent=27 // pred_check
          %p184 = pneg %p35
        $region30: #{basic_block.3} parent=27 // pred_check_branch
          %186 = sbr.rel (%p184) target = $region32
        $region31: #{basic_block.3} parent=27 // pred_region
          %s187 = sand.u32 %s25, 1
          %s188 = scalar_lea.sflag [#allocation5], %s187
          %s189 = sand.u32 %s25, 1
          %s190 = smul.addr %s189, 512
          %s191 = scalar_lea.vmem [#allocation4], %s190
          %193 = vsyncadd %s188, 0
          %s194 = smul.addr %s15, 64
          %s195 = smul.addr %s194, 8
          %s196 = scalar_lea.hbm %s0, %s195
          %s197 = sshll.u32 %s196, 4
          %s198 = int_to_ptr.hbm [resolvable:$true] %s197
          %s199 = sshll.u32 %s191, 4
          %s200 = int_to_ptr.vmem [resolvable:$true] %s199
          %205 = dma.hbm_to_vmem [thread:$0]  %s198, 8192, %s200, %s188, 128, 128, 8
        $region32: #{basic_block.3} parent=27 // pred_fallthru
          _
      $region28: #{basic_block.3} parent=5 // pred_fallthru
        _
      %p206 = scmp.le.s32.totalorder 1, %s15
      %p207 = scmp.lt.s32.totalorder %s15, 3
      %p208 = pnand %p206, %p207
      %p209 = pneg %p208
      // Predicated region
      $region33: #{basic_block.3} parent=5 // pred_check
        _
      $region34: #{basic_block.3} parent=5 // pred_check_branch
        %211 = sbr.rel (%p208) target = $region36
      $region35: #{basic_block.3} parent=5 // pred_region
        %s212 = ssub.s32 %s15, 1
        %s213 = sand.u32 %s28, 1
        %s214 = scalar_lea.sflag [#allocation5], %s213
        %s215 = sand.u32 %s28, 1
        %s216 = smul.addr %s215, 512
        %s217 = scalar_lea.vmem [#allocation4], %s216
        // Predicated region
        $region37: #{basic_block.3} parent=35 // pred_check
          %p218 = pneg %p41
        $region38: #{basic_block.3} parent=35 // pred_check_branch
          %220 = sbr.rel (%p218) target = $region40
        $region39: #{basic_block.3} parent=35 // pred_region
          %222 = dma.done %s214, 8192
        $region40: #{basic_block.3} parent=35 // pred_fallthru
          _
        %s223 = sand.u32 %s28, 1
        %s224 = scalar_lea.sflag [#allocation5], %s223
        %s225 = sand.u32 %s28, 1
        %s226 = smul.addr %s225, 512
        %s227 = scalar_lea.vmem [#allocation4], %s226
        %p228 = pneg %p41
        %p229 = pneg %p38
        %p230 = pneg %p62
        %p231 = pneg %p59
        %p232 = pneg %p83
        %p233 = pneg %p80
        %p234 = pneg %p104
        %p235 = pneg %p101
        %p236 = pneg %p130
        %p237 = pneg %p127
        %p238 = scmp.lt.s32.totalorder %s20, 1
        %s239 = scalar_select %p238, %s20, 1
        %s240 = smul.addr %s239, 64
        %s241 = smul.addr %s240, 4
        %s242 = scalar_lea.vmem %s4, %s241
        %p243 = pneg %p156
        %p244 = pneg %p153
        %p245 = scmp.lt.s32.totalorder %s20, 1
        %s246 = scalar_select %p245, %s20, 1
        %s247 = smul.addr %s246, 2
        %s248 = scalar_lea.vmem %s5, %s247
        %p249 = scmp.lt.s32.totalorder %s20, 1
        %s250 = scalar_select %p249, %s20, 1
        %s251 = smul.addr %s250, 64
        %s252 = smul.addr %s251, 4
        %s253 = scalar_lea.vmem %s4, %s252
        %p254 = scmp.lt.s32.totalorder %s20, 1
        %s255 = scalar_select %p254, %s20, 1
        %s256 = smul.addr %s255, 2
        %s257 = scalar_lea.vmem %s5, %s256
        %v259 = vld [vmem:[%s217] sm:$0xff]
        %v260 = vld [vmem:[%s217 + $0x8] sm:$0xff]
        %v261 = vld [vmem:[%s217 + $0x10] sm:$0xff]
        %v262 = vld [vmem:[%s217 + $0x18] sm:$0xff]
        %v263 = vld [vmem:[%s217 + $0x20] sm:$0xff]
        %v264 = vld [vmem:[%s217 + $0x28] sm:$0xff]
        %v265 = vld [vmem:[%s217 + $0x30] sm:$0xff]
        %v266 = vld [vmem:[%s217 + $0x38] sm:$0xff]
        %v267 = vld [vmem:[%s217 + $0x40] sm:$0xff]
        %v268 = vld [vmem:[%s217 + $0x48] sm:$0xff]
        %v269 = vld [vmem:[%s217 + $0x50] sm:$0xff]
        %v270 = vld [vmem:[%s217 + $0x58] sm:$0xff]
        %v271 = vld [vmem:[%s217 + $0x60] sm:$0xff]
        %v272 = vld [vmem:[%s217 + $0x68] sm:$0xff]
        %v273 = vld [vmem:[%s217 + $0x70] sm:$0xff]
        %v274 = vld [vmem:[%s217 + $0x78] sm:$0xff]
        %v275 = vld [vmem:[%s217 + $0x80] sm:$0xff]
        %v276 = vld [vmem:[%s217 + $0x88] sm:$0xff]
        %v277 = vld [vmem:[%s217 + $0x90] sm:$0xff]
        %v278 = vld [vmem:[%s217 + $0x98] sm:$0xff]
        %v279 = vld [vmem:[%s217 + $0xa0] sm:$0xff]
        %v280 = vld [vmem:[%s217 + $0xa8] sm:$0xff]
        %v281 = vld [vmem:[%s217 + $0xb0] sm:$0xff]
        %v282 = vld [vmem:[%s217 + $0xb8] sm:$0xff]
        %v283 = vld [vmem:[%s217 + $0xc0] sm:$0xff]
        %v284 = vld [vmem:[%s217 + $0xc8] sm:$0xff]
        %v285 = vld [vmem:[%s217 + $0xd0] sm:$0xff]
        %v286 = vld [vmem:[%s217 + $0xd8] sm:$0xff]
        %v287 = vld [vmem:[%s217 + $0xe0] sm:$0xff]
        %v288 = vld [vmem:[%s217 + $0xe8] sm:$0xff]
        %v289 = vld [vmem:[%s217 + $0xf0] sm:$0xff]
        %v290 = vld [vmem:[%s217 + $0xf8] sm:$0xff]
        %v291 = vld [vmem:[%s217 + $0x100] sm:$0xff]
        %v292 = vld [vmem:[%s217 + $0x108] sm:$0xff]
        %v293 = vld [vmem:[%s217 + $0x110] sm:$0xff]
        %v294 = vld [vmem:[%s217 + $0x118] sm:$0xff]
        %v295 = vld [vmem:[%s217 + $0x120] sm:$0xff]
        %v296 = vld [vmem:[%s217 + $0x128] sm:$0xff]
        %v297 = vld [vmem:[%s217 + $0x130] sm:$0xff]
        %v298 = vld [vmem:[%s217 + $0x138] sm:$0xff]
        %v299 = vld [vmem:[%s217 + $0x140] sm:$0xff]
        %v300 = vld [vmem:[%s217 + $0x148] sm:$0xff]
        %v301 = vld [vmem:[%s217 + $0x150] sm:$0xff]
        %v302 = vld [vmem:[%s217 + $0x158] sm:$0xff]
        %v303 = vld [vmem:[%s217 + $0x160] sm:$0xff]
        %v304 = vld [vmem:[%s217 + $0x168] sm:$0xff]
        %v305 = vld [vmem:[%s217 + $0x170] sm:$0xff]
        %v306 = vld [vmem:[%s217 + $0x178] sm:$0xff]
        %v307 = vld [vmem:[%s217 + $0x180] sm:$0xff]
        %v308 = vld [vmem:[%s217 + $0x188] sm:$0xff]
        %v309 = vld [vmem:[%s217 + $0x190] sm:$0xff]
        %v310 = vld [vmem:[%s217 + $0x198] sm:$0xff]
        %v311 = vld [vmem:[%s217 + $0x1a0] sm:$0xff]
        %v312 = vld [vmem:[%s217 + $0x1a8] sm:$0xff]
        %v313 = vld [vmem:[%s217 + $0x1b0] sm:$0xff]
        %v314 = vld [vmem:[%s217 + $0x1b8] sm:$0xff]
        %v315 = vld [vmem:[%s217 + $0x1c0] sm:$0xff]
        %v316 = vld [vmem:[%s217 + $0x1c8] sm:$0xff]
        %v317 = vld [vmem:[%s217 + $0x1d0] sm:$0xff]
        %v318 = vld [vmem:[%s217 + $0x1d8] sm:$0xff]
        %v319 = vld [vmem:[%s217 + $0x1e0] sm:$0xff]
        %v320 = vld [vmem:[%s217 + $0x1e8] sm:$0xff]
        %v321 = vld [vmem:[%s217 + $0x1f0] sm:$0xff]
        %v322 = vld [vmem:[%s217 + $0x1f8] sm:$0xff]
        %v323 = vpack.c.bf16 %v259, %v259
        %v324 = vpack.c.bf16 %v260, %v260
        %v325 = vpack.c.bf16 %v261, %v261
        %v326 = vpack.c.bf16 %v262, %v262
        %v327 = vpack.c.bf16 %v263, %v263
        %v328 = vpack.c.bf16 %v264, %v264
        %v329 = vpack.c.bf16 %v265, %v265
        %v330 = vpack.c.bf16 %v266, %v266
        %v331 = vpack.c.bf16 %v267, %v267
        %v332 = vpack.c.bf16 %v268, %v268
        %v333 = vpack.c.bf16 %v269, %v269
        %v334 = vpack.c.bf16 %v270, %v270
        %v335 = vpack.c.bf16 %v271, %v271
        %v336 = vpack.c.bf16 %v272, %v272
        %v337 = vpack.c.bf16 %v273, %v273
        %v338 = vpack.c.bf16 %v274, %v274
        %v339 = vpack.c.bf16 %v275, %v275
        %v340 = vpack.c.bf16 %v276, %v276
        %v341 = vpack.c.bf16 %v277, %v277
        %v342 = vpack.c.bf16 %v278, %v278
        %v343 = vpack.c.bf16 %v279, %v279
        %v344 = vpack.c.bf16 %v280, %v280
        %v345 = vpack.c.bf16 %v281, %v281
        %v346 = vpack.c.bf16 %v282, %v282
        %v347 = vpack.c.bf16 %v283, %v283
        %v348 = vpack.c.bf16 %v284, %v284
        %v349 = vpack.c.bf16 %v285, %v285
        %v350 = vpack.c.bf16 %v286, %v286
        %v351 = vpack.c.bf16 %v287, %v287
        %v352 = vpack.c.bf16 %v288, %v288
        %v353 = vpack.c.bf16 %v289, %v289
        %v354 = vpack.c.bf16 %v290, %v290
        %v355 = vpack.c.bf16 %v291, %v291
        %v356 = vpack.c.bf16 %v292, %v292
        %v357 = vpack.c.bf16 %v293, %v293
        %v358 = vpack.c.bf16 %v294, %v294
        %v359 = vpack.c.bf16 %v295, %v295
        %v360 = vpack.c.bf16 %v296, %v296
        %v361 = vpack.c.bf16 %v297, %v297
        %v362 = vpack.c.bf16 %v298, %v298
        %v363 = vpack.c.bf16 %v299, %v299
        %v364 = vpack.c.bf16 %v300, %v300
        %v365 = vpack.c.bf16 %v301, %v301
        %v366 = vpack.c.bf16 %v302, %v302
        %v367 = vpack.c.bf16 %v303, %v303
        %v368 = vpack.c.bf16 %v304, %v304
        %v369 = vpack.c.bf16 %v305, %v305
        %v370 = vpack.c.bf16 %v306, %v306
        %v371 = vpack.c.bf16 %v307, %v307
        %v372 = vpack.c.bf16 %v308, %v308
        %v373 = vpack.c.bf16 %v309, %v309
        %v374 = vpack.c.bf16 %v310, %v310
        %v375 = vpack.c.bf16 %v311, %v311
        %v376 = vpack.c.bf16 %v312, %v312
        %v377 = vpack.c.bf16 %v313, %v313
        %v378 = vpack.c.bf16 %v314, %v314
        %v379 = vpack.c.bf16 %v315, %v315
        %v380 = vpack.c.bf16 %v316, %v316
        %v381 = vpack.c.bf16 %v317, %v317
        %v382 = vpack.c.bf16 %v318, %v318
        %v383 = vpack.c.bf16 %v319, %v319
        %v384 = vpack.c.bf16 %v320, %v320
        %v385 = vpack.c.bf16 %v321, %v321
        %v386 = vpack.c.bf16 %v322, %v322
        %vm387 = vcmask 57344
        %vm388 = vsmask.f32 256
        %vm389 = vmand %vm387, %vm388
        %v390 = vld [vmem:[#allocation2] sm:$0x1]
        %v391 = vsel %vm389, 0, %v390
        %392 = vst [vmem:[#allocation2] sm:$0x1] %v391
        %v393 = vld [vmem:[#allocation2 + $0x8] sm:$0x1]
        %v394 = vsel %vm389, 0, %v393
        %395 = vst [vmem:[#allocation2 + $0x8] sm:$0x1] %v394
        %v396 = vld [vmem:[#allocation2 + $0x10] sm:$0x1]
        %v397 = vsel %vm389, 0, %v396
        %398 = vst [vmem:[#allocation2 + $0x10] sm:$0x1] %v397
        %v399 = vld [vmem:[#allocation2 + $0x18] sm:$0x1]
        %v400 = vsel %vm389, 0, %v399
        %401 = vst [vmem:[#allocation2 + $0x18] sm:$0x1] %v400
        %v402 = vld [vmem:[#allocation2 + $0x20] sm:$0x1]
        %v403 = vsel %vm389, 0, %v402
        %404 = vst [vmem:[#allocation2 + $0x20] sm:$0x1] %v403
        %v405 = vld [vmem:[#allocation2 + $0x28] sm:$0x1]
        %v406 = vsel %vm389, 0, %v405
        %407 = vst [vmem:[#allocation2 + $0x28] sm:$0x1] %v406
        %v408 = vld [vmem:[#allocation2 + $0x30] sm:$0x1]
        %v409 = vsel %vm389, 0, %v408
        %410 = vst [vmem:[#allocation2 + $0x30] sm:$0x1] %v409
        %v411 = vld [vmem:[#allocation2 + $0x38] sm:$0x1]
        %v412 = vsel %vm389, 0, %v411
        %413 = vst [vmem:[#allocation2 + $0x38] sm:$0x1] %v412
        %v414 = vld [vmem:[#allocation2 + $0x40] sm:$0x1]
        %v415 = vsel %vm389, 0, %v414
        %416 = vst [vmem:[#allocation2 + $0x40] sm:$0x1] %v415
        %v417 = vld [vmem:[#allocation2 + $0x48] sm:$0x1]
        %v418 = vsel %vm389, 0, %v417
        %419 = vst [vmem:[#allocation2 + $0x48] sm:$0x1] %v418
        %v420 = vld [vmem:[#allocation2 + $0x50] sm:$0x1]
        %v421 = vsel %vm389, 0, %v420
        %422 = vst [vmem:[#allocation2 + $0x50] sm:$0x1] %v421
        %v423 = vld [vmem:[#allocation2 + $0x58] sm:$0x1]
        %v424 = vsel %vm389, 0, %v423
        %425 = vst [vmem:[#allocation2 + $0x58] sm:$0x1] %v424
        %v426 = vld [vmem:[#allocation2 + $0x60] sm:$0x1]
        %v427 = vsel %vm389, 0, %v426
        %428 = vst [vmem:[#allocation2 + $0x60] sm:$0x1] %v427
        %v429 = vld [vmem:[#allocation2 + $0x68] sm:$0x1]
        %v430 = vsel %vm389, 0, %v429
        %431 = vst [vmem:[#allocation2 + $0x68] sm:$0x1] %v430
        %v432 = vld [vmem:[#allocation2 + $0x70] sm:$0x1]
        %v433 = vsel %vm389, 0, %v432
        %434 = vst [vmem:[#allocation2 + $0x70] sm:$0x1] %v433
        %v435 = vld [vmem:[#allocation2 + $0x78] sm:$0x1]
        %v436 = vsel %vm389, 0, %v435
        %437 = vst [vmem:[#allocation2 + $0x78] sm:$0x1] %v436
        %v438 = vld [vmem:[#allocation2 + $0x80] sm:$0x1]
        %v439 = vsel %vm389, 0, %v438
        %440 = vst [vmem:[#allocation2 + $0x80] sm:$0x1] %v439
        %v441 = vld [vmem:[#allocation2 + $0x88] sm:$0x1]
        %v442 = vsel %vm389, 0, %v441
        %443 = vst [vmem:[#allocation2 + $0x88] sm:$0x1] %v442
        %v444 = vld [vmem:[#allocation2 + $0x90] sm:$0x1]
        %v445 = vsel %vm389, 0, %v444
        %446 = vst [vmem:[#allocation2 + $0x90] sm:$0x1] %v445
        %v447 = vld [vmem:[#allocation2 + $0x98] sm:$0x1]
        %v448 = vsel %vm389, 0, %v447
        %449 = vst [vmem:[#allocation2 + $0x98] sm:$0x1] %v448
        %v450 = vld [vmem:[#allocation2 + $0xa0] sm:$0x1]
        %v451 = vsel %vm389, 0, %v450
        %452 = vst [vmem:[#allocation2 + $0xa0] sm:$0x1] %v451
        %v453 = vld [vmem:[#allocation2 + $0xa8] sm:$0x1]
        %v454 = vsel %vm389, 0, %v453
        %455 = vst [vmem:[#allocation2 + $0xa8] sm:$0x1] %v454
        %v456 = vld [vmem:[#allocation2 + $0xb0] sm:$0x1]
        %v457 = vsel %vm389, 0, %v456
        %458 = vst [vmem:[#allocation2 + $0xb0] sm:$0x1] %v457
        %v459 = vld [vmem:[#allocation2 + $0xb8] sm:$0x1]
        %v460 = vsel %vm389, 0, %v459
        %461 = vst [vmem:[#allocation2 + $0xb8] sm:$0x1] %v460
        %v462 = vld [vmem:[#allocation2 + $0xc0] sm:$0x1]
        %v463 = vsel %vm389, 0, %v462
        %464 = vst [vmem:[#allocation2 + $0xc0] sm:$0x1] %v463
        %v465 = vld [vmem:[#allocation2 + $0xc8] sm:$0x1]
        %v466 = vsel %vm389, 0, %v465
        %467 = vst [vmem:[#allocation2 + $0xc8] sm:$0x1] %v466
        %v468 = vld [vmem:[#allocation2 + $0xd0] sm:$0x1]
        %v469 = vsel %vm389, 0, %v468
        %470 = vst [vmem:[#allocation2 + $0xd0] sm:$0x1] %v469
        %v471 = vld [vmem:[#allocation2 + $0xd8] sm:$0x1]
        %v472 = vsel %vm389, 0, %v471
        %473 = vst [vmem:[#allocation2 + $0xd8] sm:$0x1] %v472
        %v474 = vld [vmem:[#allocation2 + $0xe0] sm:$0x1]
        %v475 = vsel %vm389, 0, %v474
        %476 = vst [vmem:[#allocation2 + $0xe0] sm:$0x1] %v475
        %v477 = vld [vmem:[#allocation2 + $0xe8] sm:$0x1]
        %v478 = vsel %vm389, 0, %v477
        %479 = vst [vmem:[#allocation2 + $0xe8] sm:$0x1] %v478
        %v480 = vld [vmem:[#allocation2 + $0xf0] sm:$0x1]
        %v481 = vsel %vm389, 0, %v480
        %482 = vst [vmem:[#allocation2 + $0xf0] sm:$0x1] %v481
        %v483 = vld [vmem:[#allocation2 + $0xf8] sm:$0x1]
        %v484 = vsel %vm389, 0, %v483
        %485 = vst [vmem:[#allocation2 + $0xf8] sm:$0x1] %v484
        %v486 = vld [vmem:[#allocation2 + $0x100] sm:$0x1]
        %v487 = vsel %vm389, 0, %v486
        %488 = vst [vmem:[#allocation2 + $0x100] sm:$0x1] %v487
        %v489 = vld [vmem:[#allocation2 + $0x108] sm:$0x1]
        %v490 = vsel %vm389, 0, %v489
        %491 = vst [vmem:[#allocation2 + $0x108] sm:$0x1] %v490
        %v492 = vld [vmem:[#allocation2 + $0x110] sm:$0x1]
        %v493 = vsel %vm389, 0, %v492
        %494 = vst [vmem:[#allocation2 + $0x110] sm:$0x1] %v493
        %v495 = vld [vmem:[#allocation2 + $0x118] sm:$0x1]
        %v496 = vsel %vm389, 0, %v495
        %497 = vst [vmem:[#allocation2 + $0x118] sm:$0x1] %v496
        %v498 = vld [vmem:[#allocation2 + $0x120] sm:$0x1]
        %v499 = vsel %vm389, 0, %v498
        %500 = vst [vmem:[#allocation2 + $0x120] sm:$0x1] %v499
        %v501 = vld [vmem:[#allocation2 + $0x128] sm:$0x1]
        %v502 = vsel %vm389, 0, %v501
        %503 = vst [vmem:[#allocation2 + $0x128] sm:$0x1] %v502
        %v504 = vld [vmem:[#allocation2 + $0x130] sm:$0x1]
        %v505 = vsel %vm389, 0, %v504
        %506 = vst [vmem:[#allocation2 + $0x130] sm:$0x1] %v505
        %v507 = vld [vmem:[#allocation2 + $0x138] sm:$0x1]
        %v508 = vsel %vm389, 0, %v507
        %509 = vst [vmem:[#allocation2 + $0x138] sm:$0x1] %v508
        %v510 = vld [vmem:[#allocation2 + $0x140] sm:$0x1]
        %v511 = vsel %vm389, 0, %v510
        %512 = vst [vmem:[#allocation2 + $0x140] sm:$0x1] %v511
        %v513 = vld [vmem:[#allocation2 + $0x148] sm:$0x1]
        %v514 = vsel %vm389, 0, %v513
        %515 = vst [vmem:[#allocation2 + $0x148] sm:$0x1] %v514
        %v516 = vld [vmem:[#allocation2 + $0x150] sm:$0x1]
        %v517 = vsel %vm389, 0, %v516
        %518 = vst [vmem:[#allocation2 + $0x150] sm:$0x1] %v517
        %v519 = vld [vmem:[#allocation2 + $0x158] sm:$0x1]
        %v520 = vsel %vm389, 0, %v519
        %521 = vst [vmem:[#allocation2 + $0x158] sm:$0x1] %v520
        %v522 = vld [vmem:[#allocation2 + $0x160] sm:$0x1]
        %v523 = vsel %vm389, 0, %v522
        %524 = vst [vmem:[#allocation2 + $0x160] sm:$0x1] %v523
        %v525 = vld [vmem:[#allocation2 + $0x168] sm:$0x1]
        %v526 = vsel %vm389, 0, %v525
        %527 = vst [vmem:[#allocation2 + $0x168] sm:$0x1] %v526
        %v528 = vld [vmem:[#allocation2 + $0x170] sm:$0x1]
        %v529 = vsel %vm389, 0, %v528
        %530 = vst [vmem:[#allocation2 + $0x170] sm:$0x1] %v529
        %v531 = vld [vmem:[#allocation2 + $0x178] sm:$0x1]
        %v532 = vsel %vm389, 0, %v531
        %533 = vst [vmem:[#allocation2 + $0x178] sm:$0x1] %v532
        %v534 = vld [vmem:[#allocation2 + $0x180] sm:$0x1]
        %v535 = vsel %vm389, 0, %v534
        %536 = vst [vmem:[#allocation2 + $0x180] sm:$0x1] %v535
        %v537 = vld [vmem:[#allocation2 + $0x188] sm:$0x1]
        %v538 = vsel %vm389, 0, %v537
        %539 = vst [vmem:[#allocation2 + $0x188] sm:$0x1] %v538
        %v540 = vld [vmem:[#allocation2 + $0x190] sm:$0x1]
        %v541 = vsel %vm389, 0, %v540
        %542 = vst [vmem:[#allocation2 + $0x190] sm:$0x1] %v541
        %v543 = vld [vmem:[#allocation2 + $0x198] sm:$0x1]
        %v544 = vsel %vm389, 0, %v543
        %545 = vst [vmem:[#allocation2 + $0x198] sm:$0x1] %v544
        %v546 = vld [vmem:[#allocation2 + $0x1a0] sm:$0x1]
        %v547 = vsel %vm389, 0, %v546
        %548 = vst [vmem:[#allocation2 + $0x1a0] sm:$0x1] %v547
        %v549 = vld [vmem:[#allocation2 + $0x1a8] sm:$0x1]
        %v550 = vsel %vm389, 0, %v549
        %551 = vst [vmem:[#allocation2 + $0x1a8] sm:$0x1] %v550
        %v552 = vld [vmem:[#allocation2 + $0x1b0] sm:$0x1]
        %v553 = vsel %vm389, 0, %v552
        %554 = vst [vmem:[#allocation2 + $0x1b0] sm:$0x1] %v553
        %v555 = vld [vmem:[#allocation2 + $0x1b8] sm:$0x1]
        %v556 = vsel %vm389, 0, %v555
        %557 = vst [vmem:[#allocation2 + $0x1b8] sm:$0x1] %v556
        %v558 = vld [vmem:[#allocation2 + $0x1c0] sm:$0x1]
        %v559 = vsel %vm389, 0, %v558
        %560 = vst [vmem:[#allocation2 + $0x1c0] sm:$0x1] %v559
        %v561 = vld [vmem:[#allocation2 + $0x1c8] sm:$0x1]
        %v562 = vsel %vm389, 0, %v561
        %563 = vst [vmem:[#allocation2 + $0x1c8] sm:$0x1] %v562
        %v564 = vld [vmem:[#allocation2 + $0x1d0] sm:$0x1]
        %v565 = vsel %vm389, 0, %v564
        %566 = vst [vmem:[#allocation2 + $0x1d0] sm:$0x1] %v565
        %v567 = vld [vmem:[#allocation2 + $0x1d8] sm:$0x1]
        %v568 = vsel %vm389, 0, %v567
        %569 = vst [vmem:[#allocation2 + $0x1d8] sm:$0x1] %v568
        %v570 = vld [vmem:[#allocation2 + $0x1e0] sm:$0x1]
        %v571 = vsel %vm389, 0, %v570
        %572 = vst [vmem:[#allocation2 + $0x1e0] sm:$0x1] %v571
        %v573 = vld [vmem:[#allocation2 + $0x1e8] sm:$0x1]
        %v574 = vsel %vm389, 0, %v573
        %575 = vst [vmem:[#allocation2 + $0x1e8] sm:$0x1] %v574
        %v576 = vld [vmem:[#allocation2 + $0x1f0] sm:$0x1]
        %v577 = vsel %vm389, 0, %v576
        %578 = vst [vmem:[#allocation2 + $0x1f0] sm:$0x1] %v577
        %v579 = vld [vmem:[#allocation2 + $0x1f8] sm:$0x1]
        %v580 = vsel %vm389, 0, %v579
        %581 = vst [vmem:[#allocation2 + $0x1f8] sm:$0x1] %v580
        %vm582 = vsmask.f32 7938
        %vm583 = vmand %vm387, %vm582
        %v584 = vld [vmem:[#allocation2 + $0x4] sm:$0x1]
        %v585 = vsel %vm583, 0, %v584
        %586 = vst [vmem:[#allocation2 + $0x4] sm:$0x1] %v585
        %v587 = vld [vmem:[#allocation2 + $0xc] sm:$0x1]
        %v588 = vsel %vm583, 0, %v587
        %589 = vst [vmem:[#allocation2 + $0xc] sm:$0x1] %v588
        %v590 = vld [vmem:[#allocation2 + $0x14] sm:$0x1]
        %v591 = vsel %vm583, 0, %v590
        %592 = vst [vmem:[#allocation2 + $0x14] sm:$0x1] %v591
        %v593 = vld [vmem:[#allocation2 + $0x1c] sm:$0x1]
        %v594 = vsel %vm583, 0, %v593
        %595 = vst [vmem:[#allocation2 + $0x1c] sm:$0x1] %v594
        %v596 = vld [vmem:[#allocation2 + $0x24] sm:$0x1]
        %v597 = vsel %vm583, 0, %v596
        %598 = vst [vmem:[#allocation2 + $0x24] sm:$0x1] %v597
        %v599 = vld [vmem:[#allocation2 + $0x2c] sm:$0x1]
        %v600 = vsel %vm583, 0, %v599
        %601 = vst [vmem:[#allocation2 + $0x2c] sm:$0x1] %v600
        %v602 = vld [vmem:[#allocation2 + $0x34] sm:$0x1]
        %v603 = vsel %vm583, 0, %v602
        %604 = vst [vmem:[#allocation2 + $0x34] sm:$0x1] %v603
        %v605 = vld [vmem:[#allocation2 + $0x3c] sm:$0x1]
        %v606 = vsel %vm583, 0, %v605
        %607 = vst [vmem:[#allocation2 + $0x3c] sm:$0x1] %v606
        %v608 = vld [vmem:[#allocation2 + $0x44] sm:$0x1]
        %v609 = vsel %vm583, 0, %v608
        %610 = vst [vmem:[#allocation2 + $0x44] sm:$0x1] %v609
        %v611 = vld [vmem:[#allocation2 + $0x4c] sm:$0x1]
        %v612 = vsel %vm583, 0, %v611
        %613 = vst [vmem:[#allocation2 + $0x4c] sm:$0x1] %v612
        %v614 = vld [vmem:[#allocation2 + $0x54] sm:$0x1]
        %v615 = vsel %vm583, 0, %v614
        %616 = vst [vmem:[#allocation2 + $0x54] sm:$0x1] %v615
        %v617 = vld [vmem:[#allocation2 + $0x5c] sm:$0x1]
        %v618 = vsel %vm583, 0, %v617
        %619 = vst [vmem:[#allocation2 + $0x5c] sm:$0x1] %v618
        %v620 = vld [vmem:[#allocation2 + $0x64] sm:$0x1]
        %v621 = vsel %vm583, 0, %v620
        %622 = vst [vmem:[#allocation2 + $0x64] sm:$0x1] %v621
        %v623 = vld [vmem:[#allocation2 + $0x6c] sm:$0x1]
        %v624 = vsel %vm583, 0, %v623
        %625 = vst [vmem:[#allocation2 + $0x6c] sm:$0x1] %v624
        %v626 = vld [vmem:[#allocation2 + $0x74] sm:$0x1]
        %v627 = vsel %vm583, 0, %v626
        %628 = vst [vmem:[#allocation2 + $0x74] sm:$0x1] %v627
        %v629 = vld [vmem:[#allocation2 + $0x7c] sm:$0x1]
        %v630 = vsel %vm583, 0, %v629
        %631 = vst [vmem:[#allocation2 + $0x7c] sm:$0x1] %v630
        %v632 = vld [vmem:[#allocation2 + $0x84] sm:$0x1]
        %v633 = vsel %vm583, 0, %v632
        %634 = vst [vmem:[#allocation2 + $0x84] sm:$0x1] %v633
        %v635 = vld [vmem:[#allocation2 + $0x8c] sm:$0x1]
        %v636 = vsel %vm583, 0, %v635
        %637 = vst [vmem:[#allocation2 + $0x8c] sm:$0x1] %v636
        %v638 = vld [vmem:[#allocation2 + $0x94] sm:$0x1]
        %v639 = vsel %vm583, 0, %v638
        %640 = vst [vmem:[#allocation2 + $0x94] sm:$0x1] %v639
        %v641 = vld [vmem:[#allocation2 + $0x9c] sm:$0x1]
        %v642 = vsel %vm583, 0, %v641
        %643 = vst [vmem:[#allocation2 + $0x9c] sm:$0x1] %v642
        %v644 = vld [vmem:[#allocation2 + $0xa4] sm:$0x1]
        %v645 = vsel %vm583, 0, %v644
        %646 = vst [vmem:[#allocation2 + $0xa4] sm:$0x1] %v645
        %v647 = vld [vmem:[#allocation2 + $0xac] sm:$0x1]
        %v648 = vsel %vm583, 0, %v647
        %649 = vst [vmem:[#allocation2 + $0xac] sm:$0x1] %v648
        %v650 = vld [vmem:[#allocation2 + $0xb4] sm:$0x1]
        %v651 = vsel %vm583, 0, %v650
        %652 = vst [vmem:[#allocation2 + $0xb4] sm:$0x1] %v651
        %v653 = vld [vmem:[#allocation2 + $0xbc] sm:$0x1]
        %v654 = vsel %vm583, 0, %v653
        %655 = vst [vmem:[#allocation2 + $0xbc] sm:$0x1] %v654
        %v656 = vld [vmem:[#allocation2 + $0xc4] sm:$0x1]
        %v657 = vsel %vm583, 0, %v656
        %658 = vst [vmem:[#allocation2 + $0xc4] sm:$0x1] %v657
        %v659 = vld [vmem:[#allocation2 + $0xcc] sm:$0x1]
        %v660 = vsel %vm583, 0, %v659
        %661 = vst [vmem:[#allocation2 + $0xcc] sm:$0x1] %v660
        %v662 = vld [vmem:[#allocation2 + $0xd4] sm:$0x1]
        %v663 = vsel %vm583, 0, %v662
        %664 = vst [vmem:[#allocation2 + $0xd4] sm:$0x1] %v663
        %v665 = vld [vmem:[#allocation2 + $0xdc] sm:$0x1]
        %v666 = vsel %vm583, 0, %v665
        %667 = vst [vmem:[#allocation2 + $0xdc] sm:$0x1] %v666
        %v668 = vld [vmem:[#allocation2 + $0xe4] sm:$0x1]
        %v669 = vsel %vm583, 0, %v668
        %670 = vst [vmem:[#allocation2 + $0xe4] sm:$0x1] %v669
        %v671 = vld [vmem:[#allocation2 + $0xec] sm:$0x1]
        %v672 = vsel %vm583, 0, %v671
        %673 = vst [vmem:[#allocation2 + $0xec] sm:$0x1] %v672
        %v674 = vld [vmem:[#allocation2 + $0xf4] sm:$0x1]
        %v675 = vsel %vm583, 0, %v674
        %676 = vst [vmem:[#allocation2 + $0xf4] sm:$0x1] %v675
        %v677 = vld [vmem:[#allocation2 + $0xfc] sm:$0x1]
        %v678 = vsel %vm583, 0, %v677
        %679 = vst [vmem:[#allocation2 + $0xfc] sm:$0x1] %v678
        %v680 = vld [vmem:[#allocation2 + $0x104] sm:$0x1]
        %v681 = vsel %vm583, 0, %v680
        %682 = vst [vmem:[#allocation2 + $0x104] sm:$0x1] %v681
        %v683 = vld [vmem:[#allocation2 + $0x10c] sm:$0x1]
        %v684 = vsel %vm583, 0, %v683
        %685 = vst [vmem:[#allocation2 + $0x10c] sm:$0x1] %v684
        %v686 = vld [vmem:[#allocation2 + $0x114] sm:$0x1]
        %v687 = vsel %vm583, 0, %v686
        %688 = vst [vmem:[#allocation2 + $0x114] sm:$0x1] %v687
        %v689 = vld [vmem:[#allocation2 + $0x11c] sm:$0x1]
        %v690 = vsel %vm583, 0, %v689
        %691 = vst [vmem:[#allocation2 + $0x11c] sm:$0x1] %v690
        %v692 = vld [vmem:[#allocation2 + $0x124] sm:$0x1]
        %v693 = vsel %vm583, 0, %v692
        %694 = vst [vmem:[#allocation2 + $0x124] sm:$0x1] %v693
        %v695 = vld [vmem:[#allocation2 + $0x12c] sm:$0x1]
        %v696 = vsel %vm583, 0, %v695
        %697 = vst [vmem:[#allocation2 + $0x12c] sm:$0x1] %v696
        %v698 = vld [vmem:[#allocation2 + $0x134] sm:$0x1]
        %v699 = vsel %vm583, 0, %v698
        %700 = vst [vmem:[#allocation2 + $0x134] sm:$0x1] %v699
        %v701 = vld [vmem:[#allocation2 + $0x13c] sm:$0x1]
        %v702 = vsel %vm583, 0, %v701
        %703 = vst [vmem:[#allocation2 + $0x13c] sm:$0x1] %v702
        %v704 = vld [vmem:[#allocation2 + $0x144] sm:$0x1]
        %v705 = vsel %vm583, 0, %v704
        %706 = vst [vmem:[#allocation2 + $0x144] sm:$0x1] %v705
        %v707 = vld [vmem:[#allocation2 + $0x14c] sm:$0x1]
        %v708 = vsel %vm583, 0, %v707
        %709 = vst [vmem:[#allocation2 + $0x14c] sm:$0x1] %v708
        %v710 = vld [vmem:[#allocation2 + $0x154] sm:$0x1]
        %v711 = vsel %vm583, 0, %v710
        %712 = vst [vmem:[#allocation2 + $0x154] sm:$0x1] %v711
        %v713 = vld [vmem:[#allocation2 + $0x15c] sm:$0x1]
        %v714 = vsel %vm583, 0, %v713
        %715 = vst [vmem:[#allocation2 + $0x15c] sm:$0x1] %v714
        %v716 = vld [vmem:[#allocation2 + $0x164] sm:$0x1]
        %v717 = vsel %vm583, 0, %v716
        %718 = vst [vmem:[#allocation2 + $0x164] sm:$0x1] %v717
        %v719 = vld [vmem:[#allocation2 + $0x16c] sm:$0x1]
        %v720 = vsel %vm583, 0, %v719
        %721 = vst [vmem:[#allocation2 + $0x16c] sm:$0x1] %v720
        %v722 = vld [vmem:[#allocation2 + $0x174] sm:$0x1]
        %v723 = vsel %vm583, 0, %v722
        %724 = vst [vmem:[#allocation2 + $0x174] sm:$0x1] %v723
        %v725 = vld [vmem:[#allocation2 + $0x17c] sm:$0x1]
        %v726 = vsel %vm583, 0, %v725
        %727 = vst [vmem:[#allocation2 + $0x17c] sm:$0x1] %v726
        %v728 = vld [vmem:[#allocation2 + $0x184] sm:$0x1]
        %v729 = vsel %vm583, 0, %v728
        %730 = vst [vmem:[#allocation2 + $0x184] sm:$0x1] %v729
        %v731 = vld [vmem:[#allocation2 + $0x18c] sm:$0x1]
        %v732 = vsel %vm583, 0, %v731
        %733 = vst [vmem:[#allocation2 + $0x18c] sm:$0x1] %v732
        %v734 = vld [vmem:[#allocation2 + $0x194] sm:$0x1]
        %v735 = vsel %vm583, 0, %v734
        %736 = vst [vmem:[#allocation2 + $0x194] sm:$0x1] %v735
        %v737 = vld [vmem:[#allocation2 + $0x19c] sm:$0x1]
        %v738 = vsel %vm583, 0, %v737
        %739 = vst [vmem:[#allocation2 + $0x19c] sm:$0x1] %v738
        %v740 = vld [vmem:[#allocation2 + $0x1a4] sm:$0x1]
        %v741 = vsel %vm583, 0, %v740
        %742 = vst [vmem:[#allocation2 + $0x1a4] sm:$0x1] %v741
        %v743 = vld [vmem:[#allocation2 + $0x1ac] sm:$0x1]
        %v744 = vsel %vm583, 0, %v743
        %745 = vst [vmem:[#allocation2 + $0x1ac] sm:$0x1] %v744
        %v746 = vld [vmem:[#allocation2 + $0x1b4] sm:$0x1]
        %v747 = vsel %vm583, 0, %v746
        %748 = vst [vmem:[#allocation2 + $0x1b4] sm:$0x1] %v747
        %v749 = vld [vmem:[#allocation2 + $0x1bc] sm:$0x1]
        %v750 = vsel %vm583, 0, %v749
        %751 = vst [vmem:[#allocation2 + $0x1bc] sm:$0x1] %v750
        %v752 = vld [vmem:[#allocation2 + $0x1c4] sm:$0x1]
        %v753 = vsel %vm583, 0, %v752
        %754 = vst [vmem:[#allocation2 + $0x1c4] sm:$0x1] %v753
        %v755 = vld [vmem:[#allocation2 + $0x1cc] sm:$0x1]
        %v756 = vsel %vm583, 0, %v755
        %757 = vst [vmem:[#allocation2 + $0x1cc] sm:$0x1] %v756
        %v758 = vld [vmem:[#allocation2 + $0x1d4] sm:$0x1]
        %v759 = vsel %vm583, 0, %v758
        %760 = vst [vmem:[#allocation2 + $0x1d4] sm:$0x1] %v759
        %v761 = vld [vmem:[#allocation2 + $0x1dc] sm:$0x1]
        %v762 = vsel %vm583, 0, %v761
        %763 = vst [vmem:[#allocation2 + $0x1dc] sm:$0x1] %v762
        %v764 = vld [vmem:[#allocation2 + $0x1e4] sm:$0x1]
        %v765 = vsel %vm583, 0, %v764
        %766 = vst [vmem:[#allocation2 + $0x1e4] sm:$0x1] %v765
        %v767 = vld [vmem:[#allocation2 + $0x1ec] sm:$0x1]
        %v768 = vsel %vm583, 0, %v767
        %769 = vst [vmem:[#allocation2 + $0x1ec] sm:$0x1] %v768
        %v770 = vld [vmem:[#allocation2 + $0x1f4] sm:$0x1]
        %v771 = vsel %vm583, 0, %v770
        %772 = vst [vmem:[#allocation2 + $0x1f4] sm:$0x1] %v771
        %v773 = vld [vmem:[#allocation2 + $0x1fc] sm:$0x1]
        %v774 = vsel %vm583, 0, %v773
        %775 = vst [vmem:[#allocation2 + $0x1fc] sm:$0x1] %v774
        %v777 = vshrl.u32 %v323, 16
        %v779 = vrot.slane %v777, 7
        %v780 = vshll.u32 %v323, 16
        %v782 = vor.u32 %v779, %v780
        %v783 = vrot.slane %v779, 4
        %v785 = vshrl.u32 %v324, 16
        %v787 = vrot.slane %v785, 7
        %v788 = vshll.u32 %v324, 16
        %v790 = vor.u32 %v787, %v788
        %v791 = vrot.slane %v787, 4
        %v793 = vshrl.u32 %v325, 16
        %v795 = vrot.slane %v793, 7
        %v796 = vshll.u32 %v325, 16
        %v798 = vor.u32 %v795, %v796
        %v799 = vrot.slane %v795, 4
        %v801 = vshrl.u32 %v326, 16
        %v803 = vrot.slane %v801, 7
        %v804 = vshll.u32 %v326, 16
        %v806 = vor.u32 %v803, %v804
        %v807 = vrot.slane %v803, 4
        %v809 = vshrl.u32 %v327, 16
        %v811 = vrot.slane %v809, 7
        %v812 = vshll.u32 %v327, 16
        %v814 = vor.u32 %v811, %v812
        %v815 = vrot.slane %v811, 4
        %v817 = vshrl.u32 %v328, 16
        %v819 = vrot.slane %v817, 7
        %v820 = vshll.u32 %v328, 16
        %v822 = vor.u32 %v819, %v820
        %v823 = vrot.slane %v819, 4
        %v825 = vshrl.u32 %v329, 16
        %v827 = vrot.slane %v825, 7
        %v828 = vshll.u32 %v329, 16
        %v830 = vor.u32 %v827, %v828
        %v831 = vrot.slane %v827, 4
        %v833 = vshrl.u32 %v330, 16
        %v835 = vrot.slane %v833, 7
        %v836 = vshll.u32 %v330, 16
        %v838 = vor.u32 %v835, %v836
        %v839 = vrot.slane %v835, 4
        %v841 = vshrl.u32 %v331, 16
        %v843 = vrot.slane %v841, 7
        %v844 = vshll.u32 %v331, 16
        %v846 = vor.u32 %v843, %v844
        %v847 = vrot.slane %v843, 4
        %v849 = vshrl.u32 %v332, 16
        %v851 = vrot.slane %v849, 7
        %v852 = vshll.u32 %v332, 16
        %v854 = vor.u32 %v851, %v852
        %v855 = vrot.slane %v851, 4
        %v857 = vshrl.u32 %v333, 16
        %v859 = vrot.slane %v857, 7
        %v860 = vshll.u32 %v333, 16
        %v862 = vor.u32 %v859, %v860
        %v863 = vrot.slane %v859, 4
        %v865 = vshrl.u32 %v334, 16
        %v867 = vrot.slane %v865, 7
        %v868 = vshll.u32 %v334, 16
        %v870 = vor.u32 %v867, %v868
        %v871 = vrot.slane %v867, 4
        %v873 = vshrl.u32 %v335, 16
        %v875 = vrot.slane %v873, 7
        %v876 = vshll.u32 %v335, 16
        %v878 = vor.u32 %v875, %v876
        %v879 = vrot.slane %v875, 4
        %v881 = vshrl.u32 %v336, 16
        %v883 = vrot.slane %v881, 7
        %v884 = vshll.u32 %v336, 16
        %v886 = vor.u32 %v883, %v884
        %v887 = vrot.slane %v883, 4
        %v889 = vshrl.u32 %v337, 16
        %v891 = vrot.slane %v889, 7
        %v892 = vshll.u32 %v337, 16
        %v894 = vor.u32 %v891, %v892
        %v895 = vrot.slane %v891, 4
        %v897 = vshrl.u32 %v338, 16
        %v899 = vrot.slane %v897, 7
        %v900 = vshll.u32 %v338, 16
        %v902 = vor.u32 %v899, %v900
        %v903 = vrot.slane %v899, 4
        %v905 = vshrl.u32 %v339, 16
        %v907 = vrot.slane %v905, 7
        %v908 = vshll.u32 %v339, 16
        %v910 = vor.u32 %v907, %v908
        %v911 = vrot.slane %v907, 4
        %v913 = vshrl.u32 %v340, 16
        %v915 = vrot.slane %v913, 7
        %v916 = vshll.u32 %v340, 16
        %v918 = vor.u32 %v915, %v916
        %v919 = vrot.slane %v915, 4
        %v921 = vshrl.u32 %v341, 16
        %v923 = vrot.slane %v921, 7
        %v924 = vshll.u32 %v341, 16
        %v926 = vor.u32 %v923, %v924
        %v927 = vrot.slane %v923, 4
        %v929 = vshrl.u32 %v342, 16
        %v931 = vrot.slane %v929, 7
        %v932 = vshll.u32 %v342, 16
        %v934 = vor.u32 %v931, %v932
        %v935 = vrot.slane %v931, 4
        %v937 = vshrl.u32 %v343, 16
        %v939 = vrot.slane %v937, 7
        %v940 = vshll.u32 %v343, 16
        %v942 = vor.u32 %v939, %v940
        %v943 = vrot.slane %v939, 4
        %v945 = vshrl.u32 %v344, 16
        %v947 = vrot.slane %v945, 7
        %v948 = vshll.u32 %v344, 16
        %v950 = vor.u32 %v947, %v948
        %v951 = vrot.slane %v947, 4
        %v953 = vshrl.u32 %v345, 16
        %v955 = vrot.slane %v953, 7
        %v956 = vshll.u32 %v345, 16
        %v958 = vor.u32 %v955, %v956
        %v959 = vrot.slane %v955, 4
        %v961 = vshrl.u32 %v346, 16
        %v963 = vrot.slane %v961, 7
        %v964 = vshll.u32 %v346, 16
        %v966 = vor.u32 %v963, %v964
        %v967 = vrot.slane %v963, 4
        %v969 = vshrl.u32 %v347, 16
        %v971 = vrot.slane %v969, 7
        %v972 = vshll.u32 %v347, 16
        %v974 = vor.u32 %v971, %v972
        %v975 = vrot.slane %v971, 4
        %v977 = vshrl.u32 %v348, 16
        %v979 = vrot.slane %v977, 7
        %v980 = vshll.u32 %v348, 16
        %v982 = vor.u32 %v979, %v980
        %v983 = vrot.slane %v979, 4
        %v985 = vshrl.u32 %v349, 16
        %v987 = vrot.slane %v985, 7
        %v988 = vshll.u32 %v349, 16
        %v990 = vor.u32 %v987, %v988
        %v991 = vrot.slane %v987, 4
        %v993 = vshrl.u32 %v350, 16
        %v995 = vrot.slane %v993, 7
        %v996 = vshll.u32 %v350, 16
        %v998 = vor.u32 %v995, %v996
        %v999 = vrot.slane %v995, 4
        %v1001 = vshrl.u32 %v351, 16
        %v1003 = vrot.slane %v1001, 7
        %v1004 = vshll.u32 %v351, 16
        %v1006 = vor.u32 %v1003, %v1004
        %v1007 = vrot.slane %v1003, 4
        %v1009 = vshrl.u32 %v352, 16
        %v1011 = vrot.slane %v1009, 7
        %v1012 = vshll.u32 %v352, 16
        %v1014 = vor.u32 %v1011, %v1012
        %v1015 = vrot.slane %v1011, 4
        %v1017 = vshrl.u32 %v353, 16
        %v1019 = vrot.slane %v1017, 7
        %v1020 = vshll.u32 %v353, 16
        %v1022 = vor.u32 %v1019, %v1020
        %v1023 = vrot.slane %v1019, 4
        %v1025 = vshrl.u32 %v354, 16
        %v1027 = vrot.slane %v1025, 7
        %v1028 = vshll.u32 %v354, 16
        %v1030 = vor.u32 %v1027, %v1028
        %v1031 = vrot.slane %v1027, 4
        %v1033 = vshrl.u32 %v355, 16
        %v1035 = vrot.slane %v1033, 7
        %v1036 = vshll.u32 %v355, 16
        %v1038 = vor.u32 %v1035, %v1036
        %v1039 = vrot.slane %v1035, 4
        %v1041 = vshrl.u32 %v356, 16
        %v1043 = vrot.slane %v1041, 7
        %v1044 = vshll.u32 %v356, 16
        %v1046 = vor.u32 %v1043, %v1044
        %v1047 = vrot.slane %v1043, 4
        %v1049 = vshrl.u32 %v357, 16
        %v1051 = vrot.slane %v1049, 7
        %v1052 = vshll.u32 %v357, 16
        %v1054 = vor.u32 %v1051, %v1052
        %v1055 = vrot.slane %v1051, 4
        %v1057 = vshrl.u32 %v358, 16
        %v1059 = vrot.slane %v1057, 7
        %v1060 = vshll.u32 %v358, 16
        %v1062 = vor.u32 %v1059, %v1060
        %v1063 = vrot.slane %v1059, 4
        %v1065 = vshrl.u32 %v359, 16
        %v1067 = vrot.slane %v1065, 7
        %v1068 = vshll.u32 %v359, 16
        %v1070 = vor.u32 %v1067, %v1068
        %v1071 = vrot.slane %v1067, 4
        %v1073 = vshrl.u32 %v360, 16
        %v1075 = vrot.slane %v1073, 7
        %v1076 = vshll.u32 %v360, 16
        %v1078 = vor.u32 %v1075, %v1076
        %v1079 = vrot.slane %v1075, 4
        %v1081 = vshrl.u32 %v361, 16
        %v1083 = vrot.slane %v1081, 7
        %v1084 = vshll.u32 %v361, 16
        %v1086 = vor.u32 %v1083, %v1084
        %v1087 = vrot.slane %v1083, 4
        %v1089 = vshrl.u32 %v362, 16
        %v1091 = vrot.slane %v1089, 7
        %v1092 = vshll.u32 %v362, 16
        %v1094 = vor.u32 %v1091, %v1092
        %v1095 = vrot.slane %v1091, 4
        %v1097 = vshrl.u32 %v363, 16
        %v1099 = vrot.slane %v1097, 7
        %v1100 = vshll.u32 %v363, 16
        %v1102 = vor.u32 %v1099, %v1100
        %v1103 = vrot.slane %v1099, 4
        %v1105 = vshrl.u32 %v364, 16
        %v1107 = vrot.slane %v1105, 7
        %v1108 = vshll.u32 %v364, 16
        %v1110 = vor.u32 %v1107, %v1108
        %v1111 = vrot.slane %v1107, 4
        %v1113 = vshrl.u32 %v365, 16
        %v1115 = vrot.slane %v1113, 7
        %v1116 = vshll.u32 %v365, 16
        %v1118 = vor.u32 %v1115, %v1116
        %v1119 = vrot.slane %v1115, 4
        %v1121 = vshrl.u32 %v366, 16
        %v1123 = vrot.slane %v1121, 7
        %v1124 = vshll.u32 %v366, 16
        %v1126 = vor.u32 %v1123, %v1124
        %v1127 = vrot.slane %v1123, 4
        %v1129 = vshrl.u32 %v367, 16
        %v1131 = vrot.slane %v1129, 7
        %v1132 = vshll.u32 %v367, 16
        %v1134 = vor.u32 %v1131, %v1132
        %v1135 = vrot.slane %v1131, 4
        %v1137 = vshrl.u32 %v368, 16
        %v1139 = vrot.slane %v1137, 7
        %v1140 = vshll.u32 %v368, 16
        %v1142 = vor.u32 %v1139, %v1140
        %v1143 = vrot.slane %v1139, 4
        %v1145 = vshrl.u32 %v369, 16
        %v1147 = vrot.slane %v1145, 7
        %v1148 = vshll.u32 %v369, 16
        %v1150 = vor.u32 %v1147, %v1148
        %v1151 = vrot.slane %v1147, 4
        %v1153 = vshrl.u32 %v370, 16
        %v1155 = vrot.slane %v1153, 7
        %v1156 = vshll.u32 %v370, 16
        %v1158 = vor.u32 %v1155, %v1156
        %v1159 = vrot.slane %v1155, 4
        %v1161 = vshrl.u32 %v371, 16
        %v1163 = vrot.slane %v1161, 7
        %v1164 = vshll.u32 %v371, 16
        %v1166 = vor.u32 %v1163, %v1164
        %v1167 = vrot.slane %v1163, 4
        %v1169 = vshrl.u32 %v372, 16
        %v1171 = vrot.slane %v1169, 7
        %v1172 = vshll.u32 %v372, 16
        %v1174 = vor.u32 %v1171, %v1172
        %v1175 = vrot.slane %v1171, 4
        %v1177 = vshrl.u32 %v373, 16
        %v1179 = vrot.slane %v1177, 7
        %v1180 = vshll.u32 %v373, 16
        %v1182 = vor.u32 %v1179, %v1180
        %v1183 = vrot.slane %v1179, 4
        %v1185 = vshrl.u32 %v374, 16
        %v1187 = vrot.slane %v1185, 7
        %v1188 = vshll.u32 %v374, 16
        %v1190 = vor.u32 %v1187, %v1188
        %v1191 = vrot.slane %v1187, 4
        %v1193 = vshrl.u32 %v375, 16
        %v1195 = vrot.slane %v1193, 7
        %v1196 = vshll.u32 %v375, 16
        %v1198 = vor.u32 %v1195, %v1196
        %v1199 = vrot.slane %v1195, 4
        %v1201 = vshrl.u32 %v376, 16
        %v1203 = vrot.slane %v1201, 7
        %v1204 = vshll.u32 %v376, 16
        %v1206 = vor.u32 %v1203, %v1204
        %v1207 = vrot.slane %v1203, 4
        %v1209 = vshrl.u32 %v377, 16
        %v1211 = vrot.slane %v1209, 7
        %v1212 = vshll.u32 %v377, 16
        %v1214 = vor.u32 %v1211, %v1212
        %v1215 = vrot.slane %v1211, 4
        %v1217 = vshrl.u32 %v378, 16
        %v1219 = vrot.slane %v1217, 7
        %v1220 = vshll.u32 %v378, 16
        %v1222 = vor.u32 %v1219, %v1220
        %v1223 = vrot.slane %v1219, 4
        %v1225 = vshrl.u32 %v379, 16
        %v1227 = vrot.slane %v1225, 7
        %v1228 = vshll.u32 %v379, 16
        %v1230 = vor.u32 %v1227, %v1228
        %v1231 = vrot.slane %v1227, 4
        %v1233 = vshrl.u32 %v380, 16
        %v1235 = vrot.slane %v1233, 7
        %v1236 = vshll.u32 %v380, 16
        %v1238 = vor.u32 %v1235, %v1236
        %v1239 = vrot.slane %v1235, 4
        %v1241 = vshrl.u32 %v381, 16
        %v1243 = vrot.slane %v1241, 7
        %v1244 = vshll.u32 %v381, 16
        %v1246 = vor.u32 %v1243, %v1244
        %v1247 = vrot.slane %v1243, 4
        %v1249 = vshrl.u32 %v382, 16
        %v1251 = vrot.slane %v1249, 7
        %v1252 = vshll.u32 %v382, 16
        %v1254 = vor.u32 %v1251, %v1252
        %v1255 = vrot.slane %v1251, 4
        %v1257 = vshrl.u32 %v383, 16
        %v1259 = vrot.slane %v1257, 7
        %v1260 = vshll.u32 %v383, 16
        %v1262 = vor.u32 %v1259, %v1260
        %v1263 = vrot.slane %v1259, 4
        %v1265 = vshrl.u32 %v384, 16
        %v1267 = vrot.slane %v1265, 7
        %v1268 = vshll.u32 %v384, 16
        %v1270 = vor.u32 %v1267, %v1268
        %v1271 = vrot.slane %v1267, 4
        %v1273 = vshrl.u32 %v385, 16
        %v1275 = vrot.slane %v1273, 7
        %v1276 = vshll.u32 %v385, 16
        %v1278 = vor.u32 %v1275, %v1276
        %v1279 = vrot.slane %v1275, 4
        %v1281 = vshrl.u32 %v386, 16
        %v1283 = vrot.slane %v1281, 7
        %v1284 = vshll.u32 %v386, 16
        %v1286 = vor.u32 %v1283, %v1284
        %v1287 = vrot.slane %v1283, 4
        %vm1416 = vcmask 60416
        %vm1417 = vmand %vm1416, %vm582
        %v1418 = vld [vmem:[#allocation2] sm:$0xf]
        %v1419 = vsel %vm1417, %v782, %v1418
        %1420 = vst [vmem:[#allocation2] sm:$0xf] %v1419
        %v1421 = vld [vmem:[#allocation2 + $0x4] sm:$0x1]
        %v1422 = vsel %vm389, %v783, %v1421
        %1423 = vst [vmem:[#allocation2 + $0x4] sm:$0x1] %v1422
        %v1424 = vld [vmem:[#allocation2 + $0x8] sm:$0xf]
        %v1425 = vsel %vm1417, %v790, %v1424
        %1426 = vst [vmem:[#allocation2 + $0x8] sm:$0xf] %v1425
        %v1427 = vld [vmem:[#allocation2 + $0xc] sm:$0x1]
        %v1428 = vsel %vm389, %v791, %v1427
        %1429 = vst [vmem:[#allocation2 + $0xc] sm:$0x1] %v1428
        %v1430 = vld [vmem:[#allocation2 + $0x10] sm:$0xf]
        %v1431 = vsel %vm1417, %v798, %v1430
        %1432 = vst [vmem:[#allocation2 + $0x10] sm:$0xf] %v1431
        %v1433 = vld [vmem:[#allocation2 + $0x14] sm:$0x1]
        %v1434 = vsel %vm389, %v799, %v1433
        %1435 = vst [vmem:[#allocation2 + $0x14] sm:$0x1] %v1434
        %v1436 = vld [vmem:[#allocation2 + $0x18] sm:$0xf]
        %v1437 = vsel %vm1417, %v806, %v1436
        %1438 = vst [vmem:[#allocation2 + $0x18] sm:$0xf] %v1437
        %v1439 = vld [vmem:[#allocation2 + $0x1c] sm:$0x1]
        %v1440 = vsel %vm389, %v807, %v1439
        %1441 = vst [vmem:[#allocation2 + $0x1c] sm:$0x1] %v1440
        %v1442 = vld [vmem:[#allocation2 + $0x20] sm:$0xf]
        %v1443 = vsel %vm1417, %v814, %v1442
        %1444 = vst [vmem:[#allocation2 + $0x20] sm:$0xf] %v1443
        %v1445 = vld [vmem:[#allocation2 + $0x24] sm:$0x1]
        %v1446 = vsel %vm389, %v815, %v1445
        %1447 = vst [vmem:[#allocation2 + $0x24] sm:$0x1] %v1446
        %v1448 = vld [vmem:[#allocation2 + $0x28] sm:$0xf]
        %v1449 = vsel %vm1417, %v822, %v1448
        %1450 = vst [vmem:[#allocation2 + $0x28] sm:$0xf] %v1449
        %v1451 = vld [vmem:[#allocation2 + $0x2c] sm:$0x1]
        %v1452 = vsel %vm389, %v823, %v1451
        %1453 = vst [vmem:[#allocation2 + $0x2c] sm:$0x1] %v1452
        %v1454 = vld [vmem:[#allocation2 + $0x30] sm:$0xf]
        %v1455 = vsel %vm1417, %v830, %v1454
        %1456 = vst [vmem:[#allocation2 + $0x30] sm:$0xf] %v1455
        %v1457 = vld [vmem:[#allocation2 + $0x34] sm:$0x1]
        %v1458 = vsel %vm389, %v831, %v1457
        %1459 = vst [vmem:[#allocation2 + $0x34] sm:$0x1] %v1458
        %v1460 = vld [vmem:[#allocation2 + $0x38] sm:$0xf]
        %v1461 = vsel %vm1417, %v838, %v1460
        %1462 = vst [vmem:[#allocation2 + $0x38] sm:$0xf] %v1461
        %v1463 = vld [vmem:[#allocation2 + $0x3c] sm:$0x1]
        %v1464 = vsel %vm389, %v839, %v1463
        %1465 = vst [vmem:[#allocation2 + $0x3c] sm:$0x1] %v1464
        %v1466 = vld [vmem:[#allocation2 + $0x40] sm:$0xf]
        %v1467 = vsel %vm1417, %v846, %v1466
        %1468 = vst [vmem:[#allocation2 + $0x40] sm:$0xf] %v1467
        %v1469 = vld [vmem:[#allocation2 + $0x44] sm:$0x1]
        %v1470 = vsel %vm389, %v847, %v1469
        %1471 = vst [vmem:[#allocation2 + $0x44] sm:$0x1] %v1470
        %v1472 = vld [vmem:[#allocation2 + $0x48] sm:$0xf]
        %v1473 = vsel %vm1417, %v854, %v1472
        %1474 = vst [vmem:[#allocation2 + $0x48] sm:$0xf] %v1473
        %v1475 = vld [vmem:[#allocation2 + $0x4c] sm:$0x1]
        %v1476 = vsel %vm389, %v855, %v1475
        %1477 = vst [vmem:[#allocation2 + $0x4c] sm:$0x1] %v1476
        %v1478 = vld [vmem:[#allocation2 + $0x50] sm:$0xf]
        %v1479 = vsel %vm1417, %v862, %v1478
        %1480 = vst [vmem:[#allocation2 + $0x50] sm:$0xf] %v1479
        %v1481 = vld [vmem:[#allocation2 + $0x54] sm:$0x1]
        %v1482 = vsel %vm389, %v863, %v1481
        %1483 = vst [vmem:[#allocation2 + $0x54] sm:$0x1] %v1482
        %v1484 = vld [vmem:[#allocation2 + $0x58] sm:$0xf]
        %v1485 = vsel %vm1417, %v870, %v1484
        %1486 = vst [vmem:[#allocation2 + $0x58] sm:$0xf] %v1485
        %v1487 = vld [vmem:[#allocation2 + $0x5c] sm:$0x1]
        %v1488 = vsel %vm389, %v871, %v1487
        %1489 = vst [vmem:[#allocation2 + $0x5c] sm:$0x1] %v1488
        %v1490 = vld [vmem:[#allocation2 + $0x60] sm:$0xf]
        %v1491 = vsel %vm1417, %v878, %v1490
        %1492 = vst [vmem:[#allocation2 + $0x60] sm:$0xf] %v1491
        %v1493 = vld [vmem:[#allocation2 + $0x64] sm:$0x1]
        %v1494 = vsel %vm389, %v879, %v1493
        %1495 = vst [vmem:[#allocation2 + $0x64] sm:$0x1] %v1494
        %v1496 = vld [vmem:[#allocation2 + $0x68] sm:$0xf]
        %v1497 = vsel %vm1417, %v886, %v1496
        %1498 = vst [vmem:[#allocation2 + $0x68] sm:$0xf] %v1497
        %v1499 = vld [vmem:[#allocation2 + $0x6c] sm:$0x1]
        %v1500 = vsel %vm389, %v887, %v1499
        %1501 = vst [vmem:[#allocation2 + $0x6c] sm:$0x1] %v1500
        %v1502 = vld [vmem:[#allocation2 + $0x70] sm:$0xf]
        %v1503 = vsel %vm1417, %v894, %v1502
        %1504 = vst [vmem:[#allocation2 + $0x70] sm:$0xf] %v1503
        %v1505 = vld [vmem:[#allocation2 + $0x74] sm:$0x1]
        %v1506 = vsel %vm389, %v895, %v1505
        %1507 = vst [vmem:[#allocation2 + $0x74] sm:$0x1] %v1506
        %v1508 = vld [vmem:[#allocation2 + $0x78] sm:$0xf]
        %v1509 = vsel %vm1417, %v902, %v1508
        %1510 = vst [vmem:[#allocation2 + $0x78] sm:$0xf] %v1509
        %v1511 = vld [vmem:[#allocation2 + $0x7c] sm:$0x1]
        %v1512 = vsel %vm389, %v903, %v1511
        %1513 = vst [vmem:[#allocation2 + $0x7c] sm:$0x1] %v1512
        %v1514 = vld [vmem:[#allocation2 + $0x80] sm:$0xf]
        %v1515 = vsel %vm1417, %v910, %v1514
        %1516 = vst [vmem:[#allocation2 + $0x80] sm:$0xf] %v1515
        %v1517 = vld [vmem:[#allocation2 + $0x84] sm:$0x1]
        %v1518 = vsel %vm389, %v911, %v1517
        %1519 = vst [vmem:[#allocation2 + $0x84] sm:$0x1] %v1518
        %v1520 = vld [vmem:[#allocation2 + $0x88] sm:$0xf]
        %v1521 = vsel %vm1417, %v918, %v1520
        %1522 = vst [vmem:[#allocation2 + $0x88] sm:$0xf] %v1521
        %v1523 = vld [vmem:[#allocation2 + $0x8c] sm:$0x1]
        %v1524 = vsel %vm389, %v919, %v1523
        %1525 = vst [vmem:[#allocation2 + $0x8c] sm:$0x1] %v1524
        %v1526 = vld [vmem:[#allocation2 + $0x90] sm:$0xf]
        %v1527 = vsel %vm1417, %v926, %v1526
        %1528 = vst [vmem:[#allocation2 + $0x90] sm:$0xf] %v1527
        %v1529 = vld [vmem:[#allocation2 + $0x94] sm:$0x1]
        %v1530 = vsel %vm389, %v927, %v1529
        %1531 = vst [vmem:[#allocation2 + $0x94] sm:$0x1] %v1530
        %v1532 = vld [vmem:[#allocation2 + $0x98] sm:$0xf]
        %v1533 = vsel %vm1417, %v934, %v1532
        %1534 = vst [vmem:[#allocation2 + $0x98] sm:$0xf] %v1533
        %v1535 = vld [vmem:[#allocation2 + $0x9c] sm:$0x1]
        %v1536 = vsel %vm389, %v935, %v1535
        %1537 = vst [vmem:[#allocation2 + $0x9c] sm:$0x1] %v1536
        %v1538 = vld [vmem:[#allocation2 + $0xa0] sm:$0xf]
        %v1539 = vsel %vm1417, %v942, %v1538
        %1540 = vst [vmem:[#allocation2 + $0xa0] sm:$0xf] %v1539
        %v1541 = vld [vmem:[#allocation2 + $0xa4] sm:$0x1]
        %v1542 = vsel %vm389, %v943, %v1541
        %1543 = vst [vmem:[#allocation2 + $0xa4] sm:$0x1] %v1542
        %v1544 = vld [vmem:[#allocation2 + $0xa8] sm:$0xf]
        %v1545 = vsel %vm1417, %v950, %v1544
        %1546 = vst [vmem:[#allocation2 + $0xa8] sm:$0xf] %v1545
        %v1547 = vld [vmem:[#allocation2 + $0xac] sm:$0x1]
        %v1548 = vsel %vm389, %v951, %v1547
        %1549 = vst [vmem:[#allocation2 + $0xac] sm:$0x1] %v1548
        %v1550 = vld [vmem:[#allocation2 + $0xb0] sm:$0xf]
        %v1551 = vsel %vm1417, %v958, %v1550
        %1552 = vst [vmem:[#allocation2 + $0xb0] sm:$0xf] %v1551
        %v1553 = vld [vmem:[#allocation2 + $0xb4] sm:$0x1]
        %v1554 = vsel %vm389, %v959, %v1553
        %1555 = vst [vmem:[#allocation2 + $0xb4] sm:$0x1] %v1554
        %v1556 = vld [vmem:[#allocation2 + $0xb8] sm:$0xf]
        %v1557 = vsel %vm1417, %v966, %v1556
        %1558 = vst [vmem:[#allocation2 + $0xb8] sm:$0xf] %v1557
        %v1559 = vld [vmem:[#allocation2 + $0xbc] sm:$0x1]
        %v1560 = vsel %vm389, %v967, %v1559
        %1561 = vst [vmem:[#allocation2 + $0xbc] sm:$0x1] %v1560
        %v1562 = vld [vmem:[#allocation2 + $0xc0] sm:$0xf]
        %v1563 = vsel %vm1417, %v974, %v1562
        %1564 = vst [vmem:[#allocation2 + $0xc0] sm:$0xf] %v1563
        %v1565 = vld [vmem:[#allocation2 + $0xc4] sm:$0x1]
        %v1566 = vsel %vm389, %v975, %v1565
        %1567 = vst [vmem:[#allocation2 + $0xc4] sm:$0x1] %v1566
        %v1568 = vld [vmem:[#allocation2 + $0xc8] sm:$0xf]
        %v1569 = vsel %vm1417, %v982, %v1568
        %1570 = vst [vmem:[#allocation2 + $0xc8] sm:$0xf] %v1569
        %v1571 = vld [vmem:[#allocation2 + $0xcc] sm:$0x1]
        %v1572 = vsel %vm389, %v983, %v1571
        %1573 = vst [vmem:[#allocation2 + $0xcc] sm:$0x1] %v1572
        %v1574 = vld [vmem:[#allocation2 + $0xd0] sm:$0xf]
        %v1575 = vsel %vm1417, %v990, %v1574
        %1576 = vst [vmem:[#allocation2 + $0xd0] sm:$0xf] %v1575
        %v1577 = vld [vmem:[#allocation2 + $0xd4] sm:$0x1]
        %v1578 = vsel %vm389, %v991, %v1577
        %1579 = vst [vmem:[#allocation2 + $0xd4] sm:$0x1] %v1578
        %v1580 = vld [vmem:[#allocation2 + $0xd8] sm:$0xf]
        %v1581 = vsel %vm1417, %v998, %v1580
        %1582 = vst [vmem:[#allocation2 + $0xd8] sm:$0xf] %v1581
        %v1583 = vld [vmem:[#allocation2 + $0xdc] sm:$0x1]
        %v1584 = vsel %vm389, %v999, %v1583
        %1585 = vst [vmem:[#allocation2 + $0xdc] sm:$0x1] %v1584
        %v1586 = vld [vmem:[#allocation2 + $0xe0] sm:$0xf]
        %v1587 = vsel %vm1417, %v1006, %v1586
        %1588 = vst [vmem:[#allocation2 + $0xe0] sm:$0xf] %v1587
        %v1589 = vld [vmem:[#allocation2 + $0xe4] sm:$0x1]
        %v1590 = vsel %vm389, %v1007, %v1589
        %1591 = vst [vmem:[#allocation2 + $0xe4] sm:$0x1] %v1590
        %v1592 = vld [vmem:[#allocation2 + $0xe8] sm:$0xf]
        %v1593 = vsel %vm1417, %v1014, %v1592
        %1594 = vst [vmem:[#allocation2 + $0xe8] sm:$0xf] %v1593
        %v1595 = vld [vmem:[#allocation2 + $0xec] sm:$0x1]
        %v1596 = vsel %vm389, %v1015, %v1595
        %1597 = vst [vmem:[#allocation2 + $0xec] sm:$0x1] %v1596
        %v1598 = vld [vmem:[#allocation2 + $0xf0] sm:$0xf]
        %v1599 = vsel %vm1417, %v1022, %v1598
        %1600 = vst [vmem:[#allocation2 + $0xf0] sm:$0xf] %v1599
        %v1601 = vld [vmem:[#allocation2 + $0xf4] sm:$0x1]
        %v1602 = vsel %vm389, %v1023, %v1601
        %1603 = vst [vmem:[#allocation2 + $0xf4] sm:$0x1] %v1602
        %v1604 = vld [vmem:[#allocation2 + $0xf8] sm:$0xf]
        %v1605 = vsel %vm1417, %v1030, %v1604
        %1606 = vst [vmem:[#allocation2 + $0xf8] sm:$0xf] %v1605
        %v1607 = vld [vmem:[#allocation2 + $0xfc] sm:$0x1]
        %v1608 = vsel %vm389, %v1031, %v1607
        %1609 = vst [vmem:[#allocation2 + $0xfc] sm:$0x1] %v1608
        %v1610 = vld [vmem:[#allocation2 + $0x100] sm:$0xf]
        %v1611 = vsel %vm1417, %v1038, %v1610
        %1612 = vst [vmem:[#allocation2 + $0x100] sm:$0xf] %v1611
        %v1613 = vld [vmem:[#allocation2 + $0x104] sm:$0x1]
        %v1614 = vsel %vm389, %v1039, %v1613
        %1615 = vst [vmem:[#allocation2 + $0x104] sm:$0x1] %v1614
        %v1616 = vld [vmem:[#allocation2 + $0x108] sm:$0xf]
        %v1617 = vsel %vm1417, %v1046, %v1616
        %1618 = vst [vmem:[#allocation2 + $0x108] sm:$0xf] %v1617
        %v1619 = vld [vmem:[#allocation2 + $0x10c] sm:$0x1]
        %v1620 = vsel %vm389, %v1047, %v1619
        %1621 = vst [vmem:[#allocation2 + $0x10c] sm:$0x1] %v1620
        %v1622 = vld [vmem:[#allocation2 + $0x110] sm:$0xf]
        %v1623 = vsel %vm1417, %v1054, %v1622
        %1624 = vst [vmem:[#allocation2 + $0x110] sm:$0xf] %v1623
        %v1625 = vld [vmem:[#allocation2 + $0x114] sm:$0x1]
        %v1626 = vsel %vm389, %v1055, %v1625
        %1627 = vst [vmem:[#allocation2 + $0x114] sm:$0x1] %v1626
        %v1628 = vld [vmem:[#allocation2 + $0x118] sm:$0xf]
        %v1629 = vsel %vm1417, %v1062, %v1628
        %1630 = vst [vmem:[#allocation2 + $0x118] sm:$0xf] %v1629
        %v1631 = vld [vmem:[#allocation2 + $0x11c] sm:$0x1]
        %v1632 = vsel %vm389, %v1063, %v1631
        %1633 = vst [vmem:[#allocation2 + $0x11c] sm:$0x1] %v1632
        %v1634 = vld [vmem:[#allocation2 + $0x120] sm:$0xf]
        %v1635 = vsel %vm1417, %v1070, %v1634
        %1636 = vst [vmem:[#allocation2 + $0x120] sm:$0xf] %v1635
        %v1637 = vld [vmem:[#allocation2 + $0x124] sm:$0x1]
        %v1638 = vsel %vm389, %v1071, %v1637
        %1639 = vst [vmem:[#allocation2 + $0x124] sm:$0x1] %v1638
        %v1640 = vld [vmem:[#allocation2 + $0x128] sm:$0xf]
        %v1641 = vsel %vm1417, %v1078, %v1640
        %1642 = vst [vmem:[#allocation2 + $0x128] sm:$0xf] %v1641
        %v1643 = vld [vmem:[#allocation2 + $0x12c] sm:$0x1]
        %v1644 = vsel %vm389, %v1079, %v1643
        %1645 = vst [vmem:[#allocation2 + $0x12c] sm:$0x1] %v1644
        %v1646 = vld [vmem:[#allocation2 + $0x130] sm:$0xf]
        %v1647 = vsel %vm1417, %v1086, %v1646
        %1648 = vst [vmem:[#allocation2 + $0x130] sm:$0xf] %v1647
        %v1649 = vld [vmem:[#allocation2 + $0x134] sm:$0x1]
        %v1650 = vsel %vm389, %v1087, %v1649
        %1651 = vst [vmem:[#allocation2 + $0x134] sm:$0x1] %v1650
        %v1652 = vld [vmem:[#allocation2 + $0x138] sm:$0xf]
        %v1653 = vsel %vm1417, %v1094, %v1652
        %1654 = vst [vmem:[#allocation2 + $0x138] sm:$0xf] %v1653
        %v1655 = vld [vmem:[#allocation2 + $0x13c] sm:$0x1]
        %v1656 = vsel %vm389, %v1095, %v1655
        %1657 = vst [vmem:[#allocation2 + $0x13c] sm:$0x1] %v1656
        %v1658 = vld [vmem:[#allocation2 + $0x140] sm:$0xf]
        %v1659 = vsel %vm1417, %v1102, %v1658
        %1660 = vst [vmem:[#allocation2 + $0x140] sm:$0xf] %v1659
        %v1661 = vld [vmem:[#allocation2 + $0x144] sm:$0x1]
        %v1662 = vsel %vm389, %v1103, %v1661
        %1663 = vst [vmem:[#allocation2 + $0x144] sm:$0x1] %v1662
        %v1664 = vld [vmem:[#allocation2 + $0x148] sm:$0xf]
        %v1665 = vsel %vm1417, %v1110, %v1664
        %1666 = vst [vmem:[#allocation2 + $0x148] sm:$0xf] %v1665
        %v1667 = vld [vmem:[#allocation2 + $0x14c] sm:$0x1]
        %v1668 = vsel %vm389, %v1111, %v1667
        %1669 = vst [vmem:[#allocation2 + $0x14c] sm:$0x1] %v1668
        %v1670 = vld [vmem:[#allocation2 + $0x150] sm:$0xf]
        %v1671 = vsel %vm1417, %v1118, %v1670
        %1672 = vst [vmem:[#allocation2 + $0x150] sm:$0xf] %v1671
        %v1673 = vld [vmem:[#allocation2 + $0x154] sm:$0x1]
        %v1674 = vsel %vm389, %v1119, %v1673
        %1675 = vst [vmem:[#allocation2 + $0x154] sm:$0x1] %v1674
        %v1676 = vld [vmem:[#allocation2 + $0x158] sm:$0xf]
        %v1677 = vsel %vm1417, %v1126, %v1676
        %1678 = vst [vmem:[#allocation2 + $0x158] sm:$0xf] %v1677
        %v1679 = vld [vmem:[#allocation2 + $0x15c] sm:$0x1]
        %v1680 = vsel %vm389, %v1127, %v1679
        %1681 = vst [vmem:[#allocation2 + $0x15c] sm:$0x1] %v1680
        %v1682 = vld [vmem:[#allocation2 + $0x160] sm:$0xf]
        %v1683 = vsel %vm1417, %v1134, %v1682
        %1684 = vst [vmem:[#allocation2 + $0x160] sm:$0xf] %v1683
        %v1685 = vld [vmem:[#allocation2 + $0x164] sm:$0x1]
        %v1686 = vsel %vm389, %v1135, %v1685
        %1687 = vst [vmem:[#allocation2 + $0x164] sm:$0x1] %v1686
        %v1688 = vld [vmem:[#allocation2 + $0x168] sm:$0xf]
        %v1689 = vsel %vm1417, %v1142, %v1688
        %1690 = vst [vmem:[#allocation2 + $0x168] sm:$0xf] %v1689
        %v1691 = vld [vmem:[#allocation2 + $0x16c] sm:$0x1]
        %v1692 = vsel %vm389, %v1143, %v1691
        %1693 = vst [vmem:[#allocation2 + $0x16c] sm:$0x1] %v1692
        %v1694 = vld [vmem:[#allocation2 + $0x170] sm:$0xf]
        %v1695 = vsel %vm1417, %v1150, %v1694
        %1696 = vst [vmem:[#allocation2 + $0x170] sm:$0xf] %v1695
        %v1697 = vld [vmem:[#allocation2 + $0x174] sm:$0x1]
        %v1698 = vsel %vm389, %v1151, %v1697
        %1699 = vst [vmem:[#allocation2 + $0x174] sm:$0x1] %v1698
        %v1700 = vld [vmem:[#allocation2 + $0x178] sm:$0xf]
        %v1701 = vsel %vm1417, %v1158, %v1700
        %1702 = vst [vmem:[#allocation2 + $0x178] sm:$0xf] %v1701
        %v1703 = vld [vmem:[#allocation2 + $0x17c] sm:$0x1]
        %v1704 = vsel %vm389, %v1159, %v1703
        %1705 = vst [vmem:[#allocation2 + $0x17c] sm:$0x1] %v1704
        %v1706 = vld [vmem:[#allocation2 + $0x180] sm:$0xf]
        %v1707 = vsel %vm1417, %v1166, %v1706
        %1708 = vst [vmem:[#allocation2 + $0x180] sm:$0xf] %v1707
        %v1709 = vld [vmem:[#allocation2 + $0x184] sm:$0x1]
        %v1710 = vsel %vm389, %v1167, %v1709
        %1711 = vst [vmem:[#allocation2 + $0x184] sm:$0x1] %v1710
        %v1712 = vld [vmem:[#allocation2 + $0x188] sm:$0xf]
        %v1713 = vsel %vm1417, %v1174, %v1712
        %1714 = vst [vmem:[#allocation2 + $0x188] sm:$0xf] %v1713
        %v1715 = vld [vmem:[#allocation2 + $0x18c] sm:$0x1]
        %v1716 = vsel %vm389, %v1175, %v1715
        %1717 = vst [vmem:[#allocation2 + $0x18c] sm:$0x1] %v1716
        %v1718 = vld [vmem:[#allocation2 + $0x190] sm:$0xf]
        %v1719 = vsel %vm1417, %v1182, %v1718
        %1720 = vst [vmem:[#allocation2 + $0x190] sm:$0xf] %v1719
        %v1721 = vld [vmem:[#allocation2 + $0x194] sm:$0x1]
        %v1722 = vsel %vm389, %v1183, %v1721
        %1723 = vst [vmem:[#allocation2 + $0x194] sm:$0x1] %v1722
        %v1724 = vld [vmem:[#allocation2 + $0x198] sm:$0xf]
        %v1725 = vsel %vm1417, %v1190, %v1724
        %1726 = vst [vmem:[#allocation2 + $0x198] sm:$0xf] %v1725
        %v1727 = vld [vmem:[#allocation2 + $0x19c] sm:$0x1]
        %v1728 = vsel %vm389, %v1191, %v1727
        %1729 = vst [vmem:[#allocation2 + $0x19c] sm:$0x1] %v1728
        %v1730 = vld [vmem:[#allocation2 + $0x1a0] sm:$0xf]
        %v1731 = vsel %vm1417, %v1198, %v1730
        %1732 = vst [vmem:[#allocation2 + $0x1a0] sm:$0xf] %v1731
        %v1733 = vld [vmem:[#allocation2 + $0x1a4] sm:$0x1]
        %v1734 = vsel %vm389, %v1199, %v1733
        %1735 = vst [vmem:[#allocation2 + $0x1a4] sm:$0x1] %v1734
        %v1736 = vld [vmem:[#allocation2 + $0x1a8] sm:$0xf]
        %v1737 = vsel %vm1417, %v1206, %v1736
        %1738 = vst [vmem:[#allocation2 + $0x1a8] sm:$0xf] %v1737
        %v1739 = vld [vmem:[#allocation2 + $0x1ac] sm:$0x1]
        %v1740 = vsel %vm389, %v1207, %v1739
        %1741 = vst [vmem:[#allocation2 + $0x1ac] sm:$0x1] %v1740
        %v1742 = vld [vmem:[#allocation2 + $0x1b0] sm:$0xf]
        %v1743 = vsel %vm1417, %v1214, %v1742
        %1744 = vst [vmem:[#allocation2 + $0x1b0] sm:$0xf] %v1743
        %v1745 = vld [vmem:[#allocation2 + $0x1b4] sm:$0x1]
        %v1746 = vsel %vm389, %v1215, %v1745
        %1747 = vst [vmem:[#allocation2 + $0x1b4] sm:$0x1] %v1746
        %v1748 = vld [vmem:[#allocation2 + $0x1b8] sm:$0xf]
        %v1749 = vsel %vm1417, %v1222, %v1748
        %1750 = vst [vmem:[#allocation2 + $0x1b8] sm:$0xf] %v1749
        %v1751 = vld [vmem:[#allocation2 + $0x1bc] sm:$0x1]
        %v1752 = vsel %vm389, %v1223, %v1751
        %1753 = vst [vmem:[#allocation2 + $0x1bc] sm:$0x1] %v1752
        %v1754 = vld [vmem:[#allocation2 + $0x1c0] sm:$0xf]
        %v1755 = vsel %vm1417, %v1230, %v1754
        %1756 = vst [vmem:[#allocation2 + $0x1c0] sm:$0xf] %v1755
        %v1757 = vld [vmem:[#allocation2 + $0x1c4] sm:$0x1]
        %v1758 = vsel %vm389, %v1231, %v1757
        %1759 = vst [vmem:[#allocation2 + $0x1c4] sm:$0x1] %v1758
        %v1760 = vld [vmem:[#allocation2 + $0x1c8] sm:$0xf]
        %v1761 = vsel %vm1417, %v1238, %v1760
        %1762 = vst [vmem:[#allocation2 + $0x1c8] sm:$0xf] %v1761
        %v1763 = vld [vmem:[#allocation2 + $0x1cc] sm:$0x1]
        %v1764 = vsel %vm389, %v1239, %v1763
        %1765 = vst [vmem:[#allocation2 + $0x1cc] sm:$0x1] %v1764
        %v1766 = vld [vmem:[#allocation2 + $0x1d0] sm:$0xf]
        %v1767 = vsel %vm1417, %v1246, %v1766
        %1768 = vst [vmem:[#allocation2 + $0x1d0] sm:$0xf] %v1767
        %v1769 = vld [vmem:[#allocation2 + $0x1d4] sm:$0x1]
        %v1770 = vsel %vm389, %v1247, %v1769
        %1771 = vst [vmem:[#allocation2 + $0x1d4] sm:$0x1] %v1770
        %v1772 = vld [vmem:[#allocation2 + $0x1d8] sm:$0xf]
        %v1773 = vsel %vm1417, %v1254, %v1772
        %1774 = vst [vmem:[#allocation2 + $0x1d8] sm:$0xf] %v1773
        %v1775 = vld [vmem:[#allocation2 + $0x1dc] sm:$0x1]
        %v1776 = vsel %vm389, %v1255, %v1775
        %1777 = vst [vmem:[#allocation2 + $0x1dc] sm:$0x1] %v1776
        %v1778 = vld [vmem:[#allocation2 + $0x1e0] sm:$0xf]
        %v1779 = vsel %vm1417, %v1262, %v1778
        %1780 = vst [vmem:[#allocation2 + $0x1e0] sm:$0xf] %v1779
        %v1781 = vld [vmem:[#allocation2 + $0x1e4] sm:$0x1]
        %v1782 = vsel %vm389, %v1263, %v1781
        %1783 = vst [vmem:[#allocation2 + $0x1e4] sm:$0x1] %v1782
        %v1784 = vld [vmem:[#allocation2 + $0x1e8] sm:$0xf]
        %v1785 = vsel %vm1417, %v1270, %v1784
        %1786 = vst [vmem:[#allocation2 + $0x1e8] sm:$0xf] %v1785
        %v1787 = vld [vmem:[#allocation2 + $0x1ec] sm:$0x1]
        %v1788 = vsel %vm389, %v1271, %v1787
        %1789 = vst [vmem:[#allocation2 + $0x1ec] sm:$0x1] %v1788
        %v1790 = vld [vmem:[#allocation2 + $0x1f0] sm:$0xf]
        %v1791 = vsel %vm1417, %v1278, %v1790
        %1792 = vst [vmem:[#allocation2 + $0x1f0] sm:$0xf] %v1791
        %v1793 = vld [vmem:[#allocation2 + $0x1f4] sm:$0x1]
        %v1794 = vsel %vm389, %v1279, %v1793
        %1795 = vst [vmem:[#allocation2 + $0x1f4] sm:$0x1] %v1794
        %v1796 = vld [vmem:[#allocation2 + $0x1f8] sm:$0xf]
        %v1797 = vsel %vm1417, %v1286, %v1796
        %1798 = vst [vmem:[#allocation2 + $0x1f8] sm:$0xf] %v1797
        %v1799 = vld [vmem:[#allocation2 + $0x1fc] sm:$0x1]
        %v1800 = vsel %vm389, %v1287, %v1799
        %1801 = vst [vmem:[#allocation2 + $0x1fc] sm:$0x1] %v1800
        %v1802 = vld [vmem:[#allocation2] sm:$0xf]
        %v1803 = vld [vmem:[#allocation2 + $0x8] sm:$0xf]
        %v1804 = vld [vmem:[#allocation2 + $0x10] sm:$0xf]
        %v1805 = vld [vmem:[#allocation2 + $0x18] sm:$0xf]
        %v1806 = vld [vmem:[#allocation2 + $0x20] sm:$0xf]
        %v1807 = vld [vmem:[#allocation2 + $0x28] sm:$0xf]
        %v1808 = vld [vmem:[#allocation2 + $0x30] sm:$0xf]
        %v1809 = vld [vmem:[#allocation2 + $0x38] sm:$0xf]
        %v1810 = vld [vmem:[#allocation2 + $0x40] sm:$0xf]
        %v1811 = vld [vmem:[#allocation2 + $0x48] sm:$0xf]
        %v1812 = vld [vmem:[#allocation2 + $0x50] sm:$0xf]
        %v1813 = vld [vmem:[#allocation2 + $0x58] sm:$0xf]
        %v1814 = vld [vmem:[#allocation2 + $0x60] sm:$0xf]
        %v1815 = vld [vmem:[#allocation2 + $0x68] sm:$0xf]
        %v1816 = vld [vmem:[#allocation2 + $0x70] sm:$0xf]
        %v1817 = vld [vmem:[#allocation2 + $0x78] sm:$0xf]
        %v1818 = vld [vmem:[#allocation2 + $0x80] sm:$0xf]
        %v1819 = vld [vmem:[#allocation2 + $0x88] sm:$0xf]
        %v1820 = vld [vmem:[#allocation2 + $0x90] sm:$0xf]
        %v1821 = vld [vmem:[#allocation2 + $0x98] sm:$0xf]
        %v1822 = vld [vmem:[#allocation2 + $0xa0] sm:$0xf]
        %v1823 = vld [vmem:[#allocation2 + $0xa8] sm:$0xf]
        %v1824 = vld [vmem:[#allocation2 + $0xb0] sm:$0xf]
        %v1825 = vld [vmem:[#allocation2 + $0xb8] sm:$0xf]
        %v1826 = vld [vmem:[#allocation2 + $0xc0] sm:$0xf]
        %v1827 = vld [vmem:[#allocation2 + $0xc8] sm:$0xf]
        %v1828 = vld [vmem:[#allocation2 + $0xd0] sm:$0xf]
        %v1829 = vld [vmem:[#allocation2 + $0xd8] sm:$0xf]
        %v1830 = vld [vmem:[#allocation2 + $0xe0] sm:$0xf]
        %v1831 = vld [vmem:[#allocation2 + $0xe8] sm:$0xf]
        %v1832 = vld [vmem:[#allocation2 + $0xf0] sm:$0xf]
        %v1833 = vld [vmem:[#allocation2 + $0xf8] sm:$0xf]
        %v1834 = vld [vmem:[#allocation2 + $0x100] sm:$0xf]
        %v1835 = vld [vmem:[#allocation2 + $0x108] sm:$0xf]
        %v1836 = vld [vmem:[#allocation2 + $0x110] sm:$0xf]
        %v1837 = vld [vmem:[#allocation2 + $0x118] sm:$0xf]
        %v1838 = vld [vmem:[#allocation2 + $0x120] sm:$0xf]
        %v1839 = vld [vmem:[#allocation2 + $0x128] sm:$0xf]
        %v1840 = vld [vmem:[#allocation2 + $0x130] sm:$0xf]
        %v1841 = vld [vmem:[#allocation2 + $0x138] sm:$0xf]
        %v1842 = vld [vmem:[#allocation2 + $0x140] sm:$0xf]
        %v1843 = vld [vmem:[#allocation2 + $0x148] sm:$0xf]
        %v1844 = vld [vmem:[#allocation2 + $0x150] sm:$0xf]
        %v1845 = vld [vmem:[#allocation2 + $0x158] sm:$0xf]
        %v1846 = vld [vmem:[#allocation2 + $0x160] sm:$0xf]
        %v1847 = vld [vmem:[#allocation2 + $0x168] sm:$0xf]
        %v1848 = vld [vmem:[#allocation2 + $0x170] sm:$0xf]
        %v1849 = vld [vmem:[#allocation2 + $0x178] sm:$0xf]
        %v1850 = vld [vmem:[#allocation2 + $0x180] sm:$0xf]
        %v1851 = vld [vmem:[#allocation2 + $0x188] sm:$0xf]
        %v1852 = vld [vmem:[#allocation2 + $0x190] sm:$0xf]
        %v1853 = vld [vmem:[#allocation2 + $0x198] sm:$0xf]
        %v1854 = vld [vmem:[#allocation2 + $0x1a0] sm:$0xf]
        %v1855 = vld [vmem:[#allocation2 + $0x1a8] sm:$0xf]
        %v1856 = vld [vmem:[#allocation2 + $0x1b0] sm:$0xf]
        %v1857 = vld [vmem:[#allocation2 + $0x1b8] sm:$0xf]
        %v1858 = vld [vmem:[#allocation2 + $0x1c0] sm:$0xf]
        %v1859 = vld [vmem:[#allocation2 + $0x1c8] sm:$0xf]
        %v1860 = vld [vmem:[#allocation2 + $0x1d0] sm:$0xf]
        %v1861 = vld [vmem:[#allocation2 + $0x1d8] sm:$0xf]
        %v1862 = vld [vmem:[#allocation2 + $0x1e0] sm:$0xf]
        %v1863 = vld [vmem:[#allocation2 + $0x1e8] sm:$0xf]
        %v1864 = vld [vmem:[#allocation2 + $0x1f0] sm:$0xf]
        %v1865 = vld [vmem:[#allocation2 + $0x1f8] sm:$0xf]
        %v1866 = vld [vmem:[#allocation2 + $0x4] sm:$0x1]
        %v1867 = vld [vmem:[#allocation2 + $0xc] sm:$0x1]
        %v1868 = vld [vmem:[#allocation2 + $0x14] sm:$0x1]
        %v1869 = vld [vmem:[#allocation2 + $0x1c] sm:$0x1]
        %v1870 = vld [vmem:[#allocation2 + $0x24] sm:$0x1]
        %v1871 = vld [vmem:[#allocation2 + $0x2c] sm:$0x1]
        %v1872 = vld [vmem:[#allocation2 + $0x34] sm:$0x1]
        %v1873 = vld [vmem:[#allocation2 + $0x3c] sm:$0x1]
        %v1874 = vld [vmem:[#allocation2 + $0x44] sm:$0x1]
        %v1875 = vld [vmem:[#allocation2 + $0x4c] sm:$0x1]
        %v1876 = vld [vmem:[#allocation2 + $0x54] sm:$0x1]
        %v1877 = vld [vmem:[#allocation2 + $0x5c] sm:$0x1]
        %v1878 = vld [vmem:[#allocation2 + $0x64] sm:$0x1]
        %v1879 = vld [vmem:[#allocation2 + $0x6c] sm:$0x1]
        %v1880 = vld [vmem:[#allocation2 + $0x74] sm:$0x1]
        %v1881 = vld [vmem:[#allocation2 + $0x7c] sm:$0x1]
        %v1882 = vld [vmem:[#allocation2 + $0x84] sm:$0x1]
        %v1883 = vld [vmem:[#allocation2 + $0x8c] sm:$0x1]
        %v1884 = vld [vmem:[#allocation2 + $0x94] sm:$0x1]
        %v1885 = vld [vmem:[#allocation2 + $0x9c] sm:$0x1]
        %v1886 = vld [vmem:[#allocation2 + $0xa4] sm:$0x1]
        %v1887 = vld [vmem:[#allocation2 + $0xac] sm:$0x1]
        %v1888 = vld [vmem:[#allocation2 + $0xb4] sm:$0x1]
        %v1889 = vld [vmem:[#allocation2 + $0xbc] sm:$0x1]
        %v1890 = vld [vmem:[#allocation2 + $0xc4] sm:$0x1]
        %v1891 = vld [vmem:[#allocation2 + $0xcc] sm:$0x1]
        %v1892 = vld [vmem:[#allocation2 + $0xd4] sm:$0x1]
        %v1893 = vld [vmem:[#allocation2 + $0xdc] sm:$0x1]
        %v1894 = vld [vmem:[#allocation2 + $0xe4] sm:$0x1]
        %v1895 = vld [vmem:[#allocation2 + $0xec] sm:$0x1]
        %v1896 = vld [vmem:[#allocation2 + $0xf4] sm:$0x1]
        %v1897 = vld [vmem:[#allocation2 + $0xfc] sm:$0x1]
        %v1898 = vld [vmem:[#allocation2 + $0x104] sm:$0x1]
        %v1899 = vld [vmem:[#allocation2 + $0x10c] sm:$0x1]
        %v1900 = vld [vmem:[#allocation2 + $0x114] sm:$0x1]
        %v1901 = vld [vmem:[#allocation2 + $0x11c] sm:$0x1]
        %v1902 = vld [vmem:[#allocation2 + $0x124] sm:$0x1]
        %v1903 = vld [vmem:[#allocation2 + $0x12c] sm:$0x1]
        %v1904 = vld [vmem:[#allocation2 + $0x134] sm:$0x1]
        %v1905 = vld [vmem:[#allocation2 + $0x13c] sm:$0x1]
        %v1906 = vld [vmem:[#allocation2 + $0x144] sm:$0x1]
        %v1907 = vld [vmem:[#allocation2 + $0x14c] sm:$0x1]
        %v1908 = vld [vmem:[#allocation2 + $0x154] sm:$0x1]
        %v1909 = vld [vmem:[#allocation2 + $0x15c] sm:$0x1]
        %v1910 = vld [vmem:[#allocation2 + $0x164] sm:$0x1]
        %v1911 = vld [vmem:[#allocation2 + $0x16c] sm:$0x1]
        %v1912 = vld [vmem:[#allocation2 + $0x174] sm:$0x1]
        %v1913 = vld [vmem:[#allocation2 + $0x17c] sm:$0x1]
        %v1914 = vld [vmem:[#allocation2 + $0x184] sm:$0x1]
        %v1915 = vld [vmem:[#allocation2 + $0x18c] sm:$0x1]
        %v1916 = vld [vmem:[#allocation2 + $0x194] sm:$0x1]
        %v1917 = vld [vmem:[#allocation2 + $0x19c] sm:$0x1]
        %v1918 = vld [vmem:[#allocation2 + $0x1a4] sm:$0x1]
        %v1919 = vld [vmem:[#allocation2 + $0x1ac] sm:$0x1]
        %v1920 = vld [vmem:[#allocation2 + $0x1b4] sm:$0x1]
        %v1921 = vld [vmem:[#allocation2 + $0x1bc] sm:$0x1]
        %v1922 = vld [vmem:[#allocation2 + $0x1c4] sm:$0x1]
        %v1923 = vld [vmem:[#allocation2 + $0x1cc] sm:$0x1]
        %v1924 = vld [vmem:[#allocation2 + $0x1d4] sm:$0x1]
        %v1925 = vld [vmem:[#allocation2 + $0x1dc] sm:$0x1]
        %v1926 = vld [vmem:[#allocation2 + $0x1e4] sm:$0x1]
        %v1927 = vld [vmem:[#allocation2 + $0x1ec] sm:$0x1]
        %v1928 = vld [vmem:[#allocation2 + $0x1f4] sm:$0x1]
        %v1929 = vld [vmem:[#allocation2 + $0x1fc] sm:$0x1]
        %v1930 = vld [vmem:[#allocation2] sm:$0xe]
        %v1931 = vld [vmem:[#allocation2 + $0x8] sm:$0xe]
        %v1932 = vld [vmem:[#allocation2 + $0x10] sm:$0xe]
        %v1933 = vld [vmem:[#allocation2 + $0x18] sm:$0xe]
        %v1934 = vld [vmem:[#allocation2 + $0x20] sm:$0xe]
        %v1935 = vld [vmem:[#allocation2 + $0x28] sm:$0xe]
        %v1936 = vld [vmem:[#allocation2 + $0x30] sm:$0xe]
        %v1937 = vld [vmem:[#allocation2 + $0x38] sm:$0xe]
        %v1938 = vld [vmem:[#allocation2 + $0x40] sm:$0xe]
        %v1939 = vld [vmem:[#allocation2 + $0x48] sm:$0xe]
        %v1940 = vld [vmem:[#allocation2 + $0x50] sm:$0xe]
        %v1941 = vld [vmem:[#allocation2 + $0x58] sm:$0xe]
        %v1942 = vld [vmem:[#allocation2 + $0x60] sm:$0xe]
        %v1943 = vld [vmem:[#allocation2 + $0x68] sm:$0xe]
        %v1944 = vld [vmem:[#allocation2 + $0x70] sm:$0xe]
        %v1945 = vld [vmem:[#allocation2 + $0x78] sm:$0xe]
        %v1946 = vld [vmem:[#allocation2 + $0x80] sm:$0xe]
        %v1947 = vld [vmem:[#allocation2 + $0x88] sm:$0xe]
        %v1948 = vld [vmem:[#allocation2 + $0x90] sm:$0xe]
        %v1949 = vld [vmem:[#allocation2 + $0x98] sm:$0xe]
        %v1950 = vld [vmem:[#allocation2 + $0xa0] sm:$0xe]
        %v1951 = vld [vmem:[#allocation2 + $0xa8] sm:$0xe]
        %v1952 = vld [vmem:[#allocation2 + $0xb0] sm:$0xe]
        %v1953 = vld [vmem:[#allocation2 + $0xb8] sm:$0xe]
        %v1954 = vld [vmem:[#allocation2 + $0xc0] sm:$0xe]
        %v1955 = vld [vmem:[#allocation2 + $0xc8] sm:$0xe]
        %v1956 = vld [vmem:[#allocation2 + $0xd0] sm:$0xe]
        %v1957 = vld [vmem:[#allocation2 + $0xd8] sm:$0xe]
        %v1958 = vld [vmem:[#allocation2 + $0xe0] sm:$0xe]
        %v1959 = vld [vmem:[#allocation2 + $0xe8] sm:$0xe]
        %v1960 = vld [vmem:[#allocation2 + $0xf0] sm:$0xe]
        %v1961 = vld [vmem:[#allocation2 + $0xf8] sm:$0xe]
        %v1962 = vld [vmem:[#allocation2 + $0x100] sm:$0xe]
        %v1963 = vld [vmem:[#allocation2 + $0x108] sm:$0xe]
        %v1964 = vld [vmem:[#allocation2 + $0x110] sm:$0xe]
        %v1965 = vld [vmem:[#allocation2 + $0x118] sm:$0xe]
        %v1966 = vld [vmem:[#allocation2 + $0x120] sm:$0xe]
        %v1967 = vld [vmem:[#allocation2 + $0x128] sm:$0xe]
        %v1968 = vld [vmem:[#allocation2 + $0x130] sm:$0xe]
        %v1969 = vld [vmem:[#allocation2 + $0x138] sm:$0xe]
        %v1970 = vld [vmem:[#allocation2 + $0x140] sm:$0xe]
        %v1971 = vld [vmem:[#allocation2 + $0x148] sm:$0xe]
        %v1972 = vld [vmem:[#allocation2 + $0x150] sm:$0xe]
        %v1973 = vld [vmem:[#allocation2 + $0x158] sm:$0xe]
        %v1974 = vld [vmem:[#allocation2 + $0x160] sm:$0xe]
        %v1975 = vld [vmem:[#allocation2 + $0x168] sm:$0xe]
        %v1976 = vld [vmem:[#allocation2 + $0x170] sm:$0xe]
        %v1977 = vld [vmem:[#allocation2 + $0x178] sm:$0xe]
        %v1978 = vld [vmem:[#allocation2 + $0x180] sm:$0xe]
        %v1979 = vld [vmem:[#allocation2 + $0x188] sm:$0xe]
        %v1980 = vld [vmem:[#allocation2 + $0x190] sm:$0xe]
        %v1981 = vld [vmem:[#allocation2 + $0x198] sm:$0xe]
        %v1982 = vld [vmem:[#allocation2 + $0x1a0] sm:$0xe]
        %v1983 = vld [vmem:[#allocation2 + $0x1a8] sm:$0xe]
        %v1984 = vld [vmem:[#allocation2 + $0x1b0] sm:$0xe]
        %v1985 = vld [vmem:[#allocation2 + $0x1b8] sm:$0xe]
        %v1986 = vld [vmem:[#allocation2 + $0x1c0] sm:$0xe]
        %v1987 = vld [vmem:[#allocation2 + $0x1c8] sm:$0xe]
        %v1988 = vld [vmem:[#allocation2 + $0x1d0] sm:$0xe]
        %v1989 = vld [vmem:[#allocation2 + $0x1d8] sm:$0xe]
        %v1990 = vld [vmem:[#allocation2 + $0x1e0] sm:$0xe]
        %v1991 = vld [vmem:[#allocation2 + $0x1e8] sm:$0xe]
        %v1992 = vld [vmem:[#allocation2 + $0x1f0] sm:$0xe]
        %v1993 = vld [vmem:[#allocation2 + $0x1f8] sm:$0xe]
        %v2122 = vunpack.c.l.b16 %v1802
        %v2123 = vunpack.c.l.b16 %v1866
        %v2124 = vunpack.c.l.b16 %v1803
        %v2125 = vunpack.c.l.b16 %v1867
        %v2126 = vunpack.c.l.b16 %v1804
        %v2127 = vunpack.c.l.b16 %v1868
        %v2128 = vunpack.c.l.b16 %v1805
        %v2129 = vunpack.c.l.b16 %v1869
        %v2130 = vunpack.c.l.b16 %v1806
        %v2131 = vunpack.c.l.b16 %v1870
        %v2132 = vunpack.c.l.b16 %v1807
        %v2133 = vunpack.c.l.b16 %v1871
        %v2134 = vunpack.c.l.b16 %v1808
        %v2135 = vunpack.c.l.b16 %v1872
        %v2136 = vunpack.c.l.b16 %v1809
        %v2137 = vunpack.c.l.b16 %v1873
        %v2138 = vunpack.c.l.b16 %v1810
        %v2139 = vunpack.c.l.b16 %v1874
        %v2140 = vunpack.c.l.b16 %v1811
        %v2141 = vunpack.c.l.b16 %v1875
        %v2142 = vunpack.c.l.b16 %v1812
        %v2143 = vunpack.c.l.b16 %v1876
        %v2144 = vunpack.c.l.b16 %v1813
        %v2145 = vunpack.c.l.b16 %v1877
        %v2146 = vunpack.c.l.b16 %v1814
        %v2147 = vunpack.c.l.b16 %v1878
        %v2148 = vunpack.c.l.b16 %v1815
        %v2149 = vunpack.c.l.b16 %v1879
        %v2150 = vunpack.c.l.b16 %v1816
        %v2151 = vunpack.c.l.b16 %v1880
        %v2152 = vunpack.c.l.b16 %v1817
        %v2153 = vunpack.c.l.b16 %v1881
        %v2154 = vunpack.c.l.b16 %v1818
        %v2155 = vunpack.c.l.b16 %v1882
        %v2156 = vunpack.c.l.b16 %v1819
        %v2157 = vunpack.c.l.b16 %v1883
        %v2158 = vunpack.c.l.b16 %v1820
        %v2159 = vunpack.c.l.b16 %v1884
        %v2160 = vunpack.c.l.b16 %v1821
        %v2161 = vunpack.c.l.b16 %v1885
        %v2162 = vunpack.c.l.b16 %v1822
        %v2163 = vunpack.c.l.b16 %v1886
        %v2164 = vunpack.c.l.b16 %v1823
        %v2165 = vunpack.c.l.b16 %v1887
        %v2166 = vunpack.c.l.b16 %v1824
        %v2167 = vunpack.c.l.b16 %v1888
        %v2168 = vunpack.c.l.b16 %v1825
        %v2169 = vunpack.c.l.b16 %v1889
        %v2170 = vunpack.c.l.b16 %v1826
        %v2171 = vunpack.c.l.b16 %v1890
        %v2172 = vunpack.c.l.b16 %v1827
        %v2173 = vunpack.c.l.b16 %v1891
        %v2174 = vunpack.c.l.b16 %v1828
        %v2175 = vunpack.c.l.b16 %v1892
        %v2176 = vunpack.c.l.b16 %v1829
        %v2177 = vunpack.c.l.b16 %v1893
        %v2178 = vunpack.c.l.b16 %v1830
        %v2179 = vunpack.c.l.b16 %v1894
        %v2180 = vunpack.c.l.b16 %v1831
        %v2181 = vunpack.c.l.b16 %v1895
        %v2182 = vunpack.c.l.b16 %v1832
        %v2183 = vunpack.c.l.b16 %v1896
        %v2184 = vunpack.c.l.b16 %v1833
        %v2185 = vunpack.c.l.b16 %v1897
        %v2186 = vunpack.c.l.b16 %v1834
        %v2187 = vunpack.c.l.b16 %v1898
        %v2188 = vunpack.c.l.b16 %v1835
        %v2189 = vunpack.c.l.b16 %v1899
        %v2190 = vunpack.c.l.b16 %v1836
        %v2191 = vunpack.c.l.b16 %v1900
        %v2192 = vunpack.c.l.b16 %v1837
        %v2193 = vunpack.c.l.b16 %v1901
        %v2194 = vunpack.c.l.b16 %v1838
        %v2195 = vunpack.c.l.b16 %v1902
        %v2196 = vunpack.c.l.b16 %v1839
        %v2197 = vunpack.c.l.b16 %v1903
        %v2198 = vunpack.c.l.b16 %v1840
        %v2199 = vunpack.c.l.b16 %v1904
        %v2200 = vunpack.c.l.b16 %v1841
        %v2201 = vunpack.c.l.b16 %v1905
        %v2202 = vunpack.c.l.b16 %v1842
        %v2203 = vunpack.c.l.b16 %v1906
        %v2204 = vunpack.c.l.b16 %v1843
        %v2205 = vunpack.c.l.b16 %v1907
        %v2206 = vunpack.c.l.b16 %v1844
        %v2207 = vunpack.c.l.b16 %v1908
        %v2208 = vunpack.c.l.b16 %v1845
        %v2209 = vunpack.c.l.b16 %v1909
        %v2210 = vunpack.c.l.b16 %v1846
        %v2211 = vunpack.c.l.b16 %v1910
        %v2212 = vunpack.c.l.b16 %v1847
        %v2213 = vunpack.c.l.b16 %v1911
        %v2214 = vunpack.c.l.b16 %v1848
        %v2215 = vunpack.c.l.b16 %v1912
        %v2216 = vunpack.c.l.b16 %v1849
        %v2217 = vunpack.c.l.b16 %v1913
        %v2218 = vunpack.c.l.b16 %v1850
        %v2219 = vunpack.c.l.b16 %v1914
        %v2220 = vunpack.c.l.b16 %v1851
        %v2221 = vunpack.c.l.b16 %v1915
        %v2222 = vunpack.c.l.b16 %v1852
        %v2223 = vunpack.c.l.b16 %v1916
        %v2224 = vunpack.c.l.b16 %v1853
        %v2225 = vunpack.c.l.b16 %v1917
        %v2226 = vunpack.c.l.b16 %v1854
        %v2227 = vunpack.c.l.b16 %v1918
        %v2228 = vunpack.c.l.b16 %v1855
        %v2229 = vunpack.c.l.b16 %v1919
        %v2230 = vunpack.c.l.b16 %v1856
        %v2231 = vunpack.c.l.b16 %v1920
        %v2232 = vunpack.c.l.b16 %v1857
        %v2233 = vunpack.c.l.b16 %v1921
        %v2234 = vunpack.c.l.b16 %v1858
        %v2235 = vunpack.c.l.b16 %v1922
        %v2236 = vunpack.c.l.b16 %v1859
        %v2237 = vunpack.c.l.b16 %v1923
        %v2238 = vunpack.c.l.b16 %v1860
        %v2239 = vunpack.c.l.b16 %v1924
        %v2240 = vunpack.c.l.b16 %v1861
        %v2241 = vunpack.c.l.b16 %v1925
        %v2242 = vunpack.c.l.b16 %v1862
        %v2243 = vunpack.c.l.b16 %v1926
        %v2244 = vunpack.c.l.b16 %v1863
        %v2245 = vunpack.c.l.b16 %v1927
        %v2246 = vunpack.c.l.b16 %v1864
        %v2247 = vunpack.c.l.b16 %v1928
        %v2248 = vunpack.c.l.b16 %v1865
        %v2249 = vunpack.c.l.b16 %v1929
        %v2250 = vpack.c.b16 %v2123, %v2122
        %v2251 = vpack.c.b16 %v2125, %v2124
        %v2252 = vpack.c.b16 %v2127, %v2126
        %v2253 = vpack.c.b16 %v2129, %v2128
        %v2254 = vpack.c.b16 %v2131, %v2130
        %v2255 = vpack.c.b16 %v2133, %v2132
        %v2256 = vpack.c.b16 %v2135, %v2134
        %v2257 = vpack.c.b16 %v2137, %v2136
        %v2258 = vpack.c.b16 %v2139, %v2138
        %v2259 = vpack.c.b16 %v2141, %v2140
        %v2260 = vpack.c.b16 %v2143, %v2142
        %v2261 = vpack.c.b16 %v2145, %v2144
        %v2262 = vpack.c.b16 %v2147, %v2146
        %v2263 = vpack.c.b16 %v2149, %v2148
        %v2264 = vpack.c.b16 %v2151, %v2150
        %v2265 = vpack.c.b16 %v2153, %v2152
        %v2266 = vpack.c.b16 %v2155, %v2154
        %v2267 = vpack.c.b16 %v2157, %v2156
        %v2268 = vpack.c.b16 %v2159, %v2158
        %v2269 = vpack.c.b16 %v2161, %v2160
        %v2270 = vpack.c.b16 %v2163, %v2162
        %v2271 = vpack.c.b16 %v2165, %v2164
        %v2272 = vpack.c.b16 %v2167, %v2166
        %v2273 = vpack.c.b16 %v2169, %v2168
        %v2274 = vpack.c.b16 %v2171, %v2170
        %v2275 = vpack.c.b16 %v2173, %v2172
        %v2276 = vpack.c.b16 %v2175, %v2174
        %v2277 = vpack.c.b16 %v2177, %v2176
        %v2278 = vpack.c.b16 %v2179, %v2178
        %v2279 = vpack.c.b16 %v2181, %v2180
        %v2280 = vpack.c.b16 %v2183, %v2182
        %v2281 = vpack.c.b16 %v2185, %v2184
        %v2282 = vpack.c.b16 %v2187, %v2186
        %v2283 = vpack.c.b16 %v2189, %v2188
        %v2284 = vpack.c.b16 %v2191, %v2190
        %v2285 = vpack.c.b16 %v2193, %v2192
        %v2286 = vpack.c.b16 %v2195, %v2194
        %v2287 = vpack.c.b16 %v2197, %v2196
        %v2288 = vpack.c.b16 %v2199, %v2198
        %v2289 = vpack.c.b16 %v2201, %v2200
        %v2290 = vpack.c.b16 %v2203, %v2202
        %v2291 = vpack.c.b16 %v2205, %v2204
        %v2292 = vpack.c.b16 %v2207, %v2206
        %v2293 = vpack.c.b16 %v2209, %v2208
        %v2294 = vpack.c.b16 %v2211, %v2210
        %v2295 = vpack.c.b16 %v2213, %v2212
        %v2296 = vpack.c.b16 %v2215, %v2214
        %v2297 = vpack.c.b16 %v2217, %v2216
        %v2298 = vpack.c.b16 %v2219, %v2218
        %v2299 = vpack.c.b16 %v2221, %v2220
        %v2300 = vpack.c.b16 %v2223, %v2222
        %v2301 = vpack.c.b16 %v2225, %v2224
        %v2302 = vpack.c.b16 %v2227, %v2226
        %v2303 = vpack.c.b16 %v2229, %v2228
        %v2304 = vpack.c.b16 %v2231, %v2230
        %v2305 = vpack.c.b16 %v2233, %v2232
        %v2306 = vpack.c.b16 %v2235, %v2234
        %v2307 = vpack.c.b16 %v2237, %v2236
        %v2308 = vpack.c.b16 %v2239, %v2238
        %v2309 = vpack.c.b16 %v2241, %v2240
        %v2310 = vpack.c.b16 %v2243, %v2242
        %v2311 = vpack.c.b16 %v2245, %v2244
        %v2312 = vpack.c.b16 %v2247, %v2246
        %v2313 = vpack.c.b16 %v2249, %v2248
        %v2315 = vshrl.u32 %v2250, 16
        %v2317 = vshll.u32 %v2250, 16
        %v2319 = vrot.slane %v2317, 1
        %v2320 = vor.u32 %v2315, %v2319
        %v2322 = vshrl.u32 %v2251, 16
        %v2324 = vshll.u32 %v2251, 16
        %v2326 = vrot.slane %v2324, 1
        %v2327 = vor.u32 %v2322, %v2326
        %v2329 = vshrl.u32 %v2252, 16
        %v2331 = vshll.u32 %v2252, 16
        %v2333 = vrot.slane %v2331, 1
        %v2334 = vor.u32 %v2329, %v2333
        %v2336 = vshrl.u32 %v2253, 16
        %v2338 = vshll.u32 %v2253, 16
        %v2340 = vrot.slane %v2338, 1
        %v2341 = vor.u32 %v2336, %v2340
        %v2343 = vshrl.u32 %v2254, 16
        %v2345 = vshll.u32 %v2254, 16
        %v2347 = vrot.slane %v2345, 1
        %v2348 = vor.u32 %v2343, %v2347
        %v2350 = vshrl.u32 %v2255, 16
        %v2352 = vshll.u32 %v2255, 16
        %v2354 = vrot.slane %v2352, 1
        %v2355 = vor.u32 %v2350, %v2354
        %v2357 = vshrl.u32 %v2256, 16
        %v2359 = vshll.u32 %v2256, 16
        %v2361 = vrot.slane %v2359, 1
        %v2362 = vor.u32 %v2357, %v2361
        %v2364 = vshrl.u32 %v2257, 16
        %v2366 = vshll.u32 %v2257, 16
        %v2368 = vrot.slane %v2366, 1
        %v2369 = vor.u32 %v2364, %v2368
        %v2371 = vshrl.u32 %v2258, 16
        %v2373 = vshll.u32 %v2258, 16
        %v2375 = vrot.slane %v2373, 1
        %v2376 = vor.u32 %v2371, %v2375
        %v2378 = vshrl.u32 %v2259, 16
        %v2380 = vshll.u32 %v2259, 16
        %v2382 = vrot.slane %v2380, 1
        %v2383 = vor.u32 %v2378, %v2382
        %v2385 = vshrl.u32 %v2260, 16
        %v2387 = vshll.u32 %v2260, 16
        %v2389 = vrot.slane %v2387, 1
        %v2390 = vor.u32 %v2385, %v2389
        %v2392 = vshrl.u32 %v2261, 16
        %v2394 = vshll.u32 %v2261, 16
        %v2396 = vrot.slane %v2394, 1
        %v2397 = vor.u32 %v2392, %v2396
        %v2399 = vshrl.u32 %v2262, 16
        %v2401 = vshll.u32 %v2262, 16
        %v2403 = vrot.slane %v2401, 1
        %v2404 = vor.u32 %v2399, %v2403
        %v2406 = vshrl.u32 %v2263, 16
        %v2408 = vshll.u32 %v2263, 16
        %v2410 = vrot.slane %v2408, 1
        %v2411 = vor.u32 %v2406, %v2410
        %v2413 = vshrl.u32 %v2264, 16
        %v2415 = vshll.u32 %v2264, 16
        %v2417 = vrot.slane %v2415, 1
        %v2418 = vor.u32 %v2413, %v2417
        %v2420 = vshrl.u32 %v2265, 16
        %v2422 = vshll.u32 %v2265, 16
        %v2424 = vrot.slane %v2422, 1
        %v2425 = vor.u32 %v2420, %v2424
        %v2427 = vshrl.u32 %v2266, 16
        %v2429 = vshll.u32 %v2266, 16
        %v2431 = vrot.slane %v2429, 1
        %v2432 = vor.u32 %v2427, %v2431
        %v2434 = vshrl.u32 %v2267, 16
        %v2436 = vshll.u32 %v2267, 16
        %v2438 = vrot.slane %v2436, 1
        %v2439 = vor.u32 %v2434, %v2438
        %v2441 = vshrl.u32 %v2268, 16
        %v2443 = vshll.u32 %v2268, 16
        %v2445 = vrot.slane %v2443, 1
        %v2446 = vor.u32 %v2441, %v2445
        %v2448 = vshrl.u32 %v2269, 16
        %v2450 = vshll.u32 %v2269, 16
        %v2452 = vrot.slane %v2450, 1
        %v2453 = vor.u32 %v2448, %v2452
        %v2455 = vshrl.u32 %v2270, 16
        %v2457 = vshll.u32 %v2270, 16
        %v2459 = vrot.slane %v2457, 1
        %v2460 = vor.u32 %v2455, %v2459
        %v2462 = vshrl.u32 %v2271, 16
        %v2464 = vshll.u32 %v2271, 16
        %v2466 = vrot.slane %v2464, 1
        %v2467 = vor.u32 %v2462, %v2466
        %v2469 = vshrl.u32 %v2272, 16
        %v2471 = vshll.u32 %v2272, 16
        %v2473 = vrot.slane %v2471, 1
        %v2474 = vor.u32 %v2469, %v2473
        %v2476 = vshrl.u32 %v2273, 16
        %v2478 = vshll.u32 %v2273, 16
        %v2480 = vrot.slane %v2478, 1
        %v2481 = vor.u32 %v2476, %v2480
        %v2483 = vshrl.u32 %v2274, 16
        %v2485 = vshll.u32 %v2274, 16
        %v2487 = vrot.slane %v2485, 1
        %v2488 = vor.u32 %v2483, %v2487
        %v2490 = vshrl.u32 %v2275, 16
        %v2492 = vshll.u32 %v2275, 16
        %v2494 = vrot.slane %v2492, 1
        %v2495 = vor.u32 %v2490, %v2494
        %v2497 = vshrl.u32 %v2276, 16
        %v2499 = vshll.u32 %v2276, 16
        %v2501 = vrot.slane %v2499, 1
        %v2502 = vor.u32 %v2497, %v2501
        %v2504 = vshrl.u32 %v2277, 16
        %v2506 = vshll.u32 %v2277, 16
        %v2508 = vrot.slane %v2506, 1
        %v2509 = vor.u32 %v2504, %v2508
        %v2511 = vshrl.u32 %v2278, 16
        %v2513 = vshll.u32 %v2278, 16
        %v2515 = vrot.slane %v2513, 1
        %v2516 = vor.u32 %v2511, %v2515
        %v2518 = vshrl.u32 %v2279, 16
        %v2520 = vshll.u32 %v2279, 16
        %v2522 = vrot.slane %v2520, 1
        %v2523 = vor.u32 %v2518, %v2522
        %v2525 = vshrl.u32 %v2280, 16
        %v2527 = vshll.u32 %v2280, 16
        %v2529 = vrot.slane %v2527, 1
        %v2530 = vor.u32 %v2525, %v2529
        %v2532 = vshrl.u32 %v2281, 16
        %v2534 = vshll.u32 %v2281, 16
        %v2536 = vrot.slane %v2534, 1
        %v2537 = vor.u32 %v2532, %v2536
        %v2539 = vshrl.u32 %v2282, 16
        %v2541 = vshll.u32 %v2282, 16
        %v2543 = vrot.slane %v2541, 1
        %v2544 = vor.u32 %v2539, %v2543
        %v2546 = vshrl.u32 %v2283, 16
        %v2548 = vshll.u32 %v2283, 16
        %v2550 = vrot.slane %v2548, 1
        %v2551 = vor.u32 %v2546, %v2550
        %v2553 = vshrl.u32 %v2284, 16
        %v2555 = vshll.u32 %v2284, 16
        %v2557 = vrot.slane %v2555, 1
        %v2558 = vor.u32 %v2553, %v2557
        %v2560 = vshrl.u32 %v2285, 16
        %v2562 = vshll.u32 %v2285, 16
        %v2564 = vrot.slane %v2562, 1
        %v2565 = vor.u32 %v2560, %v2564
        %v2567 = vshrl.u32 %v2286, 16
        %v2569 = vshll.u32 %v2286, 16
        %v2571 = vrot.slane %v2569, 1
        %v2572 = vor.u32 %v2567, %v2571
        %v2574 = vshrl.u32 %v2287, 16
        %v2576 = vshll.u32 %v2287, 16
        %v2578 = vrot.slane %v2576, 1
        %v2579 = vor.u32 %v2574, %v2578
        %v2581 = vshrl.u32 %v2288, 16
        %v2583 = vshll.u32 %v2288, 16
        %v2585 = vrot.slane %v2583, 1
        %v2586 = vor.u32 %v2581, %v2585
        %v2588 = vshrl.u32 %v2289, 16
        %v2590 = vshll.u32 %v2289, 16
        %v2592 = vrot.slane %v2590, 1
        %v2593 = vor.u32 %v2588, %v2592
        %v2595 = vshrl.u32 %v2290, 16
        %v2597 = vshll.u32 %v2290, 16
        %v2599 = vrot.slane %v2597, 1
        %v2600 = vor.u32 %v2595, %v2599
        %v2602 = vshrl.u32 %v2291, 16
        %v2604 = vshll.u32 %v2291, 16
        %v2606 = vrot.slane %v2604, 1
        %v2607 = vor.u32 %v2602, %v2606
        %v2609 = vshrl.u32 %v2292, 16
        %v2611 = vshll.u32 %v2292, 16
        %v2613 = vrot.slane %v2611, 1
        %v2614 = vor.u32 %v2609, %v2613
        %v2616 = vshrl.u32 %v2293, 16
        %v2618 = vshll.u32 %v2293, 16
        %v2620 = vrot.slane %v2618, 1
        %v2621 = vor.u32 %v2616, %v2620
        %v2623 = vshrl.u32 %v2294, 16
        %v2625 = vshll.u32 %v2294, 16
        %v2627 = vrot.slane %v2625, 1
        %v2628 = vor.u32 %v2623, %v2627
        %v2630 = vshrl.u32 %v2295, 16
        %v2632 = vshll.u32 %v2295, 16
        %v2634 = vrot.slane %v2632, 1
        %v2635 = vor.u32 %v2630, %v2634
        %v2637 = vshrl.u32 %v2296, 16
        %v2639 = vshll.u32 %v2296, 16
        %v2641 = vrot.slane %v2639, 1
        %v2642 = vor.u32 %v2637, %v2641
        %v2644 = vshrl.u32 %v2297, 16
        %v2646 = vshll.u32 %v2297, 16
        %v2648 = vrot.slane %v2646, 1
        %v2649 = vor.u32 %v2644, %v2648
        %v2651 = vshrl.u32 %v2298, 16
        %v2653 = vshll.u32 %v2298, 16
        %v2655 = vrot.slane %v2653, 1
        %v2656 = vor.u32 %v2651, %v2655
        %v2658 = vshrl.u32 %v2299, 16
        %v2660 = vshll.u32 %v2299, 16
        %v2662 = vrot.slane %v2660, 1
        %v2663 = vor.u32 %v2658, %v2662
        %v2665 = vshrl.u32 %v2300, 16
        %v2667 = vshll.u32 %v2300, 16
        %v2669 = vrot.slane %v2667, 1
        %v2670 = vor.u32 %v2665, %v2669
        %v2672 = vshrl.u32 %v2301, 16
        %v2674 = vshll.u32 %v2301, 16
        %v2676 = vrot.slane %v2674, 1
        %v2677 = vor.u32 %v2672, %v2676
        %v2679 = vshrl.u32 %v2302, 16
        %v2681 = vshll.u32 %v2302, 16
        %v2683 = vrot.slane %v2681, 1
        %v2684 = vor.u32 %v2679, %v2683
        %v2686 = vshrl.u32 %v2303, 16
        %v2688 = vshll.u32 %v2303, 16
        %v2690 = vrot.slane %v2688, 1
        %v2691 = vor.u32 %v2686, %v2690
        %v2693 = vshrl.u32 %v2304, 16
        %v2695 = vshll.u32 %v2304, 16
        %v2697 = vrot.slane %v2695, 1
        %v2698 = vor.u32 %v2693, %v2697
        %v2700 = vshrl.u32 %v2305, 16
        %v2702 = vshll.u32 %v2305, 16
        %v2704 = vrot.slane %v2702, 1
        %v2705 = vor.u32 %v2700, %v2704
        %v2707 = vshrl.u32 %v2306, 16
        %v2709 = vshll.u32 %v2306, 16
        %v2711 = vrot.slane %v2709, 1
        %v2712 = vor.u32 %v2707, %v2711
        %v2714 = vshrl.u32 %v2307, 16
        %v2716 = vshll.u32 %v2307, 16
        %v2718 = vrot.slane %v2716, 1
        %v2719 = vor.u32 %v2714, %v2718
        %v2721 = vshrl.u32 %v2308, 16
        %v2723 = vshll.u32 %v2308, 16
        %v2725 = vrot.slane %v2723, 1
        %v2726 = vor.u32 %v2721, %v2725
        %v2728 = vshrl.u32 %v2309, 16
        %v2730 = vshll.u32 %v2309, 16
        %v2732 = vrot.slane %v2730, 1
        %v2733 = vor.u32 %v2728, %v2732
        %v2735 = vshrl.u32 %v2310, 16
        %v2737 = vshll.u32 %v2310, 16
        %v2739 = vrot.slane %v2737, 1
        %v2740 = vor.u32 %v2735, %v2739
        %v2742 = vshrl.u32 %v2311, 16
        %v2744 = vshll.u32 %v2311, 16
        %v2746 = vrot.slane %v2744, 1
        %v2747 = vor.u32 %v2742, %v2746
        %v2749 = vshrl.u32 %v2312, 16
        %v2751 = vshll.u32 %v2312, 16
        %v2753 = vrot.slane %v2751, 1
        %v2754 = vor.u32 %v2749, %v2753
        %v2756 = vshrl.u32 %v2313, 16
        %v2758 = vshll.u32 %v2313, 16
        %v2760 = vrot.slane %v2758, 1
        %v2761 = vor.u32 %v2756, %v2760
        %2762 = vrot.lane.b32.xlu0 %v2320, 8
        %v2763 = vpop.permute.xlu0 %2762
        %2764 = vrot.lane.b32.xlu0 %v2327, 8
        %v2765 = vpop.permute.xlu0 %2764
        %2766 = vrot.lane.b32.xlu0 %v2334, 8
        %v2767 = vpop.permute.xlu0 %2766
        %2768 = vrot.lane.b32.xlu0 %v2341, 8
        %v2769 = vpop.permute.xlu0 %2768
        %2770 = vrot.lane.b32.xlu0 %v2348, 8
        %v2771 = vpop.permute.xlu0 %2770
        %2772 = vrot.lane.b32.xlu0 %v2355, 8
        %v2773 = vpop.permute.xlu0 %2772
        %2774 = vrot.lane.b32.xlu0 %v2362, 8
        %v2775 = vpop.permute.xlu0 %2774
        %2776 = vrot.lane.b32.xlu0 %v2369, 8
        %v2777 = vpop.permute.xlu0 %2776
        %2778 = vrot.lane.b32.xlu0 %v2376, 8
        %v2779 = vpop.permute.xlu0 %2778
        %2780 = vrot.lane.b32.xlu0 %v2383, 8
        %v2781 = vpop.permute.xlu0 %2780
        %2782 = vrot.lane.b32.xlu0 %v2390, 8
        %v2783 = vpop.permute.xlu0 %2782
        %2784 = vrot.lane.b32.xlu0 %v2397, 8
        %v2785 = vpop.permute.xlu0 %2784
        %2786 = vrot.lane.b32.xlu0 %v2404, 8
        %v2787 = vpop.permute.xlu0 %2786
        %2788 = vrot.lane.b32.xlu0 %v2411, 8
        %v2789 = vpop.permute.xlu0 %2788
        %2790 = vrot.lane.b32.xlu0 %v2418, 8
        %v2791 = vpop.permute.xlu0 %2790
        %2792 = vrot.lane.b32.xlu0 %v2425, 8
        %v2793 = vpop.permute.xlu0 %2792
        %2794 = vrot.lane.b32.xlu0 %v2432, 8
        %v2795 = vpop.permute.xlu0 %2794
        %2796 = vrot.lane.b32.xlu0 %v2439, 8
        %v2797 = vpop.permute.xlu0 %2796
        %2798 = vrot.lane.b32.xlu0 %v2446, 8
        %v2799 = vpop.permute.xlu0 %2798
        %2800 = vrot.lane.b32.xlu0 %v2453, 8
        %v2801 = vpop.permute.xlu0 %2800
        %2802 = vrot.lane.b32.xlu0 %v2460, 8
        %v2803 = vpop.permute.xlu0 %2802
        %2804 = vrot.lane.b32.xlu0 %v2467, 8
        %v2805 = vpop.permute.xlu0 %2804
        %2806 = vrot.lane.b32.xlu0 %v2474, 8
        %v2807 = vpop.permute.xlu0 %2806
        %2808 = vrot.lane.b32.xlu0 %v2481, 8
        %v2809 = vpop.permute.xlu0 %2808
        %2810 = vrot.lane.b32.xlu0 %v2488, 8
        %v2811 = vpop.permute.xlu0 %2810
        %2812 = vrot.lane.b32.xlu0 %v2495, 8
        %v2813 = vpop.permute.xlu0 %2812
        %2814 = vrot.lane.b32.xlu0 %v2502, 8
        %v2815 = vpop.permute.xlu0 %2814
        %2816 = vrot.lane.b32.xlu0 %v2509, 8
        %v2817 = vpop.permute.xlu0 %2816
        %2818 = vrot.lane.b32.xlu0 %v2516, 8
        %v2819 = vpop.permute.xlu0 %2818
        %2820 = vrot.lane.b32.xlu0 %v2523, 8
        %v2821 = vpop.permute.xlu0 %2820
        %2822 = vrot.lane.b32.xlu0 %v2530, 8
        %v2823 = vpop.permute.xlu0 %2822
        %2824 = vrot.lane.b32.xlu0 %v2537, 8
        %v2825 = vpop.permute.xlu0 %2824
        %2826 = vrot.lane.b32.xlu0 %v2544, 8
        %v2827 = vpop.permute.xlu0 %2826
        %2828 = vrot.lane.b32.xlu0 %v2551, 8
        %v2829 = vpop.permute.xlu0 %2828
        %2830 = vrot.lane.b32.xlu0 %v2558, 8
        %v2831 = vpop.permute.xlu0 %2830
        %2832 = vrot.lane.b32.xlu0 %v2565, 8
        %v2833 = vpop.permute.xlu0 %2832
        %2834 = vrot.lane.b32.xlu0 %v2572, 8
        %v2835 = vpop.permute.xlu0 %2834
        %2836 = vrot.lane.b32.xlu0 %v2579, 8
        %v2837 = vpop.permute.xlu0 %2836
        %2838 = vrot.lane.b32.xlu0 %v2586, 8
        %v2839 = vpop.permute.xlu0 %2838
        %2840 = vrot.lane.b32.xlu0 %v2593, 8
        %v2841 = vpop.permute.xlu0 %2840
        %2842 = vrot.lane.b32.xlu0 %v2600, 8
        %v2843 = vpop.permute.xlu0 %2842
        %2844 = vrot.lane.b32.xlu0 %v2607, 8
        %v2845 = vpop.permute.xlu0 %2844
        %2846 = vrot.lane.b32.xlu0 %v2614, 8
        %v2847 = vpop.permute.xlu0 %2846
        %2848 = vrot.lane.b32.xlu0 %v2621, 8
        %v2849 = vpop.permute.xlu0 %2848
        %2850 = vrot.lane.b32.xlu0 %v2628, 8
        %v2851 = vpop.permute.xlu0 %2850
        %2852 = vrot.lane.b32.xlu0 %v2635, 8
        %v2853 = vpop.permute.xlu0 %2852
        %2854 = vrot.lane.b32.xlu0 %v2642, 8
        %v2855 = vpop.permute.xlu0 %2854
        %2856 = vrot.lane.b32.xlu0 %v2649, 8
        %v2857 = vpop.permute.xlu0 %2856
        %2858 = vrot.lane.b32.xlu0 %v2656, 8
        %v2859 = vpop.permute.xlu0 %2858
        %2860 = vrot.lane.b32.xlu0 %v2663, 8
        %v2861 = vpop.permute.xlu0 %2860
        %2862 = vrot.lane.b32.xlu0 %v2670, 8
        %v2863 = vpop.permute.xlu0 %2862
        %2864 = vrot.lane.b32.xlu0 %v2677, 8
        %v2865 = vpop.permute.xlu0 %2864
        %2866 = vrot.lane.b32.xlu0 %v2684, 8
        %v2867 = vpop.permute.xlu0 %2866
        %2868 = vrot.lane.b32.xlu0 %v2691, 8
        %v2869 = vpop.permute.xlu0 %2868
        %2870 = vrot.lane.b32.xlu0 %v2698, 8
        %v2871 = vpop.permute.xlu0 %2870
        %2872 = vrot.lane.b32.xlu0 %v2705, 8
        %v2873 = vpop.permute.xlu0 %2872
        %2874 = vrot.lane.b32.xlu0 %v2712, 8
        %v2875 = vpop.permute.xlu0 %2874
        %2876 = vrot.lane.b32.xlu0 %v2719, 8
        %v2877 = vpop.permute.xlu0 %2876
        %2878 = vrot.lane.b32.xlu0 %v2726, 8
        %v2879 = vpop.permute.xlu0 %2878
        %2880 = vrot.lane.b32.xlu0 %v2733, 8
        %v2881 = vpop.permute.xlu0 %2880
        %2882 = vrot.lane.b32.xlu0 %v2740, 8
        %v2883 = vpop.permute.xlu0 %2882
        %2884 = vrot.lane.b32.xlu0 %v2747, 8
        %v2885 = vpop.permute.xlu0 %2884
        %2886 = vrot.lane.b32.xlu0 %v2754, 8
        %v2887 = vpop.permute.xlu0 %2886
        %2888 = vrot.lane.b32.xlu0 %v2761, 8
        %v2889 = vpop.permute.xlu0 %2888
        %v2954 = vunpack.c.l.b16 %v1930
        %v2955 = vunpack.c.l.b16 %v1931
        %v2956 = vunpack.c.l.b16 %v1932
        %v2957 = vunpack.c.l.b16 %v1933
        %v2958 = vunpack.c.l.b16 %v1934
        %v2959 = vunpack.c.l.b16 %v1935
        %v2960 = vunpack.c.l.b16 %v1936
        %v2961 = vunpack.c.l.b16 %v1937
        %v2962 = vunpack.c.l.b16 %v1938
        %v2963 = vunpack.c.l.b16 %v1939
        %v2964 = vunpack.c.l.b16 %v1940
        %v2965 = vunpack.c.l.b16 %v1941
        %v2966 = vunpack.c.l.b16 %v1942
        %v2967 = vunpack.c.l.b16 %v1943
        %v2968 = vunpack.c.l.b16 %v1944
        %v2969 = vunpack.c.l.b16 %v1945
        %v2970 = vunpack.c.l.b16 %v1946
        %v2971 = vunpack.c.l.b16 %v1947
        %v2972 = vunpack.c.l.b16 %v1948
        %v2973 = vunpack.c.l.b16 %v1949
        %v2974 = vunpack.c.l.b16 %v1950
        %v2975 = vunpack.c.l.b16 %v1951
        %v2976 = vunpack.c.l.b16 %v1952
        %v2977 = vunpack.c.l.b16 %v1953
        %v2978 = vunpack.c.l.b16 %v1954
        %v2979 = vunpack.c.l.b16 %v1955
        %v2980 = vunpack.c.l.b16 %v1956
        %v2981 = vunpack.c.l.b16 %v1957
        %v2982 = vunpack.c.l.b16 %v1958
        %v2983 = vunpack.c.l.b16 %v1959
        %v2984 = vunpack.c.l.b16 %v1960
        %v2985 = vunpack.c.l.b16 %v1961
        %v2986 = vunpack.c.l.b16 %v1962
        %v2987 = vunpack.c.l.b16 %v1963
        %v2988 = vunpack.c.l.b16 %v1964
        %v2989 = vunpack.c.l.b16 %v1965
        %v2990 = vunpack.c.l.b16 %v1966
        %v2991 = vunpack.c.l.b16 %v1967
        %v2992 = vunpack.c.l.b16 %v1968
        %v2993 = vunpack.c.l.b16 %v1969
        %v2994 = vunpack.c.l.b16 %v1970
        %v2995 = vunpack.c.l.b16 %v1971
        %v2996 = vunpack.c.l.b16 %v1972
        %v2997 = vunpack.c.l.b16 %v1973
        %v2998 = vunpack.c.l.b16 %v1974
        %v2999 = vunpack.c.l.b16 %v1975
        %v3000 = vunpack.c.l.b16 %v1976
        %v3001 = vunpack.c.l.b16 %v1977
        %v3002 = vunpack.c.l.b16 %v1978
        %v3003 = vunpack.c.l.b16 %v1979
        %v3004 = vunpack.c.l.b16 %v1980
        %v3005 = vunpack.c.l.b16 %v1981
        %v3006 = vunpack.c.l.b16 %v1982
        %v3007 = vunpack.c.l.b16 %v1983
        %v3008 = vunpack.c.l.b16 %v1984
        %v3009 = vunpack.c.l.b16 %v1985
        %v3010 = vunpack.c.l.b16 %v1986
        %v3011 = vunpack.c.l.b16 %v1987
        %v3012 = vunpack.c.l.b16 %v1988
        %v3013 = vunpack.c.l.b16 %v1989
        %v3014 = vunpack.c.l.b16 %v1990
        %v3015 = vunpack.c.l.b16 %v1991
        %v3016 = vunpack.c.l.b16 %v1992
        %v3017 = vunpack.c.l.b16 %v1993
        %v3018 = vpack.c.b16 %v2123, %v2954
        %v3019 = vpack.c.b16 %v2125, %v2955
        %v3020 = vpack.c.b16 %v2127, %v2956
        %v3021 = vpack.c.b16 %v2129, %v2957
        %v3022 = vpack.c.b16 %v2131, %v2958
        %v3023 = vpack.c.b16 %v2133, %v2959
        %v3024 = vpack.c.b16 %v2135, %v2960
        %v3025 = vpack.c.b16 %v2137, %v2961
        %v3026 = vpack.c.b16 %v2139, %v2962
        %v3027 = vpack.c.b16 %v2141, %v2963
        %v3028 = vpack.c.b16 %v2143, %v2964
        %v3029 = vpack.c.b16 %v2145, %v2965
        %v3030 = vpack.c.b16 %v2147, %v2966
        %v3031 = vpack.c.b16 %v2149, %v2967
        %v3032 = vpack.c.b16 %v2151, %v2968
        %v3033 = vpack.c.b16 %v2153, %v2969
        %v3034 = vpack.c.b16 %v2155, %v2970
        %v3035 = vpack.c.b16 %v2157, %v2971
        %v3036 = vpack.c.b16 %v2159, %v2972
        %v3037 = vpack.c.b16 %v2161, %v2973
        %v3038 = vpack.c.b16 %v2163, %v2974
        %v3039 = vpack.c.b16 %v2165, %v2975
        %v3040 = vpack.c.b16 %v2167, %v2976
        %v3041 = vpack.c.b16 %v2169, %v2977
        %v3042 = vpack.c.b16 %v2171, %v2978
        %v3043 = vpack.c.b16 %v2173, %v2979
        %v3044 = vpack.c.b16 %v2175, %v2980
        %v3045 = vpack.c.b16 %v2177, %v2981
        %v3046 = vpack.c.b16 %v2179, %v2982
        %v3047 = vpack.c.b16 %v2181, %v2983
        %v3048 = vpack.c.b16 %v2183, %v2984
        %v3049 = vpack.c.b16 %v2185, %v2985
        %v3050 = vpack.c.b16 %v2187, %v2986
        %v3051 = vpack.c.b16 %v2189, %v2987
        %v3052 = vpack.c.b16 %v2191, %v2988
        %v3053 = vpack.c.b16 %v2193, %v2989
        %v3054 = vpack.c.b16 %v2195, %v2990
        %v3055 = vpack.c.b16 %v2197, %v2991
        %v3056 = vpack.c.b16 %v2199, %v2992
        %v3057 = vpack.c.b16 %v2201, %v2993
        %v3058 = vpack.c.b16 %v2203, %v2994
        %v3059 = vpack.c.b16 %v2205, %v2995
        %v3060 = vpack.c.b16 %v2207, %v2996
        %v3061 = vpack.c.b16 %v2209, %v2997
        %v3062 = vpack.c.b16 %v2211, %v2998
        %v3063 = vpack.c.b16 %v2213, %v2999
        %v3064 = vpack.c.b16 %v2215, %v3000
        %v3065 = vpack.c.b16 %v2217, %v3001
        %v3066 = vpack.c.b16 %v2219, %v3002
        %v3067 = vpack.c.b16 %v2221, %v3003
        %v3068 = vpack.c.b16 %v2223, %v3004
        %v3069 = vpack.c.b16 %v2225, %v3005
        %v3070 = vpack.c.b16 %v2227, %v3006
        %v3071 = vpack.c.b16 %v2229, %v3007
        %v3072 = vpack.c.b16 %v2231, %v3008
        %v3073 = vpack.c.b16 %v2233, %v3009
        %v3074 = vpack.c.b16 %v2235, %v3010
        %v3075 = vpack.c.b16 %v2237, %v3011
        %v3076 = vpack.c.b16 %v2239, %v3012
        %v3077 = vpack.c.b16 %v2241, %v3013
        %v3078 = vpack.c.b16 %v2243, %v3014
        %v3079 = vpack.c.b16 %v2245, %v3015
        %v3080 = vpack.c.b16 %v2247, %v3016
        %v3081 = vpack.c.b16 %v2249, %v3017
        %v3082 = vrot.slane %v3018, 1
        %v3083 = vrot.slane %v3019, 1
        %v3084 = vrot.slane %v3020, 1
        %v3085 = vrot.slane %v3021, 1
        %v3086 = vrot.slane %v3022, 1
        %v3087 = vrot.slane %v3023, 1
        %v3088 = vrot.slane %v3024, 1
        %v3089 = vrot.slane %v3025, 1
        %v3090 = vrot.slane %v3026, 1
        %v3091 = vrot.slane %v3027, 1
        %v3092 = vrot.slane %v3028, 1
        %v3093 = vrot.slane %v3029, 1
        %v3094 = vrot.slane %v3030, 1
        %v3095 = vrot.slane %v3031, 1
        %v3096 = vrot.slane %v3032, 1
        %v3097 = vrot.slane %v3033, 1
        %v3098 = vrot.slane %v3034, 1
        %v3099 = vrot.slane %v3035, 1
        %v3100 = vrot.slane %v3036, 1
        %v3101 = vrot.slane %v3037, 1
        %v3102 = vrot.slane %v3038, 1
        %v3103 = vrot.slane %v3039, 1
        %v3104 = vrot.slane %v3040, 1
        %v3105 = vrot.slane %v3041, 1
        %v3106 = vrot.slane %v3042, 1
        %v3107 = vrot.slane %v3043, 1
        %v3108 = vrot.slane %v3044, 1
        %v3109 = vrot.slane %v3045, 1
        %v3110 = vrot.slane %v3046, 1
        %v3111 = vrot.slane %v3047, 1
        %v3112 = vrot.slane %v3048, 1
        %v3113 = vrot.slane %v3049, 1
        %v3114 = vrot.slane %v3050, 1
        %v3115 = vrot.slane %v3051, 1
        %v3116 = vrot.slane %v3052, 1
        %v3117 = vrot.slane %v3053, 1
        %v3118 = vrot.slane %v3054, 1
        %v3119 = vrot.slane %v3055, 1
        %v3120 = vrot.slane %v3056, 1
        %v3121 = vrot.slane %v3057, 1
        %v3122 = vrot.slane %v3058, 1
        %v3123 = vrot.slane %v3059, 1
        %v3124 = vrot.slane %v3060, 1
        %v3125 = vrot.slane %v3061, 1
        %v3126 = vrot.slane %v3062, 1
        %v3127 = vrot.slane %v3063, 1
        %v3128 = vrot.slane %v3064, 1
        %v3129 = vrot.slane %v3065, 1
        %v3130 = vrot.slane %v3066, 1
        %v3131 = vrot.slane %v3067, 1
        %v3132 = vrot.slane %v3068, 1
        %v3133 = vrot.slane %v3069, 1
        %v3134 = vrot.slane %v3070, 1
        %v3135 = vrot.slane %v3071, 1
        %v3136 = vrot.slane %v3072, 1
        %v3137 = vrot.slane %v3073, 1
        %v3138 = vrot.slane %v3074, 1
        %v3139 = vrot.slane %v3075, 1
        %v3140 = vrot.slane %v3076, 1
        %v3141 = vrot.slane %v3077, 1
        %v3142 = vrot.slane %v3078, 1
        %v3143 = vrot.slane %v3079, 1
        %v3144 = vrot.slane %v3080, 1
        %v3145 = vrot.slane %v3081, 1
        %3146 = vrot.lane.b32.xlu0 %v3082, 16
        %v3147 = vpop.permute.xlu0 %3146
        %3148 = vrot.lane.b32.xlu0 %v3083, 16
        %v3149 = vpop.permute.xlu0 %3148
        %3150 = vrot.lane.b32.xlu0 %v3084, 16
        %v3151 = vpop.permute.xlu0 %3150
        %3152 = vrot.lane.b32.xlu0 %v3085, 16
        %v3153 = vpop.permute.xlu0 %3152
        %3154 = vrot.lane.b32.xlu0 %v3086, 16
        %v3155 = vpop.permute.xlu0 %3154
        %3156 = vrot.lane.b32.xlu0 %v3087, 16
        %v3157 = vpop.permute.xlu0 %3156
        %3158 = vrot.lane.b32.xlu0 %v3088, 16
        %v3159 = vpop.permute.xlu0 %3158
        %3160 = vrot.lane.b32.xlu0 %v3089, 16
        %v3161 = vpop.permute.xlu0 %3160
        %3162 = vrot.lane.b32.xlu0 %v3090, 16
        %v3163 = vpop.permute.xlu0 %3162
        %3164 = vrot.lane.b32.xlu0 %v3091, 16
        %v3165 = vpop.permute.xlu0 %3164
        %3166 = vrot.lane.b32.xlu0 %v3092, 16
        %v3167 = vpop.permute.xlu0 %3166
        %3168 = vrot.lane.b32.xlu0 %v3093, 16
        %v3169 = vpop.permute.xlu0 %3168
        %3170 = vrot.lane.b32.xlu0 %v3094, 16
        %v3171 = vpop.permute.xlu0 %3170
        %3172 = vrot.lane.b32.xlu0 %v3095, 16
        %v3173 = vpop.permute.xlu0 %3172
        %3174 = vrot.lane.b32.xlu0 %v3096, 16
        %v3175 = vpop.permute.xlu0 %3174
        %3176 = vrot.lane.b32.xlu0 %v3097, 16
        %v3177 = vpop.permute.xlu0 %3176
        %3178 = vrot.lane.b32.xlu0 %v3098, 16
        %v3179 = vpop.permute.xlu0 %3178
        %3180 = vrot.lane.b32.xlu0 %v3099, 16
        %v3181 = vpop.permute.xlu0 %3180
        %3182 = vrot.lane.b32.xlu0 %v3100, 16
        %v3183 = vpop.permute.xlu0 %3182
        %3184 = vrot.lane.b32.xlu0 %v3101, 16
        %v3185 = vpop.permute.xlu0 %3184
        %3186 = vrot.lane.b32.xlu0 %v3102, 16
        %v3187 = vpop.permute.xlu0 %3186
        %3188 = vrot.lane.b32.xlu0 %v3103, 16
        %v3189 = vpop.permute.xlu0 %3188
        %3190 = vrot.lane.b32.xlu0 %v3104, 16
        %v3191 = vpop.permute.xlu0 %3190
        %3192 = vrot.lane.b32.xlu0 %v3105, 16
        %v3193 = vpop.permute.xlu0 %3192
        %3194 = vrot.lane.b32.xlu0 %v3106, 16
        %v3195 = vpop.permute.xlu0 %3194
        %3196 = vrot.lane.b32.xlu0 %v3107, 16
        %v3197 = vpop.permute.xlu0 %3196
        %3198 = vrot.lane.b32.xlu0 %v3108, 16
        %v3199 = vpop.permute.xlu0 %3198
        %3200 = vrot.lane.b32.xlu0 %v3109, 16
        %v3201 = vpop.permute.xlu0 %3200
        %3202 = vrot.lane.b32.xlu0 %v3110, 16
        %v3203 = vpop.permute.xlu0 %3202
        %3204 = vrot.lane.b32.xlu0 %v3111, 16
        %v3205 = vpop.permute.xlu0 %3204
        %3206 = vrot.lane.b32.xlu0 %v3112, 16
        %v3207 = vpop.permute.xlu0 %3206
        %3208 = vrot.lane.b32.xlu0 %v3113, 16
        %v3209 = vpop.permute.xlu0 %3208
        %3210 = vrot.lane.b32.xlu0 %v3114, 16
        %v3211 = vpop.permute.xlu0 %3210
        %3212 = vrot.lane.b32.xlu0 %v3115, 16
        %v3213 = vpop.permute.xlu0 %3212
        %3214 = vrot.lane.b32.xlu0 %v3116, 16
        %v3215 = vpop.permute.xlu0 %3214
        %3216 = vrot.lane.b32.xlu0 %v3117, 16
        %v3217 = vpop.permute.xlu0 %3216
        %3218 = vrot.lane.b32.xlu0 %v3118, 16
        %v3219 = vpop.permute.xlu0 %3218
        %3220 = vrot.lane.b32.xlu0 %v3119, 16
        %v3221 = vpop.permute.xlu0 %3220
        %3222 = vrot.lane.b32.xlu0 %v3120, 16
        %v3223 = vpop.permute.xlu0 %3222
        %3224 = vrot.lane.b32.xlu0 %v3121, 16
        %v3225 = vpop.permute.xlu0 %3224
        %3226 = vrot.lane.b32.xlu0 %v3122, 16
        %v3227 = vpop.permute.xlu0 %3226
        %3228 = vrot.lane.b32.xlu0 %v3123, 16
        %v3229 = vpop.permute.xlu0 %3228
        %3230 = vrot.lane.b32.xlu0 %v3124, 16
        %v3231 = vpop.permute.xlu0 %3230
        %3232 = vrot.lane.b32.xlu0 %v3125, 16
        %v3233 = vpop.permute.xlu0 %3232
        %3234 = vrot.lane.b32.xlu0 %v3126, 16
        %v3235 = vpop.permute.xlu0 %3234
        %3236 = vrot.lane.b32.xlu0 %v3127, 16
        %v3237 = vpop.permute.xlu0 %3236
        %3238 = vrot.lane.b32.xlu0 %v3128, 16
        %v3239 = vpop.permute.xlu0 %3238
        %3240 = vrot.lane.b32.xlu0 %v3129, 16
        %v3241 = vpop.permute.xlu0 %3240
        %3242 = vrot.lane.b32.xlu0 %v3130, 16
        %v3243 = vpop.permute.xlu0 %3242
        %3244 = vrot.lane.b32.xlu0 %v3131, 16
        %v3245 = vpop.permute.xlu0 %3244
        %3246 = vrot.lane.b32.xlu0 %v3132, 16
        %v3247 = vpop.permute.xlu0 %3246
        %3248 = vrot.lane.b32.xlu0 %v3133, 16
        %v3249 = vpop.permute.xlu0 %3248
        %3250 = vrot.lane.b32.xlu0 %v3134, 16
        %v3251 = vpop.permute.xlu0 %3250
        %3252 = vrot.lane.b32.xlu0 %v3135, 16
        %v3253 = vpop.permute.xlu0 %3252
        %3254 = vrot.lane.b32.xlu0 %v3136, 16
        %v3255 = vpop.permute.xlu0 %3254
        %3256 = vrot.lane.b32.xlu0 %v3137, 16
        %v3257 = vpop.permute.xlu0 %3256
        %3258 = vrot.lane.b32.xlu0 %v3138, 16
        %v3259 = vpop.permute.xlu0 %3258
        %3260 = vrot.lane.b32.xlu0 %v3139, 16
        %v3261 = vpop.permute.xlu0 %3260
        %3262 = vrot.lane.b32.xlu0 %v3140, 16
        %v3263 = vpop.permute.xlu0 %3262
        %3264 = vrot.lane.b32.xlu0 %v3141, 16
        %v3265 = vpop.permute.xlu0 %3264
        %3266 = vrot.lane.b32.xlu0 %v3142, 16
        %v3267 = vpop.permute.xlu0 %3266
        %3268 = vrot.lane.b32.xlu0 %v3143, 16
        %v3269 = vpop.permute.xlu0 %3268
        %3270 = vrot.lane.b32.xlu0 %v3144, 16
        %v3271 = vpop.permute.xlu0 %3270
        %3272 = vrot.lane.b32.xlu0 %v3145, 16
        %v3273 = vpop.permute.xlu0 %3272
        %vm3274 = vcmask 64512
        %v3277 = vsel %vm3274, %v1802, %v2763
        %v3280 = vsel %vm3274, %v1803, %v2765
        %v3283 = vsel %vm3274, %v1804, %v2767
        %v3286 = vsel %vm3274, %v1805, %v2769
        %v3289 = vsel %vm3274, %v1806, %v2771
        %v3292 = vsel %vm3274, %v1807, %v2773
        %v3295 = vsel %vm3274, %v1808, %v2775
        %v3298 = vsel %vm3274, %v1809, %v2777
        %v3301 = vsel %vm3274, %v1810, %v2779
        %v3304 = vsel %vm3274, %v1811, %v2781
        %v3307 = vsel %vm3274, %v1812, %v2783
        %v3310 = vsel %vm3274, %v1813, %v2785
        %v3313 = vsel %vm3274, %v1814, %v2787
        %v3316 = vsel %vm3274, %v1815, %v2789
        %v3319 = vsel %vm3274, %v1816, %v2791
        %v3322 = vsel %vm3274, %v1817, %v2793
        %v3325 = vsel %vm3274, %v1818, %v2795
        %v3328 = vsel %vm3274, %v1819, %v2797
        %v3331 = vsel %vm3274, %v1820, %v2799
        %v3334 = vsel %vm3274, %v1821, %v2801
        %v3337 = vsel %vm3274, %v1822, %v2803
        %v3340 = vsel %vm3274, %v1823, %v2805
        %v3343 = vsel %vm3274, %v1824, %v2807
        %v3346 = vsel %vm3274, %v1825, %v2809
        %v3349 = vsel %vm3274, %v1826, %v2811
        %v3352 = vsel %vm3274, %v1827, %v2813
        %v3355 = vsel %vm3274, %v1828, %v2815
        %v3358 = vsel %vm3274, %v1829, %v2817
        %v3361 = vsel %vm3274, %v1830, %v2819
        %v3364 = vsel %vm3274, %v1831, %v2821
        %v3367 = vsel %vm3274, %v1832, %v2823
        %v3370 = vsel %vm3274, %v1833, %v2825
        %v3373 = vsel %vm3274, %v1834, %v2827
        %v3376 = vsel %vm3274, %v1835, %v2829
        %v3379 = vsel %vm3274, %v1836, %v2831
        %v3382 = vsel %vm3274, %v1837, %v2833
        %v3385 = vsel %vm3274, %v1838, %v2835
        %v3388 = vsel %vm3274, %v1839, %v2837
        %v3391 = vsel %vm3274, %v1840, %v2839
        %v3394 = vsel %vm3274, %v1841, %v2841
        %v3397 = vsel %vm3274, %v1842, %v2843
        %v3400 = vsel %vm3274, %v1843, %v2845
        %v3403 = vsel %vm3274, %v1844, %v2847
        %v3406 = vsel %vm3274, %v1845, %v2849
        %v3409 = vsel %vm3274, %v1846, %v2851
        %v3412 = vsel %vm3274, %v1847, %v2853
        %v3415 = vsel %vm3274, %v1848, %v2855
        %v3418 = vsel %vm3274, %v1849, %v2857
        %v3421 = vsel %vm3274, %v1850, %v2859
        %v3424 = vsel %vm3274, %v1851, %v2861
        %v3427 = vsel %vm3274, %v1852, %v2863
        %v3430 = vsel %vm3274, %v1853, %v2865
        %v3433 = vsel %vm3274, %v1854, %v2867
        %v3436 = vsel %vm3274, %v1855, %v2869
        %v3439 = vsel %vm3274, %v1856, %v2871
        %v3442 = vsel %vm3274, %v1857, %v2873
        %v3445 = vsel %vm3274, %v1858, %v2875
        %v3448 = vsel %vm3274, %v1859, %v2877
        %v3451 = vsel %vm3274, %v1860, %v2879
        %v3454 = vsel %vm3274, %v1861, %v2881
        %v3457 = vsel %vm3274, %v1862, %v2883
        %v3460 = vsel %vm3274, %v1863, %v2885
        %v3463 = vsel %vm3274, %v1864, %v2887
        %v3466 = vsel %vm3274, %v1865, %v2889
        %vm3467 = vcmask 130048
        %v3469 = vsel %vm3467, %v3277, %v3147
        %v3471 = vsel %vm3467, %v3280, %v3149
        %v3473 = vsel %vm3467, %v3283, %v3151
        %v3475 = vsel %vm3467, %v3286, %v3153
        %v3477 = vsel %vm3467, %v3289, %v3155
        %v3479 = vsel %vm3467, %v3292, %v3157
        %v3481 = vsel %vm3467, %v3295, %v3159
        %v3483 = vsel %vm3467, %v3298, %v3161
        %v3485 = vsel %vm3467, %v3301, %v3163
        %v3487 = vsel %vm3467, %v3304, %v3165
        %v3489 = vsel %vm3467, %v3307, %v3167
        %v3491 = vsel %vm3467, %v3310, %v3169
        %v3493 = vsel %vm3467, %v3313, %v3171
        %v3495 = vsel %vm3467, %v3316, %v3173
        %v3497 = vsel %vm3467, %v3319, %v3175
        %v3499 = vsel %vm3467, %v3322, %v3177
        %v3501 = vsel %vm3467, %v3325, %v3179
        %v3503 = vsel %vm3467, %v3328, %v3181
        %v3505 = vsel %vm3467, %v3331, %v3183
        %v3507 = vsel %vm3467, %v3334, %v3185
        %v3509 = vsel %vm3467, %v3337, %v3187
        %v3511 = vsel %vm3467, %v3340, %v3189
        %v3513 = vsel %vm3467, %v3343, %v3191
        %v3515 = vsel %vm3467, %v3346, %v3193
        %v3517 = vsel %vm3467, %v3349, %v3195
        %v3519 = vsel %vm3467, %v3352, %v3197
        %v3521 = vsel %vm3467, %v3355, %v3199
        %v3523 = vsel %vm3467, %v3358, %v3201
        %v3525 = vsel %vm3467, %v3361, %v3203
        %v3527 = vsel %vm3467, %v3364, %v3205
        %v3529 = vsel %vm3467, %v3367, %v3207
        %v3531 = vsel %vm3467, %v3370, %v3209
        %v3533 = vsel %vm3467, %v3373, %v3211
        %v3535 = vsel %vm3467, %v3376, %v3213
        %v3537 = vsel %vm3467, %v3379, %v3215
        %v3539 = vsel %vm3467, %v3382, %v3217
        %v3541 = vsel %vm3467, %v3385, %v3219
        %v3543 = vsel %vm3467, %v3388, %v3221
        %v3545 = vsel %vm3467, %v3391, %v3223
        %v3547 = vsel %vm3467, %v3394, %v3225
        %v3549 = vsel %vm3467, %v3397, %v3227
        %v3551 = vsel %vm3467, %v3400, %v3229
        %v3553 = vsel %vm3467, %v3403, %v3231
        %v3555 = vsel %vm3467, %v3406, %v3233
        %v3557 = vsel %vm3467, %v3409, %v3235
        %v3559 = vsel %vm3467, %v3412, %v3237
        %v3561 = vsel %vm3467, %v3415, %v3239
        %v3563 = vsel %vm3467, %v3418, %v3241
        %v3565 = vsel %vm3467, %v3421, %v3243
        %v3567 = vsel %vm3467, %v3424, %v3245
        %v3569 = vsel %vm3467, %v3427, %v3247
        %v3571 = vsel %vm3467, %v3430, %v3249
        %v3573 = vsel %vm3467, %v3433, %v3251
        %v3575 = vsel %vm3467, %v3436, %v3253
        %v3577 = vsel %vm3467, %v3439, %v3255
        %v3579 = vsel %vm3467, %v3442, %v3257
        %v3581 = vsel %vm3467, %v3445, %v3259
        %v3583 = vsel %vm3467, %v3448, %v3261
        %v3585 = vsel %vm3467, %v3451, %v3263
        %v3587 = vsel %vm3467, %v3454, %v3265
        %v3589 = vsel %vm3467, %v3457, %v3267
        %v3591 = vsel %vm3467, %v3460, %v3269
        %v3593 = vsel %vm3467, %v3463, %v3271
        %v3595 = vsel %vm3467, %v3466, %v3273
        %3660 = vrot.lane.b32.xlu0 %v3469, 24
        %v3661 = vpop.permute.xlu0 %3660
        %3662 = vrot.lane.b32.xlu0 %v3471, 24
        %v3663 = vpop.permute.xlu0 %3662
        %3664 = vrot.lane.b32.xlu0 %v3473, 24
        %v3665 = vpop.permute.xlu0 %3664
        %3666 = vrot.lane.b32.xlu0 %v3475, 24
        %v3667 = vpop.permute.xlu0 %3666
        %3668 = vrot.lane.b32.xlu0 %v3477, 24
        %v3669 = vpop.permute.xlu0 %3668
        %3670 = vrot.lane.b32.xlu0 %v3479, 24
        %v3671 = vpop.permute.xlu0 %3670
        %3672 = vrot.lane.b32.xlu0 %v3481, 24
        %v3673 = vpop.permute.xlu0 %3672
        %3674 = vrot.lane.b32.xlu0 %v3483, 24
        %v3675 = vpop.permute.xlu0 %3674
        %3676 = vrot.lane.b32.xlu0 %v3485, 24
        %v3677 = vpop.permute.xlu0 %3676
        %3678 = vrot.lane.b32.xlu0 %v3487, 24
        %v3679 = vpop.permute.xlu0 %3678
        %3680 = vrot.lane.b32.xlu0 %v3489, 24
        %v3681 = vpop.permute.xlu0 %3680
        %3682 = vrot.lane.b32.xlu0 %v3491, 24
        %v3683 = vpop.permute.xlu0 %3682
        %3684 = vrot.lane.b32.xlu0 %v3493, 24
        %v3685 = vpop.permute.xlu0 %3684
        %3686 = vrot.lane.b32.xlu0 %v3495, 24
        %v3687 = vpop.permute.xlu0 %3686
        %3688 = vrot.lane.b32.xlu0 %v3497, 24
        %v3689 = vpop.permute.xlu0 %3688
        %3690 = vrot.lane.b32.xlu0 %v3499, 24
        %v3691 = vpop.permute.xlu0 %3690
        %3692 = vrot.lane.b32.xlu0 %v3501, 24
        %v3693 = vpop.permute.xlu0 %3692
        %3694 = vrot.lane.b32.xlu0 %v3503, 24
        %v3695 = vpop.permute.xlu0 %3694
        %3696 = vrot.lane.b32.xlu0 %v3505, 24
        %v3697 = vpop.permute.xlu0 %3696
        %3698 = vrot.lane.b32.xlu0 %v3507, 24
        %v3699 = vpop.permute.xlu0 %3698
        %3700 = vrot.lane.b32.xlu0 %v3509, 24
        %v3701 = vpop.permute.xlu0 %3700
        %3702 = vrot.lane.b32.xlu0 %v3511, 24
        %v3703 = vpop.permute.xlu0 %3702
        %3704 = vrot.lane.b32.xlu0 %v3513, 24
        %v3705 = vpop.permute.xlu0 %3704
        %3706 = vrot.lane.b32.xlu0 %v3515, 24
        %v3707 = vpop.permute.xlu0 %3706
        %3708 = vrot.lane.b32.xlu0 %v3517, 24
        %v3709 = vpop.permute.xlu0 %3708
        %3710 = vrot.lane.b32.xlu0 %v3519, 24
        %v3711 = vpop.permute.xlu0 %3710
        %3712 = vrot.lane.b32.xlu0 %v3521, 24
        %v3713 = vpop.permute.xlu0 %3712
        %3714 = vrot.lane.b32.xlu0 %v3523, 24
        %v3715 = vpop.permute.xlu0 %3714
        %3716 = vrot.lane.b32.xlu0 %v3525, 24
        %v3717 = vpop.permute.xlu0 %3716
        %3718 = vrot.lane.b32.xlu0 %v3527, 24
        %v3719 = vpop.permute.xlu0 %3718
        %3720 = vrot.lane.b32.xlu0 %v3529, 24
        %v3721 = vpop.permute.xlu0 %3720
        %3722 = vrot.lane.b32.xlu0 %v3531, 24
        %v3723 = vpop.permute.xlu0 %3722
        %3724 = vrot.lane.b32.xlu0 %v3533, 24
        %v3725 = vpop.permute.xlu0 %3724
        %3726 = vrot.lane.b32.xlu0 %v3535, 24
        %v3727 = vpop.permute.xlu0 %3726
        %3728 = vrot.lane.b32.xlu0 %v3537, 24
        %v3729 = vpop.permute.xlu0 %3728
        %3730 = vrot.lane.b32.xlu0 %v3539, 24
        %v3731 = vpop.permute.xlu0 %3730
        %3732 = vrot.lane.b32.xlu0 %v3541, 24
        %v3733 = vpop.permute.xlu0 %3732
        %3734 = vrot.lane.b32.xlu0 %v3543, 24
        %v3735 = vpop.permute.xlu0 %3734
        %3736 = vrot.lane.b32.xlu0 %v3545, 24
        %v3737 = vpop.permute.xlu0 %3736
        %3738 = vrot.lane.b32.xlu0 %v3547, 24
        %v3739 = vpop.permute.xlu0 %3738
        %3740 = vrot.lane.b32.xlu0 %v3549, 24
        %v3741 = vpop.permute.xlu0 %3740
        %3742 = vrot.lane.b32.xlu0 %v3551, 24
        %v3743 = vpop.permute.xlu0 %3742
        %3744 = vrot.lane.b32.xlu0 %v3553, 24
        %v3745 = vpop.permute.xlu0 %3744
        %3746 = vrot.lane.b32.xlu0 %v3555, 24
        %v3747 = vpop.permute.xlu0 %3746
        %3748 = vrot.lane.b32.xlu0 %v3557, 24
        %v3749 = vpop.permute.xlu0 %3748
        %3750 = vrot.lane.b32.xlu0 %v3559, 24
        %v3751 = vpop.permute.xlu0 %3750
        %3752 = vrot.lane.b32.xlu0 %v3561, 24
        %v3753 = vpop.permute.xlu0 %3752
        %3754 = vrot.lane.b32.xlu0 %v3563, 24
        %v3755 = vpop.permute.xlu0 %3754
        %3756 = vrot.lane.b32.xlu0 %v3565, 24
        %v3757 = vpop.permute.xlu0 %3756
        %3758 = vrot.lane.b32.xlu0 %v3567, 24
        %v3759 = vpop.permute.xlu0 %3758
        %3760 = vrot.lane.b32.xlu0 %v3569, 24
        %v3761 = vpop.permute.xlu0 %3760
        %3762 = vrot.lane.b32.xlu0 %v3571, 24
        %v3763 = vpop.permute.xlu0 %3762
        %3764 = vrot.lane.b32.xlu0 %v3573, 24
        %v3765 = vpop.permute.xlu0 %3764
        %3766 = vrot.lane.b32.xlu0 %v3575, 24
        %v3767 = vpop.permute.xlu0 %3766
        %3768 = vrot.lane.b32.xlu0 %v3577, 24
        %v3769 = vpop.permute.xlu0 %3768
        %3770 = vrot.lane.b32.xlu0 %v3579, 24
        %v3771 = vpop.permute.xlu0 %3770
        %3772 = vrot.lane.b32.xlu0 %v3581, 24
        %v3773 = vpop.permute.xlu0 %3772
        %3774 = vrot.lane.b32.xlu0 %v3583, 24
        %v3775 = vpop.permute.xlu0 %3774
        %3776 = vrot.lane.b32.xlu0 %v3585, 24
        %v3777 = vpop.permute.xlu0 %3776
        %3778 = vrot.lane.b32.xlu0 %v3587, 24
        %v3779 = vpop.permute.xlu0 %3778
        %3780 = vrot.lane.b32.xlu0 %v3589, 24
        %v3781 = vpop.permute.xlu0 %3780
        %3782 = vrot.lane.b32.xlu0 %v3591, 24
        %v3783 = vpop.permute.xlu0 %3782
        %3784 = vrot.lane.b32.xlu0 %v3593, 24
        %v3785 = vpop.permute.xlu0 %3784
        %3786 = vrot.lane.b32.xlu0 %v3595, 24
        %v3787 = vpop.permute.xlu0 %3786
        %3789 = vrot.lane.b32.xlu0 %v3471, 48
        %v3790 = vpop.permute.xlu0 %3789
        %3791 = vrot.lane.b32.xlu0 %v3473, 48
        %v3792 = vpop.permute.xlu0 %3791
        %3793 = vrot.lane.b32.xlu0 %v3475, 48
        %v3794 = vpop.permute.xlu0 %3793
        %3795 = vrot.lane.b32.xlu0 %v3477, 48
        %v3796 = vpop.permute.xlu0 %3795
        %3797 = vrot.lane.b32.xlu0 %v3479, 48
        %v3798 = vpop.permute.xlu0 %3797
        %3799 = vrot.lane.b32.xlu0 %v3481, 48
        %v3800 = vpop.permute.xlu0 %3799
        %3801 = vrot.lane.b32.xlu0 %v3483, 48
        %v3802 = vpop.permute.xlu0 %3801
        %3803 = vrot.lane.b32.xlu0 0, 48
        %v3804 = vpop.permute.xlu0 %3803
        %3805 = vrot.lane.b32.xlu0 %v3487, 48
        %v3806 = vpop.permute.xlu0 %3805
        %3807 = vrot.lane.b32.xlu0 %v3489, 48
        %v3808 = vpop.permute.xlu0 %3807
        %3809 = vrot.lane.b32.xlu0 %v3491, 48
        %v3810 = vpop.permute.xlu0 %3809
        %3811 = vrot.lane.b32.xlu0 %v3493, 48
        %v3812 = vpop.permute.xlu0 %3811
        %3813 = vrot.lane.b32.xlu0 %v3495, 48
        %v3814 = vpop.permute.xlu0 %3813
        %3815 = vrot.lane.b32.xlu0 %v3497, 48
        %v3816 = vpop.permute.xlu0 %3815
        %3817 = vrot.lane.b32.xlu0 %v3499, 48
        %v3818 = vpop.permute.xlu0 %3817
        %3819 = vrot.lane.b32.xlu0 %v3503, 48
        %v3820 = vpop.permute.xlu0 %3819
        %3821 = vrot.lane.b32.xlu0 %v3505, 48
        %v3822 = vpop.permute.xlu0 %3821
        %3823 = vrot.lane.b32.xlu0 %v3507, 48
        %v3824 = vpop.permute.xlu0 %3823
        %3825 = vrot.lane.b32.xlu0 %v3509, 48
        %v3826 = vpop.permute.xlu0 %3825
        %3827 = vrot.lane.b32.xlu0 %v3511, 48
        %v3828 = vpop.permute.xlu0 %3827
        %3829 = vrot.lane.b32.xlu0 %v3513, 48
        %v3830 = vpop.permute.xlu0 %3829
        %3831 = vrot.lane.b32.xlu0 %v3515, 48
        %v3832 = vpop.permute.xlu0 %3831
        %3833 = vrot.lane.b32.xlu0 %v3519, 48
        %v3834 = vpop.permute.xlu0 %3833
        %3835 = vrot.lane.b32.xlu0 %v3521, 48
        %v3836 = vpop.permute.xlu0 %3835
        %3837 = vrot.lane.b32.xlu0 %v3523, 48
        %v3838 = vpop.permute.xlu0 %3837
        %3839 = vrot.lane.b32.xlu0 %v3525, 48
        %v3840 = vpop.permute.xlu0 %3839
        %3841 = vrot.lane.b32.xlu0 %v3527, 48
        %v3842 = vpop.permute.xlu0 %3841
        %3843 = vrot.lane.b32.xlu0 %v3529, 48
        %v3844 = vpop.permute.xlu0 %3843
        %3845 = vrot.lane.b32.xlu0 %v3531, 48
        %v3846 = vpop.permute.xlu0 %3845
        %3847 = vrot.lane.b32.xlu0 %v3535, 48
        %v3848 = vpop.permute.xlu0 %3847
        %3849 = vrot.lane.b32.xlu0 %v3537, 48
        %v3850 = vpop.permute.xlu0 %3849
        %3851 = vrot.lane.b32.xlu0 %v3539, 48
        %v3852 = vpop.permute.xlu0 %3851
        %3853 = vrot.lane.b32.xlu0 %v3541, 48
        %v3854 = vpop.permute.xlu0 %3853
        %3855 = vrot.lane.b32.xlu0 %v3543, 48
        %v3856 = vpop.permute.xlu0 %3855
        %3857 = vrot.lane.b32.xlu0 %v3545, 48
        %v3858 = vpop.permute.xlu0 %3857
        %3859 = vrot.lane.b32.xlu0 %v3547, 48
        %v3860 = vpop.permute.xlu0 %3859
        %3861 = vrot.lane.b32.xlu0 %v3551, 48
        %v3862 = vpop.permute.xlu0 %3861
        %3863 = vrot.lane.b32.xlu0 %v3553, 48
        %v3864 = vpop.permute.xlu0 %3863
        %3865 = vrot.lane.b32.xlu0 %v3555, 48
        %v3866 = vpop.permute.xlu0 %3865
        %3867 = vrot.lane.b32.xlu0 %v3557, 48
        %v3868 = vpop.permute.xlu0 %3867
        %3869 = vrot.lane.b32.xlu0 %v3559, 48
        %v3870 = vpop.permute.xlu0 %3869
        %3871 = vrot.lane.b32.xlu0 %v3561, 48
        %v3872 = vpop.permute.xlu0 %3871
        %3873 = vrot.lane.b32.xlu0 %v3563, 48
        %v3874 = vpop.permute.xlu0 %3873
        %3875 = vrot.lane.b32.xlu0 %v3567, 48
        %v3876 = vpop.permute.xlu0 %3875
        %3877 = vrot.lane.b32.xlu0 %v3569, 48
        %v3878 = vpop.permute.xlu0 %3877
        %3879 = vrot.lane.b32.xlu0 %v3571, 48
        %v3880 = vpop.permute.xlu0 %3879
        %3881 = vrot.lane.b32.xlu0 %v3573, 48
        %v3882 = vpop.permute.xlu0 %3881
        %3883 = vrot.lane.b32.xlu0 %v3575, 48
        %v3884 = vpop.permute.xlu0 %3883
        %3885 = vrot.lane.b32.xlu0 %v3577, 48
        %v3886 = vpop.permute.xlu0 %3885
        %3887 = vrot.lane.b32.xlu0 %v3579, 48
        %v3888 = vpop.permute.xlu0 %3887
        %3889 = vrot.lane.b32.xlu0 %v3583, 48
        %v3890 = vpop.permute.xlu0 %3889
        %3891 = vrot.lane.b32.xlu0 %v3585, 48
        %v3892 = vpop.permute.xlu0 %3891
        %3893 = vrot.lane.b32.xlu0 %v3587, 48
        %v3894 = vpop.permute.xlu0 %3893
        %3895 = vrot.lane.b32.xlu0 %v3589, 48
        %v3896 = vpop.permute.xlu0 %3895
        %3897 = vrot.lane.b32.xlu0 %v3591, 48
        %v3898 = vpop.permute.xlu0 %3897
        %3899 = vrot.lane.b32.xlu0 %v3593, 48
        %v3900 = vpop.permute.xlu0 %3899
        %3901 = vrot.lane.b32.xlu0 %v3595, 48
        %v3902 = vpop.permute.xlu0 %3901
        %vm3903 = vcmask 195584
        %v3906 = vsel %vm3903, 0, %v3661
        %v3908 = vsel %vm3903, %v3469, %v3663
        %v3910 = vsel %vm3903, %v3471, %v3665
        %v3912 = vsel %vm3903, %v3473, %v3667
        %v3914 = vsel %vm3903, %v3475, %v3669
        %v3916 = vsel %vm3903, %v3477, %v3671
        %v3918 = vsel %vm3903, %v3479, %v3673
        %v3920 = vsel %vm3903, %v3481, %v3675
        %v3922 = vsel %vm3903, 0, %v3677
        %v3924 = vsel %vm3903, %v3485, %v3679
        %v3926 = vsel %vm3903, %v3487, %v3681
        %v3928 = vsel %vm3903, %v3489, %v3683
        %v3930 = vsel %vm3903, %v3491, %v3685
        %v3932 = vsel %vm3903, %v3493, %v3687
        %v3934 = vsel %vm3903, %v3495, %v3689
        %v3936 = vsel %vm3903, %v3497, %v3691
        %v3938 = vsel %vm3903, 0, %v3693
        %v3940 = vsel %vm3903, %v3501, %v3695
        %v3942 = vsel %vm3903, %v3503, %v3697
        %v3944 = vsel %vm3903, %v3505, %v3699
        %v3946 = vsel %vm3903, %v3507, %v3701
        %v3948 = vsel %vm3903, %v3509, %v3703
        %v3950 = vsel %vm3903, %v3511, %v3705
        %v3952 = vsel %vm3903, %v3513, %v3707
        %v3954 = vsel %vm3903, 0, %v3709
        %v3956 = vsel %vm3903, %v3517, %v3711
        %v3958 = vsel %vm3903, %v3519, %v3713
        %v3960 = vsel %vm3903, %v3521, %v3715
        %v3962 = vsel %vm3903, %v3523, %v3717
        %v3964 = vsel %vm3903, %v3525, %v3719
        %v3966 = vsel %vm3903, %v3527, %v3721
        %v3968 = vsel %vm3903, %v3529, %v3723
        %v3970 = vsel %vm3903, 0, %v3725
        %v3972 = vsel %vm3903, %v3533, %v3727
        %v3974 = vsel %vm3903, %v3535, %v3729
        %v3976 = vsel %vm3903, %v3537, %v3731
        %v3978 = vsel %vm3903, %v3539, %v3733
        %v3980 = vsel %vm3903, %v3541, %v3735
        %v3982 = vsel %vm3903, %v3543, %v3737
        %v3984 = vsel %vm3903, %v3545, %v3739
        %v3986 = vsel %vm3903, 0, %v3741
        %v3988 = vsel %vm3903, %v3549, %v3743
        %v3990 = vsel %vm3903, %v3551, %v3745
        %v3992 = vsel %vm3903, %v3553, %v3747
        %v3994 = vsel %vm3903, %v3555, %v3749
        %v3996 = vsel %vm3903, %v3557, %v3751
        %v3998 = vsel %vm3903, %v3559, %v3753
        %v4000 = vsel %vm3903, %v3561, %v3755
        %v4002 = vsel %vm3903, 0, %v3757
        %v4004 = vsel %vm3903, %v3565, %v3759
        %v4006 = vsel %vm3903, %v3567, %v3761
        %v4008 = vsel %vm3903, %v3569, %v3763
        %v4010 = vsel %vm3903, %v3571, %v3765
        %v4012 = vsel %vm3903, %v3573, %v3767
        %v4014 = vsel %vm3903, %v3575, %v3769
        %v4016 = vsel %vm3903, %v3577, %v3771
        %v4018 = vsel %vm3903, 0, %v3773
        %v4020 = vsel %vm3903, %v3581, %v3775
        %v4022 = vsel %vm3903, %v3583, %v3777
        %v4024 = vsel %vm3903, %v3585, %v3779
        %v4026 = vsel %vm3903, %v3587, %v3781
        %v4028 = vsel %vm3903, %v3589, %v3783
        %v4030 = vsel %vm3903, %v3591, %v3785
        %v4032 = vsel %vm3903, %v3593, %v3787
        %vm4033 = vcmask 392192
        %v4035 = vsel %vm4033, %v3906, %v3790
        %v4038 = vsel %vm4033, %v3908, %v3792
        %v4041 = vsel %vm4033, %v3910, %v3794
        %v4044 = vsel %vm4033, %v3912, %v3796
        %v4047 = vsel %vm4033, %v3914, %v3798
        %v4050 = vsel %vm4033, %v3916, %v3800
        %v4053 = vsel %vm4033, %v3918, %v3802
        %v4056 = vsel %vm4033, %v3920, %v3804
        %v4059 = vsel %vm4033, %v3922, %v3806
        %v4062 = vsel %vm4033, %v3924, %v3808
        %v4065 = vsel %vm4033, %v3926, %v3810
        %v4068 = vsel %vm4033, %v3928, %v3812
        %v4071 = vsel %vm4033, %v3930, %v3814
        %v4074 = vsel %vm4033, %v3932, %v3816
        %v4077 = vsel %vm4033, %v3934, %v3818
        %v4079 = vsel %vm4033, %v3936, %v3804
        %v4082 = vsel %vm4033, %v3938, %v3820
        %v4085 = vsel %vm4033, %v3940, %v3822
        %v4088 = vsel %vm4033, %v3942, %v3824
        %v4091 = vsel %vm4033, %v3944, %v3826
        %v4094 = vsel %vm4033, %v3946, %v3828
        %v4097 = vsel %vm4033, %v3948, %v3830
        %v4100 = vsel %vm4033, %v3950, %v3832
        %v4102 = vsel %vm4033, %v3952, %v3804
        %v4105 = vsel %vm4033, %v3954, %v3834
        %v4108 = vsel %vm4033, %v3956, %v3836
        %v4111 = vsel %vm4033, %v3958, %v3838
        %v4114 = vsel %vm4033, %v3960, %v3840
        %v4117 = vsel %vm4033, %v3962, %v3842
        %v4120 = vsel %vm4033, %v3964, %v3844
        %v4123 = vsel %vm4033, %v3966, %v3846
        %v4125 = vsel %vm4033, %v3968, %v3804
        %v4128 = vsel %vm4033, %v3970, %v3848
        %v4131 = vsel %vm4033, %v3972, %v3850
        %v4134 = vsel %vm4033, %v3974, %v3852
        %v4137 = vsel %vm4033, %v3976, %v3854
        %v4140 = vsel %vm4033, %v3978, %v3856
        %v4143 = vsel %vm4033, %v3980, %v3858
        %v4146 = vsel %vm4033, %v3982, %v3860
        %v4148 = vsel %vm4033, %v3984, %v3804
        %v4151 = vsel %vm4033, %v3986, %v3862
        %v4154 = vsel %vm4033, %v3988, %v3864
        %v4157 = vsel %vm4033, %v3990, %v3866
        %v4160 = vsel %vm4033, %v3992, %v3868
        %v4163 = vsel %vm4033, %v3994, %v3870
        %v4166 = vsel %vm4033, %v3996, %v3872
        %v4169 = vsel %vm4033, %v3998, %v3874
        %v4171 = vsel %vm4033, %v4000, %v3804
        %v4174 = vsel %vm4033, %v4002, %v3876
        %v4177 = vsel %vm4033, %v4004, %v3878
        %v4180 = vsel %vm4033, %v4006, %v3880
        %v4183 = vsel %vm4033, %v4008, %v3882
        %v4186 = vsel %vm4033, %v4010, %v3884
        %v4189 = vsel %vm4033, %v4012, %v3886
        %v4192 = vsel %vm4033, %v4014, %v3888
        %v4194 = vsel %vm4033, %v4016, %v3804
        %v4197 = vsel %vm4033, %v4018, %v3890
        %v4200 = vsel %vm4033, %v4020, %v3892
        %v4203 = vsel %vm4033, %v4022, %v3894
        %v4206 = vsel %vm4033, %v4024, %v3896
        %v4209 = vsel %vm4033, %v4026, %v3898
        %v4212 = vsel %vm4033, %v4028, %v3900
        %v4215 = vsel %vm4033, %v4030, %v3902
        %v4217 = vsel %vm4033, %v4032, %v3804
        %vm4219 = vcmask 584704
        %4220 = vst.msk [vmem:[#allocation3] sm:$0xf] %vm4219, 0
        %4221 = vst.msk [vmem:[#allocation3 + $0x4] sm:$0xf] %vm4219, 0
        %4222 = vst.msk [vmem:[#allocation3 + $0x8] sm:$0xf] %vm4219, 0
        %4223 = vst.msk [vmem:[#allocation3 + $0xc] sm:$0xf] %vm4219, 0
        %4224 = vst.msk [vmem:[#allocation3 + $0x10] sm:$0xf] %vm4219, 0
        %4225 = vst.msk [vmem:[#allocation3 + $0x14] sm:$0xf] %vm4219, 0
        %4226 = vst.msk [vmem:[#allocation3 + $0x18] sm:$0xf] %vm4219, 0
        %4227 = vst.msk [vmem:[#allocation3 + $0x1c] sm:$0xf] %vm4219, 0
        %4228 = vst.msk [vmem:[#allocation3 + $0x120] sm:$0xf] %vm4219, 0
        %4229 = vst.msk [vmem:[#allocation3 + $0x124] sm:$0xf] %vm4219, 0
        %4230 = vst.msk [vmem:[#allocation3 + $0x128] sm:$0xf] %vm4219, 0
        %4231 = vst.msk [vmem:[#allocation3 + $0x12c] sm:$0xf] %vm4219, 0
        %4232 = vst.msk [vmem:[#allocation3 + $0x130] sm:$0xf] %vm4219, 0
        %4233 = vst.msk [vmem:[#allocation3 + $0x134] sm:$0xf] %vm4219, 0
        %4234 = vst.msk [vmem:[#allocation3 + $0x138] sm:$0xf] %vm4219, 0
        %4235 = vst.msk [vmem:[#allocation3 + $0x13c] sm:$0xf] %vm4219, 0
        %4236 = vst.msk [vmem:[#allocation3 + $0x20] sm:$0xf] %vm4219, %v4035
        %4237 = vst.msk [vmem:[#allocation3 + $0x24] sm:$0xf] %vm4219, %v4038
        %4238 = vst.msk [vmem:[#allocation3 + $0x28] sm:$0xf] %vm4219, %v4041
        %4239 = vst.msk [vmem:[#allocation3 + $0x2c] sm:$0xf] %vm4219, %v4044
        %4240 = vst.msk [vmem:[#allocation3 + $0x30] sm:$0xf] %vm4219, %v4047
        %4241 = vst.msk [vmem:[#allocation3 + $0x34] sm:$0xf] %vm4219, %v4050
        %4242 = vst.msk [vmem:[#allocation3 + $0x38] sm:$0xf] %vm4219, %v4053
        %4243 = vst.msk [vmem:[#allocation3 + $0x3c] sm:$0xf] %vm4219, %v4056
        %4244 = vst.msk [vmem:[#allocation3 + $0x40] sm:$0xf] %vm4219, %v4059
        %4245 = vst.msk [vmem:[#allocation3 + $0x44] sm:$0xf] %vm4219, %v4062
        %4246 = vst.msk [vmem:[#allocation3 + $0x48] sm:$0xf] %vm4219, %v4065
        %4247 = vst.msk [vmem:[#allocation3 + $0x4c] sm:$0xf] %vm4219, %v4068
        %4248 = vst.msk [vmem:[#allocation3 + $0x50] sm:$0xf] %vm4219, %v4071
        %4249 = vst.msk [vmem:[#allocation3 + $0x54] sm:$0xf] %vm4219, %v4074
        %4250 = vst.msk [vmem:[#allocation3 + $0x58] sm:$0xf] %vm4219, %v4077
        %4251 = vst.msk [vmem:[#allocation3 + $0x5c] sm:$0xf] %vm4219, %v4079
        %4252 = vst.msk [vmem:[#allocation3 + $0x60] sm:$0xf] %vm4219, %v4082
        %4253 = vst.msk [vmem:[#allocation3 + $0x64] sm:$0xf] %vm4219, %v4085
        %4254 = vst.msk [vmem:[#allocation3 + $0x68] sm:$0xf] %vm4219, %v4088
        %4255 = vst.msk [vmem:[#allocation3 + $0x6c] sm:$0xf] %vm4219, %v4091
        %4256 = vst.msk [vmem:[#allocation3 + $0x70] sm:$0xf] %vm4219, %v4094
        %4257 = vst.msk [vmem:[#allocation3 + $0x74] sm:$0xf] %vm4219, %v4097
        %4258 = vst.msk [vmem:[#allocation3 + $0x78] sm:$0xf] %vm4219, %v4100
        %4259 = vst.msk [vmem:[#allocation3 + $0x7c] sm:$0xf] %vm4219, %v4102
        %4260 = vst.msk [vmem:[#allocation3 + $0x80] sm:$0xf] %vm4219, %v4105
        %4261 = vst.msk [vmem:[#allocation3 + $0x84] sm:$0xf] %vm4219, %v4108
        %4262 = vst.msk [vmem:[#allocation3 + $0x88] sm:$0xf] %vm4219, %v4111
        %4263 = vst.msk [vmem:[#allocation3 + $0x8c] sm:$0xf] %vm4219, %v4114
        %4264 = vst.msk [vmem:[#allocation3 + $0x90] sm:$0xf] %vm4219, %v4117
        %4265 = vst.msk [vmem:[#allocation3 + $0x94] sm:$0xf] %vm4219, %v4120
        %4266 = vst.msk [vmem:[#allocation3 + $0x98] sm:$0xf] %vm4219, %v4123
        %4267 = vst.msk [vmem:[#allocation3 + $0x9c] sm:$0xf] %vm4219, %v4125
        %4268 = vst.msk [vmem:[#allocation3 + $0xa0] sm:$0xf] %vm4219, %v4128
        %4269 = vst.msk [vmem:[#allocation3 + $0xa4] sm:$0xf] %vm4219, %v4131
        %4270 = vst.msk [vmem:[#allocation3 + $0xa8] sm:$0xf] %vm4219, %v4134
        %4271 = vst.msk [vmem:[#allocation3 + $0xac] sm:$0xf] %vm4219, %v4137
        %4272 = vst.msk [vmem:[#allocation3 + $0xb0] sm:$0xf] %vm4219, %v4140
        %4273 = vst.msk [vmem:[#allocation3 + $0xb4] sm:$0xf] %vm4219, %v4143
        %4274 = vst.msk [vmem:[#allocation3 + $0xb8] sm:$0xf] %vm4219, %v4146
        %4275 = vst.msk [vmem:[#allocation3 + $0xbc] sm:$0xf] %vm4219, %v4148
        %4276 = vst.msk [vmem:[#allocation3 + $0xc0] sm:$0xf] %vm4219, %v4151
        %4277 = vst.msk [vmem:[#allocation3 + $0xc4] sm:$0xf] %vm4219, %v4154
        %4278 = vst.msk [vmem:[#allocation3 + $0xc8] sm:$0xf] %vm4219, %v4157
        %4279 = vst.msk [vmem:[#allocation3 + $0xcc] sm:$0xf] %vm4219, %v4160
        %4280 = vst.msk [vmem:[#allocation3 + $0xd0] sm:$0xf] %vm4219, %v4163
        %4281 = vst.msk [vmem:[#allocation3 + $0xd4] sm:$0xf] %vm4219, %v4166
        %4282 = vst.msk [vmem:[#allocation3 + $0xd8] sm:$0xf] %vm4219, %v4169
        %4283 = vst.msk [vmem:[#allocation3 + $0xdc] sm:$0xf] %vm4219, %v4171
        %4284 = vst.msk [vmem:[#allocation3 + $0xe0] sm:$0xf] %vm4219, %v4174
        %4285 = vst.msk [vmem:[#allocation3 + $0xe4] sm:$0xf] %vm4219, %v4177
        %4286 = vst.msk [vmem:[#allocation3 + $0xe8] sm:$0xf] %vm4219, %v4180
        %4287 = vst.msk [vmem:[#allocation3 + $0xec] sm:$0xf] %vm4219, %v4183
        %4288 = vst.msk [vmem:[#allocation3 + $0xf0] sm:$0xf] %vm4219, %v4186
        %4289 = vst.msk [vmem:[#allocation3 + $0xf4] sm:$0xf] %vm4219, %v4189
        %4290 = vst.msk [vmem:[#allocation3 + $0xf8] sm:$0xf] %vm4219, %v4192
        %4291 = vst.msk [vmem:[#allocation3 + $0xfc] sm:$0xf] %vm4219, %v4194
        %4292 = vst.msk [vmem:[#allocation3 + $0x100] sm:$0xf] %vm4219, %v4197
        %4293 = vst.msk [vmem:[#allocation3 + $0x104] sm:$0xf] %vm4219, %v4200
        %4294 = vst.msk [vmem:[#allocation3 + $0x108] sm:$0xf] %vm4219, %v4203
        %4295 = vst.msk [vmem:[#allocation3 + $0x10c] sm:$0xf] %vm4219, %v4206
        %4296 = vst.msk [vmem:[#allocation3 + $0x110] sm:$0xf] %vm4219, %v4209
        %4297 = vst.msk [vmem:[#allocation3 + $0x114] sm:$0xf] %vm4219, %v4212
        %4298 = vst.msk [vmem:[#allocation3 + $0x118] sm:$0xf] %vm4219, %v4215
        %4299 = vst.msk [vmem:[#allocation3 + $0x11c] sm:$0xf] %vm4219, %v4217
        %v4300 = vld [vmem:[#allocation3] sm:$0xf]
        %v4301 = vld [vmem:[#allocation3 + $0x4] sm:$0xf]
        %v4302 = vld [vmem:[#allocation3 + $0x8] sm:$0xf]
        %v4303 = vld [vmem:[#allocation3 + $0xc] sm:$0xf]
        %v4304 = vld [vmem:[#allocation3 + $0x10] sm:$0xf]
        %v4305 = vld [vmem:[#allocation3 + $0x14] sm:$0xf]
        %v4306 = vld [vmem:[#allocation3 + $0x18] sm:$0xf]
        %v4307 = vld [vmem:[#allocation3 + $0x1c] sm:$0xf]
        %v4308 = vld [vmem:[#allocation3 + $0x20] sm:$0xf]
        %v4309 = vld [vmem:[#allocation3 + $0x24] sm:$0xf]
        %v4310 = vld [vmem:[#allocation3 + $0x28] sm:$0xf]
        %v4311 = vld [vmem:[#allocation3 + $0x2c] sm:$0xf]
        %v4312 = vld [vmem:[#allocation3 + $0x30] sm:$0xf]
        %v4313 = vld [vmem:[#allocation3 + $0x34] sm:$0xf]
        %v4314 = vld [vmem:[#allocation3 + $0x38] sm:$0xf]
        %v4315 = vld [vmem:[#allocation3 + $0x3c] sm:$0xf]
        %v4316 = vld [vmem:[#allocation3 + $0x40] sm:$0xf]
        %v4317 = vld [vmem:[#allocation3 + $0x44] sm:$0xf]
        %v4318 = vld [vmem:[#allocation3 + $0x48] sm:$0xf]
        %v4319 = vld [vmem:[#allocation3 + $0x4c] sm:$0xf]
        %v4320 = vld [vmem:[#allocation3 + $0x50] sm:$0xf]
        %v4321 = vld [vmem:[#allocation3 + $0x54] sm:$0xf]
        %v4322 = vld [vmem:[#allocation3 + $0x58] sm:$0xf]
        %v4323 = vld [vmem:[#allocation3 + $0x5c] sm:$0xf]
        %v4324 = vld [vmem:[#allocation3 + $0x60] sm:$0xf]
        %v4325 = vld [vmem:[#allocation3 + $0x64] sm:$0xf]
        %v4326 = vld [vmem:[#allocation3 + $0x68] sm:$0xf]
        %v4327 = vld [vmem:[#allocation3 + $0x6c] sm:$0xf]
        %v4328 = vld [vmem:[#allocation3 + $0x70] sm:$0xf]
        %v4329 = vld [vmem:[#allocation3 + $0x74] sm:$0xf]
        %v4330 = vld [vmem:[#allocation3 + $0x78] sm:$0xf]
        %v4331 = vld [vmem:[#allocation3 + $0x7c] sm:$0xf]
        %v4332 = vld [vmem:[#allocation3 + $0x80] sm:$0xf]
        %v4333 = vld [vmem:[#allocation3 + $0x84] sm:$0xf]
        %v4334 = vld [vmem:[#allocation3 + $0x88] sm:$0xf]
        %v4335 = vld [vmem:[#allocation3 + $0x8c] sm:$0xf]
        %v4336 = vld [vmem:[#allocation3 + $0x90] sm:$0xf]
        %v4337 = vld [vmem:[#allocation3 + $0x94] sm:$0xf]
        %v4338 = vld [vmem:[#allocation3 + $0x98] sm:$0xf]
        %v4339 = vld [vmem:[#allocation3 + $0x9c] sm:$0xf]
        %v4340 = vld [vmem:[#allocation3 + $0xa0] sm:$0xf]
        %v4341 = vld [vmem:[#allocation3 + $0xa4] sm:$0xf]
        %v4342 = vld [vmem:[#allocation3 + $0xa8] sm:$0xf]
        %v4343 = vld [vmem:[#allocation3 + $0xac] sm:$0xf]
        %v4344 = vld [vmem:[#allocation3 + $0xb0] sm:$0xf]
        %v4345 = vld [vmem:[#allocation3 + $0xb4] sm:$0xf]
        %v4346 = vld [vmem:[#allocation3 + $0xb8] sm:$0xf]
        %v4347 = vld [vmem:[#allocation3 + $0xbc] sm:$0xf]
        %v4348 = vld [vmem:[#allocation3 + $0xc0] sm:$0xf]
        %v4349 = vld [vmem:[#allocation3 + $0xc4] sm:$0xf]
        %v4350 = vld [vmem:[#allocation3 + $0xc8] sm:$0xf]
        %v4351 = vld [vmem:[#allocation3 + $0xcc] sm:$0xf]
        %v4352 = vld [vmem:[#allocation3 + $0xd0] sm:$0xf]
        %v4353 = vld [vmem:[#allocation3 + $0xd4] sm:$0xf]
        %v4354 = vld [vmem:[#allocation3 + $0xd8] sm:$0xf]
        %v4355 = vld [vmem:[#allocation3 + $0xdc] sm:$0xf]
        %v4356 = vld [vmem:[#allocation3 + $0xe0] sm:$0xf]
        %v4357 = vld [vmem:[#allocation3 + $0xe4] sm:$0xf]
        %v4358 = vld [vmem:[#allocation3 + $0xe8] sm:$0xf]
        %v4359 = vld [vmem:[#allocation3 + $0xec] sm:$0xf]
        %v4360 = vld [vmem:[#allocation3 + $0xf0] sm:$0xf]
        %v4361 = vld [vmem:[#allocation3 + $0xf4] sm:$0xf]
        %v4362 = vld [vmem:[#allocation3 + $0xf8] sm:$0xf]
        %v4363 = vld [vmem:[#allocation3 + $0xfc] sm:$0xf]
        %v4364 = vld [vmem:[%s3] sm:$0xf]
        %v4365 = vld [vmem:[%s3 + $0x4] sm:$0xf]
        %v4366 = vld [vmem:[%s3 + $0x8] sm:$0xf]
        %v4367 = vld [vmem:[%s3 + $0xc] sm:$0xf]
        %v4368 = vld [vmem:[%s3 + $0x10] sm:$0xf]
        %v4369 = vld [vmem:[%s3 + $0x14] sm:$0xf]
        %v4370 = vld [vmem:[%s3 + $0x18] sm:$0xf]
        %v4371 = vld [vmem:[%s3 + $0x1c] sm:$0xf]
        %v4372 = vld [vmem:[%s3 + $0x20] sm:$0xf]
        %v4373 = vld [vmem:[#allocation3 + $0x100] sm:$0xf]
        %v4374 = vld [vmem:[#allocation3 + $0x104] sm:$0xf]
        %v4375 = vld [vmem:[#allocation3 + $0x108] sm:$0xf]
        %v4376 = vld [vmem:[#allocation3 + $0x10c] sm:$0xf]
        %v4377 = vld [vmem:[#allocation3 + $0x110] sm:$0xf]
        %v4378 = vld [vmem:[#allocation3 + $0x114] sm:$0xf]
        %v4379 = vld [vmem:[#allocation3 + $0x118] sm:$0xf]
        %v4380 = vld [vmem:[#allocation3 + $0x11c] sm:$0xf]
        %s4381 = scalar_lea.vmem %s3, 36
        %v4382 = vld [vmem:[%s4381] sm:$0xf]
        %v4383 = vld [vmem:[%s4381 + $0x4] sm:$0xf]
        %v4384 = vld [vmem:[%s4381 + $0x8] sm:$0xf]
        %v4385 = vld [vmem:[%s4381 + $0xc] sm:$0xf]
        %v4386 = vld [vmem:[%s4381 + $0x10] sm:$0xf]
        %v4387 = vld [vmem:[%s4381 + $0x14] sm:$0xf]
        %v4388 = vld [vmem:[%s4381 + $0x18] sm:$0xf]
        %v4389 = vld [vmem:[%s4381 + $0x1c] sm:$0xf]
        %v4390 = vld [vmem:[%s4381 + $0x20] sm:$0xf]
        %v4455 = vunpack.c.l.b16 %v4308
        %v4456 = vunpack.c.l.b16 %v4309
        %v4457 = vunpack.c.l.b16 %v4310
        %v4458 = vunpack.c.l.b16 %v4311
        %v4459 = vunpack.c.l.b16 %v4312
        %v4460 = vunpack.c.l.b16 %v4313
        %v4461 = vunpack.c.l.b16 %v4314
        %v4462 = vunpack.c.l.b16 %v4315
        %v4463 = vunpack.c.l.b16 %v4316
        %v4464 = vunpack.c.l.b16 %v4317
        %v4465 = vunpack.c.l.b16 %v4318
        %v4466 = vunpack.c.l.b16 %v4319
        %v4467 = vunpack.c.l.b16 %v4320
        %v4468 = vunpack.c.l.b16 %v4321
        %v4469 = vunpack.c.l.b16 %v4322
        %v4470 = vunpack.c.l.b16 %v4323
        %v4471 = vunpack.c.l.b16 %v4324
        %v4472 = vunpack.c.l.b16 %v4325
        %v4473 = vunpack.c.l.b16 %v4326
        %v4474 = vunpack.c.l.b16 %v4327
        %v4475 = vunpack.c.l.b16 %v4328
        %v4476 = vunpack.c.l.b16 %v4329
        %v4477 = vunpack.c.l.b16 %v4330
        %v4478 = vunpack.c.l.b16 %v4331
        %v4479 = vunpack.c.l.b16 %v4332
        %v4480 = vunpack.c.l.b16 %v4333
        %v4481 = vunpack.c.l.b16 %v4334
        %v4482 = vunpack.c.l.b16 %v4335
        %v4483 = vunpack.c.l.b16 %v4336
        %v4484 = vunpack.c.l.b16 %v4337
        %v4485 = vunpack.c.l.b16 %v4338
        %v4486 = vunpack.c.l.b16 %v4339
        %v4487 = vunpack.c.l.b16 %v4340
        %v4488 = vunpack.c.l.b16 %v4341
        %v4489 = vunpack.c.l.b16 %v4342
        %v4490 = vunpack.c.l.b16 %v4343
        %v4491 = vunpack.c.l.b16 %v4344
        %v4492 = vunpack.c.l.b16 %v4345
        %v4493 = vunpack.c.l.b16 %v4346
        %v4494 = vunpack.c.l.b16 %v4347
        %v4495 = vunpack.c.l.b16 %v4348
        %v4496 = vunpack.c.l.b16 %v4349
        %v4497 = vunpack.c.l.b16 %v4350
        %v4498 = vunpack.c.l.b16 %v4351
        %v4499 = vunpack.c.l.b16 %v4352
        %v4500 = vunpack.c.l.b16 %v4353
        %v4501 = vunpack.c.l.b16 %v4354
        %v4502 = vunpack.c.l.b16 %v4355
        %v4503 = vunpack.c.l.b16 %v4356
        %v4504 = vunpack.c.l.b16 %v4357
        %v4505 = vunpack.c.l.b16 %v4358
        %v4506 = vunpack.c.l.b16 %v4359
        %v4507 = vunpack.c.l.b16 %v4360
        %v4508 = vunpack.c.l.b16 %v4361
        %v4509 = vunpack.c.l.b16 %v4362
        %v4510 = vunpack.c.l.b16 %v4363
        %v4511 = vunpack.c.l.b16 %v4373
        %v4512 = vunpack.c.l.b16 %v4374
        %v4513 = vunpack.c.l.b16 %v4375
        %v4514 = vunpack.c.l.b16 %v4376
        %v4515 = vunpack.c.l.b16 %v4377
        %v4516 = vunpack.c.l.b16 %v4378
        %v4517 = vunpack.c.l.b16 %v4379
        %v4518 = vunpack.c.l.b16 %v4380
        %v4519 = vpack.c.b16 %v4456, %v4455
        %v4520 = vpack.c.b16 %v4458, %v4457
        %v4521 = vpack.c.b16 %v4460, %v4459
        %v4522 = vpack.c.b16 %v4462, %v4461
        %v4523 = vpack.c.b16 %v4464, %v4463
        %v4524 = vpack.c.b16 %v4466, %v4465
        %v4525 = vpack.c.b16 %v4468, %v4467
        %v4526 = vpack.c.b16 %v4470, %v4469
        %v4527 = vpack.c.b16 %v4472, %v4471
        %v4528 = vpack.c.b16 %v4474, %v4473
        %v4529 = vpack.c.b16 %v4476, %v4475
        %v4530 = vpack.c.b16 %v4478, %v4477
        %v4531 = vpack.c.b16 %v4480, %v4479
        %v4532 = vpack.c.b16 %v4482, %v4481
        %v4533 = vpack.c.b16 %v4484, %v4483
        %v4534 = vpack.c.b16 %v4486, %v4485
        %v4535 = vpack.c.b16 %v4488, %v4487
        %v4536 = vpack.c.b16 %v4490, %v4489
        %v4537 = vpack.c.b16 %v4492, %v4491
        %v4538 = vpack.c.b16 %v4494, %v4493
        %v4539 = vpack.c.b16 %v4496, %v4495
        %v4540 = vpack.c.b16 %v4498, %v4497
        %v4541 = vpack.c.b16 %v4500, %v4499
        %v4542 = vpack.c.b16 %v4502, %v4501
        %v4543 = vpack.c.b16 %v4504, %v4503
        %v4544 = vpack.c.b16 %v4506, %v4505
        %v4545 = vpack.c.b16 %v4508, %v4507
        %v4546 = vpack.c.b16 %v4510, %v4509
        %v4547 = vpack.c.b16 %v4512, %v4511
        %v4548 = vpack.c.b16 %v4514, %v4513
        %v4549 = vpack.c.b16 %v4516, %v4515
        %v4550 = vpack.c.b16 %v4518, %v4517
        %v4560 = vunpack.c.l.b16 %v4382
        %v4561 = vunpack.c.l.b16 %v4383
        %v4562 = vunpack.c.l.b16 %v4384
        %v4563 = vunpack.c.l.b16 %v4385
        %v4564 = vunpack.c.l.b16 %v4386
        %v4565 = vunpack.c.l.b16 %v4387
        %v4566 = vunpack.c.l.b16 %v4388
        %v4567 = vunpack.c.l.b16 %v4389
        %v4568 = vunpack.c.l.b16 %v4390
        %v4569 = vpack.c.b16 %v4561, %v4560
        %v4570 = vpack.c.b16 %v4563, %v4562
        %v4571 = vpack.c.b16 %v4565, %v4564
        %v4572 = vpack.c.b16 %v4567, %v4566
        %v4573 = vpack.c.b16 %v4568, %v4568
        %vm4578 = vcmask 588800
        %v4580 = vsel %vm4578, %v4519, 0
        %v4583 = vsel %vm4578, %v4520, 0
        %v4586 = vsel %vm4578, %v4521, 0
        %v4589 = vsel %vm4578, %v4522, 0
        %v4592 = vsel %vm4578, %v4523, 0
        %v4595 = vsel %vm4578, %v4524, 0
        %v4598 = vsel %vm4578, %v4525, 0
        %v4601 = vsel %vm4578, %v4526, 0
        %v4604 = vsel %vm4578, %v4527, 0
        %v4607 = vsel %vm4578, %v4528, 0
        %v4610 = vsel %vm4578, %v4529, 0
        %v4613 = vsel %vm4578, %v4530, 0
        %v4616 = vsel %vm4578, %v4531, 0
        %v4619 = vsel %vm4578, %v4532, 0
        %v4622 = vsel %vm4578, %v4533, 0
        %v4625 = vsel %vm4578, %v4534, 0
        %v4628 = vsel %vm4578, %v4535, 0
        %v4631 = vsel %vm4578, %v4536, 0
        %v4634 = vsel %vm4578, %v4537, 0
        %v4637 = vsel %vm4578, %v4538, 0
        %v4640 = vsel %vm4578, %v4539, 0
        %v4643 = vsel %vm4578, %v4540, 0
        %v4646 = vsel %vm4578, %v4541, 0
        %v4649 = vsel %vm4578, %v4542, 0
        %v4652 = vsel %vm4578, %v4543, 0
        %v4655 = vsel %vm4578, %v4544, 0
        %v4658 = vsel %vm4578, %v4545, 0
        %v4661 = vsel %vm4578, %v4546, 0
        %v4664 = vsel %vm4578, %v4547, 0
        %v4667 = vsel %vm4578, %v4548, 0
        %v4670 = vsel %vm4578, %v4549, 0
        %v4673 = vsel %vm4578, %v4550, 0
        %vm4675 = vcmask 1043456
        %v4677 = vsel %vm4675, %v4573, 0
        %4679 = vmatpush.bf16.msra.mxu0 0
        %4680 = vmatpush.bf16.msra.mxu0 0
        %4681 = vmatpush.bf16.msra.mxu0 0
        %4682 = vmatpush.bf16.msra.mxu0 %v4677
        %4683 = vmatpush.bf16.msra.mxu0 %v4572
        %4684 = vmatpush.bf16.msra.mxu0 %v4571
        %4685 = vmatpush.bf16.msra.mxu0 %v4570
        %4686 = vmatpush.bf16.msra.mxu0 %v4569
        %4687 = vmatmul.bf16.gmra.mxu0 %v4580
        %v4688 = vpop.f32.mrf.mxu0
        %v4689 = vadd.f32 0.0, %v4688
        %v4690 = vpop.f32.mrf.mxu0
        %v4691 = vadd.f32 0.0, %v4690
        %4692 = vmatmul.bf16.gmra.mxu0 %v4583
        %v4693 = vpop.f32.mrf.mxu0
        %v4694 = vadd.f32 0.0, %v4693
        %v4695 = vpop.f32.mrf.mxu0
        %v4696 = vadd.f32 0.0, %v4695
        %4697 = vmatmul.bf16.gmra.mxu0 %v4586
        %v4698 = vpop.f32.mrf.mxu0
        %v4699 = vadd.f32 0.0, %v4698
        %v4700 = vpop.f32.mrf.mxu0
        %v4701 = vadd.f32 0.0, %v4700
        %4702 = vmatmul.bf16.gmra.mxu0 %v4589
        %v4703 = vpop.f32.mrf.mxu0
        %v4704 = vadd.f32 0.0, %v4703
        %v4705 = vpop.f32.mrf.mxu0
        %v4706 = vadd.f32 0.0, %v4705
        %4707 = vmatmul.bf16.gmra.mxu0 %v4592
        %v4708 = vpop.f32.mrf.mxu0
        %v4709 = vadd.f32 0.0, %v4708
        %v4710 = vpop.f32.mrf.mxu0
        %v4711 = vadd.f32 0.0, %v4710
        %4712 = vmatmul.bf16.gmra.mxu0 %v4595
        %v4713 = vpop.f32.mrf.mxu0
        %v4714 = vadd.f32 0.0, %v4713
        %v4715 = vpop.f32.mrf.mxu0
        %v4716 = vadd.f32 0.0, %v4715
        %4717 = vmatmul.bf16.gmra.mxu0 %v4598
        %v4718 = vpop.f32.mrf.mxu0
        %v4719 = vadd.f32 0.0, %v4718
        %v4720 = vpop.f32.mrf.mxu0
        %v4721 = vadd.f32 0.0, %v4720
        %4722 = vmatmul.bf16.gmra.mxu0 %v4601
        %v4723 = vpop.f32.mrf.mxu0
        %v4724 = vadd.f32 0.0, %v4723
        %v4725 = vpop.f32.mrf.mxu0
        %v4726 = vadd.f32 0.0, %v4725
        %4727 = vmatmul.bf16.gmra.mxu0 %v4604
        %v4728 = vpop.f32.mrf.mxu0
        %v4729 = vadd.f32 0.0, %v4728
        %v4730 = vpop.f32.mrf.mxu0
        %v4731 = vadd.f32 0.0, %v4730
        %4732 = vmatmul.bf16.gmra.mxu0 %v4607
        %v4733 = vpop.f32.mrf.mxu0
        %v4734 = vadd.f32 0.0, %v4733
        %v4735 = vpop.f32.mrf.mxu0
        %v4736 = vadd.f32 0.0, %v4735
        %4737 = vmatmul.bf16.gmra.mxu0 %v4610
        %v4738 = vpop.f32.mrf.mxu0
        %v4739 = vadd.f32 0.0, %v4738
        %v4740 = vpop.f32.mrf.mxu0
        %v4741 = vadd.f32 0.0, %v4740
        %4742 = vmatmul.bf16.gmra.mxu0 %v4613
        %v4743 = vpop.f32.mrf.mxu0
        %v4744 = vadd.f32 0.0, %v4743
        %v4745 = vpop.f32.mrf.mxu0
        %v4746 = vadd.f32 0.0, %v4745
        %4747 = vmatmul.bf16.gmra.mxu0 %v4616
        %v4748 = vpop.f32.mrf.mxu0
        %v4749 = vadd.f32 0.0, %v4748
        %v4750 = vpop.f32.mrf.mxu0
        %v4751 = vadd.f32 0.0, %v4750
        %4752 = vmatmul.bf16.gmra.mxu0 %v4619
        %v4753 = vpop.f32.mrf.mxu0
        %v4754 = vadd.f32 0.0, %v4753
        %v4755 = vpop.f32.mrf.mxu0
        %v4756 = vadd.f32 0.0, %v4755
        %4757 = vmatmul.bf16.gmra.mxu0 %v4622
        %v4758 = vpop.f32.mrf.mxu0
        %v4759 = vadd.f32 0.0, %v4758
        %v4760 = vpop.f32.mrf.mxu0
        %v4761 = vadd.f32 0.0, %v4760
        %4762 = vmatmul.bf16.gmra.mxu0 %v4625
        %v4763 = vpop.f32.mrf.mxu0
        %v4764 = vadd.f32 0.0, %v4763
        %v4765 = vpop.f32.mrf.mxu0
        %v4766 = vadd.f32 0.0, %v4765
        %4767 = vmatmul.bf16.gmra.mxu0 %v4628
        %v4768 = vpop.f32.mrf.mxu0
        %v4769 = vadd.f32 0.0, %v4768
        %v4770 = vpop.f32.mrf.mxu0
        %v4771 = vadd.f32 0.0, %v4770
        %4772 = vmatmul.bf16.gmra.mxu0 %v4631
        %v4773 = vpop.f32.mrf.mxu0
        %v4774 = vadd.f32 0.0, %v4773
        %v4775 = vpop.f32.mrf.mxu0
        %v4776 = vadd.f32 0.0, %v4775
        %4777 = vmatmul.bf16.gmra.mxu0 %v4634
        %v4778 = vpop.f32.mrf.mxu0
        %v4779 = vadd.f32 0.0, %v4778
        %v4780 = vpop.f32.mrf.mxu0
        %v4781 = vadd.f32 0.0, %v4780
        %4782 = vmatmul.bf16.gmra.mxu0 %v4637
        %v4783 = vpop.f32.mrf.mxu0
        %v4784 = vadd.f32 0.0, %v4783
        %v4785 = vpop.f32.mrf.mxu0
        %v4786 = vadd.f32 0.0, %v4785
        %4787 = vmatmul.bf16.gmra.mxu0 %v4640
        %v4788 = vpop.f32.mrf.mxu0
        %v4789 = vadd.f32 0.0, %v4788
        %v4790 = vpop.f32.mrf.mxu0
        %v4791 = vadd.f32 0.0, %v4790
        %4792 = vmatmul.bf16.gmra.mxu0 %v4643
        %v4793 = vpop.f32.mrf.mxu0
        %v4794 = vadd.f32 0.0, %v4793
        %v4795 = vpop.f32.mrf.mxu0
        %v4796 = vadd.f32 0.0, %v4795
        %4797 = vmatmul.bf16.gmra.mxu0 %v4646
        %v4798 = vpop.f32.mrf.mxu0
        %v4799 = vadd.f32 0.0, %v4798
        %v4800 = vpop.f32.mrf.mxu0
        %v4801 = vadd.f32 0.0, %v4800
        %4802 = vmatmul.bf16.gmra.mxu0 %v4649
        %v4803 = vpop.f32.mrf.mxu0
        %v4804 = vadd.f32 0.0, %v4803
        %v4805 = vpop.f32.mrf.mxu0
        %v4806 = vadd.f32 0.0, %v4805
        %4807 = vmatmul.bf16.gmra.mxu0 %v4652
        %v4808 = vpop.f32.mrf.mxu0
        %v4809 = vadd.f32 0.0, %v4808
        %v4810 = vpop.f32.mrf.mxu0
        %v4811 = vadd.f32 0.0, %v4810
        %4812 = vmatmul.bf16.gmra.mxu0 %v4655
        %v4813 = vpop.f32.mrf.mxu0
        %v4814 = vadd.f32 0.0, %v4813
        %v4815 = vpop.f32.mrf.mxu0
        %v4816 = vadd.f32 0.0, %v4815
        %4817 = vmatmul.bf16.gmra.mxu0 %v4658
        %v4818 = vpop.f32.mrf.mxu0
        %v4819 = vadd.f32 0.0, %v4818
        %v4820 = vpop.f32.mrf.mxu0
        %v4821 = vadd.f32 0.0, %v4820
        %4822 = vmatmul.bf16.gmra.mxu0 %v4661
        %v4823 = vpop.f32.mrf.mxu0
        %v4824 = vadd.f32 0.0, %v4823
        %v4825 = vpop.f32.mrf.mxu0
        %v4826 = vadd.f32 0.0, %v4825
        %4827 = vmatmul.bf16.gmra.mxu0 %v4664
        %v4828 = vpop.f32.mrf.mxu0
        %v4829 = vadd.f32 0.0, %v4828
        %v4830 = vpop.f32.mrf.mxu0
        %v4831 = vadd.f32 0.0, %v4830
        %4832 = vmatmul.bf16.gmra.mxu0 %v4667
        %v4833 = vpop.f32.mrf.mxu0
        %v4834 = vadd.f32 0.0, %v4833
        %v4835 = vpop.f32.mrf.mxu0
        %v4836 = vadd.f32 0.0, %v4835
        %4837 = vmatmul.bf16.gmra.mxu0 %v4670
        %v4838 = vpop.f32.mrf.mxu0
        %v4839 = vadd.f32 0.0, %v4838
        %v4840 = vpop.f32.mrf.mxu0
        %v4841 = vadd.f32 0.0, %v4840
        %4842 = vmatmul.bf16.gmra.mxu0 %v4673
        %v4843 = vpop.f32.mrf.mxu0
        %v4844 = vadd.f32 0.0, %v4843
        %v4845 = vpop.f32.mrf.mxu0
        %v4846 = vadd.f32 0.0, %v4845
        %4847 = vdwg.mxu0
        %v4856 = vunpack.c.l.b16 %v4300
        %v4857 = vunpack.c.l.b16 %v4301
        %v4858 = vunpack.c.l.b16 %v4302
        %v4859 = vunpack.c.l.b16 %v4303
        %v4860 = vunpack.c.l.b16 %v4304
        %v4861 = vunpack.c.l.b16 %v4305
        %v4862 = vunpack.c.l.b16 %v4306
        %v4863 = vunpack.c.l.b16 %v4307
        %v4864 = vpack.c.b16 %v4857, %v4856
        %v4865 = vpack.c.b16 %v4859, %v4858
        %v4866 = vpack.c.b16 %v4861, %v4860
        %v4867 = vpack.c.b16 %v4863, %v4862
        %v4877 = vunpack.c.l.b16 %v4364
        %v4878 = vunpack.c.l.b16 %v4365
        %v4879 = vunpack.c.l.b16 %v4366
        %v4880 = vunpack.c.l.b16 %v4367
        %v4881 = vunpack.c.l.b16 %v4368
        %v4882 = vunpack.c.l.b16 %v4369
        %v4883 = vunpack.c.l.b16 %v4370
        %v4884 = vunpack.c.l.b16 %v4371
        %v4885 = vunpack.c.l.b16 %v4372
        %v4886 = vpack.c.b16 %v4878, %v4877
        %v4887 = vpack.c.b16 %v4880, %v4879
        %v4888 = vpack.c.b16 %v4882, %v4881
        %v4889 = vpack.c.b16 %v4884, %v4883
        %v4890 = vpack.c.b16 %v4885, %v4885
        %v4896 = vsel %vm4578, %v4864, 0
        %v4899 = vsel %vm4578, %v4865, 0
        %v4902 = vsel %vm4578, %v4866, 0
        %v4905 = vsel %vm4578, %v4867, 0
        %v4908 = vsel %vm4675, %v4890, 0
        %4910 = vmatpush.bf16.msra.mxu0 0
        %4911 = vmatpush.bf16.msra.mxu0 0
        %4912 = vmatpush.bf16.msra.mxu0 0
        %4913 = vmatpush.bf16.msra.mxu0 %v4908
        %4914 = vmatpush.bf16.msra.mxu0 %v4889
        %4915 = vmatpush.bf16.msra.mxu0 %v4888
        %4916 = vmatpush.bf16.msra.mxu0 %v4887
        %4917 = vmatpush.bf16.msra.mxu0 %v4886
        %4918 = vmatmul.bf16.gmra.mxu0 %v4896
        %v4919 = vpop.f32.mrf.mxu0
        %v4920 = vadd.f32 %v4689, %v4919
        %v4921 = vpop.f32.mrf.mxu0
        %v4922 = vadd.f32 %v4691, %v4921
        %4923 = vmatmul.bf16.gmra.mxu0 %v4899
        %v4924 = vpop.f32.mrf.mxu0
        %v4925 = vadd.f32 %v4694, %v4924
        %v4926 = vpop.f32.mrf.mxu0
        %v4927 = vadd.f32 %v4696, %v4926
        %4928 = vmatmul.bf16.gmra.mxu0 %v4902
        %v4929 = vpop.f32.mrf.mxu0
        %v4930 = vadd.f32 %v4699, %v4929
        %v4931 = vpop.f32.mrf.mxu0
        %v4932 = vadd.f32 %v4701, %v4931
        %4933 = vmatmul.bf16.gmra.mxu0 %v4905
        %v4934 = vpop.f32.mrf.mxu0
        %v4935 = vadd.f32 %v4704, %v4934
        %v4936 = vpop.f32.mrf.mxu0
        %v4937 = vadd.f32 %v4706, %v4936
        %4938 = vmatmul.bf16.gmra.mxu0 %v4580
        %v4939 = vpop.f32.mrf.mxu0
        %v4940 = vadd.f32 %v4709, %v4939
        %v4941 = vpop.f32.mrf.mxu0
        %v4942 = vadd.f32 %v4711, %v4941
        %4943 = vmatmul.bf16.gmra.mxu0 %v4583
        %v4944 = vpop.f32.mrf.mxu0
        %v4945 = vadd.f32 %v4714, %v4944
        %v4946 = vpop.f32.mrf.mxu0
        %v4947 = vadd.f32 %v4716, %v4946
        %4948 = vmatmul.bf16.gmra.mxu0 %v4586
        %v4949 = vpop.f32.mrf.mxu0
        %v4950 = vadd.f32 %v4719, %v4949
        %v4951 = vpop.f32.mrf.mxu0
        %v4952 = vadd.f32 %v4721, %v4951
        %4953 = vmatmul.bf16.gmra.mxu0 %v4589
        %v4954 = vpop.f32.mrf.mxu0
        %v4955 = vadd.f32 %v4724, %v4954
        %v4956 = vpop.f32.mrf.mxu0
        %v4957 = vadd.f32 %v4726, %v4956
        %4958 = vmatmul.bf16.gmra.mxu0 %v4592
        %v4959 = vpop.f32.mrf.mxu0
        %v4960 = vadd.f32 %v4729, %v4959
        %v4961 = vpop.f32.mrf.mxu0
        %v4962 = vadd.f32 %v4731, %v4961
        %4963 = vmatmul.bf16.gmra.mxu0 %v4595
        %v4964 = vpop.f32.mrf.mxu0
        %v4965 = vadd.f32 %v4734, %v4964
        %v4966 = vpop.f32.mrf.mxu0
        %v4967 = vadd.f32 %v4736, %v4966
        %4968 = vmatmul.bf16.gmra.mxu0 %v4598
        %v4969 = vpop.f32.mrf.mxu0
        %v4970 = vadd.f32 %v4739, %v4969
        %v4971 = vpop.f32.mrf.mxu0
        %v4972 = vadd.f32 %v4741, %v4971
        %4973 = vmatmul.bf16.gmra.mxu0 %v4601
        %v4974 = vpop.f32.mrf.mxu0
        %v4975 = vadd.f32 %v4744, %v4974
        %v4976 = vpop.f32.mrf.mxu0
        %v4977 = vadd.f32 %v4746, %v4976
        %4978 = vmatmul.bf16.gmra.mxu0 %v4604
        %v4979 = vpop.f32.mrf.mxu0
        %v4980 = vadd.f32 %v4749, %v4979
        %v4981 = vpop.f32.mrf.mxu0
        %v4982 = vadd.f32 %v4751, %v4981
        %4983 = vmatmul.bf16.gmra.mxu0 %v4607
        %v4984 = vpop.f32.mrf.mxu0
        %v4985 = vadd.f32 %v4754, %v4984
        %v4986 = vpop.f32.mrf.mxu0
        %v4987 = vadd.f32 %v4756, %v4986
        %4988 = vmatmul.bf16.gmra.mxu0 %v4610
        %v4989 = vpop.f32.mrf.mxu0
        %v4990 = vadd.f32 %v4759, %v4989
        %v4991 = vpop.f32.mrf.mxu0
        %v4992 = vadd.f32 %v4761, %v4991
        %4993 = vmatmul.bf16.gmra.mxu0 %v4613
        %v4994 = vpop.f32.mrf.mxu0
        %v4995 = vadd.f32 %v4764, %v4994
        %v4996 = vpop.f32.mrf.mxu0
        %v4997 = vadd.f32 %v4766, %v4996
        %4998 = vmatmul.bf16.gmra.mxu0 %v4616
        %v4999 = vpop.f32.mrf.mxu0
        %v5000 = vadd.f32 %v4769, %v4999
        %v5001 = vpop.f32.mrf.mxu0
        %v5002 = vadd.f32 %v4771, %v5001
        %5003 = vmatmul.bf16.gmra.mxu0 %v4619
        %v5004 = vpop.f32.mrf.mxu0
        %v5005 = vadd.f32 %v4774, %v5004
        %v5006 = vpop.f32.mrf.mxu0
        %v5007 = vadd.f32 %v4776, %v5006
        %5008 = vmatmul.bf16.gmra.mxu0 %v4622
        %v5009 = vpop.f32.mrf.mxu0
        %v5010 = vadd.f32 %v4779, %v5009
        %v5011 = vpop.f32.mrf.mxu0
        %v5012 = vadd.f32 %v4781, %v5011
        %5013 = vmatmul.bf16.gmra.mxu0 %v4625
        %v5014 = vpop.f32.mrf.mxu0
        %v5015 = vadd.f32 %v4784, %v5014
        %v5016 = vpop.f32.mrf.mxu0
        %v5017 = vadd.f32 %v4786, %v5016
        %5018 = vmatmul.bf16.gmra.mxu0 %v4628
        %v5019 = vpop.f32.mrf.mxu0
        %v5020 = vadd.f32 %v4789, %v5019
        %v5021 = vpop.f32.mrf.mxu0
        %v5022 = vadd.f32 %v4791, %v5021
        %5023 = vmatmul.bf16.gmra.mxu0 %v4631
        %v5024 = vpop.f32.mrf.mxu0
        %v5025 = vadd.f32 %v4794, %v5024
        %v5026 = vpop.f32.mrf.mxu0
        %v5027 = vadd.f32 %v4796, %v5026
        %5028 = vmatmul.bf16.gmra.mxu0 %v4634
        %v5029 = vpop.f32.mrf.mxu0
        %v5030 = vadd.f32 %v4799, %v5029
        %v5031 = vpop.f32.mrf.mxu0
        %v5032 = vadd.f32 %v4801, %v5031
        %5033 = vmatmul.bf16.gmra.mxu0 %v4637
        %v5034 = vpop.f32.mrf.mxu0
        %v5035 = vadd.f32 %v4804, %v5034
        %v5036 = vpop.f32.mrf.mxu0
        %v5037 = vadd.f32 %v4806, %v5036
        %5038 = vmatmul.bf16.gmra.mxu0 %v4640
        %v5039 = vpop.f32.mrf.mxu0
        %v5040 = vadd.f32 %v4809, %v5039
        %v5041 = vpop.f32.mrf.mxu0
        %v5042 = vadd.f32 %v4811, %v5041
        %5043 = vmatmul.bf16.gmra.mxu0 %v4643
        %v5044 = vpop.f32.mrf.mxu0
        %v5045 = vadd.f32 %v4814, %v5044
        %v5046 = vpop.f32.mrf.mxu0
        %v5047 = vadd.f32 %v4816, %v5046
        %5048 = vmatmul.bf16.gmra.mxu0 %v4646
        %v5049 = vpop.f32.mrf.mxu0
        %v5050 = vadd.f32 %v4819, %v5049
        %v5051 = vpop.f32.mrf.mxu0
        %v5052 = vadd.f32 %v4821, %v5051
        %5053 = vmatmul.bf16.gmra.mxu0 %v4649
        %v5054 = vpop.f32.mrf.mxu0
        %v5055 = vadd.f32 %v4824, %v5054
        %v5056 = vpop.f32.mrf.mxu0
        %v5057 = vadd.f32 %v4826, %v5056
        %5058 = vmatmul.bf16.gmra.mxu0 %v4652
        %v5059 = vpop.f32.mrf.mxu0
        %v5060 = vadd.f32 %v4829, %v5059
        %v5061 = vpop.f32.mrf.mxu0
        %v5062 = vadd.f32 %v4831, %v5061
        %5063 = vmatmul.bf16.gmra.mxu0 %v4655
        %v5064 = vpop.f32.mrf.mxu0
        %v5065 = vadd.f32 %v4834, %v5064
        %v5066 = vpop.f32.mrf.mxu0
        %v5067 = vadd.f32 %v4836, %v5066
        %5068 = vmatmul.bf16.gmra.mxu0 %v4658
        %v5069 = vpop.f32.mrf.mxu0
        %v5070 = vadd.f32 %v4839, %v5069
        %v5071 = vpop.f32.mrf.mxu0
        %v5072 = vadd.f32 %v4841, %v5071
        %5073 = vmatmul.bf16.gmra.mxu0 %v4661
        %v5074 = vpop.f32.mrf.mxu0
        %v5075 = vadd.f32 %v4844, %v5074
        %v5076 = vpop.f32.mrf.mxu0
        %v5077 = vadd.f32 %v4846, %v5076
        %5078 = vdwg.mxu0
        %v5079 = vld [vmem:[#allocation3 + $0x40] sm:$0xf]
        %v5080 = vld [vmem:[#allocation3 + $0x44] sm:$0xf]
        %v5081 = vld [vmem:[#allocation3 + $0x48] sm:$0xf]
        %v5082 = vld [vmem:[#allocation3 + $0x4c] sm:$0xf]
        %v5083 = vld [vmem:[#allocation3 + $0x50] sm:$0xf]
        %v5084 = vld [vmem:[#allocation3 + $0x54] sm:$0xf]
        %v5085 = vld [vmem:[#allocation3 + $0x58] sm:$0xf]
        %v5086 = vld [vmem:[#allocation3 + $0x5c] sm:$0xf]
        %v5087 = vld [vmem:[#allocation3 + $0x60] sm:$0xf]
        %v5088 = vld [vmem:[#allocation3 + $0x64] sm:$0xf]
        %v5089 = vld [vmem:[#allocation3 + $0x68] sm:$0xf]
        %v5090 = vld [vmem:[#allocation3 + $0x6c] sm:$0xf]
        %v5091 = vld [vmem:[#allocation3 + $0x70] sm:$0xf]
        %v5092 = vld [vmem:[#allocation3 + $0x74] sm:$0xf]
        %v5093 = vld [vmem:[#allocation3 + $0x78] sm:$0xf]
        %v5094 = vld [vmem:[#allocation3 + $0x7c] sm:$0xf]
        %v5095 = vld [vmem:[#allocation3 + $0x80] sm:$0xf]
        %v5096 = vld [vmem:[#allocation3 + $0x84] sm:$0xf]
        %v5097 = vld [vmem:[#allocation3 + $0x88] sm:$0xf]
        %v5098 = vld [vmem:[#allocation3 + $0x8c] sm:$0xf]
        %v5099 = vld [vmem:[#allocation3 + $0x90] sm:$0xf]
        %v5100 = vld [vmem:[#allocation3 + $0x94] sm:$0xf]
        %v5101 = vld [vmem:[#allocation3 + $0x98] sm:$0xf]
        %v5102 = vld [vmem:[#allocation3 + $0x9c] sm:$0xf]
        %v5103 = vld [vmem:[#allocation3 + $0xa0] sm:$0xf]
        %v5104 = vld [vmem:[#allocation3 + $0xa4] sm:$0xf]
        %v5105 = vld [vmem:[#allocation3 + $0xa8] sm:$0xf]
        %v5106 = vld [vmem:[#allocation3 + $0xac] sm:$0xf]
        %v5107 = vld [vmem:[#allocation3 + $0xb0] sm:$0xf]
        %v5108 = vld [vmem:[#allocation3 + $0xb4] sm:$0xf]
        %v5109 = vld [vmem:[#allocation3 + $0xb8] sm:$0xf]
        %v5110 = vld [vmem:[#allocation3 + $0xbc] sm:$0xf]
        %v5111 = vld [vmem:[#allocation3 + $0xc0] sm:$0xf]
        %v5112 = vld [vmem:[#allocation3 + $0xc4] sm:$0xf]
        %v5113 = vld [vmem:[#allocation3 + $0xc8] sm:$0xf]
        %v5114 = vld [vmem:[#allocation3 + $0xcc] sm:$0xf]
        %v5115 = vld [vmem:[#allocation3 + $0xd0] sm:$0xf]
        %v5116 = vld [vmem:[#allocation3 + $0xd4] sm:$0xf]
        %v5117 = vld [vmem:[#allocation3 + $0xd8] sm:$0xf]
        %v5118 = vld [vmem:[#allocation3 + $0xdc] sm:$0xf]
        %v5119 = vld [vmem:[#allocation3 + $0xe0] sm:$0xf]
        %v5120 = vld [vmem:[#allocation3 + $0xe4] sm:$0xf]
        %v5121 = vld [vmem:[#allocation3 + $0xe8] sm:$0xf]
        %v5122 = vld [vmem:[#allocation3 + $0xec] sm:$0xf]
        %v5123 = vld [vmem:[#allocation3 + $0xf0] sm:$0xf]
        %v5124 = vld [vmem:[#allocation3 + $0xf4] sm:$0xf]
        %v5125 = vld [vmem:[#allocation3 + $0xf8] sm:$0xf]
        %v5126 = vld [vmem:[#allocation3 + $0xfc] sm:$0xf]
        %v5127 = vld [vmem:[#allocation3 + $0x100] sm:$0xf]
        %v5128 = vld [vmem:[#allocation3 + $0x104] sm:$0xf]
        %v5129 = vld [vmem:[#allocation3 + $0x108] sm:$0xf]
        %v5130 = vld [vmem:[#allocation3 + $0x10c] sm:$0xf]
        %v5131 = vld [vmem:[#allocation3 + $0x110] sm:$0xf]
        %v5132 = vld [vmem:[#allocation3 + $0x114] sm:$0xf]
        %v5133 = vld [vmem:[#allocation3 + $0x118] sm:$0xf]
        %v5134 = vld [vmem:[#allocation3 + $0x11c] sm:$0xf]
        %v5135 = vld [vmem:[#allocation3 + $0x120] sm:$0xf]
        %v5136 = vld [vmem:[#allocation3 + $0x124] sm:$0xf]
        %v5137 = vld [vmem:[#allocation3 + $0x128] sm:$0xf]
        %v5138 = vld [vmem:[#allocation3 + $0x12c] sm:$0xf]
        %v5139 = vld [vmem:[#allocation3 + $0x130] sm:$0xf]
        %v5140 = vld [vmem:[#allocation3 + $0x134] sm:$0xf]
        %v5141 = vld [vmem:[#allocation3 + $0x138] sm:$0xf]
        %v5142 = vld [vmem:[#allocation3 + $0x13c] sm:$0xf]
        %s5143 = scalar_lea.vmem %s3, 72
        %v5144 = vld [vmem:[%s5143] sm:$0xf]
        %v5145 = vld [vmem:[%s5143 + $0x4] sm:$0xf]
        %v5146 = vld [vmem:[%s5143 + $0x8] sm:$0xf]
        %v5147 = vld [vmem:[%s5143 + $0xc] sm:$0xf]
        %v5148 = vld [vmem:[%s5143 + $0x10] sm:$0xf]
        %v5149 = vld [vmem:[%s5143 + $0x14] sm:$0xf]
        %v5150 = vld [vmem:[%s5143 + $0x18] sm:$0xf]
        %v5151 = vld [vmem:[%s5143 + $0x1c] sm:$0xf]
        %v5152 = vld [vmem:[%s5143 + $0x20] sm:$0xf]
        %v5217 = vunpack.c.l.b16 %v5079
        %v5218 = vunpack.c.l.b16 %v5080
        %v5219 = vunpack.c.l.b16 %v5081
        %v5220 = vunpack.c.l.b16 %v5082
        %v5221 = vunpack.c.l.b16 %v5083
        %v5222 = vunpack.c.l.b16 %v5084
        %v5223 = vunpack.c.l.b16 %v5085
        %v5224 = vunpack.c.l.b16 %v5086
        %v5225 = vunpack.c.l.b16 %v5087
        %v5226 = vunpack.c.l.b16 %v5088
        %v5227 = vunpack.c.l.b16 %v5089
        %v5228 = vunpack.c.l.b16 %v5090
        %v5229 = vunpack.c.l.b16 %v5091
        %v5230 = vunpack.c.l.b16 %v5092
        %v5231 = vunpack.c.l.b16 %v5093
        %v5232 = vunpack.c.l.b16 %v5094
        %v5233 = vunpack.c.l.b16 %v5095
        %v5234 = vunpack.c.l.b16 %v5096
        %v5235 = vunpack.c.l.b16 %v5097
        %v5236 = vunpack.c.l.b16 %v5098
        %v5237 = vunpack.c.l.b16 %v5099
        %v5238 = vunpack.c.l.b16 %v5100
        %v5239 = vunpack.c.l.b16 %v5101
        %v5240 = vunpack.c.l.b16 %v5102
        %v5241 = vunpack.c.l.b16 %v5103
        %v5242 = vunpack.c.l.b16 %v5104
        %v5243 = vunpack.c.l.b16 %v5105
        %v5244 = vunpack.c.l.b16 %v5106
        %v5245 = vunpack.c.l.b16 %v5107
        %v5246 = vunpack.c.l.b16 %v5108
        %v5247 = vunpack.c.l.b16 %v5109
        %v5248 = vunpack.c.l.b16 %v5110
        %v5249 = vunpack.c.l.b16 %v5111
        %v5250 = vunpack.c.l.b16 %v5112
        %v5251 = vunpack.c.l.b16 %v5113
        %v5252 = vunpack.c.l.b16 %v5114
        %v5253 = vunpack.c.l.b16 %v5115
        %v5254 = vunpack.c.l.b16 %v5116
        %v5255 = vunpack.c.l.b16 %v5117
        %v5256 = vunpack.c.l.b16 %v5118
        %v5257 = vunpack.c.l.b16 %v5119
        %v5258 = vunpack.c.l.b16 %v5120
        %v5259 = vunpack.c.l.b16 %v5121
        %v5260 = vunpack.c.l.b16 %v5122
        %v5261 = vunpack.c.l.b16 %v5123
        %v5262 = vunpack.c.l.b16 %v5124
        %v5263 = vunpack.c.l.b16 %v5125
        %v5264 = vunpack.c.l.b16 %v5126
        %v5265 = vunpack.c.l.b16 %v5127
        %v5266 = vunpack.c.l.b16 %v5128
        %v5267 = vunpack.c.l.b16 %v5129
        %v5268 = vunpack.c.l.b16 %v5130
        %v5269 = vunpack.c.l.b16 %v5131
        %v5270 = vunpack.c.l.b16 %v5132
        %v5271 = vunpack.c.l.b16 %v5133
        %v5272 = vunpack.c.l.b16 %v5134
        %v5273 = vunpack.c.l.b16 %v5135
        %v5274 = vunpack.c.l.b16 %v5136
        %v5275 = vunpack.c.l.b16 %v5137
        %v5276 = vunpack.c.l.b16 %v5138
        %v5277 = vunpack.c.l.b16 %v5139
        %v5278 = vunpack.c.l.b16 %v5140
        %v5279 = vunpack.c.l.b16 %v5141
        %v5280 = vunpack.c.l.b16 %v5142
        %v5281 = vpack.c.b16 %v5218, %v5217
        %v5282 = vpack.c.b16 %v5220, %v5219
        %v5283 = vpack.c.b16 %v5222, %v5221
        %v5284 = vpack.c.b16 %v5224, %v5223
        %v5285 = vpack.c.b16 %v5226, %v5225
        %v5286 = vpack.c.b16 %v5228, %v5227
        %v5287 = vpack.c.b16 %v5230, %v5229
        %v5288 = vpack.c.b16 %v5232, %v5231
        %v5289 = vpack.c.b16 %v5234, %v5233
        %v5290 = vpack.c.b16 %v5236, %v5235
        %v5291 = vpack.c.b16 %v5238, %v5237
        %v5292 = vpack.c.b16 %v5240, %v5239
        %v5293 = vpack.c.b16 %v5242, %v5241
        %v5294 = vpack.c.b16 %v5244, %v5243
        %v5295 = vpack.c.b16 %v5246, %v5245
        %v5296 = vpack.c.b16 %v5248, %v5247
        %v5297 = vpack.c.b16 %v5250, %v5249
        %v5298 = vpack.c.b16 %v5252, %v5251
        %v5299 = vpack.c.b16 %v5254, %v5253
        %v5300 = vpack.c.b16 %v5256, %v5255
        %v5301 = vpack.c.b16 %v5258, %v5257
        %v5302 = vpack.c.b16 %v5260, %v5259
        %v5303 = vpack.c.b16 %v5262, %v5261
        %v5304 = vpack.c.b16 %v5264, %v5263
        %v5305 = vpack.c.b16 %v5266, %v5265
        %v5306 = vpack.c.b16 %v5268, %v5267
        %v5307 = vpack.c.b16 %v5270, %v5269
        %v5308 = vpack.c.b16 %v5272, %v5271
        %v5309 = vpack.c.b16 %v5274, %v5273
        %v5310 = vpack.c.b16 %v5276, %v5275
        %v5311 = vpack.c.b16 %v5278, %v5277
        %v5312 = vpack.c.b16 %v5280, %v5279
        %v5322 = vunpack.c.l.b16 %v5144
        %v5323 = vunpack.c.l.b16 %v5145
        %v5324 = vunpack.c.l.b16 %v5146
        %v5325 = vunpack.c.l.b16 %v5147
        %v5326 = vunpack.c.l.b16 %v5148
        %v5327 = vunpack.c.l.b16 %v5149
        %v5328 = vunpack.c.l.b16 %v5150
        %v5329 = vunpack.c.l.b16 %v5151
        %v5330 = vunpack.c.l.b16 %v5152
        %v5331 = vpack.c.b16 %v5323, %v5322
        %v5332 = vpack.c.b16 %v5325, %v5324
        %v5333 = vpack.c.b16 %v5327, %v5326
        %v5334 = vpack.c.b16 %v5329, %v5328
        %v5335 = vpack.c.b16 %v5330, %v5330
        %v5341 = vsel %vm4578, %v5281, 0
        %v5344 = vsel %vm4578, %v5282, 0
        %v5347 = vsel %vm4578, %v5283, 0
        %v5350 = vsel %vm4578, %v5284, 0
        %v5353 = vsel %vm4578, %v5285, 0
        %v5356 = vsel %vm4578, %v5286, 0
        %v5359 = vsel %vm4578, %v5287, 0
        %v5362 = vsel %vm4578, %v5288, 0
        %v5365 = vsel %vm4578, %v5289, 0
        %v5368 = vsel %vm4578, %v5290, 0
        %v5371 = vsel %vm4578, %v5291, 0
        %v5374 = vsel %vm4578, %v5292, 0
        %v5377 = vsel %vm4578, %v5293, 0
        %v5380 = vsel %vm4578, %v5294, 0
        %v5383 = vsel %vm4578, %v5295, 0
        %v5386 = vsel %vm4578, %v5296, 0
        %v5389 = vsel %vm4578, %v5297, 0
        %v5392 = vsel %vm4578, %v5298, 0
        %v5395 = vsel %vm4578, %v5299, 0
        %v5398 = vsel %vm4578, %v5300, 0
        %v5401 = vsel %vm4578, %v5301, 0
        %v5404 = vsel %vm4578, %v5302, 0
        %v5407 = vsel %vm4578, %v5303, 0
        %v5410 = vsel %vm4578, %v5304, 0
        %v5413 = vsel %vm4578, %v5305, 0
        %v5416 = vsel %vm4578, %v5306, 0
        %v5419 = vsel %vm4578, %v5307, 0
        %v5422 = vsel %vm4578, %v5308, 0
        %v5425 = vsel %vm4578, %v5309, 0
        %v5428 = vsel %vm4578, %v5310, 0
        %v5431 = vsel %vm4578, %v5311, 0
        %v5434 = vsel %vm4578, %v5312, 0
        %v5437 = vsel %vm4675, %v5335, 0
        %5439 = vmatpush.bf16.msra.mxu0 0
        %5440 = vmatpush.bf16.msra.mxu0 0
        %5441 = vmatpush.bf16.msra.mxu0 0
        %5442 = vmatpush.bf16.msra.mxu0 %v5437
        %5443 = vmatpush.bf16.msra.mxu0 %v5334
        %5444 = vmatpush.bf16.msra.mxu0 %v5333
        %5445 = vmatpush.bf16.msra.mxu0 %v5332
        %5446 = vmatpush.bf16.msra.mxu0 %v5331
        %5447 = vmatmul.bf16.gmra.mxu0 %v5341
        %v5448 = vpop.f32.mrf.mxu0
        %v5449 = vadd.f32 0.0, %v5448
        %v5450 = vpop.f32.mrf.mxu0
        %v5451 = vadd.f32 0.0, %v5450
        %5452 = vmatmul.bf16.gmra.mxu0 %v5344
        %v5453 = vpop.f32.mrf.mxu0
        %v5454 = vadd.f32 0.0, %v5453
        %v5455 = vpop.f32.mrf.mxu0
        %v5456 = vadd.f32 0.0, %v5455
        %5457 = vmatmul.bf16.gmra.mxu0 %v5347
        %v5458 = vpop.f32.mrf.mxu0
        %v5459 = vadd.f32 0.0, %v5458
        %v5460 = vpop.f32.mrf.mxu0
        %v5461 = vadd.f32 0.0, %v5460
        %5462 = vmatmul.bf16.gmra.mxu0 %v5350
        %v5463 = vpop.f32.mrf.mxu0
        %v5464 = vadd.f32 0.0, %v5463
        %v5465 = vpop.f32.mrf.mxu0
        %v5466 = vadd.f32 0.0, %v5465
        %5467 = vmatmul.bf16.gmra.mxu0 %v5353
        %v5468 = vpop.f32.mrf.mxu0
        %v5469 = vadd.f32 0.0, %v5468
        %v5470 = vpop.f32.mrf.mxu0
        %v5471 = vadd.f32 0.0, %v5470
        %5472 = vmatmul.bf16.gmra.mxu0 %v5356
        %v5473 = vpop.f32.mrf.mxu0
        %v5474 = vadd.f32 0.0, %v5473
        %v5475 = vpop.f32.mrf.mxu0
        %v5476 = vadd.f32 0.0, %v5475
        %5477 = vmatmul.bf16.gmra.mxu0 %v5359
        %v5478 = vpop.f32.mrf.mxu0
        %v5479 = vadd.f32 0.0, %v5478
        %v5480 = vpop.f32.mrf.mxu0
        %v5481 = vadd.f32 0.0, %v5480
        %5482 = vmatmul.bf16.gmra.mxu0 %v5362
        %v5483 = vpop.f32.mrf.mxu0
        %v5484 = vadd.f32 0.0, %v5483
        %v5485 = vpop.f32.mrf.mxu0
        %v5486 = vadd.f32 0.0, %v5485
        %5487 = vmatmul.bf16.gmra.mxu0 %v5365
        %v5488 = vpop.f32.mrf.mxu0
        %v5489 = vadd.f32 0.0, %v5488
        %v5490 = vpop.f32.mrf.mxu0
        %v5491 = vadd.f32 0.0, %v5490
        %5492 = vmatmul.bf16.gmra.mxu0 %v5368
        %v5493 = vpop.f32.mrf.mxu0
        %v5494 = vadd.f32 0.0, %v5493
        %v5495 = vpop.f32.mrf.mxu0
        %v5496 = vadd.f32 0.0, %v5495
        %5497 = vmatmul.bf16.gmra.mxu0 %v5371
        %v5498 = vpop.f32.mrf.mxu0
        %v5499 = vadd.f32 0.0, %v5498
        %v5500 = vpop.f32.mrf.mxu0
        %v5501 = vadd.f32 0.0, %v5500
        %5502 = vmatmul.bf16.gmra.mxu0 %v5374
        %v5503 = vpop.f32.mrf.mxu0
        %v5504 = vadd.f32 0.0, %v5503
        %v5505 = vpop.f32.mrf.mxu0
        %v5506 = vadd.f32 0.0, %v5505
        %5507 = vmatmul.bf16.gmra.mxu0 %v5377
        %v5508 = vpop.f32.mrf.mxu0
        %v5509 = vadd.f32 0.0, %v5508
        %v5510 = vpop.f32.mrf.mxu0
        %v5511 = vadd.f32 0.0, %v5510
        %5512 = vmatmul.bf16.gmra.mxu0 %v5380
        %v5513 = vpop.f32.mrf.mxu0
        %v5514 = vadd.f32 0.0, %v5513
        %v5515 = vpop.f32.mrf.mxu0
        %v5516 = vadd.f32 0.0, %v5515
        %5517 = vmatmul.bf16.gmra.mxu0 %v5383
        %v5518 = vpop.f32.mrf.mxu0
        %v5519 = vadd.f32 0.0, %v5518
        %v5520 = vpop.f32.mrf.mxu0
        %v5521 = vadd.f32 0.0, %v5520
        %5522 = vmatmul.bf16.gmra.mxu0 %v5386
        %v5523 = vpop.f32.mrf.mxu0
        %v5524 = vadd.f32 0.0, %v5523
        %v5525 = vpop.f32.mrf.mxu0
        %v5526 = vadd.f32 0.0, %v5525
        %5527 = vmatmul.bf16.gmra.mxu0 %v5389
        %v5528 = vpop.f32.mrf.mxu0
        %v5529 = vadd.f32 0.0, %v5528
        %v5530 = vpop.f32.mrf.mxu0
        %v5531 = vadd.f32 0.0, %v5530
        %5532 = vmatmul.bf16.gmra.mxu0 %v5392
        %v5533 = vpop.f32.mrf.mxu0
        %v5534 = vadd.f32 0.0, %v5533
        %v5535 = vpop.f32.mrf.mxu0
        %v5536 = vadd.f32 0.0, %v5535
        %5537 = vmatmul.bf16.gmra.mxu0 %v5395
        %v5538 = vpop.f32.mrf.mxu0
        %v5539 = vadd.f32 0.0, %v5538
        %v5540 = vpop.f32.mrf.mxu0
        %v5541 = vadd.f32 0.0, %v5540
        %5542 = vmatmul.bf16.gmra.mxu0 %v5398
        %v5543 = vpop.f32.mrf.mxu0
        %v5544 = vadd.f32 0.0, %v5543
        %v5545 = vpop.f32.mrf.mxu0
        %v5546 = vadd.f32 0.0, %v5545
        %5547 = vmatmul.bf16.gmra.mxu0 %v5401
        %v5548 = vpop.f32.mrf.mxu0
        %v5549 = vadd.f32 0.0, %v5548
        %v5550 = vpop.f32.mrf.mxu0
        %v5551 = vadd.f32 0.0, %v5550
        %5552 = vmatmul.bf16.gmra.mxu0 %v5404
        %v5553 = vpop.f32.mrf.mxu0
        %v5554 = vadd.f32 0.0, %v5553
        %v5555 = vpop.f32.mrf.mxu0
        %v5556 = vadd.f32 0.0, %v5555
        %5557 = vmatmul.bf16.gmra.mxu0 %v5407
        %v5558 = vpop.f32.mrf.mxu0
        %v5559 = vadd.f32 0.0, %v5558
        %v5560 = vpop.f32.mrf.mxu0
        %v5561 = vadd.f32 0.0, %v5560
        %5562 = vmatmul.bf16.gmra.mxu0 %v5410
        %v5563 = vpop.f32.mrf.mxu0
        %v5564 = vadd.f32 0.0, %v5563
        %v5565 = vpop.f32.mrf.mxu0
        %v5566 = vadd.f32 0.0, %v5565
        %5567 = vmatmul.bf16.gmra.mxu0 %v5413
        %v5568 = vpop.f32.mrf.mxu0
        %v5569 = vadd.f32 0.0, %v5568
        %v5570 = vpop.f32.mrf.mxu0
        %v5571 = vadd.f32 0.0, %v5570
        %5572 = vmatmul.bf16.gmra.mxu0 %v5416
        %v5573 = vpop.f32.mrf.mxu0
        %v5574 = vadd.f32 0.0, %v5573
        %v5575 = vpop.f32.mrf.mxu0
        %v5576 = vadd.f32 0.0, %v5575
        %5577 = vmatmul.bf16.gmra.mxu0 %v5419
        %v5578 = vpop.f32.mrf.mxu0
        %v5579 = vadd.f32 0.0, %v5578
        %v5580 = vpop.f32.mrf.mxu0
        %v5581 = vadd.f32 0.0, %v5580
        %5582 = vmatmul.bf16.gmra.mxu0 %v5422
        %v5583 = vpop.f32.mrf.mxu0
        %v5584 = vadd.f32 0.0, %v5583
        %v5585 = vpop.f32.mrf.mxu0
        %v5586 = vadd.f32 0.0, %v5585
        %5587 = vmatmul.bf16.gmra.mxu0 %v5425
        %v5588 = vpop.f32.mrf.mxu0
        %v5589 = vadd.f32 0.0, %v5588
        %v5590 = vpop.f32.mrf.mxu0
        %v5591 = vadd.f32 0.0, %v5590
        %5592 = vmatmul.bf16.gmra.mxu0 %v5428
        %v5593 = vpop.f32.mrf.mxu0
        %v5594 = vadd.f32 0.0, %v5593
        %v5595 = vpop.f32.mrf.mxu0
        %v5596 = vadd.f32 0.0, %v5595
        %5597 = vmatmul.bf16.gmra.mxu0 %v5431
        %v5598 = vpop.f32.mrf.mxu0
        %v5599 = vadd.f32 0.0, %v5598
        %v5600 = vpop.f32.mrf.mxu0
        %v5601 = vadd.f32 0.0, %v5600
        %5602 = vmatmul.bf16.gmra.mxu0 %v5434
        %v5603 = vpop.f32.mrf.mxu0
        %v5604 = vadd.f32 0.0, %v5603
        %v5605 = vpop.f32.mrf.mxu0
        %v5606 = vadd.f32 0.0, %v5605
        %5607 = vdwg.mxu0
        %v5608 = vadd.f32 %v4920, %v5449
        %v5609 = vadd.f32 %v4922, %v5451
        %v5610 = vadd.f32 %v4925, %v5454
        %v5611 = vadd.f32 %v4927, %v5456
        %v5612 = vadd.f32 %v4930, %v5459
        %v5613 = vadd.f32 %v4932, %v5461
        %v5614 = vadd.f32 %v4935, %v5464
        %v5615 = vadd.f32 %v4937, %v5466
        %v5616 = vadd.f32 %v4940, %v5469
        %v5617 = vadd.f32 %v4942, %v5471
        %v5618 = vadd.f32 %v4945, %v5474
        %v5619 = vadd.f32 %v4947, %v5476
        %v5620 = vadd.f32 %v4950, %v5479
        %v5621 = vadd.f32 %v4952, %v5481
        %v5622 = vadd.f32 %v4955, %v5484
        %v5623 = vadd.f32 %v4957, %v5486
        %v5624 = vadd.f32 %v4960, %v5489
        %v5625 = vadd.f32 %v4962, %v5491
        %v5626 = vadd.f32 %v4965, %v5494
        %v5627 = vadd.f32 %v4967, %v5496
        %v5628 = vadd.f32 %v4970, %v5499
        %v5629 = vadd.f32 %v4972, %v5501
        %v5630 = vadd.f32 %v4975, %v5504
        %v5631 = vadd.f32 %v4977, %v5506
        %v5632 = vadd.f32 %v4980, %v5509
        %v5633 = vadd.f32 %v4982, %v5511
        %v5634 = vadd.f32 %v4985, %v5514
        %v5635 = vadd.f32 %v4987, %v5516
        %v5636 = vadd.f32 %v4990, %v5519
        %v5637 = vadd.f32 %v4992, %v5521
        %v5638 = vadd.f32 %v4995, %v5524
        %v5639 = vadd.f32 %v4997, %v5526
        %v5640 = vadd.f32 %v5000, %v5529
        %v5641 = vadd.f32 %v5002, %v5531
        %v5642 = vadd.f32 %v5005, %v5534
        %v5643 = vadd.f32 %v5007, %v5536
        %v5644 = vadd.f32 %v5010, %v5539
        %v5645 = vadd.f32 %v5012, %v5541
        %v5646 = vadd.f32 %v5015, %v5544
        %v5647 = vadd.f32 %v5017, %v5546
        %v5648 = vadd.f32 %v5020, %v5549
        %v5649 = vadd.f32 %v5022, %v5551
        %v5650 = vadd.f32 %v5025, %v5554
        %v5651 = vadd.f32 %v5027, %v5556
        %v5652 = vadd.f32 %v5030, %v5559
        %v5653 = vadd.f32 %v5032, %v5561
        %v5654 = vadd.f32 %v5035, %v5564
        %v5655 = vadd.f32 %v5037, %v5566
        %v5656 = vadd.f32 %v5040, %v5569
        %v5657 = vadd.f32 %v5042, %v5571
        %v5658 = vadd.f32 %v5045, %v5574
        %v5659 = vadd.f32 %v5047, %v5576
        %v5660 = vadd.f32 %v5050, %v5579
        %v5661 = vadd.f32 %v5052, %v5581
        %v5662 = vadd.f32 %v5055, %v5584
        %v5663 = vadd.f32 %v5057, %v5586
        %v5664 = vadd.f32 %v5060, %v5589
        %v5665 = vadd.f32 %v5062, %v5591
        %v5666 = vadd.f32 %v5065, %v5594
        %v5667 = vadd.f32 %v5067, %v5596
        %v5668 = vadd.f32 %v5070, %v5599
        %v5669 = vadd.f32 %v5072, %v5601
        %v5670 = vadd.f32 %v5075, %v5604
        %v5671 = vadd.f32 %v5077, %v5606
        %v5672 = vsel %vm3274, %v5608, 0.0
        %v5673 = vsel %vm3274, %v5609, 0.0
        %v5674 = vadd.f32 %v5672, %v5673
        %v5675 = vsel %vm3274, %v5610, 0.0
        %v5676 = vadd.f32 %v5674, %v5675
        %v5677 = vsel %vm3274, %v5611, 0.0
        %v5678 = vadd.f32 %v5676, %v5677
        %v5679 = vsel %vm3274, %v5612, 0.0
        %v5680 = vadd.f32 %v5678, %v5679
        %v5681 = vsel %vm3274, %v5613, 0.0
        %v5682 = vadd.f32 %v5680, %v5681
        %v5683 = vsel %vm3274, %v5614, 0.0
        %v5684 = vadd.f32 %v5682, %v5683
        %v5685 = vsel %vm3274, %v5615, 0.0
        %v5686 = vadd.f32 %v5684, %v5685
        %v5687 = vsel %vm3274, %v5616, 0.0
        %v5688 = vadd.f32 %v5686, %v5687
        %v5689 = vsel %vm3274, %v5617, 0.0
        %v5690 = vadd.f32 %v5688, %v5689
        %v5691 = vsel %vm3274, %v5618, 0.0
        %v5692 = vadd.f32 %v5690, %v5691
        %v5693 = vsel %vm3274, %v5619, 0.0
        %v5694 = vadd.f32 %v5692, %v5693
        %v5695 = vsel %vm3274, %v5620, 0.0
        %v5696 = vadd.f32 %v5694, %v5695
        %v5697 = vsel %vm3274, %v5621, 0.0
        %v5698 = vadd.f32 %v5696, %v5697
        %v5699 = vsel %vm3274, %v5622, 0.0
        %v5700 = vadd.f32 %v5698, %v5699
        %v5701 = vsel %vm3274, %v5623, 0.0
        %v5702 = vadd.f32 %v5700, %v5701
        %v5703 = vsel %vm3274, %v5624, 0.0
        %v5704 = vadd.f32 %v5702, %v5703
        %v5705 = vsel %vm3274, %v5625, 0.0
        %v5706 = vadd.f32 %v5704, %v5705
        %v5707 = vsel %vm3274, %v5626, 0.0
        %v5708 = vadd.f32 %v5706, %v5707
        %v5709 = vsel %vm3274, %v5627, 0.0
        %v5710 = vadd.f32 %v5708, %v5709
        %v5711 = vsel %vm3274, %v5628, 0.0
        %v5712 = vadd.f32 %v5710, %v5711
        %v5713 = vsel %vm3274, %v5629, 0.0
        %v5714 = vadd.f32 %v5712, %v5713
        %v5715 = vsel %vm3274, %v5630, 0.0
        %v5716 = vadd.f32 %v5714, %v5715
        %v5717 = vsel %vm3274, %v5631, 0.0
        %v5718 = vadd.f32 %v5716, %v5717
        %v5719 = vsel %vm3274, %v5632, 0.0
        %v5720 = vadd.f32 %v5718, %v5719
        %v5721 = vsel %vm3274, %v5633, 0.0
        %v5722 = vadd.f32 %v5720, %v5721
        %v5723 = vsel %vm3274, %v5634, 0.0
        %v5724 = vadd.f32 %v5722, %v5723
        %v5725 = vsel %vm3274, %v5635, 0.0
        %v5726 = vadd.f32 %v5724, %v5725
        %v5727 = vsel %vm3274, %v5636, 0.0
        %v5728 = vadd.f32 %v5726, %v5727
        %v5729 = vsel %vm3274, %v5637, 0.0
        %v5730 = vadd.f32 %v5728, %v5729
        %v5731 = vsel %vm3274, %v5638, 0.0
        %v5732 = vadd.f32 %v5730, %v5731
        %v5733 = vsel %vm3274, %v5639, 0.0
        %v5734 = vadd.f32 %v5732, %v5733
        %v5735 = vsel %vm3274, %v5640, 0.0
        %v5736 = vadd.f32 %v5734, %v5735
        %v5737 = vsel %vm3274, %v5641, 0.0
        %v5738 = vadd.f32 %v5736, %v5737
        %v5739 = vsel %vm3274, %v5642, 0.0
        %v5740 = vadd.f32 %v5738, %v5739
        %v5741 = vsel %vm3274, %v5643, 0.0
        %v5742 = vadd.f32 %v5740, %v5741
        %v5743 = vsel %vm3274, %v5644, 0.0
        %v5744 = vadd.f32 %v5742, %v5743
        %v5745 = vsel %vm3274, %v5645, 0.0
        %v5746 = vadd.f32 %v5744, %v5745
        %v5747 = vsel %vm3274, %v5646, 0.0
        %v5748 = vadd.f32 %v5746, %v5747
        %v5749 = vsel %vm3274, %v5647, 0.0
        %v5750 = vadd.f32 %v5748, %v5749
        %v5751 = vsel %vm3274, %v5648, 0.0
        %v5752 = vadd.f32 %v5750, %v5751
        %v5753 = vsel %vm3274, %v5649, 0.0
        %v5754 = vadd.f32 %v5752, %v5753
        %v5755 = vsel %vm3274, %v5650, 0.0
        %v5756 = vadd.f32 %v5754, %v5755
        %v5757 = vsel %vm3274, %v5651, 0.0
        %v5758 = vadd.f32 %v5756, %v5757
        %v5759 = vsel %vm3274, %v5652, 0.0
        %v5760 = vadd.f32 %v5758, %v5759
        %v5761 = vsel %vm3274, %v5653, 0.0
        %v5762 = vadd.f32 %v5760, %v5761
        %v5763 = vsel %vm3274, %v5654, 0.0
        %v5764 = vadd.f32 %v5762, %v5763
        %v5765 = vsel %vm3274, %v5655, 0.0
        %v5766 = vadd.f32 %v5764, %v5765
        %v5767 = vsel %vm3274, %v5656, 0.0
        %v5768 = vadd.f32 %v5766, %v5767
        %v5769 = vsel %vm3274, %v5657, 0.0
        %v5770 = vadd.f32 %v5768, %v5769
        %v5771 = vsel %vm3274, %v5658, 0.0
        %v5772 = vadd.f32 %v5770, %v5771
        %v5773 = vsel %vm3274, %v5659, 0.0
        %v5774 = vadd.f32 %v5772, %v5773
        %v5775 = vsel %vm3274, %v5660, 0.0
        %v5776 = vadd.f32 %v5774, %v5775
        %v5777 = vsel %vm3274, %v5661, 0.0
        %v5778 = vadd.f32 %v5776, %v5777
        %v5779 = vsel %vm3274, %v5662, 0.0
        %v5780 = vadd.f32 %v5778, %v5779
        %v5781 = vsel %vm3274, %v5663, 0.0
        %v5782 = vadd.f32 %v5780, %v5781
        %v5783 = vsel %vm3274, %v5664, 0.0
        %v5784 = vadd.f32 %v5782, %v5783
        %v5785 = vsel %vm3274, %v5665, 0.0
        %v5786 = vadd.f32 %v5784, %v5785
        %v5787 = vsel %vm3274, %v5666, 0.0
        %v5788 = vadd.f32 %v5786, %v5787
        %v5789 = vsel %vm3274, %v5667, 0.0
        %v5790 = vadd.f32 %v5788, %v5789
        %v5791 = vsel %vm3274, %v5668, 0.0
        %v5792 = vadd.f32 %v5790, %v5791
        %v5793 = vsel %vm3274, %v5669, 0.0
        %v5794 = vadd.f32 %v5792, %v5793
        %v5795 = vsel %vm3274, %v5670, 0.0
        %v5796 = vadd.f32 %v5794, %v5795
        %v5797 = vsel %vm3274, %v5671, 0.0
        %v5798 = vadd.f32 %v5796, %v5797
        %v5799 = vrot.slane %v5798, 4
        %v5800 = vadd.f32 %v5798, %v5799
        %v5801 = vrot.slane %v5800, 2
        %v5802 = vadd.f32 %v5800, %v5801
        %v5803 = vrot.slane %v5802, 1
        %v5804 = vadd.f32 %v5802, %v5803
        %v5805 = vmul.f32 %v5608, %v5608
        %v5806 = vmul.f32 %v5609, %v5609
        %v5807 = vmul.f32 %v5610, %v5610
        %v5808 = vmul.f32 %v5611, %v5611
        %v5809 = vmul.f32 %v5612, %v5612
        %v5810 = vmul.f32 %v5613, %v5613
        %v5811 = vmul.f32 %v5614, %v5614
        %v5812 = vmul.f32 %v5615, %v5615
        %v5813 = vmul.f32 %v5616, %v5616
        %v5814 = vmul.f32 %v5617, %v5617
        %v5815 = vmul.f32 %v5618, %v5618
        %v5816 = vmul.f32 %v5619, %v5619
        %v5817 = vmul.f32 %v5620, %v5620
        %v5818 = vmul.f32 %v5621, %v5621
        %v5819 = vmul.f32 %v5622, %v5622
        %v5820 = vmul.f32 %v5623, %v5623
        %v5821 = vmul.f32 %v5624, %v5624
        %v5822 = vmul.f32 %v5625, %v5625
        %v5823 = vmul.f32 %v5626, %v5626
        %v5824 = vmul.f32 %v5627, %v5627
        %v5825 = vmul.f32 %v5628, %v5628
        %v5826 = vmul.f32 %v5629, %v5629
        %v5827 = vmul.f32 %v5630, %v5630
        %v5828 = vmul.f32 %v5631, %v5631
        %v5829 = vmul.f32 %v5632, %v5632
        %v5830 = vmul.f32 %v5633, %v5633
        %v5831 = vmul.f32 %v5634, %v5634
        %v5832 = vmul.f32 %v5635, %v5635
        %v5833 = vmul.f32 %v5636, %v5636
        %v5834 = vmul.f32 %v5637, %v5637
        %v5835 = vmul.f32 %v5638, %v5638
        %v5836 = vmul.f32 %v5639, %v5639
        %v5837 = vmul.f32 %v5640, %v5640
        %v5838 = vmul.f32 %v5641, %v5641
        %v5839 = vmul.f32 %v5642, %v5642
        %v5840 = vmul.f32 %v5643, %v5643
        %v5841 = vmul.f32 %v5644, %v5644
        %v5842 = vmul.f32 %v5645, %v5645
        %v5843 = vmul.f32 %v5646, %v5646
        %v5844 = vmul.f32 %v5647, %v5647
        %v5845 = vmul.f32 %v5648, %v5648
        %v5846 = vmul.f32 %v5649, %v5649
        %v5847 = vmul.f32 %v5650, %v5650
        %v5848 = vmul.f32 %v5651, %v5651
        %v5849 = vmul.f32 %v5652, %v5652
        %v5850 = vmul.f32 %v5653, %v5653
        %v5851 = vmul.f32 %v5654, %v5654
        %v5852 = vmul.f32 %v5655, %v5655
        %v5853 = vmul.f32 %v5656, %v5656
        %v5854 = vmul.f32 %v5657, %v5657
        %v5855 = vmul.f32 %v5658, %v5658
        %v5856 = vmul.f32 %v5659, %v5659
        %v5857 = vmul.f32 %v5660, %v5660
        %v5858 = vmul.f32 %v5661, %v5661
        %v5859 = vmul.f32 %v5662, %v5662
        %v5860 = vmul.f32 %v5663, %v5663
        %v5861 = vmul.f32 %v5664, %v5664
        %v5862 = vmul.f32 %v5665, %v5665
        %v5863 = vmul.f32 %v5666, %v5666
        %v5864 = vmul.f32 %v5667, %v5667
        %v5865 = vmul.f32 %v5668, %v5668
        %v5866 = vmul.f32 %v5669, %v5669
        %v5867 = vmul.f32 %v5670, %v5670
        %v5868 = vmul.f32 %v5671, %v5671
        %v5869 = vsel %vm3274, %v5805, 0.0
        %v5870 = vsel %vm3274, %v5806, 0.0
        %v5871 = vadd.f32 %v5869, %v5870
        %v5872 = vsel %vm3274, %v5807, 0.0
        %v5873 = vadd.f32 %v5871, %v5872
        %v5874 = vsel %vm3274, %v5808, 0.0
        %v5875 = vadd.f32 %v5873, %v5874
        %v5876 = vsel %vm3274, %v5809, 0.0
        %v5877 = vadd.f32 %v5875, %v5876
        %v5878 = vsel %vm3274, %v5810, 0.0
        %v5879 = vadd.f32 %v5877, %v5878
        %v5880 = vsel %vm3274, %v5811, 0.0
        %v5881 = vadd.f32 %v5879, %v5880
        %v5882 = vsel %vm3274, %v5812, 0.0
        %v5883 = vadd.f32 %v5881, %v5882
        %v5884 = vsel %vm3274, %v5813, 0.0
        %v5885 = vadd.f32 %v5883, %v5884
        %v5886 = vsel %vm3274, %v5814, 0.0
        %v5887 = vadd.f32 %v5885, %v5886
        %v5888 = vsel %vm3274, %v5815, 0.0
        %v5889 = vadd.f32 %v5887, %v5888
        %v5890 = vsel %vm3274, %v5816, 0.0
        %v5891 = vadd.f32 %v5889, %v5890
        %v5892 = vsel %vm3274, %v5817, 0.0
        %v5893 = vadd.f32 %v5891, %v5892
        %v5894 = vsel %vm3274, %v5818, 0.0
        %v5895 = vadd.f32 %v5893, %v5894
        %v5896 = vsel %vm3274, %v5819, 0.0
        %v5897 = vadd.f32 %v5895, %v5896
        %v5898 = vsel %vm3274, %v5820, 0.0
        %v5899 = vadd.f32 %v5897, %v5898
        %v5900 = vsel %vm3274, %v5821, 0.0
        %v5901 = vadd.f32 %v5899, %v5900
        %v5902 = vsel %vm3274, %v5822, 0.0
        %v5903 = vadd.f32 %v5901, %v5902
        %v5904 = vsel %vm3274, %v5823, 0.0
        %v5905 = vadd.f32 %v5903, %v5904
        %v5906 = vsel %vm3274, %v5824, 0.0
        %v5907 = vadd.f32 %v5905, %v5906
        %v5908 = vsel %vm3274, %v5825, 0.0
        %v5909 = vadd.f32 %v5907, %v5908
        %v5910 = vsel %vm3274, %v5826, 0.0
        %v5911 = vadd.f32 %v5909, %v5910
        %v5912 = vsel %vm3274, %v5827, 0.0
        %v5913 = vadd.f32 %v5911, %v5912
        %v5914 = vsel %vm3274, %v5828, 0.0
        %v5915 = vadd.f32 %v5913, %v5914
        %v5916 = vsel %vm3274, %v5829, 0.0
        %v5917 = vadd.f32 %v5915, %v5916
        %v5918 = vsel %vm3274, %v5830, 0.0
        %v5919 = vadd.f32 %v5917, %v5918
        %v5920 = vsel %vm3274, %v5831, 0.0
        %v5921 = vadd.f32 %v5919, %v5920
        %v5922 = vsel %vm3274, %v5832, 0.0
        %v5923 = vadd.f32 %v5921, %v5922
        %v5924 = vsel %vm3274, %v5833, 0.0
        %v5925 = vadd.f32 %v5923, %v5924
        %v5926 = vsel %vm3274, %v5834, 0.0
        %v5927 = vadd.f32 %v5925, %v5926
        %v5928 = vsel %vm3274, %v5835, 0.0
        %v5929 = vadd.f32 %v5927, %v5928
        %v5930 = vsel %vm3274, %v5836, 0.0
        %v5931 = vadd.f32 %v5929, %v5930
        %v5932 = vsel %vm3274, %v5837, 0.0
        %v5933 = vadd.f32 %v5931, %v5932
        %v5934 = vsel %vm3274, %v5838, 0.0
        %v5935 = vadd.f32 %v5933, %v5934
        %v5936 = vsel %vm3274, %v5839, 0.0
        %v5937 = vadd.f32 %v5935, %v5936
        %v5938 = vsel %vm3274, %v5840, 0.0
        %v5939 = vadd.f32 %v5937, %v5938
        %v5940 = vsel %vm3274, %v5841, 0.0
        %v5941 = vadd.f32 %v5939, %v5940
        %v5942 = vsel %vm3274, %v5842, 0.0
        %v5943 = vadd.f32 %v5941, %v5942
        %v5944 = vsel %vm3274, %v5843, 0.0
        %v5945 = vadd.f32 %v5943, %v5944
        %v5946 = vsel %vm3274, %v5844, 0.0
        %v5947 = vadd.f32 %v5945, %v5946
        %v5948 = vsel %vm3274, %v5845, 0.0
        %v5949 = vadd.f32 %v5947, %v5948
        %v5950 = vsel %vm3274, %v5846, 0.0
        %v5951 = vadd.f32 %v5949, %v5950
        %v5952 = vsel %vm3274, %v5847, 0.0
        %v5953 = vadd.f32 %v5951, %v5952
        %v5954 = vsel %vm3274, %v5848, 0.0
        %v5955 = vadd.f32 %v5953, %v5954
        %v5956 = vsel %vm3274, %v5849, 0.0
        %v5957 = vadd.f32 %v5955, %v5956
        %v5958 = vsel %vm3274, %v5850, 0.0
        %v5959 = vadd.f32 %v5957, %v5958
        %v5960 = vsel %vm3274, %v5851, 0.0
        %v5961 = vadd.f32 %v5959, %v5960
        %v5962 = vsel %vm3274, %v5852, 0.0
        %v5963 = vadd.f32 %v5961, %v5962
        %v5964 = vsel %vm3274, %v5853, 0.0
        %v5965 = vadd.f32 %v5963, %v5964
        %v5966 = vsel %vm3274, %v5854, 0.0
        %v5967 = vadd.f32 %v5965, %v5966
        %v5968 = vsel %vm3274, %v5855, 0.0
        %v5969 = vadd.f32 %v5967, %v5968
        %v5970 = vsel %vm3274, %v5856, 0.0
        %v5971 = vadd.f32 %v5969, %v5970
        %v5972 = vsel %vm3274, %v5857, 0.0
        %v5973 = vadd.f32 %v5971, %v5972
        %v5974 = vsel %vm3274, %v5858, 0.0
        %v5975 = vadd.f32 %v5973, %v5974
        %v5976 = vsel %vm3274, %v5859, 0.0
        %v5977 = vadd.f32 %v5975, %v5976
        %v5978 = vsel %vm3274, %v5860, 0.0
        %v5979 = vadd.f32 %v5977, %v5978
        %v5980 = vsel %vm3274, %v5861, 0.0
        %v5981 = vadd.f32 %v5979, %v5980
        %v5982 = vsel %vm3274, %v5862, 0.0
        %v5983 = vadd.f32 %v5981, %v5982
        %v5984 = vsel %vm3274, %v5863, 0.0
        %v5985 = vadd.f32 %v5983, %v5984
        %v5986 = vsel %vm3274, %v5864, 0.0
        %v5987 = vadd.f32 %v5985, %v5986
        %v5988 = vsel %vm3274, %v5865, 0.0
        %v5989 = vadd.f32 %v5987, %v5988
        %v5990 = vsel %vm3274, %v5866, 0.0
        %v5991 = vadd.f32 %v5989, %v5990
        %v5992 = vsel %vm3274, %v5867, 0.0
        %v5993 = vadd.f32 %v5991, %v5992
        %v5994 = vsel %vm3274, %v5868, 0.0
        %v5995 = vadd.f32 %v5993, %v5994
        %v5996 = vrot.slane %v5995, 4
        %v5997 = vadd.f32 %v5995, %v5996
        %v5998 = vrot.slane %v5997, 2
        %v5999 = vadd.f32 %v5997, %v5998
        %v6000 = vrot.slane %v5999, 1
        %v6001 = vadd.f32 %v5999, %v6000
        %vm6002 = vcmask 1040384
        %v6003 = vsel %vm6002, %v5804, %v6001
        %vm6004 = vcmask 58368
        %6005 = vst.msk [vmem:[%s257] sm:$0x3] %vm6004, %v6003
        %v6006 = vpack.c.bf16 %v5608, %v5608
        %v6007 = vpack.c.bf16 %v5609, %v5609
        %v6008 = vpack.c.bf16 %v5610, %v5610
        %v6009 = vpack.c.bf16 %v5611, %v5611
        %v6010 = vpack.c.bf16 %v5612, %v5612
        %v6011 = vpack.c.bf16 %v5613, %v5613
        %v6012 = vpack.c.bf16 %v5614, %v5614
        %v6013 = vpack.c.bf16 %v5615, %v5615
        %v6014 = vpack.c.bf16 %v5616, %v5616
        %v6015 = vpack.c.bf16 %v5617, %v5617
        %v6016 = vpack.c.bf16 %v5618, %v5618
        %v6017 = vpack.c.bf16 %v5619, %v5619
        %v6018 = vpack.c.bf16 %v5620, %v5620
        %v6019 = vpack.c.bf16 %v5621, %v5621
        %v6020 = vpack.c.bf16 %v5622, %v5622
        %v6021 = vpack.c.bf16 %v5623, %v5623
        %v6022 = vpack.c.bf16 %v5624, %v5624
        %v6023 = vpack.c.bf16 %v5625, %v5625
        %v6024 = vpack.c.bf16 %v5626, %v5626
        %v6025 = vpack.c.bf16 %v5627, %v5627
        %v6026 = vpack.c.bf16 %v5628, %v5628
        %v6027 = vpack.c.bf16 %v5629, %v5629
        %v6028 = vpack.c.bf16 %v5630, %v5630
        %v6029 = vpack.c.bf16 %v5631, %v5631
        %v6030 = vpack.c.bf16 %v5632, %v5632
        %v6031 = vpack.c.bf16 %v5633, %v5633
        %v6032 = vpack.c.bf16 %v5634, %v5634
        %v6033 = vpack.c.bf16 %v5635, %v5635
        %v6034 = vpack.c.bf16 %v5636, %v5636
        %v6035 = vpack.c.bf16 %v5637, %v5637
        %v6036 = vpack.c.bf16 %v5638, %v5638
        %v6037 = vpack.c.bf16 %v5639, %v5639
        %v6038 = vpack.c.bf16 %v5640, %v5640
        %v6039 = vpack.c.bf16 %v5641, %v5641
        %v6040 = vpack.c.bf16 %v5642, %v5642
        %v6041 = vpack.c.bf16 %v5643, %v5643
        %v6042 = vpack.c.bf16 %v5644, %v5644
        %v6043 = vpack.c.bf16 %v5645, %v5645
        %v6044 = vpack.c.bf16 %v5646, %v5646
        %v6045 = vpack.c.bf16 %v5647, %v5647
        %v6046 = vpack.c.bf16 %v5648, %v5648
        %v6047 = vpack.c.bf16 %v5649, %v5649
        %v6048 = vpack.c.bf16 %v5650, %v5650
        %v6049 = vpack.c.bf16 %v5651, %v5651
        %v6050 = vpack.c.bf16 %v5652, %v5652
        %v6051 = vpack.c.bf16 %v5653, %v5653
        %v6052 = vpack.c.bf16 %v5654, %v5654
        %v6053 = vpack.c.bf16 %v5655, %v5655
        %v6054 = vpack.c.bf16 %v5656, %v5656
        %v6055 = vpack.c.bf16 %v5657, %v5657
        %v6056 = vpack.c.bf16 %v5658, %v5658
        %v6057 = vpack.c.bf16 %v5659, %v5659
        %v6058 = vpack.c.bf16 %v5660, %v5660
        %v6059 = vpack.c.bf16 %v5661, %v5661
        %v6060 = vpack.c.bf16 %v5662, %v5662
        %v6061 = vpack.c.bf16 %v5663, %v5663
        %v6062 = vpack.c.bf16 %v5664, %v5664
        %v6063 = vpack.c.bf16 %v5665, %v5665
        %v6064 = vpack.c.bf16 %v5666, %v5666
        %v6065 = vpack.c.bf16 %v5667, %v5667
        %v6066 = vpack.c.bf16 %v5668, %v5668
        %v6067 = vpack.c.bf16 %v5669, %v5669
        %v6068 = vpack.c.bf16 %v5670, %v5670
        %v6069 = vpack.c.bf16 %v5671, %v5671
        %vm6070 = vcmask 60416
        %6071 = vst.msk [vmem:[%s253] sm:$0xf] %vm6070, %v6006
        %6072 = vst.msk [vmem:[%s253 + $0x4] sm:$0xf] %vm6070, %v6007
        %6073 = vst.msk [vmem:[%s253 + $0x8] sm:$0xf] %vm6070, %v6008
        %6074 = vst.msk [vmem:[%s253 + $0xc] sm:$0xf] %vm6070, %v6009
        %6075 = vst.msk [vmem:[%s253 + $0x10] sm:$0xf] %vm6070, %v6010
        %6076 = vst.msk [vmem:[%s253 + $0x14] sm:$0xf] %vm6070, %v6011
        %6077 = vst.msk [vmem:[%s253 + $0x18] sm:$0xf] %vm6070, %v6012
        %6078 = vst.msk [vmem:[%s253 + $0x1c] sm:$0xf] %vm6070, %v6013
        %6079 = vst.msk [vmem:[%s253 + $0x20] sm:$0xf] %vm6070, %v6014
        %6080 = vst.msk [vmem:[%s253 + $0x24] sm:$0xf] %vm6070, %v6015
        %6081 = vst.msk [vmem:[%s253 + $0x28] sm:$0xf] %vm6070, %v6016
        %6082 = vst.msk [vmem:[%s253 + $0x2c] sm:$0xf] %vm6070, %v6017
        %6083 = vst.msk [vmem:[%s253 + $0x30] sm:$0xf] %vm6070, %v6018
        %6084 = vst.msk [vmem:[%s253 + $0x34] sm:$0xf] %vm6070, %v6019
        %6085 = vst.msk [vmem:[%s253 + $0x38] sm:$0xf] %vm6070, %v6020
        %6086 = vst.msk [vmem:[%s253 + $0x3c] sm:$0xf] %vm6070, %v6021
        %6087 = vst.msk [vmem:[%s253 + $0x40] sm:$0xf] %vm6070, %v6022
        %6088 = vst.msk [vmem:[%s253 + $0x44] sm:$0xf] %vm6070, %v6023
        %6089 = vst.msk [vmem:[%s253 + $0x48] sm:$0xf] %vm6070, %v6024
        %6090 = vst.msk [vmem:[%s253 + $0x4c] sm:$0xf] %vm6070, %v6025
        %6091 = vst.msk [vmem:[%s253 + $0x50] sm:$0xf] %vm6070, %v6026
        %6092 = vst.msk [vmem:[%s253 + $0x54] sm:$0xf] %vm6070, %v6027
        %6093 = vst.msk [vmem:[%s253 + $0x58] sm:$0xf] %vm6070, %v6028
        %6094 = vst.msk [vmem:[%s253 + $0x5c] sm:$0xf] %vm6070, %v6029
        %6095 = vst.msk [vmem:[%s253 + $0x60] sm:$0xf] %vm6070, %v6030
        %6096 = vst.msk [vmem:[%s253 + $0x64] sm:$0xf] %vm6070, %v6031
        %6097 = vst.msk [vmem:[%s253 + $0x68] sm:$0xf] %vm6070, %v6032
        %6098 = vst.msk [vmem:[%s253 + $0x6c] sm:$0xf] %vm6070, %v6033
        %6099 = vst.msk [vmem:[%s253 + $0x70] sm:$0xf] %vm6070, %v6034
        %6100 = vst.msk [vmem:[%s253 + $0x74] sm:$0xf] %vm6070, %v6035
        %6101 = vst.msk [vmem:[%s253 + $0x78] sm:$0xf] %vm6070, %v6036
        %6102 = vst.msk [vmem:[%s253 + $0x7c] sm:$0xf] %vm6070, %v6037
        %6103 = vst.msk [vmem:[%s253 + $0x80] sm:$0xf] %vm6070, %v6038
        %6104 = vst.msk [vmem:[%s253 + $0x84] sm:$0xf] %vm6070, %v6039
        %6105 = vst.msk [vmem:[%s253 + $0x88] sm:$0xf] %vm6070, %v6040
        %6106 = vst.msk [vmem:[%s253 + $0x8c] sm:$0xf] %vm6070, %v6041
        %6107 = vst.msk [vmem:[%s253 + $0x90] sm:$0xf] %vm6070, %v6042
        %6108 = vst.msk [vmem:[%s253 + $0x94] sm:$0xf] %vm6070, %v6043
        %6109 = vst.msk [vmem:[%s253 + $0x98] sm:$0xf] %vm6070, %v6044
        %6110 = vst.msk [vmem:[%s253 + $0x9c] sm:$0xf] %vm6070, %v6045
        %6111 = vst.msk [vmem:[%s253 + $0xa0] sm:$0xf] %vm6070, %v6046
        %6112 = vst.msk [vmem:[%s253 + $0xa4] sm:$0xf] %vm6070, %v6047
        %6113 = vst.msk [vmem:[%s253 + $0xa8] sm:$0xf] %vm6070, %v6048
        %6114 = vst.msk [vmem:[%s253 + $0xac] sm:$0xf] %vm6070, %v6049
        %6115 = vst.msk [vmem:[%s253 + $0xb0] sm:$0xf] %vm6070, %v6050
        %6116 = vst.msk [vmem:[%s253 + $0xb4] sm:$0xf] %vm6070, %v6051
        %6117 = vst.msk [vmem:[%s253 + $0xb8] sm:$0xf] %vm6070, %v6052
        %6118 = vst.msk [vmem:[%s253 + $0xbc] sm:$0xf] %vm6070, %v6053
        %6119 = vst.msk [vmem:[%s253 + $0xc0] sm:$0xf] %vm6070, %v6054
        %6120 = vst.msk [vmem:[%s253 + $0xc4] sm:$0xf] %vm6070, %v6055
        %6121 = vst.msk [vmem:[%s253 + $0xc8] sm:$0xf] %vm6070, %v6056
        %6122 = vst.msk [vmem:[%s253 + $0xcc] sm:$0xf] %vm6070, %v6057
        %6123 = vst.msk [vmem:[%s253 + $0xd0] sm:$0xf] %vm6070, %v6058
        %6124 = vst.msk [vmem:[%s253 + $0xd4] sm:$0xf] %vm6070, %v6059
        %6125 = vst.msk [vmem:[%s253 + $0xd8] sm:$0xf] %vm6070, %v6060
        %6126 = vst.msk [vmem:[%s253 + $0xdc] sm:$0xf] %vm6070, %v6061
        %6127 = vst.msk [vmem:[%s253 + $0xe0] sm:$0xf] %vm6070, %v6062
        %6128 = vst.msk [vmem:[%s253 + $0xe4] sm:$0xf] %vm6070, %v6063
        %6129 = vst.msk [vmem:[%s253 + $0xe8] sm:$0xf] %vm6070, %v6064
        %6130 = vst.msk [vmem:[%s253 + $0xec] sm:$0xf] %vm6070, %v6065
        %6131 = vst.msk [vmem:[%s253 + $0xf0] sm:$0xf] %vm6070, %v6066
        %6132 = vst.msk [vmem:[%s253 + $0xf4] sm:$0xf] %vm6070, %v6067
        %6133 = vst.msk [vmem:[%s253 + $0xf8] sm:$0xf] %vm6070, %v6068
        %6134 = vst.msk [vmem:[%s253 + $0xfc] sm:$0xf] %vm6070, %v6069
        %p6135 = scmp.lt.s32.totalorder %s20, 1
        %s6136 = scalar_select %p6135, %s20, 1
        %s6137 = smul.addr %s6136, 64
        %s6138 = smul.addr %s6137, 4
        %s6139 = scalar_lea.vmem %s4, %s6138
        %p6140 = scmp.lt.s32.totalorder %s20, 1
        %s6141 = scalar_select %p6140, %s20, 1
        %s6142 = smul.addr %s6141, 2
        %s6143 = scalar_lea.vmem %s5, %s6142
        // Predicated region
        $region41: #{basic_block.3} parent=35 // pred_check
          %p6144 = pneg %p127
        $region42: #{basic_block.3} parent=35 // pred_check_branch
          %6146 = sbr.rel (%p6144) target = $region44
        $region43: #{basic_block.3} parent=35 // pred_region
          _
        $region44: #{basic_block.3} parent=35 // pred_fallthru
          _
        // Predicated region
        $region45: #{basic_block.3} parent=35 // pred_check
          %p6147 = pneg %p153
        $region46: #{basic_block.3} parent=35 // pred_check_branch
          %6149 = sbr.rel (%p6147) target = $region48
        $region47: #{basic_block.3} parent=35 // pred_region
          _
        $region48: #{basic_block.3} parent=35 // pred_fallthru
          _
      $region36: #{basic_block.3} parent=5 // pred_fallthru
        _
      %p6150 = scmp.le.s32.totalorder 2, %s15
      // Predicated region
      $region49: #{basic_block.3} parent=5 // pred_check
        %p6151 = pneg %p6150
      $region50: #{basic_block.3} parent=5 // pred_check_branch
        %6153 = sbr.rel (%p6151) target = $region52
      $region51: #{basic_block.3} parent=5 // pred_region
        %s6154 = ssub.s32 %s15, 2
        // Predicated region
        $region53: #{basic_block.3} parent=51 // pred_check
          %p6155 = pneg %p133
        $region54: #{basic_block.3} parent=51 // pred_check_branch
          %6157 = sbr.rel (%p6155) target = $region56
        $region55: #{basic_block.3} parent=51 // pred_region
          %p6158 = scmp.lt.s32.totalorder %s21, 1
          %s6159 = scalar_select %p6158, %s21, 1
          %s6160 = smul.addr %s6159, 64
          %s6161 = smul.addr %s6160, 4
          %s6162 = scalar_lea.vmem %s4, %s6161
        $region56: #{basic_block.3} parent=51 // pred_fallthru
          _
        // Predicated region
        $region57: #{basic_block.3} parent=51 // pred_check
          %p6163 = pneg %p159
        $region58: #{basic_block.3} parent=51 // pred_check_branch
          %6165 = sbr.rel (%p6163) target = $region60
        $region59: #{basic_block.3} parent=51 // pred_region
          %p6166 = scmp.lt.s32.totalorder %s21, 1
          %s6167 = scalar_select %p6166, %s21, 1
          %s6168 = smul.addr %s6167, 2
          %s6169 = scalar_lea.vmem %s5, %s6168
        $region60: #{basic_block.3} parent=51 // pred_fallthru
          _
      $region52: #{basic_block.3} parent=5 // pred_fallthru
        _
    $region6: #{basic_block.3} parent=1 // loop_footer
      %s19 = sadd.s32 1, %s15
    $region7: #{basic_block.3} parent=1 // loop_footer_branch
      %14 = sbr.rel target = $region3
    $region8: #{basic_block.3} parent=1 // loop_exit
      _
    %6170 = vsyncpa [#allocation5], 1
    %s6171 = scalar_lea.sflag [#allocation5], 1
    %6172 = vsyncpa %s6171, 1

// kernel: basic_block.4
$region0: #{basic_block.4}
  #allocation0 [shape = 'u32[]', space=smem, size = 0x4, offset = 0x4, fixed_abs, tag = 'smem constant byte address 0x4 - core index']
  #allocation1 [shape = 'u32[72,128]{1,0:T(1,128)}', space=vmem, size = 0x9000, scoped, tag = 'internal scratch']
  #allocation2 [shape = 'bf16[8,8,10,8]{3,2,1,0:T(8,128)(2,1)}', space=vmem, size = 0x40000, scoped, tag = 'scratch operand']
  #allocation3 [shape = 'bf16[640,72]{1,0:T(8,128)(2,1)}', space=vmem, size = 0x28000, scoped, tag = 'scratch operand']
  %s0 = inlined_call_operand.vmem [shape: bf16[2,8,8,8,8], index: 0, kind: input, shape index: {}]
  %s1 = inlined_call_operand.vmem [shape: f32[1,8], index: 1, kind: input, shape index: {}]
  %s2 = inlined_call_operand.vmem [shape: f32[1,8], index: 2, kind: input, shape index: {}]
  %s3 = inlined_call_operand.vmem [shape: bf16[3,72,8], index: 3, kind: input, shape index: {}]
  %s4 = inlined_call_operand.vmem [shape: bf16[2,8,8,8,8], index: 4, kind: output, shape index: {0}]
  %s5 = inlined_call_operand.vmem [shape: f32[2,2,8], index: 5, kind: output, shape index: {1}]
  %6 = xla_tuple %s4, %s5
  %s7 = sld [smem:[#allocation0]]
  $region57: #{basic_block.4} parent=0
    _
  %s9 = ssub.s32 1, %s7
  %s10 = scalar_select 0, %s9, %s7
  loop: start=0, step=1, limit=4
  $region2: #{basic_block.4} parent=0 // loop_pre_header
    _
  $region3: #{basic_block.4} parent=0 // loop_header
    %s12 = sphi 0, %s16
    %p13 = scmp.ge.s32.totalorder %s12, 4
    %s22 = sphi 0, %s24
    %s25 = sphi 0, %s22
    %s26 = sphi 0, %s25
    %s42 = sphi 0, %s26
    %s46 = sphi 0, %s46
    %s48 = sphi 0, %s46
    %s49 = sphi 0, %s48
    %s63 = sphi 0, %s49
    %s67 = sphi 0, %s67
    %s69 = sphi 0, %s67
    %s70 = sphi 0, %s69
    %s84 = sphi 0, %s70
    %s88 = sphi 0, %s88
    %s90 = sphi 0, %s88
    %s91 = sphi 0, %s90
    %s105 = sphi 0, %s91
    %s111 = sphi 0, %s113
    %s114 = sphi 0, %s111
    %s115 = sphi 0, %s114
    %s131 = sphi 0, %s115
    %s137 = sphi 0, %s139
    %s140 = sphi 0, %s137
    %s141 = sphi 0, %s140
    %s157 = sphi 0, %s141
  $region4: #{basic_block.4} parent=0 // loop_header_branch
    %15 = sbr.rel (%p13) target = $region8
  $region5: #{basic_block.4} parent=0 // loop_body
    %s17 = ssub.s32 %s12, 1
    %s18 = ssub.s32 %s12, 2
    %s19 = sadd.s32 %s12, 1
    %s20 = ssub.s32 %s12, %s19
    %p21 = scmp.eq.s32.totalorder %s20, 0
    %s23 = sadd.s32 %s22, 1
    %s24 = scalar_select %p21, %s22, %s23
    %p27 = pneg %p21
    %p28 = scmp.eq.s32.totalorder %s12, 1
    %p29 = por %p27, %p28
    %p30 = scmp.ne.s32.totalorder %s22, %s25
    %p31 = scmp.eq.s32.totalorder %s12, 0
    %p32 = por %p30, %p31
    %p33 = scmp.ne.s32.totalorder %s22, %s25
    %p34 = scmp.eq.s32.totalorder %s17, 1
    %p35 = por %p33, %p34
    %p36 = scmp.ne.s32.totalorder %s25, %s26
    %p37 = scmp.eq.s32.totalorder %s17, 0
    %p38 = por %p36, %p37
    %p39 = scmp.ne.s32.totalorder %s25, %s26
    %p40 = scmp.eq.s32.totalorder %s18, 1
    %p41 = por %p39, %p40
    %p43 = scmp.ne.s32.totalorder %s26, %s42
    %p44 = scmp.eq.s32.totalorder %s18, 0
    %p45 = por %p43, %p44
    %s47 = sadd.s32 %s46, 1
    %p50 = scmp.eq.s32.totalorder %s12, 1
    %p51 = scmp.ne.s32.totalorder %s46, %s48
    %p52 = scmp.eq.s32.totalorder %s12, 0
    %p53 = por %p51, %p52
    %p54 = scmp.ne.s32.totalorder %s46, %s48
    %p55 = scmp.eq.s32.totalorder %s17, 1
    %p56 = por %p54, %p55
    %p57 = scmp.ne.s32.totalorder %s48, %s49
    %p58 = scmp.eq.s32.totalorder %s17, 0
    %p59 = por %p57, %p58
    %p60 = scmp.ne.s32.totalorder %s48, %s49
    %p61 = scmp.eq.s32.totalorder %s18, 1
    %p62 = por %p60, %p61
    %p64 = scmp.ne.s32.totalorder %s49, %s63
    %p65 = scmp.eq.s32.totalorder %s18, 0
    %p66 = por %p64, %p65
    %s68 = sadd.s32 %s67, 1
    %p71 = scmp.eq.s32.totalorder %s12, 1
    %p72 = scmp.ne.s32.totalorder %s67, %s69
    %p73 = scmp.eq.s32.totalorder %s12, 0
    %p74 = por %p72, %p73
    %p75 = scmp.ne.s32.totalorder %s67, %s69
    %p76 = scmp.eq.s32.totalorder %s17, 1
    %p77 = por %p75, %p76
    %p78 = scmp.ne.s32.totalorder %s69, %s70
    %p79 = scmp.eq.s32.totalorder %s17, 0
    %p80 = por %p78, %p79
    %p81 = scmp.ne.s32.totalorder %s69, %s70
    %p82 = scmp.eq.s32.totalorder %s18, 1
    %p83 = por %p81, %p82
    %p85 = scmp.ne.s32.totalorder %s70, %s84
    %p86 = scmp.eq.s32.totalorder %s18, 0
    %p87 = por %p85, %p86
    %s89 = sadd.s32 %s88, 1
    %p92 = scmp.eq.s32.totalorder %s12, 1
    %p93 = scmp.ne.s32.totalorder %s88, %s90
    %p94 = scmp.eq.s32.totalorder %s12, 0
    %p95 = por %p93, %p94
    %p96 = scmp.ne.s32.totalorder %s88, %s90
    %p97 = scmp.eq.s32.totalorder %s17, 1
    %p98 = por %p96, %p97
    %p99 = scmp.ne.s32.totalorder %s90, %s91
    %p100 = scmp.eq.s32.totalorder %s17, 0
    %p101 = por %p99, %p100
    %p102 = scmp.ne.s32.totalorder %s90, %s91
    %p103 = scmp.eq.s32.totalorder %s18, 1
    %p104 = por %p102, %p103
    %p106 = scmp.ne.s32.totalorder %s91, %s105
    %p107 = scmp.eq.s32.totalorder %s18, 0
    %p108 = por %p106, %p107
    %s109 = ssub.s32 %s12, %s19
    %p110 = scmp.eq.s32.totalorder %s109, 0
    %s112 = sadd.s32 %s111, 1
    %s113 = scalar_select %p110, %s111, %s112
    %p116 = pneg %p110
    %p117 = scmp.eq.s32.totalorder %s12, 1
    %p118 = por %p116, %p117
    %p119 = scmp.ne.s32.totalorder %s111, %s114
    %p120 = scmp.eq.s32.totalorder %s12, 0
    %p121 = por %p119, %p120
    %p122 = scmp.ne.s32.totalorder %s111, %s114
    %p123 = scmp.eq.s32.totalorder %s17, 1
    %p124 = por %p122, %p123
    %p125 = scmp.ne.s32.totalorder %s114, %s115
    %p126 = scmp.eq.s32.totalorder %s17, 0
    %p127 = por %p125, %p126
    %p128 = scmp.ne.s32.totalorder %s114, %s115
    %p129 = scmp.eq.s32.totalorder %s18, 1
    %p130 = por %p128, %p129
    %p132 = scmp.ne.s32.totalorder %s115, %s131
    %p133 = scmp.eq.s32.totalorder %s18, 0
    %p134 = por %p132, %p133
    %s135 = ssub.s32 %s12, %s19
    %p136 = scmp.eq.s32.totalorder %s135, 0
    %s138 = sadd.s32 %s137, 1
    %s139 = scalar_select %p136, %s137, %s138
    %p142 = pneg %p136
    %p143 = scmp.eq.s32.totalorder %s12, 1
    %p144 = por %p142, %p143
    %p145 = scmp.ne.s32.totalorder %s137, %s140
    %p146 = scmp.eq.s32.totalorder %s12, 0
    %p147 = por %p145, %p146
    %p148 = scmp.ne.s32.totalorder %s137, %s140
    %p149 = scmp.eq.s32.totalorder %s17, 1
    %p150 = por %p148, %p149
    %p151 = scmp.ne.s32.totalorder %s140, %s141
    %p152 = scmp.eq.s32.totalorder %s17, 0
    %p153 = por %p151, %p152
    %p154 = scmp.ne.s32.totalorder %s140, %s141
    %p155 = scmp.eq.s32.totalorder %s18, 1
    %p156 = por %p154, %p155
    %p158 = scmp.ne.s32.totalorder %s141, %s157
    %p159 = scmp.eq.s32.totalorder %s18, 0
    %p160 = por %p158, %p159
    %p161 = scmp.le.s32.totalorder 1, %s12
    %p162 = scmp.lt.s32.totalorder %s12, 3
    %p163 = pnand %p161, %p162
    %p164 = pneg %p163
    // Predicated region
    $region9: #{basic_block.4} parent=5 // pred_check
      _
    $region10: #{basic_block.4} parent=5 // pred_check_branch
      %166 = sbr.rel (%p163) target = $region12
    $region11: #{basic_block.4} parent=5 // pred_region
      %s167 = ssub.s32 %s12, 1
      // Predicated region
      $region13: #{basic_block.4} parent=11 // pred_check
        %p168 = pneg %p59
      $region14: #{basic_block.4} parent=11 // pred_check_branch
        %170 = sbr.rel (%p168) target = $region16
      $region15: #{basic_block.4} parent=11 // pred_region
        _
      $region16: #{basic_block.4} parent=11 // pred_fallthru
        _
      // Predicated region
      $region17: #{basic_block.4} parent=11 // pred_check
        %p171 = pneg %p80
      $region18: #{basic_block.4} parent=11 // pred_check_branch
        %173 = sbr.rel (%p171) target = $region20
      $region19: #{basic_block.4} parent=11 // pred_region
        _
      $region20: #{basic_block.4} parent=11 // pred_fallthru
        _
      // Predicated region
      $region21: #{basic_block.4} parent=11 // pred_check
        %p174 = pneg %p101
      $region22: #{basic_block.4} parent=11 // pred_check_branch
        %176 = sbr.rel (%p174) target = $region24
      $region23: #{basic_block.4} parent=11 // pred_region
        _
      $region24: #{basic_block.4} parent=11 // pred_fallthru
        _
    $region12: #{basic_block.4} parent=5 // pred_fallthru
      _
    %p177 = scmp.lt.s32.totalorder %s12, 2
    // Predicated region
    $region25: #{basic_block.4} parent=5 // pred_check
      %p178 = pneg %p177
    $region26: #{basic_block.4} parent=5 // pred_check_branch
      %180 = sbr.rel (%p178) target = $region28
    $region27: #{basic_block.4} parent=5 // pred_region
      // Predicated region
      $region29: #{basic_block.4} parent=27 // pred_check
        %p181 = pneg %p32
      $region30: #{basic_block.4} parent=27 // pred_check_branch
        %183 = sbr.rel (%p181) target = $region32
      $region31: #{basic_block.4} parent=27 // pred_region
        %p184 = scmp.lt.s32.totalorder %s12, 1
        %s185 = scalar_select %p184, %s12, 1
        %s186 = smul.addr %s185, 64
        %s187 = smul.addr %s186, 4
        %s188 = scalar_lea.vmem %s0, %s187
      $region32: #{basic_block.4} parent=27 // pred_fallthru
        _
    $region28: #{basic_block.4} parent=5 // pred_fallthru
      _
    %p189 = scmp.le.s32.totalorder 1, %s12
    %p190 = scmp.lt.s32.totalorder %s12, 3
    %p191 = pnand %p189, %p190
    %p192 = pneg %p191
    // Predicated region
    $region33: #{basic_block.4} parent=5 // pred_check
      _
    $region34: #{basic_block.4} parent=5 // pred_check_branch
      %194 = sbr.rel (%p191) target = $region36
    $region35: #{basic_block.4} parent=5 // pred_region
      %s195 = ssub.s32 %s12, 1
      %p196 = scmp.lt.s32.totalorder %s17, 1
      %s197 = scalar_select %p196, %s17, 1
      %s198 = smul.addr %s197, 64
      %s199 = smul.addr %s198, 4
      %s200 = scalar_lea.vmem %s0, %s199
      %p201 = pneg %p38
      %p202 = pneg %p35
      %p203 = pneg %p59
      %p204 = pneg %p56
      %p205 = pneg %p80
      %p206 = pneg %p77
      %p207 = pneg %p101
      %p208 = pneg %p98
      %p209 = pneg %p127
      %p210 = pneg %p124
      %p211 = scmp.lt.s32.totalorder %s17, 1
      %s212 = scalar_select %p211, %s17, 1
      %s213 = smul.addr %s212, 64
      %s214 = smul.addr %s213, 4
      %s215 = scalar_lea.vmem %s4, %s214
      %p216 = pneg %p153
      %p217 = pneg %p150
      %p218 = scmp.lt.s32.totalorder %s17, 1
      %s219 = scalar_select %p218, %s17, 1
      %s220 = smul.addr %s219, 2
      %s221 = scalar_lea.vmem %s5, %s220
      %p222 = scmp.lt.s32.totalorder %s17, 1
      %s223 = scalar_select %p222, %s17, 1
      %s224 = smul.addr %s223, 64
      %s225 = smul.addr %s224, 4
      %s226 = scalar_lea.vmem %s0, %s225
      %p227 = scmp.lt.s32.totalorder %s17, 1
      %s228 = scalar_select %p227, %s17, 1
      %s229 = smul.addr %s228, 64
      %s230 = smul.addr %s229, 4
      %s231 = scalar_lea.vmem %s4, %s230
      %p232 = scmp.lt.s32.totalorder %s17, 1
      %s233 = scalar_select %p232, %s17, 1
      %s234 = smul.addr %s233, 2
      %s235 = scalar_lea.vmem %s5, %s234
      %v237 = vld [vmem:[%s226] sm:$0xf]
      %v238 = vld [vmem:[%s226 + $0x4] sm:$0xf]
      %v239 = vld [vmem:[%s226 + $0x8] sm:$0xf]
      %v240 = vld [vmem:[%s226 + $0xc] sm:$0xf]
      %v241 = vld [vmem:[%s226 + $0x10] sm:$0xf]
      %v242 = vld [vmem:[%s226 + $0x14] sm:$0xf]
      %v243 = vld [vmem:[%s226 + $0x18] sm:$0xf]
      %v244 = vld [vmem:[%s226 + $0x1c] sm:$0xf]
      %v245 = vld [vmem:[%s226 + $0x20] sm:$0xf]
      %v246 = vld [vmem:[%s226 + $0x24] sm:$0xf]
      %v247 = vld [vmem:[%s226 + $0x28] sm:$0xf]
      %v248 = vld [vmem:[%s226 + $0x2c] sm:$0xf]
      %v249 = vld [vmem:[%s226 + $0x30] sm:$0xf]
      %v250 = vld [vmem:[%s226 + $0x34] sm:$0xf]
      %v251 = vld [vmem:[%s226 + $0x38] sm:$0xf]
      %v252 = vld [vmem:[%s226 + $0x3c] sm:$0xf]
      %v253 = vld [vmem:[%s226 + $0x40] sm:$0xf]
      %v254 = vld [vmem:[%s226 + $0x44] sm:$0xf]
      %v255 = vld [vmem:[%s226 + $0x48] sm:$0xf]
      %v256 = vld [vmem:[%s226 + $0x4c] sm:$0xf]
      %v257 = vld [vmem:[%s226 + $0x50] sm:$0xf]
      %v258 = vld [vmem:[%s226 + $0x54] sm:$0xf]
      %v259 = vld [vmem:[%s226 + $0x58] sm:$0xf]
      %v260 = vld [vmem:[%s226 + $0x5c] sm:$0xf]
      %v261 = vld [vmem:[%s226 + $0x60] sm:$0xf]
      %v262 = vld [vmem:[%s226 + $0x64] sm:$0xf]
      %v263 = vld [vmem:[%s226 + $0x68] sm:$0xf]
      %v264 = vld [vmem:[%s226 + $0x6c] sm:$0xf]
      %v265 = vld [vmem:[%s226 + $0x70] sm:$0xf]
      %v266 = vld [vmem:[%s226 + $0x74] sm:$0xf]
      %v267 = vld [vmem:[%s226 + $0x78] sm:$0xf]
      %v268 = vld [vmem:[%s226 + $0x7c] sm:$0xf]
      %v269 = vld [vmem:[%s226 + $0x80] sm:$0xf]
      %v270 = vld [vmem:[%s226 + $0x84] sm:$0xf]
      %v271 = vld [vmem:[%s226 + $0x88] sm:$0xf]
      %v272 = vld [vmem:[%s226 + $0x8c] sm:$0xf]
      %v273 = vld [vmem:[%s226 + $0x90] sm:$0xf]
      %v274 = vld [vmem:[%s226 + $0x94] sm:$0xf]
      %v275 = vld [vmem:[%s226 + $0x98] sm:$0xf]
      %v276 = vld [vmem:[%s226 + $0x9c] sm:$0xf]
      %v277 = vld [vmem:[%s226 + $0xa0] sm:$0xf]
      %v278 = vld [vmem:[%s226 + $0xa4] sm:$0xf]
      %v279 = vld [vmem:[%s226 + $0xa8] sm:$0xf]
      %v280 = vld [vmem:[%s226 + $0xac] sm:$0xf]
      %v281 = vld [vmem:[%s226 + $0xb0] sm:$0xf]
      %v282 = vld [vmem:[%s226 + $0xb4] sm:$0xf]
      %v283 = vld [vmem:[%s226 + $0xb8] sm:$0xf]
      %v284 = vld [vmem:[%s226 + $0xbc] sm:$0xf]
      %v285 = vld [vmem:[%s226 + $0xc0] sm:$0xf]
      %v286 = vld [vmem:[%s226 + $0xc4] sm:$0xf]
      %v287 = vld [vmem:[%s226 + $0xc8] sm:$0xf]
      %v288 = vld [vmem:[%s226 + $0xcc] sm:$0xf]
      %v289 = vld [vmem:[%s226 + $0xd0] sm:$0xf]
      %v290 = vld [vmem:[%s226 + $0xd4] sm:$0xf]
      %v291 = vld [vmem:[%s226 + $0xd8] sm:$0xf]
      %v292 = vld [vmem:[%s226 + $0xdc] sm:$0xf]
      %v293 = vld [vmem:[%s226 + $0xe0] sm:$0xf]
      %v294 = vld [vmem:[%s226 + $0xe4] sm:$0xf]
      %v295 = vld [vmem:[%s226 + $0xe8] sm:$0xf]
      %v296 = vld [vmem:[%s226 + $0xec] sm:$0xf]
      %v297 = vld [vmem:[%s226 + $0xf0] sm:$0xf]
      %v298 = vld [vmem:[%s226 + $0xf4] sm:$0xf]
      %v299 = vld [vmem:[%s226 + $0xf8] sm:$0xf]
      %v300 = vld [vmem:[%s226 + $0xfc] sm:$0xf]
      %v301 = vunpack.c.l.bf16 %v237
      %v302 = vunpack.c.l.bf16 %v238
      %v303 = vunpack.c.l.bf16 %v239
      %v304 = vunpack.c.l.bf16 %v240
      %v305 = vunpack.c.l.bf16 %v241
      %v306 = vunpack.c.l.bf16 %v242
      %v307 = vunpack.c.l.bf16 %v243
      %v308 = vunpack.c.l.bf16 %v244
      %v309 = vunpack.c.l.bf16 %v245
      %v310 = vunpack.c.l.bf16 %v246
      %v311 = vunpack.c.l.bf16 %v247
      %v312 = vunpack.c.l.bf16 %v248
      %v313 = vunpack.c.l.bf16 %v249
      %v314 = vunpack.c.l.bf16 %v250
      %v315 = vunpack.c.l.bf16 %v251
      %v316 = vunpack.c.l.bf16 %v252
      %v317 = vunpack.c.l.bf16 %v253
      %v318 = vunpack.c.l.bf16 %v254
      %v319 = vunpack.c.l.bf16 %v255
      %v320 = vunpack.c.l.bf16 %v256
      %v321 = vunpack.c.l.bf16 %v257
      %v322 = vunpack.c.l.bf16 %v258
      %v323 = vunpack.c.l.bf16 %v259
      %v324 = vunpack.c.l.bf16 %v260
      %v325 = vunpack.c.l.bf16 %v261
      %v326 = vunpack.c.l.bf16 %v262
      %v327 = vunpack.c.l.bf16 %v263
      %v328 = vunpack.c.l.bf16 %v264
      %v329 = vunpack.c.l.bf16 %v265
      %v330 = vunpack.c.l.bf16 %v266
      %v331 = vunpack.c.l.bf16 %v267
      %v332 = vunpack.c.l.bf16 %v268
      %v333 = vunpack.c.l.bf16 %v269
      %v334 = vunpack.c.l.bf16 %v270
      %v335 = vunpack.c.l.bf16 %v271
      %v336 = vunpack.c.l.bf16 %v272
      %v337 = vunpack.c.l.bf16 %v273
      %v338 = vunpack.c.l.bf16 %v274
      %v339 = vunpack.c.l.bf16 %v275
      %v340 = vunpack.c.l.bf16 %v276
      %v341 = vunpack.c.l.bf16 %v277
      %v342 = vunpack.c.l.bf16 %v278
      %v343 = vunpack.c.l.bf16 %v279
      %v344 = vunpack.c.l.bf16 %v280
      %v345 = vunpack.c.l.bf16 %v281
      %v346 = vunpack.c.l.bf16 %v282
      %v347 = vunpack.c.l.bf16 %v283
      %v348 = vunpack.c.l.bf16 %v284
      %v349 = vunpack.c.l.bf16 %v285
      %v350 = vunpack.c.l.bf16 %v286
      %v351 = vunpack.c.l.bf16 %v287
      %v352 = vunpack.c.l.bf16 %v288
      %v353 = vunpack.c.l.bf16 %v289
      %v354 = vunpack.c.l.bf16 %v290
      %v355 = vunpack.c.l.bf16 %v291
      %v356 = vunpack.c.l.bf16 %v292
      %v357 = vunpack.c.l.bf16 %v293
      %v358 = vunpack.c.l.bf16 %v294
      %v359 = vunpack.c.l.bf16 %v295
      %v360 = vunpack.c.l.bf16 %v296
      %v361 = vunpack.c.l.bf16 %v297
      %v362 = vunpack.c.l.bf16 %v298
      %v363 = vunpack.c.l.bf16 %v299
      %v364 = vunpack.c.l.bf16 %v300
      %v365 = vld [vmem:[%s1] sm:$0x1]
      %v367 = vperm.slane %v365, 0
      %v369 = vmul.f32 %v301, %v367
      %v370 = vmul.f32 %v302, %v367
      %v371 = vmul.f32 %v303, %v367
      %v372 = vmul.f32 %v304, %v367
      %v373 = vmul.f32 %v305, %v367
      %v374 = vmul.f32 %v306, %v367
      %v375 = vmul.f32 %v307, %v367
      %v376 = vmul.f32 %v308, %v367
      %v377 = vmul.f32 %v309, %v367
      %v378 = vmul.f32 %v310, %v367
      %v379 = vmul.f32 %v311, %v367
      %v380 = vmul.f32 %v312, %v367
      %v381 = vmul.f32 %v313, %v367
      %v382 = vmul.f32 %v314, %v367
      %v383 = vmul.f32 %v315, %v367
      %v384 = vmul.f32 %v316, %v367
      %v385 = vmul.f32 %v317, %v367
      %v386 = vmul.f32 %v318, %v367
      %v387 = vmul.f32 %v319, %v367
      %v388 = vmul.f32 %v320, %v367
      %v389 = vmul.f32 %v321, %v367
      %v390 = vmul.f32 %v322, %v367
      %v391 = vmul.f32 %v323, %v367
      %v392 = vmul.f32 %v324, %v367
      %v393 = vmul.f32 %v325, %v367
      %v394 = vmul.f32 %v326, %v367
      %v395 = vmul.f32 %v327, %v367
      %v396 = vmul.f32 %v328, %v367
      %v397 = vmul.f32 %v329, %v367
      %v398 = vmul.f32 %v330, %v367
      %v399 = vmul.f32 %v331, %v367
      %v400 = vmul.f32 %v332, %v367
      %v401 = vmul.f32 %v333, %v367
      %v402 = vmul.f32 %v334, %v367
      %v403 = vmul.f32 %v335, %v367
      %v404 = vmul.f32 %v336, %v367
      %v405 = vmul.f32 %v337, %v367
      %v406 = vmul.f32 %v338, %v367
      %v407 = vmul.f32 %v339, %v367
      %v408 = vmul.f32 %v340, %v367
      %v409 = vmul.f32 %v341, %v367
      %v410 = vmul.f32 %v342, %v367
      %v411 = vmul.f32 %v343, %v367
      %v412 = vmul.f32 %v344, %v367
      %v413 = vmul.f32 %v345, %v367
      %v414 = vmul.f32 %v346, %v367
      %v415 = vmul.f32 %v347, %v367
      %v416 = vmul.f32 %v348, %v367
      %v417 = vmul.f32 %v349, %v367
      %v418 = vmul.f32 %v350, %v367
      %v419 = vmul.f32 %v351, %v367
      %v420 = vmul.f32 %v352, %v367
      %v421 = vmul.f32 %v353, %v367
      %v422 = vmul.f32 %v354, %v367
      %v423 = vmul.f32 %v355, %v367
      %v424 = vmul.f32 %v356, %v367
      %v425 = vmul.f32 %v357, %v367
      %v426 = vmul.f32 %v358, %v367
      %v427 = vmul.f32 %v359, %v367
      %v428 = vmul.f32 %v360, %v367
      %v429 = vmul.f32 %v361, %v367
      %v430 = vmul.f32 %v362, %v367
      %v431 = vmul.f32 %v363, %v367
      %v432 = vmul.f32 %v364, %v367
      %v433 = vld [vmem:[%s2] sm:$0x1]
      %v435 = vperm.slane %v433, 0
      %v437 = vadd.f32 %v369, %v435
      %v438 = vadd.f32 %v370, %v435
      %v439 = vadd.f32 %v371, %v435
      %v440 = vadd.f32 %v372, %v435
      %v441 = vadd.f32 %v373, %v435
      %v442 = vadd.f32 %v374, %v435
      %v443 = vadd.f32 %v375, %v435
      %v444 = vadd.f32 %v376, %v435
      %v445 = vadd.f32 %v377, %v435
      %v446 = vadd.f32 %v378, %v435
      %v447 = vadd.f32 %v379, %v435
      %v448 = vadd.f32 %v380, %v435
      %v449 = vadd.f32 %v381, %v435
      %v450 = vadd.f32 %v382, %v435
      %v451 = vadd.f32 %v383, %v435
      %v452 = vadd.f32 %v384, %v435
      %v453 = vadd.f32 %v385, %v435
      %v454 = vadd.f32 %v386, %v435
      %v455 = vadd.f32 %v387, %v435
      %v456 = vadd.f32 %v388, %v435
      %v457 = vadd.f32 %v389, %v435
      %v458 = vadd.f32 %v390, %v435
      %v459 = vadd.f32 %v391, %v435
      %v460 = vadd.f32 %v392, %v435
      %v461 = vadd.f32 %v393, %v435
      %v462 = vadd.f32 %v394, %v435
      %v463 = vadd.f32 %v395, %v435
      %v464 = vadd.f32 %v396, %v435
      %v465 = vadd.f32 %v397, %v435
      %v466 = vadd.f32 %v398, %v435
      %v467 = vadd.f32 %v399, %v435
      %v468 = vadd.f32 %v400, %v435
      %v469 = vadd.f32 %v401, %v435
      %v470 = vadd.f32 %v402, %v435
      %v471 = vadd.f32 %v403, %v435
      %v472 = vadd.f32 %v404, %v435
      %v473 = vadd.f32 %v405, %v435
      %v474 = vadd.f32 %v406, %v435
      %v475 = vadd.f32 %v407, %v435
      %v476 = vadd.f32 %v408, %v435
      %v477 = vadd.f32 %v409, %v435
      %v478 = vadd.f32 %v410, %v435
      %v479 = vadd.f32 %v411, %v435
      %v480 = vadd.f32 %v412, %v435
      %v481 = vadd.f32 %v413, %v435
      %v482 = vadd.f32 %v414, %v435
      %v483 = vadd.f32 %v415, %v435
      %v484 = vadd.f32 %v416, %v435
      %v485 = vadd.f32 %v417, %v435
      %v486 = vadd.f32 %v418, %v435
      %v487 = vadd.f32 %v419, %v435
      %v488 = vadd.f32 %v420, %v435
      %v489 = vadd.f32 %v421, %v435
      %v490 = vadd.f32 %v422, %v435
      %v491 = vadd.f32 %v423, %v435
      %v492 = vadd.f32 %v424, %v435
      %v493 = vadd.f32 %v425, %v435
      %v494 = vadd.f32 %v426, %v435
      %v495 = vadd.f32 %v427, %v435
      %v496 = vadd.f32 %v428, %v435
      %v497 = vadd.f32 %v429, %v435
      %v498 = vadd.f32 %v430, %v435
      %v499 = vadd.f32 %v431, %v435
      %v500 = vadd.f32 %v432, %v435
      %v501 = vmax.f32 %v437, 0.0
      %v502 = vmax.f32 %v438, 0.0
      %v503 = vmax.f32 %v439, 0.0
      %v504 = vmax.f32 %v440, 0.0
      %v505 = vmax.f32 %v441, 0.0
      %v506 = vmax.f32 %v442, 0.0
      %v507 = vmax.f32 %v443, 0.0
      %v508 = vmax.f32 %v444, 0.0
      %v509 = vmax.f32 %v445, 0.0
      %v510 = vmax.f32 %v446, 0.0
      %v511 = vmax.f32 %v447, 0.0
      %v512 = vmax.f32 %v448, 0.0
      %v513 = vmax.f32 %v449, 0.0
      %v514 = vmax.f32 %v450, 0.0
      %v515 = vmax.f32 %v451, 0.0
      %v516 = vmax.f32 %v452, 0.0
      %v517 = vmax.f32 %v453, 0.0
      %v518 = vmax.f32 %v454, 0.0
      %v519 = vmax.f32 %v455, 0.0
      %v520 = vmax.f32 %v456, 0.0
      %v521 = vmax.f32 %v457, 0.0
      %v522 = vmax.f32 %v458, 0.0
      %v523 = vmax.f32 %v459, 0.0
      %v524 = vmax.f32 %v460, 0.0
      %v525 = vmax.f32 %v461, 0.0
      %v526 = vmax.f32 %v462, 0.0
      %v527 = vmax.f32 %v463, 0.0
      %v528 = vmax.f32 %v464, 0.0
      %v529 = vmax.f32 %v465, 0.0
      %v530 = vmax.f32 %v466, 0.0
      %v531 = vmax.f32 %v467, 0.0
      %v532 = vmax.f32 %v468, 0.0
      %v533 = vmax.f32 %v469, 0.0
      %v534 = vmax.f32 %v470, 0.0
      %v535 = vmax.f32 %v471, 0.0
      %v536 = vmax.f32 %v472, 0.0
      %v537 = vmax.f32 %v473, 0.0
      %v538 = vmax.f32 %v474, 0.0
      %v539 = vmax.f32 %v475, 0.0
      %v540 = vmax.f32 %v476, 0.0
      %v541 = vmax.f32 %v477, 0.0
      %v542 = vmax.f32 %v478, 0.0
      %v543 = vmax.f32 %v479, 0.0
      %v544 = vmax.f32 %v480, 0.0
      %v545 = vmax.f32 %v481, 0.0
      %v546 = vmax.f32 %v482, 0.0
      %v547 = vmax.f32 %v483, 0.0
      %v548 = vmax.f32 %v484, 0.0
      %v549 = vmax.f32 %v485, 0.0
      %v550 = vmax.f32 %v486, 0.0
      %v551 = vmax.f32 %v487, 0.0
      %v552 = vmax.f32 %v488, 0.0
      %v553 = vmax.f32 %v489, 0.0
      %v554 = vmax.f32 %v490, 0.0
      %v555 = vmax.f32 %v491, 0.0
      %v556 = vmax.f32 %v492, 0.0
      %v557 = vmax.f32 %v493, 0.0
      %v558 = vmax.f32 %v494, 0.0
      %v559 = vmax.f32 %v495, 0.0
      %v560 = vmax.f32 %v496, 0.0
      %v561 = vmax.f32 %v497, 0.0
      %v562 = vmax.f32 %v498, 0.0
      %v563 = vmax.f32 %v499, 0.0
      %v564 = vmax.f32 %v500, 0.0
      %v565 = vpack.c.bf16 %v501, %v501
      %v566 = vpack.c.bf16 %v502, %v502
      %v567 = vpack.c.bf16 %v503, %v503
      %v568 = vpack.c.bf16 %v504, %v504
      %v569 = vpack.c.bf16 %v505, %v505
      %v570 = vpack.c.bf16 %v506, %v506
      %v571 = vpack.c.bf16 %v507, %v507
      %v572 = vpack.c.bf16 %v508, %v508
      %v573 = vpack.c.bf16 %v509, %v509
      %v574 = vpack.c.bf16 %v510, %v510
      %v575 = vpack.c.bf16 %v511, %v511
      %v576 = vpack.c.bf16 %v512, %v512
      %v577 = vpack.c.bf16 %v513, %v513
      %v578 = vpack.c.bf16 %v514, %v514
      %v579 = vpack.c.bf16 %v515, %v515
      %v580 = vpack.c.bf16 %v516, %v516
      %v581 = vpack.c.bf16 %v517, %v517
      %v582 = vpack.c.bf16 %v518, %v518
      %v583 = vpack.c.bf16 %v519, %v519
      %v584 = vpack.c.bf16 %v520, %v520
      %v585 = vpack.c.bf16 %v521, %v521
      %v586 = vpack.c.bf16 %v522, %v522
      %v587 = vpack.c.bf16 %v523, %v523
      %v588 = vpack.c.bf16 %v524, %v524
      %v589 = vpack.c.bf16 %v525, %v525
      %v590 = vpack.c.bf16 %v526, %v526
      %v591 = vpack.c.bf16 %v527, %v527
      %v592 = vpack.c.bf16 %v528, %v528
      %v593 = vpack.c.bf16 %v529, %v529
      %v594 = vpack.c.bf16 %v530, %v530
      %v595 = vpack.c.bf16 %v531, %v531
      %v596 = vpack.c.bf16 %v532, %v532
      %v597 = vpack.c.bf16 %v533, %v533
      %v598 = vpack.c.bf16 %v534, %v534
      %v599 = vpack.c.bf16 %v535, %v535
      %v600 = vpack.c.bf16 %v536, %v536
      %v601 = vpack.c.bf16 %v537, %v537
      %v602 = vpack.c.bf16 %v538, %v538
      %v603 = vpack.c.bf16 %v539, %v539
      %v604 = vpack.c.bf16 %v540, %v540
      %v605 = vpack.c.bf16 %v541, %v541
      %v606 = vpack.c.bf16 %v542, %v542
      %v607 = vpack.c.bf16 %v543, %v543
      %v608 = vpack.c.bf16 %v544, %v544
      %v609 = vpack.c.bf16 %v545, %v545
      %v610 = vpack.c.bf16 %v546, %v546
      %v611 = vpack.c.bf16 %v547, %v547
      %v612 = vpack.c.bf16 %v548, %v548
      %v613 = vpack.c.bf16 %v549, %v549
      %v614 = vpack.c.bf16 %v550, %v550
      %v615 = vpack.c.bf16 %v551, %v551
      %v616 = vpack.c.bf16 %v552, %v552
      %v617 = vpack.c.bf16 %v553, %v553
      %v618 = vpack.c.bf16 %v554, %v554
      %v619 = vpack.c.bf16 %v555, %v555
      %v620 = vpack.c.bf16 %v556, %v556
      %v621 = vpack.c.bf16 %v557, %v557
      %v622 = vpack.c.bf16 %v558, %v558
      %v623 = vpack.c.bf16 %v559, %v559
      %v624 = vpack.c.bf16 %v560, %v560
      %v625 = vpack.c.bf16 %v561, %v561
      %v626 = vpack.c.bf16 %v562, %v562
      %v627 = vpack.c.bf16 %v563, %v563
      %v628 = vpack.c.bf16 %v564, %v564
      %vm629 = vcmask 57344
      %vm630 = vsmask.f32 256
      %vm631 = vmand %vm629, %vm630
      %v632 = vld [vmem:[#allocation2] sm:$0x1]
      %v633 = vsel %vm631, 0, %v632
      %634 = vst [vmem:[#allocation2] sm:$0x1] %v633
      %v635 = vld [vmem:[#allocation2 + $0x8] sm:$0x1]
      %v636 = vsel %vm631, 0, %v635
      %637 = vst [vmem:[#allocation2 + $0x8] sm:$0x1] %v636
      %v638 = vld [vmem:[#allocation2 + $0x10] sm:$0x1]
      %v639 = vsel %vm631, 0, %v638
      %640 = vst [vmem:[#allocation2 + $0x10] sm:$0x1] %v639
      %v641 = vld [vmem:[#allocation2 + $0x18] sm:$0x1]
      %v642 = vsel %vm631, 0, %v641
      %643 = vst [vmem:[#allocation2 + $0x18] sm:$0x1] %v642
      %v644 = vld [vmem:[#allocation2 + $0x20] sm:$0x1]
      %v645 = vsel %vm631, 0, %v644
      %646 = vst [vmem:[#allocation2 + $0x20] sm:$0x1] %v645
      %v647 = vld [vmem:[#allocation2 + $0x28] sm:$0x1]
      %v648 = vsel %vm631, 0, %v647
      %649 = vst [vmem:[#allocation2 + $0x28] sm:$0x1] %v648
      %v650 = vld [vmem:[#allocation2 + $0x30] sm:$0x1]
      %v651 = vsel %vm631, 0, %v650
      %652 = vst [vmem:[#allocation2 + $0x30] sm:$0x1] %v651
      %v653 = vld [vmem:[#allocation2 + $0x38] sm:$0x1]
      %v654 = vsel %vm631, 0, %v653
      %655 = vst [vmem:[#allocation2 + $0x38] sm:$0x1] %v654
      %v656 = vld [vmem:[#allocation2 + $0x40] sm:$0x1]
      %v657 = vsel %vm631, 0, %v656
      %658 = vst [vmem:[#allocation2 + $0x40] sm:$0x1] %v657
      %v659 = vld [vmem:[#allocation2 + $0x48] sm:$0x1]
      %v660 = vsel %vm631, 0, %v659
      %661 = vst [vmem:[#allocation2 + $0x48] sm:$0x1] %v660
      %v662 = vld [vmem:[#allocation2 + $0x50] sm:$0x1]
      %v663 = vsel %vm631, 0, %v662
      %664 = vst [vmem:[#allocation2 + $0x50] sm:$0x1] %v663
      %v665 = vld [vmem:[#allocation2 + $0x58] sm:$0x1]
      %v666 = vsel %vm631, 0, %v665
      %667 = vst [vmem:[#allocation2 + $0x58] sm:$0x1] %v666
      %v668 = vld [vmem:[#allocation2 + $0x60] sm:$0x1]
      %v669 = vsel %vm631, 0, %v668
      %670 = vst [vmem:[#allocation2 + $0x60] sm:$0x1] %v669
      %v671 = vld [vmem:[#allocation2 + $0x68] sm:$0x1]
      %v672 = vsel %vm631, 0, %v671
      %673 = vst [vmem:[#allocation2 + $0x68] sm:$0x1] %v672
      %v674 = vld [vmem:[#allocation2 + $0x70] sm:$0x1]
      %v675 = vsel %vm631, 0, %v674
      %676 = vst [vmem:[#allocation2 + $0x70] sm:$0x1] %v675
      %v677 = vld [vmem:[#allocation2 + $0x78] sm:$0x1]
      %v678 = vsel %vm631, 0, %v677
      %679 = vst [vmem:[#allocation2 + $0x78] sm:$0x1] %v678
      %v680 = vld [vmem:[#allocation2 + $0x80] sm:$0x1]
      %v681 = vsel %vm631, 0, %v680
      %682 = vst [vmem:[#allocation2 + $0x80] sm:$0x1] %v681
      %v683 = vld [vmem:[#allocation2 + $0x88] sm:$0x1]
      %v684 = vsel %vm631, 0, %v683
      %685 = vst [vmem:[#allocation2 + $0x88] sm:$0x1] %v684
      %v686 = vld [vmem:[#allocation2 + $0x90] sm:$0x1]
      %v687 = vsel %vm631, 0, %v686
      %688 = vst [vmem:[#allocation2 + $0x90] sm:$0x1] %v687
      %v689 = vld [vmem:[#allocation2 + $0x98] sm:$0x1]
      %v690 = vsel %vm631, 0, %v689
      %691 = vst [vmem:[#allocation2 + $0x98] sm:$0x1] %v690
      %v692 = vld [vmem:[#allocation2 + $0xa0] sm:$0x1]
      %v693 = vsel %vm631, 0, %v692
      %694 = vst [vmem:[#allocation2 + $0xa0] sm:$0x1] %v693
      %v695 = vld [vmem:[#allocation2 + $0xa8] sm:$0x1]
      %v696 = vsel %vm631, 0, %v695
      %697 = vst [vmem:[#allocation2 + $0xa8] sm:$0x1] %v696
      %v698 = vld [vmem:[#allocation2 + $0xb0] sm:$0x1]
      %v699 = vsel %vm631, 0, %v698
      %700 = vst [vmem:[#allocation2 + $0xb0] sm:$0x1] %v699
      %v701 = vld [vmem:[#allocation2 + $0xb8] sm:$0x1]
      %v702 = vsel %vm631, 0, %v701
      %703 = vst [vmem:[#allocation2 + $0xb8] sm:$0x1] %v702
      %v704 = vld [vmem:[#allocation2 + $0xc0] sm:$0x1]
      %v705 = vsel %vm631, 0, %v704
      %706 = vst [vmem:[#allocation2 + $0xc0] sm:$0x1] %v705
      %v707 = vld [vmem:[#allocation2 + $0xc8] sm:$0x1]
      %v708 = vsel %vm631, 0, %v707
      %709 = vst [vmem:[#allocation2 + $0xc8] sm:$0x1] %v708
      %v710 = vld [vmem:[#allocation2 + $0xd0] sm:$0x1]
      %v711 = vsel %vm631, 0, %v710
      %712 = vst [vmem:[#allocation2 + $0xd0] sm:$0x1] %v711
      %v713 = vld [vmem:[#allocation2 + $0xd8] sm:$0x1]
      %v714 = vsel %vm631, 0, %v713
      %715 = vst [vmem:[#allocation2 + $0xd8] sm:$0x1] %v714
      %v716 = vld [vmem:[#allocation2 + $0xe0] sm:$0x1]
      %v717 = vsel %vm631, 0, %v716
      %718 = vst [vmem:[#allocation2 + $0xe0] sm:$0x1] %v717
      %v719 = vld [vmem:[#allocation2 + $0xe8] sm:$0x1]
      %v720 = vsel %vm631, 0, %v719
      %721 = vst [vmem:[#allocation2 + $0xe8] sm:$0x1] %v720
      %v722 = vld [vmem:[#allocation2 + $0xf0] sm:$0x1]
      %v723 = vsel %vm631, 0, %v722
      %724 = vst [vmem:[#allocation2 + $0xf0] sm:$0x1] %v723
      %v725 = vld [vmem:[#allocation2 + $0xf8] sm:$0x1]
      %v726 = vsel %vm631, 0, %v725
      %727 = vst [vmem:[#allocation2 + $0xf8] sm:$0x1] %v726
      %v728 = vld [vmem:[#allocation2 + $0x100] sm:$0x1]
      %v729 = vsel %vm631, 0, %v728
      %730 = vst [vmem:[#allocation2 + $0x100] sm:$0x1] %v729
      %v731 = vld [vmem:[#allocation2 + $0x108] sm:$0x1]
      %v732 = vsel %vm631, 0, %v731
      %733 = vst [vmem:[#allocation2 + $0x108] sm:$0x1] %v732
      %v734 = vld [vmem:[#allocation2 + $0x110] sm:$0x1]
      %v735 = vsel %vm631, 0, %v734
      %736 = vst [vmem:[#allocation2 + $0x110] sm:$0x1] %v735
      %v737 = vld [vmem:[#allocation2 + $0x118] sm:$0x1]
      %v738 = vsel %vm631, 0, %v737
      %739 = vst [vmem:[#allocation2 + $0x118] sm:$0x1] %v738
      %v740 = vld [vmem:[#allocation2 + $0x120] sm:$0x1]
      %v741 = vsel %vm631, 0, %v740
      %742 = vst [vmem:[#allocation2 + $0x120] sm:$0x1] %v741
      %v743 = vld [vmem:[#allocation2 + $0x128] sm:$0x1]
      %v744 = vsel %vm631, 0, %v743
      %745 = vst [vmem:[#allocation2 + $0x128] sm:$0x1] %v744
      %v746 = vld [vmem:[#allocation2 + $0x130] sm:$0x1]
      %v747 = vsel %vm631, 0, %v746
      %748 = vst [vmem:[#allocation2 + $0x130] sm:$0x1] %v747
      %v749 = vld [vmem:[#allocation2 + $0x138] sm:$0x1]
      %v750 = vsel %vm631, 0, %v749
      %751 = vst [vmem:[#allocation2 + $0x138] sm:$0x1] %v750
      %v752 = vld [vmem:[#allocation2 + $0x140] sm:$0x1]
      %v753 = vsel %vm631, 0, %v752
      %754 = vst [vmem:[#allocation2 + $0x140] sm:$0x1] %v753
      %v755 = vld [vmem:[#allocation2 + $0x148] sm:$0x1]
      %v756 = vsel %vm631, 0, %v755
      %757 = vst [vmem:[#allocation2 + $0x148] sm:$0x1] %v756
      %v758 = vld [vmem:[#allocation2 + $0x150] sm:$0x1]
      %v759 = vsel %vm631, 0, %v758
      %760 = vst [vmem:[#allocation2 + $0x150] sm:$0x1] %v759
      %v761 = vld [vmem:[#allocation2 + $0x158] sm:$0x1]
      %v762 = vsel %vm631, 0, %v761
      %763 = vst [vmem:[#allocation2 + $0x158] sm:$0x1] %v762
      %v764 = vld [vmem:[#allocation2 + $0x160] sm:$0x1]
      %v765 = vsel %vm631, 0, %v764
      %766 = vst [vmem:[#allocation2 + $0x160] sm:$0x1] %v765
      %v767 = vld [vmem:[#allocation2 + $0x168] sm:$0x1]
      %v768 = vsel %vm631, 0, %v767
      %769 = vst [vmem:[#allocation2 + $0x168] sm:$0x1] %v768
      %v770 = vld [vmem:[#allocation2 + $0x170] sm:$0x1]
      %v771 = vsel %vm631, 0, %v770
      %772 = vst [vmem:[#allocation2 + $0x170] sm:$0x1] %v771
      %v773 = vld [vmem:[#allocation2 + $0x178] sm:$0x1]
      %v774 = vsel %vm631, 0, %v773
      %775 = vst [vmem:[#allocation2 + $0x178] sm:$0x1] %v774
      %v776 = vld [vmem:[#allocation2 + $0x180] sm:$0x1]
      %v777 = vsel %vm631, 0, %v776
      %778 = vst [vmem:[#allocation2 + $0x180] sm:$0x1] %v777
      %v779 = vld [vmem:[#allocation2 + $0x188] sm:$0x1]
      %v780 = vsel %vm631, 0, %v779
      %781 = vst [vmem:[#allocation2 + $0x188] sm:$0x1] %v780
      %v782 = vld [vmem:[#allocation2 + $0x190] sm:$0x1]
      %v783 = vsel %vm631, 0, %v782
      %784 = vst [vmem:[#allocation2 + $0x190] sm:$0x1] %v783
      %v785 = vld [vmem:[#allocation2 + $0x198] sm:$0x1]
      %v786 = vsel %vm631, 0, %v785
      %787 = vst [vmem:[#allocation2 + $0x198] sm:$0x1] %v786
      %v788 = vld [vmem:[#allocation2 + $0x1a0] sm:$0x1]
      %v789 = vsel %vm631, 0, %v788
      %790 = vst [vmem:[#allocation2 + $0x1a0] sm:$0x1] %v789
      %v791 = vld [vmem:[#allocation2 + $0x1a8] sm:$0x1]
      %v792 = vsel %vm631, 0, %v791
      %793 = vst [vmem:[#allocation2 + $0x1a8] sm:$0x1] %v792
      %v794 = vld [vmem:[#allocation2 + $0x1b0] sm:$0x1]
      %v795 = vsel %vm631, 0, %v794
      %796 = vst [vmem:[#allocation2 + $0x1b0] sm:$0x1] %v795
      %v797 = vld [vmem:[#allocation2 + $0x1b8] sm:$0x1]
      %v798 = vsel %vm631, 0, %v797
      %799 = vst [vmem:[#allocation2 + $0x1b8] sm:$0x1] %v798
      %v800 = vld [vmem:[#allocation2 + $0x1c0] sm:$0x1]
      %v801 = vsel %vm631, 0, %v800
      %802 = vst [vmem:[#allocation2 + $0x1c0] sm:$0x1] %v801
      %v803 = vld [vmem:[#allocation2 + $0x1c8] sm:$0x1]
      %v804 = vsel %vm631, 0, %v803
      %805 = vst [vmem:[#allocation2 + $0x1c8] sm:$0x1] %v804
      %v806 = vld [vmem:[#allocation2 + $0x1d0] sm:$0x1]
      %v807 = vsel %vm631, 0, %v806
      %808 = vst [vmem:[#allocation2 + $0x1d0] sm:$0x1] %v807
      %v809 = vld [vmem:[#allocation2 + $0x1d8] sm:$0x1]
      %v810 = vsel %vm631, 0, %v809
      %811 = vst [vmem:[#allocation2 + $0x1d8] sm:$0x1] %v810
      %v812 = vld [vmem:[#allocation2 + $0x1e0] sm:$0x1]
      %v813 = vsel %vm631, 0, %v812
      %814 = vst [vmem:[#allocation2 + $0x1e0] sm:$0x1] %v813
      %v815 = vld [vmem:[#allocation2 + $0x1e8] sm:$0x1]
      %v816 = vsel %vm631, 0, %v815
      %817 = vst [vmem:[#allocation2 + $0x1e8] sm:$0x1] %v816
      %v818 = vld [vmem:[#allocation2 + $0x1f0] sm:$0x1]
      %v819 = vsel %vm631, 0, %v818
      %820 = vst [vmem:[#allocation2 + $0x1f0] sm:$0x1] %v819
      %v821 = vld [vmem:[#allocation2 + $0x1f8] sm:$0x1]
      %v822 = vsel %vm631, 0, %v821
      %823 = vst [vmem:[#allocation2 + $0x1f8] sm:$0x1] %v822
      %vm824 = vsmask.f32 7938
      %vm825 = vmand %vm629, %vm824
      %v826 = vld [vmem:[#allocation2 + $0x4] sm:$0x1]
      %v827 = vsel %vm825, 0, %v826
      %828 = vst [vmem:[#allocation2 + $0x4] sm:$0x1] %v827
      %v829 = vld [vmem:[#allocation2 + $0xc] sm:$0x1]
      %v830 = vsel %vm825, 0, %v829
      %831 = vst [vmem:[#allocation2 + $0xc] sm:$0x1] %v830
      %v832 = vld [vmem:[#allocation2 + $0x14] sm:$0x1]
      %v833 = vsel %vm825, 0, %v832
      %834 = vst [vmem:[#allocation2 + $0x14] sm:$0x1] %v833
      %v835 = vld [vmem:[#allocation2 + $0x1c] sm:$0x1]
      %v836 = vsel %vm825, 0, %v835
      %837 = vst [vmem:[#allocation2 + $0x1c] sm:$0x1] %v836
      %v838 = vld [vmem:[#allocation2 + $0x24] sm:$0x1]
      %v839 = vsel %vm825, 0, %v838
      %840 = vst [vmem:[#allocation2 + $0x24] sm:$0x1] %v839
      %v841 = vld [vmem:[#allocation2 + $0x2c] sm:$0x1]
      %v842 = vsel %vm825, 0, %v841
      %843 = vst [vmem:[#allocation2 + $0x2c] sm:$0x1] %v842
      %v844 = vld [vmem:[#allocation2 + $0x34] sm:$0x1]
      %v845 = vsel %vm825, 0, %v844
      %846 = vst [vmem:[#allocation2 + $0x34] sm:$0x1] %v845
      %v847 = vld [vmem:[#allocation2 + $0x3c] sm:$0x1]
      %v848 = vsel %vm825, 0, %v847
      %849 = vst [vmem:[#allocation2 + $0x3c] sm:$0x1] %v848
      %v850 = vld [vmem:[#allocation2 + $0x44] sm:$0x1]
      %v851 = vsel %vm825, 0, %v850
      %852 = vst [vmem:[#allocation2 + $0x44] sm:$0x1] %v851
      %v853 = vld [vmem:[#allocation2 + $0x4c] sm:$0x1]
      %v854 = vsel %vm825, 0, %v853
      %855 = vst [vmem:[#allocation2 + $0x4c] sm:$0x1] %v854
      %v856 = vld [vmem:[#allocation2 + $0x54] sm:$0x1]
      %v857 = vsel %vm825, 0, %v856
      %858 = vst [vmem:[#allocation2 + $0x54] sm:$0x1] %v857
      %v859 = vld [vmem:[#allocation2 + $0x5c] sm:$0x1]
      %v860 = vsel %vm825, 0, %v859
      %861 = vst [vmem:[#allocation2 + $0x5c] sm:$0x1] %v860
      %v862 = vld [vmem:[#allocation2 + $0x64] sm:$0x1]
      %v863 = vsel %vm825, 0, %v862
      %864 = vst [vmem:[#allocation2 + $0x64] sm:$0x1] %v863
      %v865 = vld [vmem:[#allocation2 + $0x6c] sm:$0x1]
      %v866 = vsel %vm825, 0, %v865
      %867 = vst [vmem:[#allocation2 + $0x6c] sm:$0x1] %v866
      %v868 = vld [vmem:[#allocation2 + $0x74] sm:$0x1]
      %v869 = vsel %vm825, 0, %v868
      %870 = vst [vmem:[#allocation2 + $0x74] sm:$0x1] %v869
      %v871 = vld [vmem:[#allocation2 + $0x7c] sm:$0x1]
      %v872 = vsel %vm825, 0, %v871
      %873 = vst [vmem:[#allocation2 + $0x7c] sm:$0x1] %v872
      %v874 = vld [vmem:[#allocation2 + $0x84] sm:$0x1]
      %v875 = vsel %vm825, 0, %v874
      %876 = vst [vmem:[#allocation2 + $0x84] sm:$0x1] %v875
      %v877 = vld [vmem:[#allocation2 + $0x8c] sm:$0x1]
      %v878 = vsel %vm825, 0, %v877
      %879 = vst [vmem:[#allocation2 + $0x8c] sm:$0x1] %v878
      %v880 = vld [vmem:[#allocation2 + $0x94] sm:$0x1]
      %v881 = vsel %vm825, 0, %v880
      %882 = vst [vmem:[#allocation2 + $0x94] sm:$0x1] %v881
      %v883 = vld [vmem:[#allocation2 + $0x9c] sm:$0x1]
      %v884 = vsel %vm825, 0, %v883
      %885 = vst [vmem:[#allocation2 + $0x9c] sm:$0x1] %v884
      %v886 = vld [vmem:[#allocation2 + $0xa4] sm:$0x1]
      %v887 = vsel %vm825, 0, %v886
      %888 = vst [vmem:[#allocation2 + $0xa4] sm:$0x1] %v887
      %v889 = vld [vmem:[#allocation2 + $0xac] sm:$0x1]
      %v890 = vsel %vm825, 0, %v889
      %891 = vst [vmem:[#allocation2 + $0xac] sm:$0x1] %v890
      %v892 = vld [vmem:[#allocation2 + $0xb4] sm:$0x1]
      %v893 = vsel %vm825, 0, %v892
      %894 = vst [vmem:[#allocation2 + $0xb4] sm:$0x1] %v893
      %v895 = vld [vmem:[#allocation2 + $0xbc] sm:$0x1]
      %v896 = vsel %vm825, 0, %v895
      %897 = vst [vmem:[#allocation2 + $0xbc] sm:$0x1] %v896
      %v898 = vld [vmem:[#allocation2 + $0xc4] sm:$0x1]
      %v899 = vsel %vm825, 0, %v898
      %900 = vst [vmem:[#allocation2 + $0xc4] sm:$0x1] %v899
      %v901 = vld [vmem:[#allocation2 + $0xcc] sm:$0x1]
      %v902 = vsel %vm825, 0, %v901
      %903 = vst [vmem:[#allocation2 + $0xcc] sm:$0x1] %v902
      %v904 = vld [vmem:[#allocation2 + $0xd4] sm:$0x1]
      %v905 = vsel %vm825, 0, %v904
      %906 = vst [vmem:[#allocation2 + $0xd4] sm:$0x1] %v905
      %v907 = vld [vmem:[#allocation2 + $0xdc] sm:$0x1]
      %v908 = vsel %vm825, 0, %v907
      %909 = vst [vmem:[#allocation2 + $0xdc] sm:$0x1] %v908
      %v910 = vld [vmem:[#allocation2 + $0xe4] sm:$0x1]
      %v911 = vsel %vm825, 0, %v910
      %912 = vst [vmem:[#allocation2 + $0xe4] sm:$0x1] %v911
      %v913 = vld [vmem:[#allocation2 + $0xec] sm:$0x1]
      %v914 = vsel %vm825, 0, %v913
      %915 = vst [vmem:[#allocation2 + $0xec] sm:$0x1] %v914
      %v916 = vld [vmem:[#allocation2 + $0xf4] sm:$0x1]
      %v917 = vsel %vm825, 0, %v916
      %918 = vst [vmem:[#allocation2 + $0xf4] sm:$0x1] %v917
      %v919 = vld [vmem:[#allocation2 + $0xfc] sm:$0x1]
      %v920 = vsel %vm825, 0, %v919
      %921 = vst [vmem:[#allocation2 + $0xfc] sm:$0x1] %v920
      %v922 = vld [vmem:[#allocation2 + $0x104] sm:$0x1]
      %v923 = vsel %vm825, 0, %v922
      %924 = vst [vmem:[#allocation2 + $0x104] sm:$0x1] %v923
      %v925 = vld [vmem:[#allocation2 + $0x10c] sm:$0x1]
      %v926 = vsel %vm825, 0, %v925
      %927 = vst [vmem:[#allocation2 + $0x10c] sm:$0x1] %v926
      %v928 = vld [vmem:[#allocation2 + $0x114] sm:$0x1]
      %v929 = vsel %vm825, 0, %v928
      %930 = vst [vmem:[#allocation2 + $0x114] sm:$0x1] %v929
      %v931 = vld [vmem:[#allocation2 + $0x11c] sm:$0x1]
      %v932 = vsel %vm825, 0, %v931
      %933 = vst [vmem:[#allocation2 + $0x11c] sm:$0x1] %v932
      %v934 = vld [vmem:[#allocation2 + $0x124] sm:$0x1]
      %v935 = vsel %vm825, 0, %v934
      %936 = vst [vmem:[#allocation2 + $0x124] sm:$0x1] %v935
      %v937 = vld [vmem:[#allocation2 + $0x12c] sm:$0x1]
      %v938 = vsel %vm825, 0, %v937
      %939 = vst [vmem:[#allocation2 + $0x12c] sm:$0x1] %v938
      %v940 = vld [vmem:[#allocation2 + $0x134] sm:$0x1]
      %v941 = vsel %vm825, 0, %v940
      %942 = vst [vmem:[#allocation2 + $0x134] sm:$0x1] %v941
      %v943 = vld [vmem:[#allocation2 + $0x13c] sm:$0x1]
      %v944 = vsel %vm825, 0, %v943
      %945 = vst [vmem:[#allocation2 + $0x13c] sm:$0x1] %v944
      %v946 = vld [vmem:[#allocation2 + $0x144] sm:$0x1]
      %v947 = vsel %vm825, 0, %v946
      %948 = vst [vmem:[#allocation2 + $0x144] sm:$0x1] %v947
      %v949 = vld [vmem:[#allocation2 + $0x14c] sm:$0x1]
      %v950 = vsel %vm825, 0, %v949
      %951 = vst [vmem:[#allocation2 + $0x14c] sm:$0x1] %v950
      %v952 = vld [vmem:[#allocation2 + $0x154] sm:$0x1]
      %v953 = vsel %vm825, 0, %v952
      %954 = vst [vmem:[#allocation2 + $0x154] sm:$0x1] %v953
      %v955 = vld [vmem:[#allocation2 + $0x15c] sm:$0x1]
      %v956 = vsel %vm825, 0, %v955
      %957 = vst [vmem:[#allocation2 + $0x15c] sm:$0x1] %v956
      %v958 = vld [vmem:[#allocation2 + $0x164] sm:$0x1]
      %v959 = vsel %vm825, 0, %v958
      %960 = vst [vmem:[#allocation2 + $0x164] sm:$0x1] %v959
      %v961 = vld [vmem:[#allocation2 + $0x16c] sm:$0x1]
      %v962 = vsel %vm825, 0, %v961
      %963 = vst [vmem:[#allocation2 + $0x16c] sm:$0x1] %v962
      %v964 = vld [vmem:[#allocation2 + $0x174] sm:$0x1]
      %v965 = vsel %vm825, 0, %v964
      %966 = vst [vmem:[#allocation2 + $0x174] sm:$0x1] %v965
      %v967 = vld [vmem:[#allocation2 + $0x17c] sm:$0x1]
      %v968 = vsel %vm825, 0, %v967
      %969 = vst [vmem:[#allocation2 + $0x17c] sm:$0x1] %v968
      %v970 = vld [vmem:[#allocation2 + $0x184] sm:$0x1]
      %v971 = vsel %vm825, 0, %v970
      %972 = vst [vmem:[#allocation2 + $0x184] sm:$0x1] %v971
      %v973 = vld [vmem:[#allocation2 + $0x18c] sm:$0x1]
      %v974 = vsel %vm825, 0, %v973
      %975 = vst [vmem:[#allocation2 + $0x18c] sm:$0x1] %v974
      %v976 = vld [vmem:[#allocation2 + $0x194] sm:$0x1]
      %v977 = vsel %vm825, 0, %v976
      %978 = vst [vmem:[#allocation2 + $0x194] sm:$0x1] %v977
      %v979 = vld [vmem:[#allocation2 + $0x19c] sm:$0x1]
      %v980 = vsel %vm825, 0, %v979
      %981 = vst [vmem:[#allocation2 + $0x19c] sm:$0x1] %v980
      %v982 = vld [vmem:[#allocation2 + $0x1a4] sm:$0x1]
      %v983 = vsel %vm825, 0, %v982
      %984 = vst [vmem:[#allocation2 + $0x1a4] sm:$0x1] %v983
      %v985 = vld [vmem:[#allocation2 + $0x1ac] sm:$0x1]
      %v986 = vsel %vm825, 0, %v985
      %987 = vst [vmem:[#allocation2 + $0x1ac] sm:$0x1] %v986
      %v988 = vld [vmem:[#allocation2 + $0x1b4] sm:$0x1]
      %v989 = vsel %vm825, 0, %v988
      %990 = vst [vmem:[#allocation2 + $0x1b4] sm:$0x1] %v989
      %v991 = vld [vmem:[#allocation2 + $0x1bc] sm:$0x1]
      %v992 = vsel %vm825, 0, %v991
      %993 = vst [vmem:[#allocation2 + $0x1bc] sm:$0x1] %v992
      %v994 = vld [vmem:[#allocation2 + $0x1c4] sm:$0x1]
      %v995 = vsel %vm825, 0, %v994
      %996 = vst [vmem:[#allocation2 + $0x1c4] sm:$0x1] %v995
      %v997 = vld [vmem:[#allocation2 + $0x1cc] sm:$0x1]
      %v998 = vsel %vm825, 0, %v997
      %999 = vst [vmem:[#allocation2 + $0x1cc] sm:$0x1] %v998
      %v1000 = vld [vmem:[#allocation2 + $0x1d4] sm:$0x1]
      %v1001 = vsel %vm825, 0, %v1000
      %1002 = vst [vmem:[#allocation2 + $0x1d4] sm:$0x1] %v1001
      %v1003 = vld [vmem:[#allocation2 + $0x1dc] sm:$0x1]
      %v1004 = vsel %vm825, 0, %v1003
      %1005 = vst [vmem:[#allocation2 + $0x1dc] sm:$0x1] %v1004
      %v1006 = vld [vmem:[#allocation2 + $0x1e4] sm:$0x1]
      %v1007 = vsel %vm825, 0, %v1006
      %1008 = vst [vmem:[#allocation2 + $0x1e4] sm:$0x1] %v1007
      %v1009 = vld [vmem:[#allocation2 + $0x1ec] sm:$0x1]
      %v1010 = vsel %vm825, 0, %v1009
      %1011 = vst [vmem:[#allocation2 + $0x1ec] sm:$0x1] %v1010
      %v1012 = vld [vmem:[#allocation2 + $0x1f4] sm:$0x1]
      %v1013 = vsel %vm825, 0, %v1012
      %1014 = vst [vmem:[#allocation2 + $0x1f4] sm:$0x1] %v1013
      %v1015 = vld [vmem:[#allocation2 + $0x1fc] sm:$0x1]
      %v1016 = vsel %vm825, 0, %v1015
      %1017 = vst [vmem:[#allocation2 + $0x1fc] sm:$0x1] %v1016
      %v1019 = vshrl.u32 %v565, 16
      %v1021 = vrot.slane %v1019, 7
      %v1022 = vshll.u32 %v565, 16
      %v1024 = vor.u32 %v1021, %v1022
      %v1025 = vrot.slane %v1021, 4
      %v1027 = vshrl.u32 %v566, 16
      %v1029 = vrot.slane %v1027, 7
      %v1030 = vshll.u32 %v566, 16
      %v1032 = vor.u32 %v1029, %v1030
      %v1033 = vrot.slane %v1029, 4
      %v1035 = vshrl.u32 %v567, 16
      %v1037 = vrot.slane %v1035, 7
      %v1038 = vshll.u32 %v567, 16
      %v1040 = vor.u32 %v1037, %v1038
      %v1041 = vrot.slane %v1037, 4
      %v1043 = vshrl.u32 %v568, 16
      %v1045 = vrot.slane %v1043, 7
      %v1046 = vshll.u32 %v568, 16
      %v1048 = vor.u32 %v1045, %v1046
      %v1049 = vrot.slane %v1045, 4
      %v1051 = vshrl.u32 %v569, 16
      %v1053 = vrot.slane %v1051, 7
      %v1054 = vshll.u32 %v569, 16
      %v1056 = vor.u32 %v1053, %v1054
      %v1057 = vrot.slane %v1053, 4
      %v1059 = vshrl.u32 %v570, 16
      %v1061 = vrot.slane %v1059, 7
      %v1062 = vshll.u32 %v570, 16
      %v1064 = vor.u32 %v1061, %v1062
      %v1065 = vrot.slane %v1061, 4
      %v1067 = vshrl.u32 %v571, 16
      %v1069 = vrot.slane %v1067, 7
      %v1070 = vshll.u32 %v571, 16
      %v1072 = vor.u32 %v1069, %v1070
      %v1073 = vrot.slane %v1069, 4
      %v1075 = vshrl.u32 %v572, 16
      %v1077 = vrot.slane %v1075, 7
      %v1078 = vshll.u32 %v572, 16
      %v1080 = vor.u32 %v1077, %v1078
      %v1081 = vrot.slane %v1077, 4
      %v1083 = vshrl.u32 %v573, 16
      %v1085 = vrot.slane %v1083, 7
      %v1086 = vshll.u32 %v573, 16
      %v1088 = vor.u32 %v1085, %v1086
      %v1089 = vrot.slane %v1085, 4
      %v1091 = vshrl.u32 %v574, 16
      %v1093 = vrot.slane %v1091, 7
      %v1094 = vshll.u32 %v574, 16
      %v1096 = vor.u32 %v1093, %v1094
      %v1097 = vrot.slane %v1093, 4
      %v1099 = vshrl.u32 %v575, 16
      %v1101 = vrot.slane %v1099, 7
      %v1102 = vshll.u32 %v575, 16
      %v1104 = vor.u32 %v1101, %v1102
      %v1105 = vrot.slane %v1101, 4
      %v1107 = vshrl.u32 %v576, 16
      %v1109 = vrot.slane %v1107, 7
      %v1110 = vshll.u32 %v576, 16
      %v1112 = vor.u32 %v1109, %v1110
      %v1113 = vrot.slane %v1109, 4
      %v1115 = vshrl.u32 %v577, 16
      %v1117 = vrot.slane %v1115, 7
      %v1118 = vshll.u32 %v577, 16
      %v1120 = vor.u32 %v1117, %v1118
      %v1121 = vrot.slane %v1117, 4
      %v1123 = vshrl.u32 %v578, 16
      %v1125 = vrot.slane %v1123, 7
      %v1126 = vshll.u32 %v578, 16
      %v1128 = vor.u32 %v1125, %v1126
      %v1129 = vrot.slane %v1125, 4
      %v1131 = vshrl.u32 %v579, 16
      %v1133 = vrot.slane %v1131, 7
      %v1134 = vshll.u32 %v579, 16
      %v1136 = vor.u32 %v1133, %v1134
      %v1137 = vrot.slane %v1133, 4
      %v1139 = vshrl.u32 %v580, 16
      %v1141 = vrot.slane %v1139, 7
      %v1142 = vshll.u32 %v580, 16
      %v1144 = vor.u32 %v1141, %v1142
      %v1145 = vrot.slane %v1141, 4
      %v1147 = vshrl.u32 %v581, 16
      %v1149 = vrot.slane %v1147, 7
      %v1150 = vshll.u32 %v581, 16
      %v1152 = vor.u32 %v1149, %v1150
      %v1153 = vrot.slane %v1149, 4
      %v1155 = vshrl.u32 %v582, 16
      %v1157 = vrot.slane %v1155, 7
      %v1158 = vshll.u32 %v582, 16
      %v1160 = vor.u32 %v1157, %v1158
      %v1161 = vrot.slane %v1157, 4
      %v1163 = vshrl.u32 %v583, 16
      %v1165 = vrot.slane %v1163, 7
      %v1166 = vshll.u32 %v583, 16
      %v1168 = vor.u32 %v1165, %v1166
      %v1169 = vrot.slane %v1165, 4
      %v1171 = vshrl.u32 %v584, 16
      %v1173 = vrot.slane %v1171, 7
      %v1174 = vshll.u32 %v584, 16
      %v1176 = vor.u32 %v1173, %v1174
      %v1177 = vrot.slane %v1173, 4
      %v1179 = vshrl.u32 %v585, 16
      %v1181 = vrot.slane %v1179, 7
      %v1182 = vshll.u32 %v585, 16
      %v1184 = vor.u32 %v1181, %v1182
      %v1185 = vrot.slane %v1181, 4
      %v1187 = vshrl.u32 %v586, 16
      %v1189 = vrot.slane %v1187, 7
      %v1190 = vshll.u32 %v586, 16
      %v1192 = vor.u32 %v1189, %v1190
      %v1193 = vrot.slane %v1189, 4
      %v1195 = vshrl.u32 %v587, 16
      %v1197 = vrot.slane %v1195, 7
      %v1198 = vshll.u32 %v587, 16
      %v1200 = vor.u32 %v1197, %v1198
      %v1201 = vrot.slane %v1197, 4
      %v1203 = vshrl.u32 %v588, 16
      %v1205 = vrot.slane %v1203, 7
      %v1206 = vshll.u32 %v588, 16
      %v1208 = vor.u32 %v1205, %v1206
      %v1209 = vrot.slane %v1205, 4
      %v1211 = vshrl.u32 %v589, 16
      %v1213 = vrot.slane %v1211, 7
      %v1214 = vshll.u32 %v589, 16
      %v1216 = vor.u32 %v1213, %v1214
      %v1217 = vrot.slane %v1213, 4
      %v1219 = vshrl.u32 %v590, 16
      %v1221 = vrot.slane %v1219, 7
      %v1222 = vshll.u32 %v590, 16
      %v1224 = vor.u32 %v1221, %v1222
      %v1225 = vrot.slane %v1221, 4
      %v1227 = vshrl.u32 %v591, 16
      %v1229 = vrot.slane %v1227, 7
      %v1230 = vshll.u32 %v591, 16
      %v1232 = vor.u32 %v1229, %v1230
      %v1233 = vrot.slane %v1229, 4
      %v1235 = vshrl.u32 %v592, 16
      %v1237 = vrot.slane %v1235, 7
      %v1238 = vshll.u32 %v592, 16
      %v1240 = vor.u32 %v1237, %v1238
      %v1241 = vrot.slane %v1237, 4
      %v1243 = vshrl.u32 %v593, 16
      %v1245 = vrot.slane %v1243, 7
      %v1246 = vshll.u32 %v593, 16
      %v1248 = vor.u32 %v1245, %v1246
      %v1249 = vrot.slane %v1245, 4
      %v1251 = vshrl.u32 %v594, 16
      %v1253 = vrot.slane %v1251, 7
      %v1254 = vshll.u32 %v594, 16
      %v1256 = vor.u32 %v1253, %v1254
      %v1257 = vrot.slane %v1253, 4
      %v1259 = vshrl.u32 %v595, 16
      %v1261 = vrot.slane %v1259, 7
      %v1262 = vshll.u32 %v595, 16
      %v1264 = vor.u32 %v1261, %v1262
      %v1265 = vrot.slane %v1261, 4
      %v1267 = vshrl.u32 %v596, 16
      %v1269 = vrot.slane %v1267, 7
      %v1270 = vshll.u32 %v596, 16
      %v1272 = vor.u32 %v1269, %v1270
      %v1273 = vrot.slane %v1269, 4
      %v1275 = vshrl.u32 %v597, 16
      %v1277 = vrot.slane %v1275, 7
      %v1278 = vshll.u32 %v597, 16
      %v1280 = vor.u32 %v1277, %v1278
      %v1281 = vrot.slane %v1277, 4
      %v1283 = vshrl.u32 %v598, 16
      %v1285 = vrot.slane %v1283, 7
      %v1286 = vshll.u32 %v598, 16
      %v1288 = vor.u32 %v1285, %v1286
      %v1289 = vrot.slane %v1285, 4
      %v1291 = vshrl.u32 %v599, 16
      %v1293 = vrot.slane %v1291, 7
      %v1294 = vshll.u32 %v599, 16
      %v1296 = vor.u32 %v1293, %v1294
      %v1297 = vrot.slane %v1293, 4
      %v1299 = vshrl.u32 %v600, 16
      %v1301 = vrot.slane %v1299, 7
      %v1302 = vshll.u32 %v600, 16
      %v1304 = vor.u32 %v1301, %v1302
      %v1305 = vrot.slane %v1301, 4
      %v1307 = vshrl.u32 %v601, 16
      %v1309 = vrot.slane %v1307, 7
      %v1310 = vshll.u32 %v601, 16
      %v1312 = vor.u32 %v1309, %v1310
      %v1313 = vrot.slane %v1309, 4
      %v1315 = vshrl.u32 %v602, 16
      %v1317 = vrot.slane %v1315, 7
      %v1318 = vshll.u32 %v602, 16
      %v1320 = vor.u32 %v1317, %v1318
      %v1321 = vrot.slane %v1317, 4
      %v1323 = vshrl.u32 %v603, 16
      %v1325 = vrot.slane %v1323, 7
      %v1326 = vshll.u32 %v603, 16
      %v1328 = vor.u32 %v1325, %v1326
      %v1329 = vrot.slane %v1325, 4
      %v1331 = vshrl.u32 %v604, 16
      %v1333 = vrot.slane %v1331, 7
      %v1334 = vshll.u32 %v604, 16
      %v1336 = vor.u32 %v1333, %v1334
      %v1337 = vrot.slane %v1333, 4
      %v1339 = vshrl.u32 %v605, 16
      %v1341 = vrot.slane %v1339, 7
      %v1342 = vshll.u32 %v605, 16
      %v1344 = vor.u32 %v1341, %v1342
      %v1345 = vrot.slane %v1341, 4
      %v1347 = vshrl.u32 %v606, 16
      %v1349 = vrot.slane %v1347, 7
      %v1350 = vshll.u32 %v606, 16
      %v1352 = vor.u32 %v1349, %v1350
      %v1353 = vrot.slane %v1349, 4
      %v1355 = vshrl.u32 %v607, 16
      %v1357 = vrot.slane %v1355, 7
      %v1358 = vshll.u32 %v607, 16
      %v1360 = vor.u32 %v1357, %v1358
      %v1361 = vrot.slane %v1357, 4
      %v1363 = vshrl.u32 %v608, 16
      %v1365 = vrot.slane %v1363, 7
      %v1366 = vshll.u32 %v608, 16
      %v1368 = vor.u32 %v1365, %v1366
      %v1369 = vrot.slane %v1365, 4
      %v1371 = vshrl.u32 %v609, 16
      %v1373 = vrot.slane %v1371, 7
      %v1374 = vshll.u32 %v609, 16
      %v1376 = vor.u32 %v1373, %v1374
      %v1377 = vrot.slane %v1373, 4
      %v1379 = vshrl.u32 %v610, 16
      %v1381 = vrot.slane %v1379, 7
      %v1382 = vshll.u32 %v610, 16
      %v1384 = vor.u32 %v1381, %v1382
      %v1385 = vrot.slane %v1381, 4
      %v1387 = vshrl.u32 %v611, 16
      %v1389 = vrot.slane %v1387, 7
      %v1390 = vshll.u32 %v611, 16
      %v1392 = vor.u32 %v1389, %v1390
      %v1393 = vrot.slane %v1389, 4
      %v1395 = vshrl.u32 %v612, 16
      %v1397 = vrot.slane %v1395, 7
      %v1398 = vshll.u32 %v612, 16
      %v1400 = vor.u32 %v1397, %v1398
      %v1401 = vrot.slane %v1397, 4
      %v1403 = vshrl.u32 %v613, 16
      %v1405 = vrot.slane %v1403, 7
      %v1406 = vshll.u32 %v613, 16
      %v1408 = vor.u32 %v1405, %v1406
      %v1409 = vrot.slane %v1405, 4
      %v1411 = vshrl.u32 %v614, 16
      %v1413 = vrot.slane %v1411, 7
      %v1414 = vshll.u32 %v614, 16
      %v1416 = vor.u32 %v1413, %v1414
      %v1417 = vrot.slane %v1413, 4
      %v1419 = vshrl.u32 %v615, 16
      %v1421 = vrot.slane %v1419, 7
      %v1422 = vshll.u32 %v615, 16
      %v1424 = vor.u32 %v1421, %v1422
      %v1425 = vrot.slane %v1421, 4
      %v1427 = vshrl.u32 %v616, 16
      %v1429 = vrot.slane %v1427, 7
      %v1430 = vshll.u32 %v616, 16
      %v1432 = vor.u32 %v1429, %v1430
      %v1433 = vrot.slane %v1429, 4
      %v1435 = vshrl.u32 %v617, 16
      %v1437 = vrot.slane %v1435, 7
      %v1438 = vshll.u32 %v617, 16
      %v1440 = vor.u32 %v1437, %v1438
      %v1441 = vrot.slane %v1437, 4
      %v1443 = vshrl.u32 %v618, 16
      %v1445 = vrot.slane %v1443, 7
      %v1446 = vshll.u32 %v618, 16
      %v1448 = vor.u32 %v1445, %v1446
      %v1449 = vrot.slane %v1445, 4
      %v1451 = vshrl.u32 %v619, 16
      %v1453 = vrot.slane %v1451, 7
      %v1454 = vshll.u32 %v619, 16
      %v1456 = vor.u32 %v1453, %v1454
      %v1457 = vrot.slane %v1453, 4
      %v1459 = vshrl.u32 %v620, 16
      %v1461 = vrot.slane %v1459, 7
      %v1462 = vshll.u32 %v620, 16
      %v1464 = vor.u32 %v1461, %v1462
      %v1465 = vrot.slane %v1461, 4
      %v1467 = vshrl.u32 %v621, 16
      %v1469 = vrot.slane %v1467, 7
      %v1470 = vshll.u32 %v621, 16
      %v1472 = vor.u32 %v1469, %v1470
      %v1473 = vrot.slane %v1469, 4
      %v1475 = vshrl.u32 %v622, 16
      %v1477 = vrot.slane %v1475, 7
      %v1478 = vshll.u32 %v622, 16
      %v1480 = vor.u32 %v1477, %v1478
      %v1481 = vrot.slane %v1477, 4
      %v1483 = vshrl.u32 %v623, 16
      %v1485 = vrot.slane %v1483, 7
      %v1486 = vshll.u32 %v623, 16
      %v1488 = vor.u32 %v1485, %v1486
      %v1489 = vrot.slane %v1485, 4
      %v1491 = vshrl.u32 %v624, 16
      %v1493 = vrot.slane %v1491, 7
      %v1494 = vshll.u32 %v624, 16
      %v1496 = vor.u32 %v1493, %v1494
      %v1497 = vrot.slane %v1493, 4
      %v1499 = vshrl.u32 %v625, 16
      %v1501 = vrot.slane %v1499, 7
      %v1502 = vshll.u32 %v625, 16
      %v1504 = vor.u32 %v1501, %v1502
      %v1505 = vrot.slane %v1501, 4
      %v1507 = vshrl.u32 %v626, 16
      %v1509 = vrot.slane %v1507, 7
      %v1510 = vshll.u32 %v626, 16
      %v1512 = vor.u32 %v1509, %v1510
      %v1513 = vrot.slane %v1509, 4
      %v1515 = vshrl.u32 %v627, 16
      %v1517 = vrot.slane %v1515, 7
      %v1518 = vshll.u32 %v627, 16
      %v1520 = vor.u32 %v1517, %v1518
      %v1521 = vrot.slane %v1517, 4
      %v1523 = vshrl.u32 %v628, 16
      %v1525 = vrot.slane %v1523, 7
      %v1526 = vshll.u32 %v628, 16
      %v1528 = vor.u32 %v1525, %v1526
      %v1529 = vrot.slane %v1525, 4
      %vm1658 = vcmask 60416
      %vm1659 = vmand %vm1658, %vm824
      %v1660 = vld [vmem:[#allocation2] sm:$0xf]
      %v1661 = vsel %vm1659, %v1024, %v1660
      %1662 = vst [vmem:[#allocation2] sm:$0xf] %v1661
      %v1663 = vld [vmem:[#allocation2 + $0x4] sm:$0x1]
      %v1664 = vsel %vm631, %v1025, %v1663
      %1665 = vst [vmem:[#allocation2 + $0x4] sm:$0x1] %v1664
      %v1666 = vld [vmem:[#allocation2 + $0x8] sm:$0xf]
      %v1667 = vsel %vm1659, %v1032, %v1666
      %1668 = vst [vmem:[#allocation2 + $0x8] sm:$0xf] %v1667
      %v1669 = vld [vmem:[#allocation2 + $0xc] sm:$0x1]
      %v1670 = vsel %vm631, %v1033, %v1669
      %1671 = vst [vmem:[#allocation2 + $0xc] sm:$0x1] %v1670
      %v1672 = vld [vmem:[#allocation2 + $0x10] sm:$0xf]
      %v1673 = vsel %vm1659, %v1040, %v1672
      %1674 = vst [vmem:[#allocation2 + $0x10] sm:$0xf] %v1673
      %v1675 = vld [vmem:[#allocation2 + $0x14] sm:$0x1]
      %v1676 = vsel %vm631, %v1041, %v1675
      %1677 = vst [vmem:[#allocation2 + $0x14] sm:$0x1] %v1676
      %v1678 = vld [vmem:[#allocation2 + $0x18] sm:$0xf]
      %v1679 = vsel %vm1659, %v1048, %v1678
      %1680 = vst [vmem:[#allocation2 + $0x18] sm:$0xf] %v1679
      %v1681 = vld [vmem:[#allocation2 + $0x1c] sm:$0x1]
      %v1682 = vsel %vm631, %v1049, %v1681
      %1683 = vst [vmem:[#allocation2 + $0x1c] sm:$0x1] %v1682
      %v1684 = vld [vmem:[#allocation2 + $0x20] sm:$0xf]
      %v1685 = vsel %vm1659, %v1056, %v1684
      %1686 = vst [vmem:[#allocation2 + $0x20] sm:$0xf] %v1685
      %v1687 = vld [vmem:[#allocation2 + $0x24] sm:$0x1]
      %v1688 = vsel %vm631, %v1057, %v1687
      %1689 = vst [vmem:[#allocation2 + $0x24] sm:$0x1] %v1688
      %v1690 = vld [vmem:[#allocation2 + $0x28] sm:$0xf]
      %v1691 = vsel %vm1659, %v1064, %v1690
      %1692 = vst [vmem:[#allocation2 + $0x28] sm:$0xf] %v1691
      %v1693 = vld [vmem:[#allocation2 + $0x2c] sm:$0x1]
      %v1694 = vsel %vm631, %v1065, %v1693
      %1695 = vst [vmem:[#allocation2 + $0x2c] sm:$0x1] %v1694
      %v1696 = vld [vmem:[#allocation2 + $0x30] sm:$0xf]
      %v1697 = vsel %vm1659, %v1072, %v1696
      %1698 = vst [vmem:[#allocation2 + $0x30] sm:$0xf] %v1697
      %v1699 = vld [vmem:[#allocation2 + $0x34] sm:$0x1]
      %v1700 = vsel %vm631, %v1073, %v1699
      %1701 = vst [vmem:[#allocation2 + $0x34] sm:$0x1] %v1700
      %v1702 = vld [vmem:[#allocation2 + $0x38] sm:$0xf]
      %v1703 = vsel %vm1659, %v1080, %v1702
      %1704 = vst [vmem:[#allocation2 + $0x38] sm:$0xf] %v1703
      %v1705 = vld [vmem:[#allocation2 + $0x3c] sm:$0x1]
      %v1706 = vsel %vm631, %v1081, %v1705
      %1707 = vst [vmem:[#allocation2 + $0x3c] sm:$0x1] %v1706
      %v1708 = vld [vmem:[#allocation2 + $0x40] sm:$0xf]
      %v1709 = vsel %vm1659, %v1088, %v1708
      %1710 = vst [vmem:[#allocation2 + $0x40] sm:$0xf] %v1709
      %v1711 = vld [vmem:[#allocation2 + $0x44] sm:$0x1]
      %v1712 = vsel %vm631, %v1089, %v1711
      %1713 = vst [vmem:[#allocation2 + $0x44] sm:$0x1] %v1712
      %v1714 = vld [vmem:[#allocation2 + $0x48] sm:$0xf]
      %v1715 = vsel %vm1659, %v1096, %v1714
      %1716 = vst [vmem:[#allocation2 + $0x48] sm:$0xf] %v1715
      %v1717 = vld [vmem:[#allocation2 + $0x4c] sm:$0x1]
      %v1718 = vsel %vm631, %v1097, %v1717
      %1719 = vst [vmem:[#allocation2 + $0x4c] sm:$0x1] %v1718
      %v1720 = vld [vmem:[#allocation2 + $0x50] sm:$0xf]
      %v1721 = vsel %vm1659, %v1104, %v1720
      %1722 = vst [vmem:[#allocation2 + $0x50] sm:$0xf] %v1721
      %v1723 = vld [vmem:[#allocation2 + $0x54] sm:$0x1]
      %v1724 = vsel %vm631, %v1105, %v1723
      %1725 = vst [vmem:[#allocation2 + $0x54] sm:$0x1] %v1724
      %v1726 = vld [vmem:[#allocation2 + $0x58] sm:$0xf]
      %v1727 = vsel %vm1659, %v1112, %v1726
      %1728 = vst [vmem:[#allocation2 + $0x58] sm:$0xf] %v1727
      %v1729 = vld [vmem:[#allocation2 + $0x5c] sm:$0x1]
      %v1730 = vsel %vm631, %v1113, %v1729
      %1731 = vst [vmem:[#allocation2 + $0x5c] sm:$0x1] %v1730
      %v1732 = vld [vmem:[#allocation2 + $0x60] sm:$0xf]
      %v1733 = vsel %vm1659, %v1120, %v1732
      %1734 = vst [vmem:[#allocation2 + $0x60] sm:$0xf] %v1733
      %v1735 = vld [vmem:[#allocation2 + $0x64] sm:$0x1]
      %v1736 = vsel %vm631, %v1121, %v1735
      %1737 = vst [vmem:[#allocation2 + $0x64] sm:$0x1] %v1736
      %v1738 = vld [vmem:[#allocation2 + $0x68] sm:$0xf]
      %v1739 = vsel %vm1659, %v1128, %v1738
      %1740 = vst [vmem:[#allocation2 + $0x68] sm:$0xf] %v1739
      %v1741 = vld [vmem:[#allocation2 + $0x6c] sm:$0x1]
      %v1742 = vsel %vm631, %v1129, %v1741
      %1743 = vst [vmem:[#allocation2 + $0x6c] sm:$0x1] %v1742
      %v1744 = vld [vmem:[#allocation2 + $0x70] sm:$0xf]
      %v1745 = vsel %vm1659, %v1136, %v1744
      %1746 = vst [vmem:[#allocation2 + $0x70] sm:$0xf] %v1745
      %v1747 = vld [vmem:[#allocation2 + $0x74] sm:$0x1]
      %v1748 = vsel %vm631, %v1137, %v1747
      %1749 = vst [vmem:[#allocation2 + $0x74] sm:$0x1] %v1748
      %v1750 = vld [vmem:[#allocation2 + $0x78] sm:$0xf]
      %v1751 = vsel %vm1659, %v1144, %v1750
      %1752 = vst [vmem:[#allocation2 + $0x78] sm:$0xf] %v1751
      %v1753 = vld [vmem:[#allocation2 + $0x7c] sm:$0x1]
      %v1754 = vsel %vm631, %v1145, %v1753
      %1755 = vst [vmem:[#allocation2 + $0x7c] sm:$0x1] %v1754
      %v1756 = vld [vmem:[#allocation2 + $0x80] sm:$0xf]
      %v1757 = vsel %vm1659, %v1152, %v1756
      %1758 = vst [vmem:[#allocation2 + $0x80] sm:$0xf] %v1757
      %v1759 = vld [vmem:[#allocation2 + $0x84] sm:$0x1]
      %v1760 = vsel %vm631, %v1153, %v1759
      %1761 = vst [vmem:[#allocation2 + $0x84] sm:$0x1] %v1760
      %v1762 = vld [vmem:[#allocation2 + $0x88] sm:$0xf]
      %v1763 = vsel %vm1659, %v1160, %v1762
      %1764 = vst [vmem:[#allocation2 + $0x88] sm:$0xf] %v1763
      %v1765 = vld [vmem:[#allocation2 + $0x8c] sm:$0x1]
      %v1766 = vsel %vm631, %v1161, %v1765
      %1767 = vst [vmem:[#allocation2 + $0x8c] sm:$0x1] %v1766
      %v1768 = vld [vmem:[#allocation2 + $0x90] sm:$0xf]
      %v1769 = vsel %vm1659, %v1168, %v1768
      %1770 = vst [vmem:[#allocation2 + $0x90] sm:$0xf] %v1769
      %v1771 = vld [vmem:[#allocation2 + $0x94] sm:$0x1]
      %v1772 = vsel %vm631, %v1169, %v1771
      %1773 = vst [vmem:[#allocation2 + $0x94] sm:$0x1] %v1772
      %v1774 = vld [vmem:[#allocation2 + $0x98] sm:$0xf]
      %v1775 = vsel %vm1659, %v1176, %v1774
      %1776 = vst [vmem:[#allocation2 + $0x98] sm:$0xf] %v1775
      %v1777 = vld [vmem:[#allocation2 + $0x9c] sm:$0x1]
      %v1778 = vsel %vm631, %v1177, %v1777
      %1779 = vst [vmem:[#allocation2 + $0x9c] sm:$0x1] %v1778
      %v1780 = vld [vmem:[#allocation2 + $0xa0] sm:$0xf]
      %v1781 = vsel %vm1659, %v1184, %v1780
      %1782 = vst [vmem:[#allocation2 + $0xa0] sm:$0xf] %v1781
      %v1783 = vld [vmem:[#allocation2 + $0xa4] sm:$0x1]
      %v1784 = vsel %vm631, %v1185, %v1783
      %1785 = vst [vmem:[#allocation2 + $0xa4] sm:$0x1] %v1784
      %v1786 = vld [vmem:[#allocation2 + $0xa8] sm:$0xf]
      %v1787 = vsel %vm1659, %v1192, %v1786
      %1788 = vst [vmem:[#allocation2 + $0xa8] sm:$0xf] %v1787
      %v1789 = vld [vmem:[#allocation2 + $0xac] sm:$0x1]
      %v1790 = vsel %vm631, %v1193, %v1789
      %1791 = vst [vmem:[#allocation2 + $0xac] sm:$0x1] %v1790
      %v1792 = vld [vmem:[#allocation2 + $0xb0] sm:$0xf]
      %v1793 = vsel %vm1659, %v1200, %v1792
      %1794 = vst [vmem:[#allocation2 + $0xb0] sm:$0xf] %v1793
      %v1795 = vld [vmem:[#allocation2 + $0xb4] sm:$0x1]
      %v1796 = vsel %vm631, %v1201, %v1795
      %1797 = vst [vmem:[#allocation2 + $0xb4] sm:$0x1] %v1796
      %v1798 = vld [vmem:[#allocation2 + $0xb8] sm:$0xf]
      %v1799 = vsel %vm1659, %v1208, %v1798
      %1800 = vst [vmem:[#allocation2 + $0xb8] sm:$0xf] %v1799
      %v1801 = vld [vmem:[#allocation2 + $0xbc] sm:$0x1]
      %v1802 = vsel %vm631, %v1209, %v1801
      %1803 = vst [vmem:[#allocation2 + $0xbc] sm:$0x1] %v1802
      %v1804 = vld [vmem:[#allocation2 + $0xc0] sm:$0xf]
      %v1805 = vsel %vm1659, %v1216, %v1804
      %1806 = vst [vmem:[#allocation2 + $0xc0] sm:$0xf] %v1805
      %v1807 = vld [vmem:[#allocation2 + $0xc4] sm:$0x1]
      %v1808 = vsel %vm631, %v1217, %v1807
      %1809 = vst [vmem:[#allocation2 + $0xc4] sm:$0x1] %v1808
      %v1810 = vld [vmem:[#allocation2 + $0xc8] sm:$0xf]
      %v1811 = vsel %vm1659, %v1224, %v1810
      %1812 = vst [vmem:[#allocation2 + $0xc8] sm:$0xf] %v1811
      %v1813 = vld [vmem:[#allocation2 + $0xcc] sm:$0x1]
      %v1814 = vsel %vm631, %v1225, %v1813
      %1815 = vst [vmem:[#allocation2 + $0xcc] sm:$0x1] %v1814
      %v1816 = vld [vmem:[#allocation2 + $0xd0] sm:$0xf]
      %v1817 = vsel %vm1659, %v1232, %v1816
      %1818 = vst [vmem:[#allocation2 + $0xd0] sm:$0xf] %v1817
      %v1819 = vld [vmem:[#allocation2 + $0xd4] sm:$0x1]
      %v1820 = vsel %vm631, %v1233, %v1819
      %1821 = vst [vmem:[#allocation2 + $0xd4] sm:$0x1] %v1820
      %v1822 = vld [vmem:[#allocation2 + $0xd8] sm:$0xf]
      %v1823 = vsel %vm1659, %v1240, %v1822
      %1824 = vst [vmem:[#allocation2 + $0xd8] sm:$0xf] %v1823
      %v1825 = vld [vmem:[#allocation2 + $0xdc] sm:$0x1]
      %v1826 = vsel %vm631, %v1241, %v1825
      %1827 = vst [vmem:[#allocation2 + $0xdc] sm:$0x1] %v1826
      %v1828 = vld [vmem:[#allocation2 + $0xe0] sm:$0xf]
      %v1829 = vsel %vm1659, %v1248, %v1828
      %1830 = vst [vmem:[#allocation2 + $0xe0] sm:$0xf] %v1829
      %v1831 = vld [vmem:[#allocation2 + $0xe4] sm:$0x1]
      %v1832 = vsel %vm631, %v1249, %v1831
      %1833 = vst [vmem:[#allocation2 + $0xe4] sm:$0x1] %v1832
      %v1834 = vld [vmem:[#allocation2 + $0xe8] sm:$0xf]
      %v1835 = vsel %vm1659, %v1256, %v1834
      %1836 = vst [vmem:[#allocation2 + $0xe8] sm:$0xf] %v1835
      %v1837 = vld [vmem:[#allocation2 + $0xec] sm:$0x1]
      %v1838 = vsel %vm631, %v1257, %v1837
      %1839 = vst [vmem:[#allocation2 + $0xec] sm:$0x1] %v1838
      %v1840 = vld [vmem:[#allocation2 + $0xf0] sm:$0xf]
      %v1841 = vsel %vm1659, %v1264, %v1840
      %1842 = vst [vmem:[#allocation2 + $0xf0] sm:$0xf] %v1841
      %v1843 = vld [vmem:[#allocation2 + $0xf4] sm:$0x1]
      %v1844 = vsel %vm631, %v1265, %v1843
      %1845 = vst [vmem:[#allocation2 + $0xf4] sm:$0x1] %v1844
      %v1846 = vld [vmem:[#allocation2 + $0xf8] sm:$0xf]
      %v1847 = vsel %vm1659, %v1272, %v1846
      %1848 = vst [vmem:[#allocation2 + $0xf8] sm:$0xf] %v1847
      %v1849 = vld [vmem:[#allocation2 + $0xfc] sm:$0x1]
      %v1850 = vsel %vm631, %v1273, %v1849
      %1851 = vst [vmem:[#allocation2 + $0xfc] sm:$0x1] %v1850
      %v1852 = vld [vmem:[#allocation2 + $0x100] sm:$0xf]
      %v1853 = vsel %vm1659, %v1280, %v1852
      %1854 = vst [vmem:[#allocation2 + $0x100] sm:$0xf] %v1853
      %v1855 = vld [vmem:[#allocation2 + $0x104] sm:$0x1]
      %v1856 = vsel %vm631, %v1281, %v1855
      %1857 = vst [vmem:[#allocation2 + $0x104] sm:$0x1] %v1856
      %v1858 = vld [vmem:[#allocation2 + $0x108] sm:$0xf]
      %v1859 = vsel %vm1659, %v1288, %v1858
      %1860 = vst [vmem:[#allocation2 + $0x108] sm:$0xf] %v1859
      %v1861 = vld [vmem:[#allocation2 + $0x10c] sm:$0x1]
      %v1862 = vsel %vm631, %v1289, %v1861
      %1863 = vst [vmem:[#allocation2 + $0x10c] sm:$0x1] %v1862
      %v1864 = vld [vmem:[#allocation2 + $0x110] sm:$0xf]
      %v1865 = vsel %vm1659, %v1296, %v1864
      %1866 = vst [vmem:[#allocation2 + $0x110] sm:$0xf] %v1865
      %v1867 = vld [vmem:[#allocation2 + $0x114] sm:$0x1]
      %v1868 = vsel %vm631, %v1297, %v1867
      %1869 = vst [vmem:[#allocation2 + $0x114] sm:$0x1] %v1868
      %v1870 = vld [vmem:[#allocation2 + $0x118] sm:$0xf]
      %v1871 = vsel %vm1659, %v1304, %v1870
      %1872 = vst [vmem:[#allocation2 + $0x118] sm:$0xf] %v1871
      %v1873 = vld [vmem:[#allocation2 + $0x11c] sm:$0x1]
      %v1874 = vsel %vm631, %v1305, %v1873
      %1875 = vst [vmem:[#allocation2 + $0x11c] sm:$0x1] %v1874
      %v1876 = vld [vmem:[#allocation2 + $0x120] sm:$0xf]
      %v1877 = vsel %vm1659, %v1312, %v1876
      %1878 = vst [vmem:[#allocation2 + $0x120] sm:$0xf] %v1877
      %v1879 = vld [vmem:[#allocation2 + $0x124] sm:$0x1]
      %v1880 = vsel %vm631, %v1313, %v1879
      %1881 = vst [vmem:[#allocation2 + $0x124] sm:$0x1] %v1880
      %v1882 = vld [vmem:[#allocation2 + $0x128] sm:$0xf]
      %v1883 = vsel %vm1659, %v1320, %v1882
      %1884 = vst [vmem:[#allocation2 + $0x128] sm:$0xf] %v1883
      %v1885 = vld [vmem:[#allocation2 + $0x12c] sm:$0x1]
      %v1886 = vsel %vm631, %v1321, %v1885
      %1887 = vst [vmem:[#allocation2 + $0x12c] sm:$0x1] %v1886
      %v1888 = vld [vmem:[#allocation2 + $0x130] sm:$0xf]
      %v1889 = vsel %vm1659, %v1328, %v1888
      %1890 = vst [vmem:[#allocation2 + $0x130] sm:$0xf] %v1889
      %v1891 = vld [vmem:[#allocation2 + $0x134] sm:$0x1]
      %v1892 = vsel %vm631, %v1329, %v1891
      %1893 = vst [vmem:[#allocation2 + $0x134] sm:$0x1] %v1892
      %v1894 = vld [vmem:[#allocation2 + $0x138] sm:$0xf]
      %v1895 = vsel %vm1659, %v1336, %v1894
      %1896 = vst [vmem:[#allocation2 + $0x138] sm:$0xf] %v1895
      %v1897 = vld [vmem:[#allocation2 + $0x13c] sm:$0x1]
      %v1898 = vsel %vm631, %v1337, %v1897
      %1899 = vst [vmem:[#allocation2 + $0x13c] sm:$0x1] %v1898
      %v1900 = vld [vmem:[#allocation2 + $0x140] sm:$0xf]
      %v1901 = vsel %vm1659, %v1344, %v1900
      %1902 = vst [vmem:[#allocation2 + $0x140] sm:$0xf] %v1901
      %v1903 = vld [vmem:[#allocation2 + $0x144] sm:$0x1]
      %v1904 = vsel %vm631, %v1345, %v1903
      %1905 = vst [vmem:[#allocation2 + $0x144] sm:$0x1] %v1904
      %v1906 = vld [vmem:[#allocation2 + $0x148] sm:$0xf]
      %v1907 = vsel %vm1659, %v1352, %v1906
      %1908 = vst [vmem:[#allocation2 + $0x148] sm:$0xf] %v1907
      %v1909 = vld [vmem:[#allocation2 + $0x14c] sm:$0x1]
      %v1910 = vsel %vm631, %v1353, %v1909
      %1911 = vst [vmem:[#allocation2 + $0x14c] sm:$0x1] %v1910
      %v1912 = vld [vmem:[#allocation2 + $0x150] sm:$0xf]
      %v1913 = vsel %vm1659, %v1360, %v1912
      %1914 = vst [vmem:[#allocation2 + $0x150] sm:$0xf] %v1913
      %v1915 = vld [vmem:[#allocation2 + $0x154] sm:$0x1]
      %v1916 = vsel %vm631, %v1361, %v1915
      %1917 = vst [vmem:[#allocation2 + $0x154] sm:$0x1] %v1916
      %v1918 = vld [vmem:[#allocation2 + $0x158] sm:$0xf]
      %v1919 = vsel %vm1659, %v1368, %v1918
      %1920 = vst [vmem:[#allocation2 + $0x158] sm:$0xf] %v1919
      %v1921 = vld [vmem:[#allocation2 + $0x15c] sm:$0x1]
      %v1922 = vsel %vm631, %v1369, %v1921
      %1923 = vst [vmem:[#allocation2 + $0x15c] sm:$0x1] %v1922
      %v1924 = vld [vmem:[#allocation2 + $0x160] sm:$0xf]
      %v1925 = vsel %vm1659, %v1376, %v1924
      %1926 = vst [vmem:[#allocation2 + $0x160] sm:$0xf] %v1925
      %v1927 = vld [vmem:[#allocation2 + $0x164] sm:$0x1]
      %v1928 = vsel %vm631, %v1377, %v1927
      %1929 = vst [vmem:[#allocation2 + $0x164] sm:$0x1] %v1928
      %v1930 = vld [vmem:[#allocation2 + $0x168] sm:$0xf]
      %v1931 = vsel %vm1659, %v1384, %v1930
      %1932 = vst [vmem:[#allocation2 + $0x168] sm:$0xf] %v1931
      %v1933 = vld [vmem:[#allocation2 + $0x16c] sm:$0x1]
      %v1934 = vsel %vm631, %v1385, %v1933
      %1935 = vst [vmem:[#allocation2 + $0x16c] sm:$0x1] %v1934
      %v1936 = vld [vmem:[#allocation2 + $0x170] sm:$0xf]
      %v1937 = vsel %vm1659, %v1392, %v1936
      %1938 = vst [vmem:[#allocation2 + $0x170] sm:$0xf] %v1937
      %v1939 = vld [vmem:[#allocation2 + $0x174] sm:$0x1]
      %v1940 = vsel %vm631, %v1393, %v1939
      %1941 = vst [vmem:[#allocation2 + $0x174] sm:$0x1] %v1940
      %v1942 = vld [vmem:[#allocation2 + $0x178] sm:$0xf]
      %v1943 = vsel %vm1659, %v1400, %v1942
      %1944 = vst [vmem:[#allocation2 + $0x178] sm:$0xf] %v1943
      %v1945 = vld [vmem:[#allocation2 + $0x17c] sm:$0x1]
      %v1946 = vsel %vm631, %v1401, %v1945
      %1947 = vst [vmem:[#allocation2 + $0x17c] sm:$0x1] %v1946
      %v1948 = vld [vmem:[#allocation2 + $0x180] sm:$0xf]
      %v1949 = vsel %vm1659, %v1408, %v1948
      %1950 = vst [vmem:[#allocation2 + $0x180] sm:$0xf] %v1949
      %v1951 = vld [vmem:[#allocation2 + $0x184] sm:$0x1]
      %v1952 = vsel %vm631, %v1409, %v1951
      %1953 = vst [vmem:[#allocation2 + $0x184] sm:$0x1] %v1952
      %v1954 = vld [vmem:[#allocation2 + $0x188] sm:$0xf]
      %v1955 = vsel %vm1659, %v1416, %v1954
      %1956 = vst [vmem:[#allocation2 + $0x188] sm:$0xf] %v1955
      %v1957 = vld [vmem:[#allocation2 + $0x18c] sm:$0x1]
      %v1958 = vsel %vm631, %v1417, %v1957
      %1959 = vst [vmem:[#allocation2 + $0x18c] sm:$0x1] %v1958
      %v1960 = vld [vmem:[#allocation2 + $0x190] sm:$0xf]
      %v1961 = vsel %vm1659, %v1424, %v1960
      %1962 = vst [vmem:[#allocation2 + $0x190] sm:$0xf] %v1961
      %v1963 = vld [vmem:[#allocation2 + $0x194] sm:$0x1]
      %v1964 = vsel %vm631, %v1425, %v1963
      %1965 = vst [vmem:[#allocation2 + $0x194] sm:$0x1] %v1964
      %v1966 = vld [vmem:[#allocation2 + $0x198] sm:$0xf]
      %v1967 = vsel %vm1659, %v1432, %v1966
      %1968 = vst [vmem:[#allocation2 + $0x198] sm:$0xf] %v1967
      %v1969 = vld [vmem:[#allocation2 + $0x19c] sm:$0x1]
      %v1970 = vsel %vm631, %v1433, %v1969
      %1971 = vst [vmem:[#allocation2 + $0x19c] sm:$0x1] %v1970
      %v1972 = vld [vmem:[#allocation2 + $0x1a0] sm:$0xf]
      %v1973 = vsel %vm1659, %v1440, %v1972
      %1974 = vst [vmem:[#allocation2 + $0x1a0] sm:$0xf] %v1973
      %v1975 = vld [vmem:[#allocation2 + $0x1a4] sm:$0x1]
      %v1976 = vsel %vm631, %v1441, %v1975
      %1977 = vst [vmem:[#allocation2 + $0x1a4] sm:$0x1] %v1976
      %v1978 = vld [vmem:[#allocation2 + $0x1a8] sm:$0xf]
      %v1979 = vsel %vm1659, %v1448, %v1978
      %1980 = vst [vmem:[#allocation2 + $0x1a8] sm:$0xf] %v1979
      %v1981 = vld [vmem:[#allocation2 + $0x1ac] sm:$0x1]
      %v1982 = vsel %vm631, %v1449, %v1981
      %1983 = vst [vmem:[#allocation2 + $0x1ac] sm:$0x1] %v1982
      %v1984 = vld [vmem:[#allocation2 + $0x1b0] sm:$0xf]
      %v1985 = vsel %vm1659, %v1456, %v1984
      %1986 = vst [vmem:[#allocation2 + $0x1b0] sm:$0xf] %v1985
      %v1987 = vld [vmem:[#allocation2 + $0x1b4] sm:$0x1]
      %v1988 = vsel %vm631, %v1457, %v1987
      %1989 = vst [vmem:[#allocation2 + $0x1b4] sm:$0x1] %v1988
      %v1990 = vld [vmem:[#allocation2 + $0x1b8] sm:$0xf]
      %v1991 = vsel %vm1659, %v1464, %v1990
      %1992 = vst [vmem:[#allocation2 + $0x1b8] sm:$0xf] %v1991
      %v1993 = vld [vmem:[#allocation2 + $0x1bc] sm:$0x1]
      %v1994 = vsel %vm631, %v1465, %v1993
      %1995 = vst [vmem:[#allocation2 + $0x1bc] sm:$0x1] %v1994
      %v1996 = vld [vmem:[#allocation2 + $0x1c0] sm:$0xf]
      %v1997 = vsel %vm1659, %v1472, %v1996
      %1998 = vst [vmem:[#allocation2 + $0x1c0] sm:$0xf] %v1997
      %v1999 = vld [vmem:[#allocation2 + $0x1c4] sm:$0x1]
      %v2000 = vsel %vm631, %v1473, %v1999
      %2001 = vst [vmem:[#allocation2 + $0x1c4] sm:$0x1] %v2000
      %v2002 = vld [vmem:[#allocation2 + $0x1c8] sm:$0xf]
      %v2003 = vsel %vm1659, %v1480, %v2002
      %2004 = vst [vmem:[#allocation2 + $0x1c8] sm:$0xf] %v2003
      %v2005 = vld [vmem:[#allocation2 + $0x1cc] sm:$0x1]
      %v2006 = vsel %vm631, %v1481, %v2005
      %2007 = vst [vmem:[#allocation2 + $0x1cc] sm:$0x1] %v2006
      %v2008 = vld [vmem:[#allocation2 + $0x1d0] sm:$0xf]
      %v2009 = vsel %vm1659, %v1488, %v2008
      %2010 = vst [vmem:[#allocation2 + $0x1d0] sm:$0xf] %v2009
      %v2011 = vld [vmem:[#allocation2 + $0x1d4] sm:$0x1]
      %v2012 = vsel %vm631, %v1489, %v2011
      %2013 = vst [vmem:[#allocation2 + $0x1d4] sm:$0x1] %v2012
      %v2014 = vld [vmem:[#allocation2 + $0x1d8] sm:$0xf]
      %v2015 = vsel %vm1659, %v1496, %v2014
      %2016 = vst [vmem:[#allocation2 + $0x1d8] sm:$0xf] %v2015
      %v2017 = vld [vmem:[#allocation2 + $0x1dc] sm:$0x1]
      %v2018 = vsel %vm631, %v1497, %v2017
      %2019 = vst [vmem:[#allocation2 + $0x1dc] sm:$0x1] %v2018
      %v2020 = vld [vmem:[#allocation2 + $0x1e0] sm:$0xf]
      %v2021 = vsel %vm1659, %v1504, %v2020
      %2022 = vst [vmem:[#allocation2 + $0x1e0] sm:$0xf] %v2021
      %v2023 = vld [vmem:[#allocation2 + $0x1e4] sm:$0x1]
      %v2024 = vsel %vm631, %v1505, %v2023
      %2025 = vst [vmem:[#allocation2 + $0x1e4] sm:$0x1] %v2024
      %v2026 = vld [vmem:[#allocation2 + $0x1e8] sm:$0xf]
      %v2027 = vsel %vm1659, %v1512, %v2026
      %2028 = vst [vmem:[#allocation2 + $0x1e8] sm:$0xf] %v2027
      %v2029 = vld [vmem:[#allocation2 + $0x1ec] sm:$0x1]
      %v2030 = vsel %vm631, %v1513, %v2029
      %2031 = vst [vmem:[#allocation2 + $0x1ec] sm:$0x1] %v2030
      %v2032 = vld [vmem:[#allocation2 + $0x1f0] sm:$0xf]
      %v2033 = vsel %vm1659, %v1520, %v2032
      %2034 = vst [vmem:[#allocation2 + $0x1f0] sm:$0xf] %v2033
      %v2035 = vld [vmem:[#allocation2 + $0x1f4] sm:$0x1]
      %v2036 = vsel %vm631, %v1521, %v2035
      %2037 = vst [vmem:[#allocation2 + $0x1f4] sm:$0x1] %v2036
      %v2038 = vld [vmem:[#allocation2 + $0x1f8] sm:$0xf]
      %v2039 = vsel %vm1659, %v1528, %v2038
      %2040 = vst [vmem:[#allocation2 + $0x1f8] sm:$0xf] %v2039
      %v2041 = vld [vmem:[#allocation2 + $0x1fc] sm:$0x1]
      %v2042 = vsel %vm631, %v1529, %v2041
      %2043 = vst [vmem:[#allocation2 + $0x1fc] sm:$0x1] %v2042
      %v2044 = vld [vmem:[#allocation2] sm:$0xf]
      %v2045 = vld [vmem:[#allocation2 + $0x8] sm:$0xf]
      %v2046 = vld [vmem:[#allocation2 + $0x10] sm:$0xf]
      %v2047 = vld [vmem:[#allocation2 + $0x18] sm:$0xf]
      %v2048 = vld [vmem:[#allocation2 + $0x20] sm:$0xf]
      %v2049 = vld [vmem:[#allocation2 + $0x28] sm:$0xf]
      %v2050 = vld [vmem:[#allocation2 + $0x30] sm:$0xf]
      %v2051 = vld [vmem:[#allocation2 + $0x38] sm:$0xf]
      %v2052 = vld [vmem:[#allocation2 + $0x40] sm:$0xf]
      %v2053 = vld [vmem:[#allocation2 + $0x48] sm:$0xf]
      %v2054 = vld [vmem:[#allocation2 + $0x50] sm:$0xf]
      %v2055 = vld [vmem:[#allocation2 + $0x58] sm:$0xf]
      %v2056 = vld [vmem:[#allocation2 + $0x60] sm:$0xf]
      %v2057 = vld [vmem:[#allocation2 + $0x68] sm:$0xf]
      %v2058 = vld [vmem:[#allocation2 + $0x70] sm:$0xf]
      %v2059 = vld [vmem:[#allocation2 + $0x78] sm:$0xf]
      %v2060 = vld [vmem:[#allocation2 + $0x80] sm:$0xf]
      %v2061 = vld [vmem:[#allocation2 + $0x88] sm:$0xf]
      %v2062 = vld [vmem:[#allocation2 + $0x90] sm:$0xf]
      %v2063 = vld [vmem:[#allocation2 + $0x98] sm:$0xf]
      %v2064 = vld [vmem:[#allocation2 + $0xa0] sm:$0xf]
      %v2065 = vld [vmem:[#allocation2 + $0xa8] sm:$0xf]
      %v2066 = vld [vmem:[#allocation2 + $0xb0] sm:$0xf]
      %v2067 = vld [vmem:[#allocation2 + $0xb8] sm:$0xf]
      %v2068 = vld [vmem:[#allocation2 + $0xc0] sm:$0xf]
      %v2069 = vld [vmem:[#allocation2 + $0xc8] sm:$0xf]
      %v2070 = vld [vmem:[#allocation2 + $0xd0] sm:$0xf]
      %v2071 = vld [vmem:[#allocation2 + $0xd8] sm:$0xf]
      %v2072 = vld [vmem:[#allocation2 + $0xe0] sm:$0xf]
      %v2073 = vld [vmem:[#allocation2 + $0xe8] sm:$0xf]
      %v2074 = vld [vmem:[#allocation2 + $0xf0] sm:$0xf]
      %v2075 = vld [vmem:[#allocation2 + $0xf8] sm:$0xf]
      %v2076 = vld [vmem:[#allocation2 + $0x100] sm:$0xf]
      %v2077 = vld [vmem:[#allocation2 + $0x108] sm:$0xf]
      %v2078 = vld [vmem:[#allocation2 + $0x110] sm:$0xf]
      %v2079 = vld [vmem:[#allocation2 + $0x118] sm:$0xf]
      %v2080 = vld [vmem:[#allocation2 + $0x120] sm:$0xf]
      %v2081 = vld [vmem:[#allocation2 + $0x128] sm:$0xf]
      %v2082 = vld [vmem:[#allocation2 + $0x130] sm:$0xf]
      %v2083 = vld [vmem:[#allocation2 + $0x138] sm:$0xf]
      %v2084 = vld [vmem:[#allocation2 + $0x140] sm:$0xf]
      %v2085 = vld [vmem:[#allocation2 + $0x148] sm:$0xf]
      %v2086 = vld [vmem:[#allocation2 + $0x150] sm:$0xf]
      %v2087 = vld [vmem:[#allocation2 + $0x158] sm:$0xf]
      %v2088 = vld [vmem:[#allocation2 + $0x160] sm:$0xf]
      %v2089 = vld [vmem:[#allocation2 + $0x168] sm:$0xf]
      %v2090 = vld [vmem:[#allocation2 + $0x170] sm:$0xf]
      %v2091 = vld [vmem:[#allocation2 + $0x178] sm:$0xf]
      %v2092 = vld [vmem:[#allocation2 + $0x180] sm:$0xf]
      %v2093 = vld [vmem:[#allocation2 + $0x188] sm:$0xf]
      %v2094 = vld [vmem:[#allocation2 + $0x190] sm:$0xf]
      %v2095 = vld [vmem:[#allocation2 + $0x198] sm:$0xf]
      %v2096 = vld [vmem:[#allocation2 + $0x1a0] sm:$0xf]
      %v2097 = vld [vmem:[#allocation2 + $0x1a8] sm:$0xf]
      %v2098 = vld [vmem:[#allocation2 + $0x1b0] sm:$0xf]
      %v2099 = vld [vmem:[#allocation2 + $0x1b8] sm:$0xf]
      %v2100 = vld [vmem:[#allocation2 + $0x1c0] sm:$0xf]
      %v2101 = vld [vmem:[#allocation2 + $0x1c8] sm:$0xf]
      %v2102 = vld [vmem:[#allocation2 + $0x1d0] sm:$0xf]
      %v2103 = vld [vmem:[#allocation2 + $0x1d8] sm:$0xf]
      %v2104 = vld [vmem:[#allocation2 + $0x1e0] sm:$0xf]
      %v2105 = vld [vmem:[#allocation2 + $0x1e8] sm:$0xf]
      %v2106 = vld [vmem:[#allocation2 + $0x1f0] sm:$0xf]
      %v2107 = vld [vmem:[#allocation2 + $0x1f8] sm:$0xf]
      %v2108 = vld [vmem:[#allocation2 + $0x4] sm:$0x1]
      %v2109 = vld [vmem:[#allocation2 + $0xc] sm:$0x1]
      %v2110 = vld [vmem:[#allocation2 + $0x14] sm:$0x1]
      %v2111 = vld [vmem:[#allocation2 + $0x1c] sm:$0x1]
      %v2112 = vld [vmem:[#allocation2 + $0x24] sm:$0x1]
      %v2113 = vld [vmem:[#allocation2 + $0x2c] sm:$0x1]
      %v2114 = vld [vmem:[#allocation2 + $0x34] sm:$0x1]
      %v2115 = vld [vmem:[#allocation2 + $0x3c] sm:$0x1]
      %v2116 = vld [vmem:[#allocation2 + $0x44] sm:$0x1]
      %v2117 = vld [vmem:[#allocation2 + $0x4c] sm:$0x1]
      %v2118 = vld [vmem:[#allocation2 + $0x54] sm:$0x1]
      %v2119 = vld [vmem:[#allocation2 + $0x5c] sm:$0x1]
      %v2120 = vld [vmem:[#allocation2 + $0x64] sm:$0x1]
      %v2121 = vld [vmem:[#allocation2 + $0x6c] sm:$0x1]
      %v2122 = vld [vmem:[#allocation2 + $0x74] sm:$0x1]
      %v2123 = vld [vmem:[#allocation2 + $0x7c] sm:$0x1]
      %v2124 = vld [vmem:[#allocation2 + $0x84] sm:$0x1]
      %v2125 = vld [vmem:[#allocation2 + $0x8c] sm:$0x1]
      %v2126 = vld [vmem:[#allocation2 + $0x94] sm:$0x1]
      %v2127 = vld [vmem:[#allocation2 + $0x9c] sm:$0x1]
      %v2128 = vld [vmem:[#allocation2 + $0xa4] sm:$0x1]
      %v2129 = vld [vmem:[#allocation2 + $0xac] sm:$0x1]
      %v2130 = vld [vmem:[#allocation2 + $0xb4] sm:$0x1]
      %v2131 = vld [vmem:[#allocation2 + $0xbc] sm:$0x1]
      %v2132 = vld [vmem:[#allocation2 + $0xc4] sm:$0x1]
      %v2133 = vld [vmem:[#allocation2 + $0xcc] sm:$0x1]
      %v2134 = vld [vmem:[#allocation2 + $0xd4] sm:$0x1]
      %v2135 = vld [vmem:[#allocation2 + $0xdc] sm:$0x1]
      %v2136 = vld [vmem:[#allocation2 + $0xe4] sm:$0x1]
      %v2137 = vld [vmem:[#allocation2 + $0xec] sm:$0x1]
      %v2138 = vld [vmem:[#allocation2 + $0xf4] sm:$0x1]
      %v2139 = vld [vmem:[#allocation2 + $0xfc] sm:$0x1]
      %v2140 = vld [vmem:[#allocation2 + $0x104] sm:$0x1]
      %v2141 = vld [vmem:[#allocation2 + $0x10c] sm:$0x1]
      %v2142 = vld [vmem:[#allocation2 + $0x114] sm:$0x1]
      %v2143 = vld [vmem:[#allocation2 + $0x11c] sm:$0x1]
      %v2144 = vld [vmem:[#allocation2 + $0x124] sm:$0x1]
      %v2145 = vld [vmem:[#allocation2 + $0x12c] sm:$0x1]
      %v2146 = vld [vmem:[#allocation2 + $0x134] sm:$0x1]
      %v2147 = vld [vmem:[#allocation2 + $0x13c] sm:$0x1]
      %v2148 = vld [vmem:[#allocation2 + $0x144] sm:$0x1]
      %v2149 = vld [vmem:[#allocation2 + $0x14c] sm:$0x1]
      %v2150 = vld [vmem:[#allocation2 + $0x154] sm:$0x1]
      %v2151 = vld [vmem:[#allocation2 + $0x15c] sm:$0x1]
      %v2152 = vld [vmem:[#allocation2 + $0x164] sm:$0x1]
      %v2153 = vld [vmem:[#allocation2 + $0x16c] sm:$0x1]
      %v2154 = vld [vmem:[#allocation2 + $0x174] sm:$0x1]
      %v2155 = vld [vmem:[#allocation2 + $0x17c] sm:$0x1]
      %v2156 = vld [vmem:[#allocation2 + $0x184] sm:$0x1]
      %v2157 = vld [vmem:[#allocation2 + $0x18c] sm:$0x1]
      %v2158 = vld [vmem:[#allocation2 + $0x194] sm:$0x1]
      %v2159 = vld [vmem:[#allocation2 + $0x19c] sm:$0x1]
      %v2160 = vld [vmem:[#allocation2 + $0x1a4] sm:$0x1]
      %v2161 = vld [vmem:[#allocation2 + $0x1ac] sm:$0x1]
      %v2162 = vld [vmem:[#allocation2 + $0x1b4] sm:$0x1]
      %v2163 = vld [vmem:[#allocation2 + $0x1bc] sm:$0x1]
      %v2164 = vld [vmem:[#allocation2 + $0x1c4] sm:$0x1]
      %v2165 = vld [vmem:[#allocation2 + $0x1cc] sm:$0x1]
      %v2166 = vld [vmem:[#allocation2 + $0x1d4] sm:$0x1]
      %v2167 = vld [vmem:[#allocation2 + $0x1dc] sm:$0x1]
      %v2168 = vld [vmem:[#allocation2 + $0x1e4] sm:$0x1]
      %v2169 = vld [vmem:[#allocation2 + $0x1ec] sm:$0x1]
      %v2170 = vld [vmem:[#allocation2 + $0x1f4] sm:$0x1]
      %v2171 = vld [vmem:[#allocation2 + $0x1fc] sm:$0x1]
      %v2172 = vld [vmem:[#allocation2] sm:$0xe]
      %v2173 = vld [vmem:[#allocation2 + $0x8] sm:$0xe]
      %v2174 = vld [vmem:[#allocation2 + $0x10] sm:$0xe]
      %v2175 = vld [vmem:[#allocation2 + $0x18] sm:$0xe]
      %v2176 = vld [vmem:[#allocation2 + $0x20] sm:$0xe]
      %v2177 = vld [vmem:[#allocation2 + $0x28] sm:$0xe]
      %v2178 = vld [vmem:[#allocation2 + $0x30] sm:$0xe]
      %v2179 = vld [vmem:[#allocation2 + $0x38] sm:$0xe]
      %v2180 = vld [vmem:[#allocation2 + $0x40] sm:$0xe]
      %v2181 = vld [vmem:[#allocation2 + $0x48] sm:$0xe]
      %v2182 = vld [vmem:[#allocation2 + $0x50] sm:$0xe]
      %v2183 = vld [vmem:[#allocation2 + $0x58] sm:$0xe]
      %v2184 = vld [vmem:[#allocation2 + $0x60] sm:$0xe]
      %v2185 = vld [vmem:[#allocation2 + $0x68] sm:$0xe]
      %v2186 = vld [vmem:[#allocation2 + $0x70] sm:$0xe]
      %v2187 = vld [vmem:[#allocation2 + $0x78] sm:$0xe]
      %v2188 = vld [vmem:[#allocation2 + $0x80] sm:$0xe]
      %v2189 = vld [vmem:[#allocation2 + $0x88] sm:$0xe]
      %v2190 = vld [vmem:[#allocation2 + $0x90] sm:$0xe]
      %v2191 = vld [vmem:[#allocation2 + $0x98] sm:$0xe]
      %v2192 = vld [vmem:[#allocation2 + $0xa0] sm:$0xe]
      %v2193 = vld [vmem:[#allocation2 + $0xa8] sm:$0xe]
      %v2194 = vld [vmem:[#allocation2 + $0xb0] sm:$0xe]
      %v2195 = vld [vmem:[#allocation2 + $0xb8] sm:$0xe]
      %v2196 = vld [vmem:[#allocation2 + $0xc0] sm:$0xe]
      %v2197 = vld [vmem:[#allocation2 + $0xc8] sm:$0xe]
      %v2198 = vld [vmem:[#allocation2 + $0xd0] sm:$0xe]
      %v2199 = vld [vmem:[#allocation2 + $0xd8] sm:$0xe]
      %v2200 = vld [vmem:[#allocation2 + $0xe0] sm:$0xe]
      %v2201 = vld [vmem:[#allocation2 + $0xe8] sm:$0xe]
      %v2202 = vld [vmem:[#allocation2 + $0xf0] sm:$0xe]
      %v2203 = vld [vmem:[#allocation2 + $0xf8] sm:$0xe]
      %v2204 = vld [vmem:[#allocation2 + $0x100] sm:$0xe]
      %v2205 = vld [vmem:[#allocation2 + $0x108] sm:$0xe]
      %v2206 = vld [vmem:[#allocation2 + $0x110] sm:$0xe]
      %v2207 = vld [vmem:[#allocation2 + $0x118] sm:$0xe]
      %v2208 = vld [vmem:[#allocation2 + $0x120] sm:$0xe]
      %v2209 = vld [vmem:[#allocation2 + $0x128] sm:$0xe]
      %v2210 = vld [vmem:[#allocation2 + $0x130] sm:$0xe]
      %v2211 = vld [vmem:[#allocation2 + $0x138] sm:$0xe]
      %v2212 = vld [vmem:[#allocation2 + $0x140] sm:$0xe]
      %v2213 = vld [vmem:[#allocation2 + $0x148] sm:$0xe]
      %v2214 = vld [vmem:[#allocation2 + $0x150] sm:$0xe]
      %v2215 = vld [vmem:[#allocation2 + $0x158] sm:$0xe]
      %v2216 = vld [vmem:[#allocation2 + $0x160] sm:$0xe]
      %v2217 = vld [vmem:[#allocation2 + $0x168] sm:$0xe]
      %v2218 = vld [vmem:[#allocation2 + $0x170] sm:$0xe]
      %v2219 = vld [vmem:[#allocation2 + $0x178] sm:$0xe]
      %v2220 = vld [vmem:[#allocation2 + $0x180] sm:$0xe]
      %v2221 = vld [vmem:[#allocation2 + $0x188] sm:$0xe]
      %v2222 = vld [vmem:[#allocation2 + $0x190] sm:$0xe]
      %v2223 = vld [vmem:[#allocation2 + $0x198] sm:$0xe]
      %v2224 = vld [vmem:[#allocation2 + $0x1a0] sm:$0xe]
      %v2225 = vld [vmem:[#allocation2 + $0x1a8] sm:$0xe]
      %v2226 = vld [vmem:[#allocation2 + $0x1b0] sm:$0xe]
      %v2227 = vld [vmem:[#allocation2 + $0x1b8] sm:$0xe]
      %v2228 = vld [vmem:[#allocation2 + $0x1c0] sm:$0xe]
      %v2229 = vld [vmem:[#allocation2 + $0x1c8] sm:$0xe]
      %v2230 = vld [vmem:[#allocation2 + $0x1d0] sm:$0xe]
      %v2231 = vld [vmem:[#allocation2 + $0x1d8] sm:$0xe]
      %v2232 = vld [vmem:[#allocation2 + $0x1e0] sm:$0xe]
      %v2233 = vld [vmem:[#allocation2 + $0x1e8] sm:$0xe]
      %v2234 = vld [vmem:[#allocation2 + $0x1f0] sm:$0xe]
      %v2235 = vld [vmem:[#allocation2 + $0x1f8] sm:$0xe]
      %v2364 = vunpack.c.l.b16 %v2044
      %v2365 = vunpack.c.l.b16 %v2108
      %v2366 = vunpack.c.l.b16 %v2045
      %v2367 = vunpack.c.l.b16 %v2109
      %v2368 = vunpack.c.l.b16 %v2046
      %v2369 = vunpack.c.l.b16 %v2110
      %v2370 = vunpack.c.l.b16 %v2047
      %v2371 = vunpack.c.l.b16 %v2111
      %v2372 = vunpack.c.l.b16 %v2048
      %v2373 = vunpack.c.l.b16 %v2112
      %v2374 = vunpack.c.l.b16 %v2049
      %v2375 = vunpack.c.l.b16 %v2113
      %v2376 = vunpack.c.l.b16 %v2050
      %v2377 = vunpack.c.l.b16 %v2114
      %v2378 = vunpack.c.l.b16 %v2051
      %v2379 = vunpack.c.l.b16 %v2115
      %v2380 = vunpack.c.l.b16 %v2052
      %v2381 = vunpack.c.l.b16 %v2116
      %v2382 = vunpack.c.l.b16 %v2053
      %v2383 = vunpack.c.l.b16 %v2117
      %v2384 = vunpack.c.l.b16 %v2054
      %v2385 = vunpack.c.l.b16 %v2118
      %v2386 = vunpack.c.l.b16 %v2055
      %v2387 = vunpack.c.l.b16 %v2119
      %v2388 = vunpack.c.l.b16 %v2056
      %v2389 = vunpack.c.l.b16 %v2120
      %v2390 = vunpack.c.l.b16 %v2057
      %v2391 = vunpack.c.l.b16 %v2121
      %v2392 = vunpack.c.l.b16 %v2058
      %v2393 = vunpack.c.l.b16 %v2122
      %v2394 = vunpack.c.l.b16 %v2059
      %v2395 = vunpack.c.l.b16 %v2123
      %v2396 = vunpack.c.l.b16 %v2060
      %v2397 = vunpack.c.l.b16 %v2124
      %v2398 = vunpack.c.l.b16 %v2061
      %v2399 = vunpack.c.l.b16 %v2125
      %v2400 = vunpack.c.l.b16 %v2062
      %v2401 = vunpack.c.l.b16 %v2126
      %v2402 = vunpack.c.l.b16 %v2063
      %v2403 = vunpack.c.l.b16 %v2127
      %v2404 = vunpack.c.l.b16 %v2064
      %v2405 = vunpack.c.l.b16 %v2128
      %v2406 = vunpack.c.l.b16 %v2065
      %v2407 = vunpack.c.l.b16 %v2129
      %v2408 = vunpack.c.l.b16 %v2066
      %v2409 = vunpack.c.l.b16 %v2130
      %v2410 = vunpack.c.l.b16 %v2067
      %v2411 = vunpack.c.l.b16 %v2131
      %v2412 = vunpack.c.l.b16 %v2068
      %v2413 = vunpack.c.l.b16 %v2132
      %v2414 = vunpack.c.l.b16 %v2069
      %v2415 = vunpack.c.l.b16 %v2133
      %v2416 = vunpack.c.l.b16 %v2070
      %v2417 = vunpack.c.l.b16 %v2134
      %v2418 = vunpack.c.l.b16 %v2071
      %v2419 = vunpack.c.l.b16 %v2135
      %v2420 = vunpack.c.l.b16 %v2072
      %v2421 = vunpack.c.l.b16 %v2136
      %v2422 = vunpack.c.l.b16 %v2073
      %v2423 = vunpack.c.l.b16 %v2137
      %v2424 = vunpack.c.l.b16 %v2074
      %v2425 = vunpack.c.l.b16 %v2138
      %v2426 = vunpack.c.l.b16 %v2075
      %v2427 = vunpack.c.l.b16 %v2139
      %v2428 = vunpack.c.l.b16 %v2076
      %v2429 = vunpack.c.l.b16 %v2140
      %v2430 = vunpack.c.l.b16 %v2077
      %v2431 = vunpack.c.l.b16 %v2141
      %v2432 = vunpack.c.l.b16 %v2078
      %v2433 = vunpack.c.l.b16 %v2142
      %v2434 = vunpack.c.l.b16 %v2079
      %v2435 = vunpack.c.l.b16 %v2143
      %v2436 = vunpack.c.l.b16 %v2080
      %v2437 = vunpack.c.l.b16 %v2144
      %v2438 = vunpack.c.l.b16 %v2081
      %v2439 = vunpack.c.l.b16 %v2145
      %v2440 = vunpack.c.l.b16 %v2082
      %v2441 = vunpack.c.l.b16 %v2146
      %v2442 = vunpack.c.l.b16 %v2083
      %v2443 = vunpack.c.l.b16 %v2147
      %v2444 = vunpack.c.l.b16 %v2084
      %v2445 = vunpack.c.l.b16 %v2148
      %v2446 = vunpack.c.l.b16 %v2085
      %v2447 = vunpack.c.l.b16 %v2149
      %v2448 = vunpack.c.l.b16 %v2086
      %v2449 = vunpack.c.l.b16 %v2150
      %v2450 = vunpack.c.l.b16 %v2087
      %v2451 = vunpack.c.l.b16 %v2151
      %v2452 = vunpack.c.l.b16 %v2088
      %v2453 = vunpack.c.l.b16 %v2152
      %v2454 = vunpack.c.l.b16 %v2089
      %v2455 = vunpack.c.l.b16 %v2153
      %v2456 = vunpack.c.l.b16 %v2090
      %v2457 = vunpack.c.l.b16 %v2154
      %v2458 = vunpack.c.l.b16 %v2091
      %v2459 = vunpack.c.l.b16 %v2155
      %v2460 = vunpack.c.l.b16 %v2092
      %v2461 = vunpack.c.l.b16 %v2156
      %v2462 = vunpack.c.l.b16 %v2093
      %v2463 = vunpack.c.l.b16 %v2157
      %v2464 = vunpack.c.l.b16 %v2094
      %v2465 = vunpack.c.l.b16 %v2158
      %v2466 = vunpack.c.l.b16 %v2095
      %v2467 = vunpack.c.l.b16 %v2159
      %v2468 = vunpack.c.l.b16 %v2096
      %v2469 = vunpack.c.l.b16 %v2160
      %v2470 = vunpack.c.l.b16 %v2097
      %v2471 = vunpack.c.l.b16 %v2161
      %v2472 = vunpack.c.l.b16 %v2098
      %v2473 = vunpack.c.l.b16 %v2162
      %v2474 = vunpack.c.l.b16 %v2099
      %v2475 = vunpack.c.l.b16 %v2163
      %v2476 = vunpack.c.l.b16 %v2100
      %v2477 = vunpack.c.l.b16 %v2164
      %v2478 = vunpack.c.l.b16 %v2101
      %v2479 = vunpack.c.l.b16 %v2165
      %v2480 = vunpack.c.l.b16 %v2102
      %v2481 = vunpack.c.l.b16 %v2166
      %v2482 = vunpack.c.l.b16 %v2103
      %v2483 = vunpack.c.l.b16 %v2167
      %v2484 = vunpack.c.l.b16 %v2104
      %v2485 = vunpack.c.l.b16 %v2168
      %v2486 = vunpack.c.l.b16 %v2105
      %v2487 = vunpack.c.l.b16 %v2169
      %v2488 = vunpack.c.l.b16 %v2106
      %v2489 = vunpack.c.l.b16 %v2170
      %v2490 = vunpack.c.l.b16 %v2107
      %v2491 = vunpack.c.l.b16 %v2171
      %v2492 = vpack.c.b16 %v2365, %v2364
      %v2493 = vpack.c.b16 %v2367, %v2366
      %v2494 = vpack.c.b16 %v2369, %v2368
      %v2495 = vpack.c.b16 %v2371, %v2370
      %v2496 = vpack.c.b16 %v2373, %v2372
      %v2497 = vpack.c.b16 %v2375, %v2374
      %v2498 = vpack.c.b16 %v2377, %v2376
      %v2499 = vpack.c.b16 %v2379, %v2378
      %v2500 = vpack.c.b16 %v2381, %v2380
      %v2501 = vpack.c.b16 %v2383, %v2382
      %v2502 = vpack.c.b16 %v2385, %v2384
      %v2503 = vpack.c.b16 %v2387, %v2386
      %v2504 = vpack.c.b16 %v2389, %v2388
      %v2505 = vpack.c.b16 %v2391, %v2390
      %v2506 = vpack.c.b16 %v2393, %v2392
      %v2507 = vpack.c.b16 %v2395, %v2394
      %v2508 = vpack.c.b16 %v2397, %v2396
      %v2509 = vpack.c.b16 %v2399, %v2398
      %v2510 = vpack.c.b16 %v2401, %v2400
      %v2511 = vpack.c.b16 %v2403, %v2402
      %v2512 = vpack.c.b16 %v2405, %v2404
      %v2513 = vpack.c.b16 %v2407, %v2406
      %v2514 = vpack.c.b16 %v2409, %v2408
      %v2515 = vpack.c.b16 %v2411, %v2410
      %v2516 = vpack.c.b16 %v2413, %v2412
      %v2517 = vpack.c.b16 %v2415, %v2414
      %v2518 = vpack.c.b16 %v2417, %v2416
      %v2519 = vpack.c.b16 %v2419, %v2418
      %v2520 = vpack.c.b16 %v2421, %v2420
      %v2521 = vpack.c.b16 %v2423, %v2422
      %v2522 = vpack.c.b16 %v2425, %v2424
      %v2523 = vpack.c.b16 %v2427, %v2426
      %v2524 = vpack.c.b16 %v2429, %v2428
      %v2525 = vpack.c.b16 %v2431, %v2430
      %v2526 = vpack.c.b16 %v2433, %v2432
      %v2527 = vpack.c.b16 %v2435, %v2434
      %v2528 = vpack.c.b16 %v2437, %v2436
      %v2529 = vpack.c.b16 %v2439, %v2438
      %v2530 = vpack.c.b16 %v2441, %v2440
      %v2531 = vpack.c.b16 %v2443, %v2442
      %v2532 = vpack.c.b16 %v2445, %v2444
      %v2533 = vpack.c.b16 %v2447, %v2446
      %v2534 = vpack.c.b16 %v2449, %v2448
      %v2535 = vpack.c.b16 %v2451, %v2450
      %v2536 = vpack.c.b16 %v2453, %v2452
      %v2537 = vpack.c.b16 %v2455, %v2454
      %v2538 = vpack.c.b16 %v2457, %v2456
      %v2539 = vpack.c.b16 %v2459, %v2458
      %v2540 = vpack.c.b16 %v2461, %v2460
      %v2541 = vpack.c.b16 %v2463, %v2462
      %v2542 = vpack.c.b16 %v2465, %v2464
      %v2543 = vpack.c.b16 %v2467, %v2466
      %v2544 = vpack.c.b16 %v2469, %v2468
      %v2545 = vpack.c.b16 %v2471, %v2470
      %v2546 = vpack.c.b16 %v2473, %v2472
      %v2547 = vpack.c.b16 %v2475, %v2474
      %v2548 = vpack.c.b16 %v2477, %v2476
      %v2549 = vpack.c.b16 %v2479, %v2478
      %v2550 = vpack.c.b16 %v2481, %v2480
      %v2551 = vpack.c.b16 %v2483, %v2482
      %v2552 = vpack.c.b16 %v2485, %v2484
      %v2553 = vpack.c.b16 %v2487, %v2486
      %v2554 = vpack.c.b16 %v2489, %v2488
      %v2555 = vpack.c.b16 %v2491, %v2490
      %v2557 = vshrl.u32 %v2492, 16
      %v2559 = vshll.u32 %v2492, 16
      %v2561 = vrot.slane %v2559, 1
      %v2562 = vor.u32 %v2557, %v2561
      %v2564 = vshrl.u32 %v2493, 16
      %v2566 = vshll.u32 %v2493, 16
      %v2568 = vrot.slane %v2566, 1
      %v2569 = vor.u32 %v2564, %v2568
      %v2571 = vshrl.u32 %v2494, 16
      %v2573 = vshll.u32 %v2494, 16
      %v2575 = vrot.slane %v2573, 1
      %v2576 = vor.u32 %v2571, %v2575
      %v2578 = vshrl.u32 %v2495, 16
      %v2580 = vshll.u32 %v2495, 16
      %v2582 = vrot.slane %v2580, 1
      %v2583 = vor.u32 %v2578, %v2582
      %v2585 = vshrl.u32 %v2496, 16
      %v2587 = vshll.u32 %v2496, 16
      %v2589 = vrot.slane %v2587, 1
      %v2590 = vor.u32 %v2585, %v2589
      %v2592 = vshrl.u32 %v2497, 16
      %v2594 = vshll.u32 %v2497, 16
      %v2596 = vrot.slane %v2594, 1
      %v2597 = vor.u32 %v2592, %v2596
      %v2599 = vshrl.u32 %v2498, 16
      %v2601 = vshll.u32 %v2498, 16
      %v2603 = vrot.slane %v2601, 1
      %v2604 = vor.u32 %v2599, %v2603
      %v2606 = vshrl.u32 %v2499, 16
      %v2608 = vshll.u32 %v2499, 16
      %v2610 = vrot.slane %v2608, 1
      %v2611 = vor.u32 %v2606, %v2610
      %v2613 = vshrl.u32 %v2500, 16
      %v2615 = vshll.u32 %v2500, 16
      %v2617 = vrot.slane %v2615, 1
      %v2618 = vor.u32 %v2613, %v2617
      %v2620 = vshrl.u32 %v2501, 16
      %v2622 = vshll.u32 %v2501, 16
      %v2624 = vrot.slane %v2622, 1
      %v2625 = vor.u32 %v2620, %v2624
      %v2627 = vshrl.u32 %v2502, 16
      %v2629 = vshll.u32 %v2502, 16
      %v2631 = vrot.slane %v2629, 1
      %v2632 = vor.u32 %v2627, %v2631
      %v2634 = vshrl.u32 %v2503, 16
      %v2636 = vshll.u32 %v2503, 16
      %v2638 = vrot.slane %v2636, 1
      %v2639 = vor.u32 %v2634, %v2638
      %v2641 = vshrl.u32 %v2504, 16
      %v2643 = vshll.u32 %v2504, 16
      %v2645 = vrot.slane %v2643, 1
      %v2646 = vor.u32 %v2641, %v2645
      %v2648 = vshrl.u32 %v2505, 16
      %v2650 = vshll.u32 %v2505, 16
      %v2652 = vrot.slane %v2650, 1
      %v2653 = vor.u32 %v2648, %v2652
      %v2655 = vshrl.u32 %v2506, 16
      %v2657 = vshll.u32 %v2506, 16
      %v2659 = vrot.slane %v2657, 1
      %v2660 = vor.u32 %v2655, %v2659
      %v2662 = vshrl.u32 %v2507, 16
      %v2664 = vshll.u32 %v2507, 16
      %v2666 = vrot.slane %v2664, 1
      %v2667 = vor.u32 %v2662, %v2666
      %v2669 = vshrl.u32 %v2508, 16
      %v2671 = vshll.u32 %v2508, 16
      %v2673 = vrot.slane %v2671, 1
      %v2674 = vor.u32 %v2669, %v2673
      %v2676 = vshrl.u32 %v2509, 16
      %v2678 = vshll.u32 %v2509, 16
      %v2680 = vrot.slane %v2678, 1
      %v2681 = vor.u32 %v2676, %v2680
      %v2683 = vshrl.u32 %v2510, 16
      %v2685 = vshll.u32 %v2510, 16
      %v2687 = vrot.slane %v2685, 1
      %v2688 = vor.u32 %v2683, %v2687
      %v2690 = vshrl.u32 %v2511, 16
      %v2692 = vshll.u32 %v2511, 16
      %v2694 = vrot.slane %v2692, 1
      %v2695 = vor.u32 %v2690, %v2694
      %v2697 = vshrl.u32 %v2512, 16
      %v2699 = vshll.u32 %v2512, 16
      %v2701 = vrot.slane %v2699, 1
      %v2702 = vor.u32 %v2697, %v2701
      %v2704 = vshrl.u32 %v2513, 16
      %v2706 = vshll.u32 %v2513, 16
      %v2708 = vrot.slane %v2706, 1
      %v2709 = vor.u32 %v2704, %v2708
      %v2711 = vshrl.u32 %v2514, 16
      %v2713 = vshll.u32 %v2514, 16
      %v2715 = vrot.slane %v2713, 1
      %v2716 = vor.u32 %v2711, %v2715
      %v2718 = vshrl.u32 %v2515, 16
      %v2720 = vshll.u32 %v2515, 16
      %v2722 = vrot.slane %v2720, 1
      %v2723 = vor.u32 %v2718, %v2722
      %v2725 = vshrl.u32 %v2516, 16
      %v2727 = vshll.u32 %v2516, 16
      %v2729 = vrot.slane %v2727, 1
      %v2730 = vor.u32 %v2725, %v2729
      %v2732 = vshrl.u32 %v2517, 16
      %v2734 = vshll.u32 %v2517, 16
      %v2736 = vrot.slane %v2734, 1
      %v2737 = vor.u32 %v2732, %v2736
      %v2739 = vshrl.u32 %v2518, 16
      %v2741 = vshll.u32 %v2518, 16
      %v2743 = vrot.slane %v2741, 1
      %v2744 = vor.u32 %v2739, %v2743
      %v2746 = vshrl.u32 %v2519, 16
      %v2748 = vshll.u32 %v2519, 16
      %v2750 = vrot.slane %v2748, 1
      %v2751 = vor.u32 %v2746, %v2750
      %v2753 = vshrl.u32 %v2520, 16
      %v2755 = vshll.u32 %v2520, 16
      %v2757 = vrot.slane %v2755, 1
      %v2758 = vor.u32 %v2753, %v2757
      %v2760 = vshrl.u32 %v2521, 16
      %v2762 = vshll.u32 %v2521, 16
      %v2764 = vrot.slane %v2762, 1
      %v2765 = vor.u32 %v2760, %v2764
      %v2767 = vshrl.u32 %v2522, 16
      %v2769 = vshll.u32 %v2522, 16
      %v2771 = vrot.slane %v2769, 1
      %v2772 = vor.u32 %v2767, %v2771
      %v2774 = vshrl.u32 %v2523, 16
      %v2776 = vshll.u32 %v2523, 16
      %v2778 = vrot.slane %v2776, 1
      %v2779 = vor.u32 %v2774, %v2778
      %v2781 = vshrl.u32 %v2524, 16
      %v2783 = vshll.u32 %v2524, 16
      %v2785 = vrot.slane %v2783, 1
      %v2786 = vor.u32 %v2781, %v2785
      %v2788 = vshrl.u32 %v2525, 16
      %v2790 = vshll.u32 %v2525, 16
      %v2792 = vrot.slane %v2790, 1
      %v2793 = vor.u32 %v2788, %v2792
      %v2795 = vshrl.u32 %v2526, 16
      %v2797 = vshll.u32 %v2526, 16
      %v2799 = vrot.slane %v2797, 1
      %v2800 = vor.u32 %v2795, %v2799
      %v2802 = vshrl.u32 %v2527, 16
      %v2804 = vshll.u32 %v2527, 16
      %v2806 = vrot.slane %v2804, 1
      %v2807 = vor.u32 %v2802, %v2806
      %v2809 = vshrl.u32 %v2528, 16
      %v2811 = vshll.u32 %v2528, 16
      %v2813 = vrot.slane %v2811, 1
      %v2814 = vor.u32 %v2809, %v2813
      %v2816 = vshrl.u32 %v2529, 16
      %v2818 = vshll.u32 %v2529, 16
      %v2820 = vrot.slane %v2818, 1
      %v2821 = vor.u32 %v2816, %v2820
      %v2823 = vshrl.u32 %v2530, 16
      %v2825 = vshll.u32 %v2530, 16
      %v2827 = vrot.slane %v2825, 1
      %v2828 = vor.u32 %v2823, %v2827
      %v2830 = vshrl.u32 %v2531, 16
      %v2832 = vshll.u32 %v2531, 16
      %v2834 = vrot.slane %v2832, 1
      %v2835 = vor.u32 %v2830, %v2834
      %v2837 = vshrl.u32 %v2532, 16
      %v2839 = vshll.u32 %v2532, 16
      %v2841 = vrot.slane %v2839, 1
      %v2842 = vor.u32 %v2837, %v2841
      %v2844 = vshrl.u32 %v2533, 16
      %v2846 = vshll.u32 %v2533, 16
      %v2848 = vrot.slane %v2846, 1
      %v2849 = vor.u32 %v2844, %v2848
      %v2851 = vshrl.u32 %v2534, 16
      %v2853 = vshll.u32 %v2534, 16
      %v2855 = vrot.slane %v2853, 1
      %v2856 = vor.u32 %v2851, %v2855
      %v2858 = vshrl.u32 %v2535, 16
      %v2860 = vshll.u32 %v2535, 16
      %v2862 = vrot.slane %v2860, 1
      %v2863 = vor.u32 %v2858, %v2862
      %v2865 = vshrl.u32 %v2536, 16
      %v2867 = vshll.u32 %v2536, 16
      %v2869 = vrot.slane %v2867, 1
      %v2870 = vor.u32 %v2865, %v2869
      %v2872 = vshrl.u32 %v2537, 16
      %v2874 = vshll.u32 %v2537, 16
      %v2876 = vrot.slane %v2874, 1
      %v2877 = vor.u32 %v2872, %v2876
      %v2879 = vshrl.u32 %v2538, 16
      %v2881 = vshll.u32 %v2538, 16
      %v2883 = vrot.slane %v2881, 1
      %v2884 = vor.u32 %v2879, %v2883
      %v2886 = vshrl.u32 %v2539, 16
      %v2888 = vshll.u32 %v2539, 16
      %v2890 = vrot.slane %v2888, 1
      %v2891 = vor.u32 %v2886, %v2890
      %v2893 = vshrl.u32 %v2540, 16
      %v2895 = vshll.u32 %v2540, 16
      %v2897 = vrot.slane %v2895, 1
      %v2898 = vor.u32 %v2893, %v2897
      %v2900 = vshrl.u32 %v2541, 16
      %v2902 = vshll.u32 %v2541, 16
      %v2904 = vrot.slane %v2902, 1
      %v2905 = vor.u32 %v2900, %v2904
      %v2907 = vshrl.u32 %v2542, 16
      %v2909 = vshll.u32 %v2542, 16
      %v2911 = vrot.slane %v2909, 1
      %v2912 = vor.u32 %v2907, %v2911
      %v2914 = vshrl.u32 %v2543, 16
      %v2916 = vshll.u32 %v2543, 16
      %v2918 = vrot.slane %v2916, 1
      %v2919 = vor.u32 %v2914, %v2918
      %v2921 = vshrl.u32 %v2544, 16
      %v2923 = vshll.u32 %v2544, 16
      %v2925 = vrot.slane %v2923, 1
      %v2926 = vor.u32 %v2921, %v2925
      %v2928 = vshrl.u32 %v2545, 16
      %v2930 = vshll.u32 %v2545, 16
      %v2932 = vrot.slane %v2930, 1
      %v2933 = vor.u32 %v2928, %v2932
      %v2935 = vshrl.u32 %v2546, 16
      %v2937 = vshll.u32 %v2546, 16
      %v2939 = vrot.slane %v2937, 1
      %v2940 = vor.u32 %v2935, %v2939
      %v2942 = vshrl.u32 %v2547, 16
      %v2944 = vshll.u32 %v2547, 16
      %v2946 = vrot.slane %v2944, 1
      %v2947 = vor.u32 %v2942, %v2946
      %v2949 = vshrl.u32 %v2548, 16
      %v2951 = vshll.u32 %v2548, 16
      %v2953 = vrot.slane %v2951, 1
      %v2954 = vor.u32 %v2949, %v2953
      %v2956 = vshrl.u32 %v2549, 16
      %v2958 = vshll.u32 %v2549, 16
      %v2960 = vrot.slane %v2958, 1
      %v2961 = vor.u32 %v2956, %v2960
      %v2963 = vshrl.u32 %v2550, 16
      %v2965 = vshll.u32 %v2550, 16
      %v2967 = vrot.slane %v2965, 1
      %v2968 = vor.u32 %v2963, %v2967
      %v2970 = vshrl.u32 %v2551, 16
      %v2972 = vshll.u32 %v2551, 16
      %v2974 = vrot.slane %v2972, 1
      %v2975 = vor.u32 %v2970, %v2974
      %v2977 = vshrl.u32 %v2552, 16
      %v2979 = vshll.u32 %v2552, 16
      %v2981 = vrot.slane %v2979, 1
      %v2982 = vor.u32 %v2977, %v2981
      %v2984 = vshrl.u32 %v2553, 16
      %v2986 = vshll.u32 %v2553, 16
      %v2988 = vrot.slane %v2986, 1
      %v2989 = vor.u32 %v2984, %v2988
      %v2991 = vshrl.u32 %v2554, 16
      %v2993 = vshll.u32 %v2554, 16
      %v2995 = vrot.slane %v2993, 1
      %v2996 = vor.u32 %v2991, %v2995
      %v2998 = vshrl.u32 %v2555, 16
      %v3000 = vshll.u32 %v2555, 16
      %v3002 = vrot.slane %v3000, 1
      %v3003 = vor.u32 %v2998, %v3002
      %3004 = vrot.lane.b32.xlu0 %v2562, 8
      %v3005 = vpop.permute.xlu0 %3004
      %3006 = vrot.lane.b32.xlu0 %v2569, 8
      %v3007 = vpop.permute.xlu0 %3006
      %3008 = vrot.lane.b32.xlu0 %v2576, 8
      %v3009 = vpop.permute.xlu0 %3008
      %3010 = vrot.lane.b32.xlu0 %v2583, 8
      %v3011 = vpop.permute.xlu0 %3010
      %3012 = vrot.lane.b32.xlu0 %v2590, 8
      %v3013 = vpop.permute.xlu0 %3012
      %3014 = vrot.lane.b32.xlu0 %v2597, 8
      %v3015 = vpop.permute.xlu0 %3014
      %3016 = vrot.lane.b32.xlu0 %v2604, 8
      %v3017 = vpop.permute.xlu0 %3016
      %3018 = vrot.lane.b32.xlu0 %v2611, 8
      %v3019 = vpop.permute.xlu0 %3018
      %3020 = vrot.lane.b32.xlu0 %v2618, 8
      %v3021 = vpop.permute.xlu0 %3020
      %3022 = vrot.lane.b32.xlu0 %v2625, 8
      %v3023 = vpop.permute.xlu0 %3022
      %3024 = vrot.lane.b32.xlu0 %v2632, 8
      %v3025 = vpop.permute.xlu0 %3024
      %3026 = vrot.lane.b32.xlu0 %v2639, 8
      %v3027 = vpop.permute.xlu0 %3026
      %3028 = vrot.lane.b32.xlu0 %v2646, 8
      %v3029 = vpop.permute.xlu0 %3028
      %3030 = vrot.lane.b32.xlu0 %v2653, 8
      %v3031 = vpop.permute.xlu0 %3030
      %3032 = vrot.lane.b32.xlu0 %v2660, 8
      %v3033 = vpop.permute.xlu0 %3032
      %3034 = vrot.lane.b32.xlu0 %v2667, 8
      %v3035 = vpop.permute.xlu0 %3034
      %3036 = vrot.lane.b32.xlu0 %v2674, 8
      %v3037 = vpop.permute.xlu0 %3036
      %3038 = vrot.lane.b32.xlu0 %v2681, 8
      %v3039 = vpop.permute.xlu0 %3038
      %3040 = vrot.lane.b32.xlu0 %v2688, 8
      %v3041 = vpop.permute.xlu0 %3040
      %3042 = vrot.lane.b32.xlu0 %v2695, 8
      %v3043 = vpop.permute.xlu0 %3042
      %3044 = vrot.lane.b32.xlu0 %v2702, 8
      %v3045 = vpop.permute.xlu0 %3044
      %3046 = vrot.lane.b32.xlu0 %v2709, 8
      %v3047 = vpop.permute.xlu0 %3046
      %3048 = vrot.lane.b32.xlu0 %v2716, 8
      %v3049 = vpop.permute.xlu0 %3048
      %3050 = vrot.lane.b32.xlu0 %v2723, 8
      %v3051 = vpop.permute.xlu0 %3050
      %3052 = vrot.lane.b32.xlu0 %v2730, 8
      %v3053 = vpop.permute.xlu0 %3052
      %3054 = vrot.lane.b32.xlu0 %v2737, 8
      %v3055 = vpop.permute.xlu0 %3054
      %3056 = vrot.lane.b32.xlu0 %v2744, 8
      %v3057 = vpop.permute.xlu0 %3056
      %3058 = vrot.lane.b32.xlu0 %v2751, 8
      %v3059 = vpop.permute.xlu0 %3058
      %3060 = vrot.lane.b32.xlu0 %v2758, 8
      %v3061 = vpop.permute.xlu0 %3060
      %3062 = vrot.lane.b32.xlu0 %v2765, 8
      %v3063 = vpop.permute.xlu0 %3062
      %3064 = vrot.lane.b32.xlu0 %v2772, 8
      %v3065 = vpop.permute.xlu0 %3064
      %3066 = vrot.lane.b32.xlu0 %v2779, 8
      %v3067 = vpop.permute.xlu0 %3066
      %3068 = vrot.lane.b32.xlu0 %v2786, 8
      %v3069 = vpop.permute.xlu0 %3068
      %3070 = vrot.lane.b32.xlu0 %v2793, 8
      %v3071 = vpop.permute.xlu0 %3070
      %3072 = vrot.lane.b32.xlu0 %v2800, 8
      %v3073 = vpop.permute.xlu0 %3072
      %3074 = vrot.lane.b32.xlu0 %v2807, 8
      %v3075 = vpop.permute.xlu0 %3074
      %3076 = vrot.lane.b32.xlu0 %v2814, 8
      %v3077 = vpop.permute.xlu0 %3076
      %3078 = vrot.lane.b32.xlu0 %v2821, 8
      %v3079 = vpop.permute.xlu0 %3078
      %3080 = vrot.lane.b32.xlu0 %v2828, 8
      %v3081 = vpop.permute.xlu0 %3080
      %3082 = vrot.lane.b32.xlu0 %v2835, 8
      %v3083 = vpop.permute.xlu0 %3082
      %3084 = vrot.lane.b32.xlu0 %v2842, 8
      %v3085 = vpop.permute.xlu0 %3084
      %3086 = vrot.lane.b32.xlu0 %v2849, 8
      %v3087 = vpop.permute.xlu0 %3086
      %3088 = vrot.lane.b32.xlu0 %v2856, 8
      %v3089 = vpop.permute.xlu0 %3088
      %3090 = vrot.lane.b32.xlu0 %v2863, 8
      %v3091 = vpop.permute.xlu0 %3090
      %3092 = vrot.lane.b32.xlu0 %v2870, 8
      %v3093 = vpop.permute.xlu0 %3092
      %3094 = vrot.lane.b32.xlu0 %v2877, 8
      %v3095 = vpop.permute.xlu0 %3094
      %3096 = vrot.lane.b32.xlu0 %v2884, 8
      %v3097 = vpop.permute.xlu0 %3096
      %3098 = vrot.lane.b32.xlu0 %v2891, 8
      %v3099 = vpop.permute.xlu0 %3098
      %3100 = vrot.lane.b32.xlu0 %v2898, 8
      %v3101 = vpop.permute.xlu0 %3100
      %3102 = vrot.lane.b32.xlu0 %v2905, 8
      %v3103 = vpop.permute.xlu0 %3102
      %3104 = vrot.lane.b32.xlu0 %v2912, 8
      %v3105 = vpop.permute.xlu0 %3104
      %3106 = vrot.lane.b32.xlu0 %v2919, 8
      %v3107 = vpop.permute.xlu0 %3106
      %3108 = vrot.lane.b32.xlu0 %v2926, 8
      %v3109 = vpop.permute.xlu0 %3108
      %3110 = vrot.lane.b32.xlu0 %v2933, 8
      %v3111 = vpop.permute.xlu0 %3110
      %3112 = vrot.lane.b32.xlu0 %v2940, 8
      %v3113 = vpop.permute.xlu0 %3112
      %3114 = vrot.lane.b32.xlu0 %v2947, 8
      %v3115 = vpop.permute.xlu0 %3114
      %3116 = vrot.lane.b32.xlu0 %v2954, 8
      %v3117 = vpop.permute.xlu0 %3116
      %3118 = vrot.lane.b32.xlu0 %v2961, 8
      %v3119 = vpop.permute.xlu0 %3118
      %3120 = vrot.lane.b32.xlu0 %v2968, 8
      %v3121 = vpop.permute.xlu0 %3120
      %3122 = vrot.lane.b32.xlu0 %v2975, 8
      %v3123 = vpop.permute.xlu0 %3122
      %3124 = vrot.lane.b32.xlu0 %v2982, 8
      %v3125 = vpop.permute.xlu0 %3124
      %3126 = vrot.lane.b32.xlu0 %v2989, 8
      %v3127 = vpop.permute.xlu0 %3126
      %3128 = vrot.lane.b32.xlu0 %v2996, 8
      %v3129 = vpop.permute.xlu0 %3128
      %3130 = vrot.lane.b32.xlu0 %v3003, 8
      %v3131 = vpop.permute.xlu0 %3130
      %v3196 = vunpack.c.l.b16 %v2172
      %v3197 = vunpack.c.l.b16 %v2173
      %v3198 = vunpack.c.l.b16 %v2174
      %v3199 = vunpack.c.l.b16 %v2175
      %v3200 = vunpack.c.l.b16 %v2176
      %v3201 = vunpack.c.l.b16 %v2177
      %v3202 = vunpack.c.l.b16 %v2178
      %v3203 = vunpack.c.l.b16 %v2179
      %v3204 = vunpack.c.l.b16 %v2180
      %v3205 = vunpack.c.l.b16 %v2181
      %v3206 = vunpack.c.l.b16 %v2182
      %v3207 = vunpack.c.l.b16 %v2183
      %v3208 = vunpack.c.l.b16 %v2184
      %v3209 = vunpack.c.l.b16 %v2185
      %v3210 = vunpack.c.l.b16 %v2186
      %v3211 = vunpack.c.l.b16 %v2187
      %v3212 = vunpack.c.l.b16 %v2188
      %v3213 = vunpack.c.l.b16 %v2189
      %v3214 = vunpack.c.l.b16 %v2190
      %v3215 = vunpack.c.l.b16 %v2191
      %v3216 = vunpack.c.l.b16 %v2192
      %v3217 = vunpack.c.l.b16 %v2193
      %v3218 = vunpack.c.l.b16 %v2194
      %v3219 = vunpack.c.l.b16 %v2195
      %v3220 = vunpack.c.l.b16 %v2196
      %v3221 = vunpack.c.l.b16 %v2197
      %v3222 = vunpack.c.l.b16 %v2198
      %v3223 = vunpack.c.l.b16 %v2199
      %v3224 = vunpack.c.l.b16 %v2200
      %v3225 = vunpack.c.l.b16 %v2201
      %v3226 = vunpack.c.l.b16 %v2202
      %v3227 = vunpack.c.l.b16 %v2203
      %v3228 = vunpack.c.l.b16 %v2204
      %v3229 = vunpack.c.l.b16 %v2205
      %v3230 = vunpack.c.l.b16 %v2206
      %v3231 = vunpack.c.l.b16 %v2207
      %v3232 = vunpack.c.l.b16 %v2208
      %v3233 = vunpack.c.l.b16 %v2209
      %v3234 = vunpack.c.l.b16 %v2210
      %v3235 = vunpack.c.l.b16 %v2211
      %v3236 = vunpack.c.l.b16 %v2212
      %v3237 = vunpack.c.l.b16 %v2213
      %v3238 = vunpack.c.l.b16 %v2214
      %v3239 = vunpack.c.l.b16 %v2215
      %v3240 = vunpack.c.l.b16 %v2216
      %v3241 = vunpack.c.l.b16 %v2217
      %v3242 = vunpack.c.l.b16 %v2218
      %v3243 = vunpack.c.l.b16 %v2219
      %v3244 = vunpack.c.l.b16 %v2220
      %v3245 = vunpack.c.l.b16 %v2221
      %v3246 = vunpack.c.l.b16 %v2222
      %v3247 = vunpack.c.l.b16 %v2223
      %v3248 = vunpack.c.l.b16 %v2224
      %v3249 = vunpack.c.l.b16 %v2225
      %v3250 = vunpack.c.l.b16 %v2226
      %v3251 = vunpack.c.l.b16 %v2227
      %v3252 = vunpack.c.l.b16 %v2228
      %v3253 = vunpack.c.l.b16 %v2229
      %v3254 = vunpack.c.l.b16 %v2230
      %v3255 = vunpack.c.l.b16 %v2231
      %v3256 = vunpack.c.l.b16 %v2232
      %v3257 = vunpack.c.l.b16 %v2233
      %v3258 = vunpack.c.l.b16 %v2234
      %v3259 = vunpack.c.l.b16 %v2235
      %v3260 = vpack.c.b16 %v2365, %v3196
      %v3261 = vpack.c.b16 %v2367, %v3197
      %v3262 = vpack.c.b16 %v2369, %v3198
      %v3263 = vpack.c.b16 %v2371, %v3199
      %v3264 = vpack.c.b16 %v2373, %v3200
      %v3265 = vpack.c.b16 %v2375, %v3201
      %v3266 = vpack.c.b16 %v2377, %v3202
      %v3267 = vpack.c.b16 %v2379, %v3203
      %v3268 = vpack.c.b16 %v2381, %v3204
      %v3269 = vpack.c.b16 %v2383, %v3205
      %v3270 = vpack.c.b16 %v2385, %v3206
      %v3271 = vpack.c.b16 %v2387, %v3207
      %v3272 = vpack.c.b16 %v2389, %v3208
      %v3273 = vpack.c.b16 %v2391, %v3209
      %v3274 = vpack.c.b16 %v2393, %v3210
      %v3275 = vpack.c.b16 %v2395, %v3211
      %v3276 = vpack.c.b16 %v2397, %v3212
      %v3277 = vpack.c.b16 %v2399, %v3213
      %v3278 = vpack.c.b16 %v2401, %v3214
      %v3279 = vpack.c.b16 %v2403, %v3215
      %v3280 = vpack.c.b16 %v2405, %v3216
      %v3281 = vpack.c.b16 %v2407, %v3217
      %v3282 = vpack.c.b16 %v2409, %v3218
      %v3283 = vpack.c.b16 %v2411, %v3219
      %v3284 = vpack.c.b16 %v2413, %v3220
      %v3285 = vpack.c.b16 %v2415, %v3221
      %v3286 = vpack.c.b16 %v2417, %v3222
      %v3287 = vpack.c.b16 %v2419, %v3223
      %v3288 = vpack.c.b16 %v2421, %v3224
      %v3289 = vpack.c.b16 %v2423, %v3225
      %v3290 = vpack.c.b16 %v2425, %v3226
      %v3291 = vpack.c.b16 %v2427, %v3227
      %v3292 = vpack.c.b16 %v2429, %v3228
      %v3293 = vpack.c.b16 %v2431, %v3229
      %v3294 = vpack.c.b16 %v2433, %v3230
      %v3295 = vpack.c.b16 %v2435, %v3231
      %v3296 = vpack.c.b16 %v2437, %v3232
      %v3297 = vpack.c.b16 %v2439, %v3233
      %v3298 = vpack.c.b16 %v2441, %v3234
      %v3299 = vpack.c.b16 %v2443, %v3235
      %v3300 = vpack.c.b16 %v2445, %v3236
      %v3301 = vpack.c.b16 %v2447, %v3237
      %v3302 = vpack.c.b16 %v2449, %v3238
      %v3303 = vpack.c.b16 %v2451, %v3239
      %v3304 = vpack.c.b16 %v2453, %v3240
      %v3305 = vpack.c.b16 %v2455, %v3241
      %v3306 = vpack.c.b16 %v2457, %v3242
      %v3307 = vpack.c.b16 %v2459, %v3243
      %v3308 = vpack.c.b16 %v2461, %v3244
      %v3309 = vpack.c.b16 %v2463, %v3245
      %v3310 = vpack.c.b16 %v2465, %v3246
      %v3311 = vpack.c.b16 %v2467, %v3247
      %v3312 = vpack.c.b16 %v2469, %v3248
      %v3313 = vpack.c.b16 %v2471, %v3249
      %v3314 = vpack.c.b16 %v2473, %v3250
      %v3315 = vpack.c.b16 %v2475, %v3251
      %v3316 = vpack.c.b16 %v2477, %v3252
      %v3317 = vpack.c.b16 %v2479, %v3253
      %v3318 = vpack.c.b16 %v2481, %v3254
      %v3319 = vpack.c.b16 %v2483, %v3255
      %v3320 = vpack.c.b16 %v2485, %v3256
      %v3321 = vpack.c.b16 %v2487, %v3257
      %v3322 = vpack.c.b16 %v2489, %v3258
      %v3323 = vpack.c.b16 %v2491, %v3259
      %v3324 = vrot.slane %v3260, 1
      %v3325 = vrot.slane %v3261, 1
      %v3326 = vrot.slane %v3262, 1
      %v3327 = vrot.slane %v3263, 1
      %v3328 = vrot.slane %v3264, 1
      %v3329 = vrot.slane %v3265, 1
      %v3330 = vrot.slane %v3266, 1
      %v3331 = vrot.slane %v3267, 1
      %v3332 = vrot.slane %v3268, 1
      %v3333 = vrot.slane %v3269, 1
      %v3334 = vrot.slane %v3270, 1
      %v3335 = vrot.slane %v3271, 1
      %v3336 = vrot.slane %v3272, 1
      %v3337 = vrot.slane %v3273, 1
      %v3338 = vrot.slane %v3274, 1
      %v3339 = vrot.slane %v3275, 1
      %v3340 = vrot.slane %v3276, 1
      %v3341 = vrot.slane %v3277, 1
      %v3342 = vrot.slane %v3278, 1
      %v3343 = vrot.slane %v3279, 1
      %v3344 = vrot.slane %v3280, 1
      %v3345 = vrot.slane %v3281, 1
      %v3346 = vrot.slane %v3282, 1
      %v3347 = vrot.slane %v3283, 1
      %v3348 = vrot.slane %v3284, 1
      %v3349 = vrot.slane %v3285, 1
      %v3350 = vrot.slane %v3286, 1
      %v3351 = vrot.slane %v3287, 1
      %v3352 = vrot.slane %v3288, 1
      %v3353 = vrot.slane %v3289, 1
      %v3354 = vrot.slane %v3290, 1
      %v3355 = vrot.slane %v3291, 1
      %v3356 = vrot.slane %v3292, 1
      %v3357 = vrot.slane %v3293, 1
      %v3358 = vrot.slane %v3294, 1
      %v3359 = vrot.slane %v3295, 1
      %v3360 = vrot.slane %v3296, 1
      %v3361 = vrot.slane %v3297, 1
      %v3362 = vrot.slane %v3298, 1
      %v3363 = vrot.slane %v3299, 1
      %v3364 = vrot.slane %v3300, 1
      %v3365 = vrot.slane %v3301, 1
      %v3366 = vrot.slane %v3302, 1
      %v3367 = vrot.slane %v3303, 1
      %v3368 = vrot.slane %v3304, 1
      %v3369 = vrot.slane %v3305, 1
      %v3370 = vrot.slane %v3306, 1
      %v3371 = vrot.slane %v3307, 1
      %v3372 = vrot.slane %v3308, 1
      %v3373 = vrot.slane %v3309, 1
      %v3374 = vrot.slane %v3310, 1
      %v3375 = vrot.slane %v3311, 1
      %v3376 = vrot.slane %v3312, 1
      %v3377 = vrot.slane %v3313, 1
      %v3378 = vrot.slane %v3314, 1
      %v3379 = vrot.slane %v3315, 1
      %v3380 = vrot.slane %v3316, 1
      %v3381 = vrot.slane %v3317, 1
      %v3382 = vrot.slane %v3318, 1
      %v3383 = vrot.slane %v3319, 1
      %v3384 = vrot.slane %v3320, 1
      %v3385 = vrot.slane %v3321, 1
      %v3386 = vrot.slane %v3322, 1
      %v3387 = vrot.slane %v3323, 1
      %3388 = vrot.lane.b32.xlu0 %v3324, 16
      %v3389 = vpop.permute.xlu0 %3388
      %3390 = vrot.lane.b32.xlu0 %v3325, 16
      %v3391 = vpop.permute.xlu0 %3390
      %3392 = vrot.lane.b32.xlu0 %v3326, 16
      %v3393 = vpop.permute.xlu0 %3392
      %3394 = vrot.lane.b32.xlu0 %v3327, 16
      %v3395 = vpop.permute.xlu0 %3394
      %3396 = vrot.lane.b32.xlu0 %v3328, 16
      %v3397 = vpop.permute.xlu0 %3396
      %3398 = vrot.lane.b32.xlu0 %v3329, 16
      %v3399 = vpop.permute.xlu0 %3398
      %3400 = vrot.lane.b32.xlu0 %v3330, 16
      %v3401 = vpop.permute.xlu0 %3400
      %3402 = vrot.lane.b32.xlu0 %v3331, 16
      %v3403 = vpop.permute.xlu0 %3402
      %3404 = vrot.lane.b32.xlu0 %v3332, 16
      %v3405 = vpop.permute.xlu0 %3404
      %3406 = vrot.lane.b32.xlu0 %v3333, 16
      %v3407 = vpop.permute.xlu0 %3406
      %3408 = vrot.lane.b32.xlu0 %v3334, 16
      %v3409 = vpop.permute.xlu0 %3408
      %3410 = vrot.lane.b32.xlu0 %v3335, 16
      %v3411 = vpop.permute.xlu0 %3410
      %3412 = vrot.lane.b32.xlu0 %v3336, 16
      %v3413 = vpop.permute.xlu0 %3412
      %3414 = vrot.lane.b32.xlu0 %v3337, 16
      %v3415 = vpop.permute.xlu0 %3414
      %3416 = vrot.lane.b32.xlu0 %v3338, 16
      %v3417 = vpop.permute.xlu0 %3416
      %3418 = vrot.lane.b32.xlu0 %v3339, 16
      %v3419 = vpop.permute.xlu0 %3418
      %3420 = vrot.lane.b32.xlu0 %v3340, 16
      %v3421 = vpop.permute.xlu0 %3420
      %3422 = vrot.lane.b32.xlu0 %v3341, 16
      %v3423 = vpop.permute.xlu0 %3422
      %3424 = vrot.lane.b32.xlu0 %v3342, 16
      %v3425 = vpop.permute.xlu0 %3424
      %3426 = vrot.lane.b32.xlu0 %v3343, 16
      %v3427 = vpop.permute.xlu0 %3426
      %3428 = vrot.lane.b32.xlu0 %v3344, 16
      %v3429 = vpop.permute.xlu0 %3428
      %3430 = vrot.lane.b32.xlu0 %v3345, 16
      %v3431 = vpop.permute.xlu0 %3430
      %3432 = vrot.lane.b32.xlu0 %v3346, 16
      %v3433 = vpop.permute.xlu0 %3432
      %3434 = vrot.lane.b32.xlu0 %v3347, 16
      %v3435 = vpop.permute.xlu0 %3434
      %3436 = vrot.lane.b32.xlu0 %v3348, 16
      %v3437 = vpop.permute.xlu0 %3436
      %3438 = vrot.lane.b32.xlu0 %v3349, 16
      %v3439 = vpop.permute.xlu0 %3438
      %3440 = vrot.lane.b32.xlu0 %v3350, 16
      %v3441 = vpop.permute.xlu0 %3440
      %3442 = vrot.lane.b32.xlu0 %v3351, 16
      %v3443 = vpop.permute.xlu0 %3442
      %3444 = vrot.lane.b32.xlu0 %v3352, 16
      %v3445 = vpop.permute.xlu0 %3444
      %3446 = vrot.lane.b32.xlu0 %v3353, 16
      %v3447 = vpop.permute.xlu0 %3446
      %3448 = vrot.lane.b32.xlu0 %v3354, 16
      %v3449 = vpop.permute.xlu0 %3448
      %3450 = vrot.lane.b32.xlu0 %v3355, 16
      %v3451 = vpop.permute.xlu0 %3450
      %3452 = vrot.lane.b32.xlu0 %v3356, 16
      %v3453 = vpop.permute.xlu0 %3452
      %3454 = vrot.lane.b32.xlu0 %v3357, 16
      %v3455 = vpop.permute.xlu0 %3454
      %3456 = vrot.lane.b32.xlu0 %v3358, 16
      %v3457 = vpop.permute.xlu0 %3456
      %3458 = vrot.lane.b32.xlu0 %v3359, 16
      %v3459 = vpop.permute.xlu0 %3458
      %3460 = vrot.lane.b32.xlu0 %v3360, 16
      %v3461 = vpop.permute.xlu0 %3460
      %3462 = vrot.lane.b32.xlu0 %v3361, 16
      %v3463 = vpop.permute.xlu0 %3462
      %3464 = vrot.lane.b32.xlu0 %v3362, 16
      %v3465 = vpop.permute.xlu0 %3464
      %3466 = vrot.lane.b32.xlu0 %v3363, 16
      %v3467 = vpop.permute.xlu0 %3466
      %3468 = vrot.lane.b32.xlu0 %v3364, 16
      %v3469 = vpop.permute.xlu0 %3468
      %3470 = vrot.lane.b32.xlu0 %v3365, 16
      %v3471 = vpop.permute.xlu0 %3470
      %3472 = vrot.lane.b32.xlu0 %v3366, 16
      %v3473 = vpop.permute.xlu0 %3472
      %3474 = vrot.lane.b32.xlu0 %v3367, 16
      %v3475 = vpop.permute.xlu0 %3474
      %3476 = vrot.lane.b32.xlu0 %v3368, 16
      %v3477 = vpop.permute.xlu0 %3476
      %3478 = vrot.lane.b32.xlu0 %v3369, 16
      %v3479 = vpop.permute.xlu0 %3478
      %3480 = vrot.lane.b32.xlu0 %v3370, 16
      %v3481 = vpop.permute.xlu0 %3480
      %3482 = vrot.lane.b32.xlu0 %v3371, 16
      %v3483 = vpop.permute.xlu0 %3482
      %3484 = vrot.lane.b32.xlu0 %v3372, 16
      %v3485 = vpop.permute.xlu0 %3484
      %3486 = vrot.lane.b32.xlu0 %v3373, 16
      %v3487 = vpop.permute.xlu0 %3486
      %3488 = vrot.lane.b32.xlu0 %v3374, 16
      %v3489 = vpop.permute.xlu0 %3488
      %3490 = vrot.lane.b32.xlu0 %v3375, 16
      %v3491 = vpop.permute.xlu0 %3490
      %3492 = vrot.lane.b32.xlu0 %v3376, 16
      %v3493 = vpop.permute.xlu0 %3492
      %3494 = vrot.lane.b32.xlu0 %v3377, 16
      %v3495 = vpop.permute.xlu0 %3494
      %3496 = vrot.lane.b32.xlu0 %v3378, 16
      %v3497 = vpop.permute.xlu0 %3496
      %3498 = vrot.lane.b32.xlu0 %v3379, 16
      %v3499 = vpop.permute.xlu0 %3498
      %3500 = vrot.lane.b32.xlu0 %v3380, 16
      %v3501 = vpop.permute.xlu0 %3500
      %3502 = vrot.lane.b32.xlu0 %v3381, 16
      %v3503 = vpop.permute.xlu0 %3502
      %3504 = vrot.lane.b32.xlu0 %v3382, 16
      %v3505 = vpop.permute.xlu0 %3504
      %3506 = vrot.lane.b32.xlu0 %v3383, 16
      %v3507 = vpop.permute.xlu0 %3506
      %3508 = vrot.lane.b32.xlu0 %v3384, 16
      %v3509 = vpop.permute.xlu0 %3508
      %3510 = vrot.lane.b32.xlu0 %v3385, 16
      %v3511 = vpop.permute.xlu0 %3510
      %3512 = vrot.lane.b32.xlu0 %v3386, 16
      %v3513 = vpop.permute.xlu0 %3512
      %3514 = vrot.lane.b32.xlu0 %v3387, 16
      %v3515 = vpop.permute.xlu0 %3514
      %vm3516 = vcmask 64512
      %v3519 = vsel %vm3516, %v2044, %v3005
      %v3522 = vsel %vm3516, %v2045, %v3007
      %v3525 = vsel %vm3516, %v2046, %v3009
      %v3528 = vsel %vm3516, %v2047, %v3011
      %v3531 = vsel %vm3516, %v2048, %v3013
      %v3534 = vsel %vm3516, %v2049, %v3015
      %v3537 = vsel %vm3516, %v2050, %v3017
      %v3540 = vsel %vm3516, %v2051, %v3019
      %v3543 = vsel %vm3516, %v2052, %v3021
      %v3546 = vsel %vm3516, %v2053, %v3023
      %v3549 = vsel %vm3516, %v2054, %v3025
      %v3552 = vsel %vm3516, %v2055, %v3027
      %v3555 = vsel %vm3516, %v2056, %v3029
      %v3558 = vsel %vm3516, %v2057, %v3031
      %v3561 = vsel %vm3516, %v2058, %v3033
      %v3564 = vsel %vm3516, %v2059, %v3035
      %v3567 = vsel %vm3516, %v2060, %v3037
      %v3570 = vsel %vm3516, %v2061, %v3039
      %v3573 = vsel %vm3516, %v2062, %v3041
      %v3576 = vsel %vm3516, %v2063, %v3043
      %v3579 = vsel %vm3516, %v2064, %v3045
      %v3582 = vsel %vm3516, %v2065, %v3047
      %v3585 = vsel %vm3516, %v2066, %v3049
      %v3588 = vsel %vm3516, %v2067, %v3051
      %v3591 = vsel %vm3516, %v2068, %v3053
      %v3594 = vsel %vm3516, %v2069, %v3055
      %v3597 = vsel %vm3516, %v2070, %v3057
      %v3600 = vsel %vm3516, %v2071, %v3059
      %v3603 = vsel %vm3516, %v2072, %v3061
      %v3606 = vsel %vm3516, %v2073, %v3063
      %v3609 = vsel %vm3516, %v2074, %v3065
      %v3612 = vsel %vm3516, %v2075, %v3067
      %v3615 = vsel %vm3516, %v2076, %v3069
      %v3618 = vsel %vm3516, %v2077, %v3071
      %v3621 = vsel %vm3516, %v2078, %v3073
      %v3624 = vsel %vm3516, %v2079, %v3075
      %v3627 = vsel %vm3516, %v2080, %v3077
      %v3630 = vsel %vm3516, %v2081, %v3079
      %v3633 = vsel %vm3516, %v2082, %v3081
      %v3636 = vsel %vm3516, %v2083, %v3083
      %v3639 = vsel %vm3516, %v2084, %v3085
      %v3642 = vsel %vm3516, %v2085, %v3087
      %v3645 = vsel %vm3516, %v2086, %v3089
      %v3648 = vsel %vm3516, %v2087, %v3091
      %v3651 = vsel %vm3516, %v2088, %v3093
      %v3654 = vsel %vm3516, %v2089, %v3095
      %v3657 = vsel %vm3516, %v2090, %v3097
      %v3660 = vsel %vm3516, %v2091, %v3099
      %v3663 = vsel %vm3516, %v2092, %v3101
      %v3666 = vsel %vm3516, %v2093, %v3103
      %v3669 = vsel %vm3516, %v2094, %v3105
      %v3672 = vsel %vm3516, %v2095, %v3107
      %v3675 = vsel %vm3516, %v2096, %v3109
      %v3678 = vsel %vm3516, %v2097, %v3111
      %v3681 = vsel %vm3516, %v2098, %v3113
      %v3684 = vsel %vm3516, %v2099, %v3115
      %v3687 = vsel %vm3516, %v2100, %v3117
      %v3690 = vsel %vm3516, %v2101, %v3119
      %v3693 = vsel %vm3516, %v2102, %v3121
      %v3696 = vsel %vm3516, %v2103, %v3123
      %v3699 = vsel %vm3516, %v2104, %v3125
      %v3702 = vsel %vm3516, %v2105, %v3127
      %v3705 = vsel %vm3516, %v2106, %v3129
      %v3708 = vsel %vm3516, %v2107, %v3131
      %vm3709 = vcmask 130048
      %v3711 = vsel %vm3709, %v3519, %v3389
      %v3713 = vsel %vm3709, %v3522, %v3391
      %v3715 = vsel %vm3709, %v3525, %v3393
      %v3717 = vsel %vm3709, %v3528, %v3395
      %v3719 = vsel %vm3709, %v3531, %v3397
      %v3721 = vsel %vm3709, %v3534, %v3399
      %v3723 = vsel %vm3709, %v3537, %v3401
      %v3725 = vsel %vm3709, %v3540, %v3403
      %v3727 = vsel %vm3709, %v3543, %v3405
      %v3729 = vsel %vm3709, %v3546, %v3407
      %v3731 = vsel %vm3709, %v3549, %v3409
      %v3733 = vsel %vm3709, %v3552, %v3411
      %v3735 = vsel %vm3709, %v3555, %v3413
      %v3737 = vsel %vm3709, %v3558, %v3415
      %v3739 = vsel %vm3709, %v3561, %v3417
      %v3741 = vsel %vm3709, %v3564, %v3419
      %v3743 = vsel %vm3709, %v3567, %v3421
      %v3745 = vsel %vm3709, %v3570, %v3423
      %v3747 = vsel %vm3709, %v3573, %v3425
      %v3749 = vsel %vm3709, %v3576, %v3427
      %v3751 = vsel %vm3709, %v3579, %v3429
      %v3753 = vsel %vm3709, %v3582, %v3431
      %v3755 = vsel %vm3709, %v3585, %v3433
      %v3757 = vsel %vm3709, %v3588, %v3435
      %v3759 = vsel %vm3709, %v3591, %v3437
      %v3761 = vsel %vm3709, %v3594, %v3439
      %v3763 = vsel %vm3709, %v3597, %v3441
      %v3765 = vsel %vm3709, %v3600, %v3443
      %v3767 = vsel %vm3709, %v3603, %v3445
      %v3769 = vsel %vm3709, %v3606, %v3447
      %v3771 = vsel %vm3709, %v3609, %v3449
      %v3773 = vsel %vm3709, %v3612, %v3451
      %v3775 = vsel %vm3709, %v3615, %v3453
      %v3777 = vsel %vm3709, %v3618, %v3455
      %v3779 = vsel %vm3709, %v3621, %v3457
      %v3781 = vsel %vm3709, %v3624, %v3459
      %v3783 = vsel %vm3709, %v3627, %v3461
      %v3785 = vsel %vm3709, %v3630, %v3463
      %v3787 = vsel %vm3709, %v3633, %v3465
      %v3789 = vsel %vm3709, %v3636, %v3467
      %v3791 = vsel %vm3709, %v3639, %v3469
      %v3793 = vsel %vm3709, %v3642, %v3471
      %v3795 = vsel %vm3709, %v3645, %v3473
      %v3797 = vsel %vm3709, %v3648, %v3475
      %v3799 = vsel %vm3709, %v3651, %v3477
      %v3801 = vsel %vm3709, %v3654, %v3479
      %v3803 = vsel %vm3709, %v3657, %v3481
      %v3805 = vsel %vm3709, %v3660, %v3483
      %v3807 = vsel %vm3709, %v3663, %v3485
      %v3809 = vsel %vm3709, %v3666, %v3487
      %v3811 = vsel %vm3709, %v3669, %v3489
      %v3813 = vsel %vm3709, %v3672, %v3491
      %v3815 = vsel %vm3709, %v3675, %v3493
      %v3817 = vsel %vm3709, %v3678, %v3495
      %v3819 = vsel %vm3709, %v3681, %v3497
      %v3821 = vsel %vm3709, %v3684, %v3499
      %v3823 = vsel %vm3709, %v3687, %v3501
      %v3825 = vsel %vm3709, %v3690, %v3503
      %v3827 = vsel %vm3709, %v3693, %v3505
      %v3829 = vsel %vm3709, %v3696, %v3507
      %v3831 = vsel %vm3709, %v3699, %v3509
      %v3833 = vsel %vm3709, %v3702, %v3511
      %v3835 = vsel %vm3709, %v3705, %v3513
      %v3837 = vsel %vm3709, %v3708, %v3515
      %3902 = vrot.lane.b32.xlu0 %v3711, 24
      %v3903 = vpop.permute.xlu0 %3902
      %3904 = vrot.lane.b32.xlu0 %v3713, 24
      %v3905 = vpop.permute.xlu0 %3904
      %3906 = vrot.lane.b32.xlu0 %v3715, 24
      %v3907 = vpop.permute.xlu0 %3906
      %3908 = vrot.lane.b32.xlu0 %v3717, 24
      %v3909 = vpop.permute.xlu0 %3908
      %3910 = vrot.lane.b32.xlu0 %v3719, 24
      %v3911 = vpop.permute.xlu0 %3910
      %3912 = vrot.lane.b32.xlu0 %v3721, 24
      %v3913 = vpop.permute.xlu0 %3912
      %3914 = vrot.lane.b32.xlu0 %v3723, 24
      %v3915 = vpop.permute.xlu0 %3914
      %3916 = vrot.lane.b32.xlu0 %v3725, 24
      %v3917 = vpop.permute.xlu0 %3916
      %3918 = vrot.lane.b32.xlu0 %v3727, 24
      %v3919 = vpop.permute.xlu0 %3918
      %3920 = vrot.lane.b32.xlu0 %v3729, 24
      %v3921 = vpop.permute.xlu0 %3920
      %3922 = vrot.lane.b32.xlu0 %v3731, 24
      %v3923 = vpop.permute.xlu0 %3922
      %3924 = vrot.lane.b32.xlu0 %v3733, 24
      %v3925 = vpop.permute.xlu0 %3924
      %3926 = vrot.lane.b32.xlu0 %v3735, 24
      %v3927 = vpop.permute.xlu0 %3926
      %3928 = vrot.lane.b32.xlu0 %v3737, 24
      %v3929 = vpop.permute.xlu0 %3928
      %3930 = vrot.lane.b32.xlu0 %v3739, 24
      %v3931 = vpop.permute.xlu0 %3930
      %3932 = vrot.lane.b32.xlu0 %v3741, 24
      %v3933 = vpop.permute.xlu0 %3932
      %3934 = vrot.lane.b32.xlu0 %v3743, 24
      %v3935 = vpop.permute.xlu0 %3934
      %3936 = vrot.lane.b32.xlu0 %v3745, 24
      %v3937 = vpop.permute.xlu0 %3936
      %3938 = vrot.lane.b32.xlu0 %v3747, 24
      %v3939 = vpop.permute.xlu0 %3938
      %3940 = vrot.lane.b32.xlu0 %v3749, 24
      %v3941 = vpop.permute.xlu0 %3940
      %3942 = vrot.lane.b32.xlu0 %v3751, 24
      %v3943 = vpop.permute.xlu0 %3942
      %3944 = vrot.lane.b32.xlu0 %v3753, 24
      %v3945 = vpop.permute.xlu0 %3944
      %3946 = vrot.lane.b32.xlu0 %v3755, 24
      %v3947 = vpop.permute.xlu0 %3946
      %3948 = vrot.lane.b32.xlu0 %v3757, 24
      %v3949 = vpop.permute.xlu0 %3948
      %3950 = vrot.lane.b32.xlu0 %v3759, 24
      %v3951 = vpop.permute.xlu0 %3950
      %3952 = vrot.lane.b32.xlu0 %v3761, 24
      %v3953 = vpop.permute.xlu0 %3952
      %3954 = vrot.lane.b32.xlu0 %v3763, 24
      %v3955 = vpop.permute.xlu0 %3954
      %3956 = vrot.lane.b32.xlu0 %v3765, 24
      %v3957 = vpop.permute.xlu0 %3956
      %3958 = vrot.lane.b32.xlu0 %v3767, 24
      %v3959 = vpop.permute.xlu0 %3958
      %3960 = vrot.lane.b32.xlu0 %v3769, 24
      %v3961 = vpop.permute.xlu0 %3960
      %3962 = vrot.lane.b32.xlu0 %v3771, 24
      %v3963 = vpop.permute.xlu0 %3962
      %3964 = vrot.lane.b32.xlu0 %v3773, 24
      %v3965 = vpop.permute.xlu0 %3964
      %3966 = vrot.lane.b32.xlu0 %v3775, 24
      %v3967 = vpop.permute.xlu0 %3966
      %3968 = vrot.lane.b32.xlu0 %v3777, 24
      %v3969 = vpop.permute.xlu0 %3968
      %3970 = vrot.lane.b32.xlu0 %v3779, 24
      %v3971 = vpop.permute.xlu0 %3970
      %3972 = vrot.lane.b32.xlu0 %v3781, 24
      %v3973 = vpop.permute.xlu0 %3972
      %3974 = vrot.lane.b32.xlu0 %v3783, 24
      %v3975 = vpop.permute.xlu0 %3974
      %3976 = vrot.lane.b32.xlu0 %v3785, 24
      %v3977 = vpop.permute.xlu0 %3976
      %3978 = vrot.lane.b32.xlu0 %v3787, 24
      %v3979 = vpop.permute.xlu0 %3978
      %3980 = vrot.lane.b32.xlu0 %v3789, 24
      %v3981 = vpop.permute.xlu0 %3980
      %3982 = vrot.lane.b32.xlu0 %v3791, 24
      %v3983 = vpop.permute.xlu0 %3982
      %3984 = vrot.lane.b32.xlu0 %v3793, 24
      %v3985 = vpop.permute.xlu0 %3984
      %3986 = vrot.lane.b32.xlu0 %v3795, 24
      %v3987 = vpop.permute.xlu0 %3986
      %3988 = vrot.lane.b32.xlu0 %v3797, 24
      %v3989 = vpop.permute.xlu0 %3988
      %3990 = vrot.lane.b32.xlu0 %v3799, 24
      %v3991 = vpop.permute.xlu0 %3990
      %3992 = vrot.lane.b32.xlu0 %v3801, 24
      %v3993 = vpop.permute.xlu0 %3992
      %3994 = vrot.lane.b32.xlu0 %v3803, 24
      %v3995 = vpop.permute.xlu0 %3994
      %3996 = vrot.lane.b32.xlu0 %v3805, 24
      %v3997 = vpop.permute.xlu0 %3996
      %3998 = vrot.lane.b32.xlu0 %v3807, 24
      %v3999 = vpop.permute.xlu0 %3998
      %4000 = vrot.lane.b32.xlu0 %v3809, 24
      %v4001 = vpop.permute.xlu0 %4000
      %4002 = vrot.lane.b32.xlu0 %v3811, 24
      %v4003 = vpop.permute.xlu0 %4002
      %4004 = vrot.lane.b32.xlu0 %v3813, 24
      %v4005 = vpop.permute.xlu0 %4004
      %4006 = vrot.lane.b32.xlu0 %v3815, 24
      %v4007 = vpop.permute.xlu0 %4006
      %4008 = vrot.lane.b32.xlu0 %v3817, 24
      %v4009 = vpop.permute.xlu0 %4008
      %4010 = vrot.lane.b32.xlu0 %v3819, 24
      %v4011 = vpop.permute.xlu0 %4010
      %4012 = vrot.lane.b32.xlu0 %v3821, 24
      %v4013 = vpop.permute.xlu0 %4012
      %4014 = vrot.lane.b32.xlu0 %v3823, 24
      %v4015 = vpop.permute.xlu0 %4014
      %4016 = vrot.lane.b32.xlu0 %v3825, 24
      %v4017 = vpop.permute.xlu0 %4016
      %4018 = vrot.lane.b32.xlu0 %v3827, 24
      %v4019 = vpop.permute.xlu0 %4018
      %4020 = vrot.lane.b32.xlu0 %v3829, 24
      %v4021 = vpop.permute.xlu0 %4020
      %4022 = vrot.lane.b32.xlu0 %v3831, 24
      %v4023 = vpop.permute.xlu0 %4022
      %4024 = vrot.lane.b32.xlu0 %v3833, 24
      %v4025 = vpop.permute.xlu0 %4024
      %4026 = vrot.lane.b32.xlu0 %v3835, 24
      %v4027 = vpop.permute.xlu0 %4026
      %4028 = vrot.lane.b32.xlu0 %v3837, 24
      %v4029 = vpop.permute.xlu0 %4028
      %4031 = vrot.lane.b32.xlu0 %v3713, 48
      %v4032 = vpop.permute.xlu0 %4031
      %4033 = vrot.lane.b32.xlu0 %v3715, 48
      %v4034 = vpop.permute.xlu0 %4033
      %4035 = vrot.lane.b32.xlu0 %v3717, 48
      %v4036 = vpop.permute.xlu0 %4035
      %4037 = vrot.lane.b32.xlu0 %v3719, 48
      %v4038 = vpop.permute.xlu0 %4037
      %4039 = vrot.lane.b32.xlu0 %v3721, 48
      %v4040 = vpop.permute.xlu0 %4039
      %4041 = vrot.lane.b32.xlu0 %v3723, 48
      %v4042 = vpop.permute.xlu0 %4041
      %4043 = vrot.lane.b32.xlu0 %v3725, 48
      %v4044 = vpop.permute.xlu0 %4043
      %4045 = vrot.lane.b32.xlu0 0, 48
      %v4046 = vpop.permute.xlu0 %4045
      %4047 = vrot.lane.b32.xlu0 %v3729, 48
      %v4048 = vpop.permute.xlu0 %4047
      %4049 = vrot.lane.b32.xlu0 %v3731, 48
      %v4050 = vpop.permute.xlu0 %4049
      %4051 = vrot.lane.b32.xlu0 %v3733, 48
      %v4052 = vpop.permute.xlu0 %4051
      %4053 = vrot.lane.b32.xlu0 %v3735, 48
      %v4054 = vpop.permute.xlu0 %4053
      %4055 = vrot.lane.b32.xlu0 %v3737, 48
      %v4056 = vpop.permute.xlu0 %4055
      %4057 = vrot.lane.b32.xlu0 %v3739, 48
      %v4058 = vpop.permute.xlu0 %4057
      %4059 = vrot.lane.b32.xlu0 %v3741, 48
      %v4060 = vpop.permute.xlu0 %4059
      %4061 = vrot.lane.b32.xlu0 %v3745, 48
      %v4062 = vpop.permute.xlu0 %4061
      %4063 = vrot.lane.b32.xlu0 %v3747, 48
      %v4064 = vpop.permute.xlu0 %4063
      %4065 = vrot.lane.b32.xlu0 %v3749, 48
      %v4066 = vpop.permute.xlu0 %4065
      %4067 = vrot.lane.b32.xlu0 %v3751, 48
      %v4068 = vpop.permute.xlu0 %4067
      %4069 = vrot.lane.b32.xlu0 %v3753, 48
      %v4070 = vpop.permute.xlu0 %4069
      %4071 = vrot.lane.b32.xlu0 %v3755, 48
      %v4072 = vpop.permute.xlu0 %4071
      %4073 = vrot.lane.b32.xlu0 %v3757, 48
      %v4074 = vpop.permute.xlu0 %4073
      %4075 = vrot.lane.b32.xlu0 %v3761, 48
      %v4076 = vpop.permute.xlu0 %4075
      %4077 = vrot.lane.b32.xlu0 %v3763, 48
      %v4078 = vpop.permute.xlu0 %4077
      %4079 = vrot.lane.b32.xlu0 %v3765, 48
      %v4080 = vpop.permute.xlu0 %4079
      %4081 = vrot.lane.b32.xlu0 %v3767, 48
      %v4082 = vpop.permute.xlu0 %4081
      %4083 = vrot.lane.b32.xlu0 %v3769, 48
      %v4084 = vpop.permute.xlu0 %4083
      %4085 = vrot.lane.b32.xlu0 %v3771, 48
      %v4086 = vpop.permute.xlu0 %4085
      %4087 = vrot.lane.b32.xlu0 %v3773, 48
      %v4088 = vpop.permute.xlu0 %4087
      %4089 = vrot.lane.b32.xlu0 %v3777, 48
      %v4090 = vpop.permute.xlu0 %4089
      %4091 = vrot.lane.b32.xlu0 %v3779, 48
      %v4092 = vpop.permute.xlu0 %4091
      %4093 = vrot.lane.b32.xlu0 %v3781, 48
      %v4094 = vpop.permute.xlu0 %4093
      %4095 = vrot.lane.b32.xlu0 %v3783, 48
      %v4096 = vpop.permute.xlu0 %4095
      %4097 = vrot.lane.b32.xlu0 %v3785, 48
      %v4098 = vpop.permute.xlu0 %4097
      %4099 = vrot.lane.b32.xlu0 %v3787, 48
      %v4100 = vpop.permute.xlu0 %4099
      %4101 = vrot.lane.b32.xlu0 %v3789, 48
      %v4102 = vpop.permute.xlu0 %4101
      %4103 = vrot.lane.b32.xlu0 %v3793, 48
      %v4104 = vpop.permute.xlu0 %4103
      %4105 = vrot.lane.b32.xlu0 %v3795, 48
      %v4106 = vpop.permute.xlu0 %4105
      %4107 = vrot.lane.b32.xlu0 %v3797, 48
      %v4108 = vpop.permute.xlu0 %4107
      %4109 = vrot.lane.b32.xlu0 %v3799, 48
      %v4110 = vpop.permute.xlu0 %4109
      %4111 = vrot.lane.b32.xlu0 %v3801, 48
      %v4112 = vpop.permute.xlu0 %4111
      %4113 = vrot.lane.b32.xlu0 %v3803, 48
      %v4114 = vpop.permute.xlu0 %4113
      %4115 = vrot.lane.b32.xlu0 %v3805, 48
      %v4116 = vpop.permute.xlu0 %4115
      %4117 = vrot.lane.b32.xlu0 %v3809, 48
      %v4118 = vpop.permute.xlu0 %4117
      %4119 = vrot.lane.b32.xlu0 %v3811, 48
      %v4120 = vpop.permute.xlu0 %4119
      %4121 = vrot.lane.b32.xlu0 %v3813, 48
      %v4122 = vpop.permute.xlu0 %4121
      %4123 = vrot.lane.b32.xlu0 %v3815, 48
      %v4124 = vpop.permute.xlu0 %4123
      %4125 = vrot.lane.b32.xlu0 %v3817, 48
      %v4126 = vpop.permute.xlu0 %4125
      %4127 = vrot.lane.b32.xlu0 %v3819, 48
      %v4128 = vpop.permute.xlu0 %4127
      %4129 = vrot.lane.b32.xlu0 %v3821, 48
      %v4130 = vpop.permute.xlu0 %4129
      %4131 = vrot.lane.b32.xlu0 %v3825, 48
      %v4132 = vpop.permute.xlu0 %4131
      %4133 = vrot.lane.b32.xlu0 %v3827, 48
      %v4134 = vpop.permute.xlu0 %4133
      %4135 = vrot.lane.b32.xlu0 %v3829, 48
      %v4136 = vpop.permute.xlu0 %4135
      %4137 = vrot.lane.b32.xlu0 %v3831, 48
      %v4138 = vpop.permute.xlu0 %4137
      %4139 = vrot.lane.b32.xlu0 %v3833, 48
      %v4140 = vpop.permute.xlu0 %4139
      %4141 = vrot.lane.b32.xlu0 %v3835, 48
      %v4142 = vpop.permute.xlu0 %4141
      %4143 = vrot.lane.b32.xlu0 %v3837, 48
      %v4144 = vpop.permute.xlu0 %4143
      %vm4145 = vcmask 195584
      %v4148 = vsel %vm4145, 0, %v3903
      %v4150 = vsel %vm4145, %v3711, %v3905
      %v4152 = vsel %vm4145, %v3713, %v3907
      %v4154 = vsel %vm4145, %v3715, %v3909
      %v4156 = vsel %vm4145, %v3717, %v3911
      %v4158 = vsel %vm4145, %v3719, %v3913
      %v4160 = vsel %vm4145, %v3721, %v3915
      %v4162 = vsel %vm4145, %v3723, %v3917
      %v4164 = vsel %vm4145, 0, %v3919
      %v4166 = vsel %vm4145, %v3727, %v3921
      %v4168 = vsel %vm4145, %v3729, %v3923
      %v4170 = vsel %vm4145, %v3731, %v3925
      %v4172 = vsel %vm4145, %v3733, %v3927
      %v4174 = vsel %vm4145, %v3735, %v3929
      %v4176 = vsel %vm4145, %v3737, %v3931
      %v4178 = vsel %vm4145, %v3739, %v3933
      %v4180 = vsel %vm4145, 0, %v3935
      %v4182 = vsel %vm4145, %v3743, %v3937
      %v4184 = vsel %vm4145, %v3745, %v3939
      %v4186 = vsel %vm4145, %v3747, %v3941
      %v4188 = vsel %vm4145, %v3749, %v3943
      %v4190 = vsel %vm4145, %v3751, %v3945
      %v4192 = vsel %vm4145, %v3753, %v3947
      %v4194 = vsel %vm4145, %v3755, %v3949
      %v4196 = vsel %vm4145, 0, %v3951
      %v4198 = vsel %vm4145, %v3759, %v3953
      %v4200 = vsel %vm4145, %v3761, %v3955
      %v4202 = vsel %vm4145, %v3763, %v3957
      %v4204 = vsel %vm4145, %v3765, %v3959
      %v4206 = vsel %vm4145, %v3767, %v3961
      %v4208 = vsel %vm4145, %v3769, %v3963
      %v4210 = vsel %vm4145, %v3771, %v3965
      %v4212 = vsel %vm4145, 0, %v3967
      %v4214 = vsel %vm4145, %v3775, %v3969
      %v4216 = vsel %vm4145, %v3777, %v3971
      %v4218 = vsel %vm4145, %v3779, %v3973
      %v4220 = vsel %vm4145, %v3781, %v3975
      %v4222 = vsel %vm4145, %v3783, %v3977
      %v4224 = vsel %vm4145, %v3785, %v3979
      %v4226 = vsel %vm4145, %v3787, %v3981
      %v4228 = vsel %vm4145, 0, %v3983
      %v4230 = vsel %vm4145, %v3791, %v3985
      %v4232 = vsel %vm4145, %v3793, %v3987
      %v4234 = vsel %vm4145, %v3795, %v3989
      %v4236 = vsel %vm4145, %v3797, %v3991
      %v4238 = vsel %vm4145, %v3799, %v3993
      %v4240 = vsel %vm4145, %v3801, %v3995
      %v4242 = vsel %vm4145, %v3803, %v3997
      %v4244 = vsel %vm4145, 0, %v3999
      %v4246 = vsel %vm4145, %v3807, %v4001
      %v4248 = vsel %vm4145, %v3809, %v4003
      %v4250 = vsel %vm4145, %v3811, %v4005
      %v4252 = vsel %vm4145, %v3813, %v4007
      %v4254 = vsel %vm4145, %v3815, %v4009
      %v4256 = vsel %vm4145, %v3817, %v4011
      %v4258 = vsel %vm4145, %v3819, %v4013
      %v4260 = vsel %vm4145, 0, %v4015
      %v4262 = vsel %vm4145, %v3823, %v4017
      %v4264 = vsel %vm4145, %v3825, %v4019
      %v4266 = vsel %vm4145, %v3827, %v4021
      %v4268 = vsel %vm4145, %v3829, %v4023
      %v4270 = vsel %vm4145, %v3831, %v4025
      %v4272 = vsel %vm4145, %v3833, %v4027
      %v4274 = vsel %vm4145, %v3835, %v4029
      %vm4275 = vcmask 392192
      %v4277 = vsel %vm4275, %v4148, %v4032
      %v4280 = vsel %vm4275, %v4150, %v4034
      %v4283 = vsel %vm4275, %v4152, %v4036
      %v4286 = vsel %vm4275, %v4154, %v4038
      %v4289 = vsel %vm4275, %v4156, %v4040
      %v4292 = vsel %vm4275, %v4158, %v4042
      %v4295 = vsel %vm4275, %v4160, %v4044
      %v4298 = vsel %vm4275, %v4162, %v4046
      %v4301 = vsel %vm4275, %v4164, %v4048
      %v4304 = vsel %vm4275, %v4166, %v4050
      %v4307 = vsel %vm4275, %v4168, %v4052
      %v4310 = vsel %vm4275, %v4170, %v4054
      %v4313 = vsel %vm4275, %v4172, %v4056
      %v4316 = vsel %vm4275, %v4174, %v4058
      %v4319 = vsel %vm4275, %v4176, %v4060
      %v4321 = vsel %vm4275, %v4178, %v4046
      %v4324 = vsel %vm4275, %v4180, %v4062
      %v4327 = vsel %vm4275, %v4182, %v4064
      %v4330 = vsel %vm4275, %v4184, %v4066
      %v4333 = vsel %vm4275, %v4186, %v4068
      %v4336 = vsel %vm4275, %v4188, %v4070
      %v4339 = vsel %vm4275, %v4190, %v4072
      %v4342 = vsel %vm4275, %v4192, %v4074
      %v4344 = vsel %vm4275, %v4194, %v4046
      %v4347 = vsel %vm4275, %v4196, %v4076
      %v4350 = vsel %vm4275, %v4198, %v4078
      %v4353 = vsel %vm4275, %v4200, %v4080
      %v4356 = vsel %vm4275, %v4202, %v4082
      %v4359 = vsel %vm4275, %v4204, %v4084
      %v4362 = vsel %vm4275, %v4206, %v4086
      %v4365 = vsel %vm4275, %v4208, %v4088
      %v4367 = vsel %vm4275, %v4210, %v4046
      %v4370 = vsel %vm4275, %v4212, %v4090
      %v4373 = vsel %vm4275, %v4214, %v4092
      %v4376 = vsel %vm4275, %v4216, %v4094
      %v4379 = vsel %vm4275, %v4218, %v4096
      %v4382 = vsel %vm4275, %v4220, %v4098
      %v4385 = vsel %vm4275, %v4222, %v4100
      %v4388 = vsel %vm4275, %v4224, %v4102
      %v4390 = vsel %vm4275, %v4226, %v4046
      %v4393 = vsel %vm4275, %v4228, %v4104
      %v4396 = vsel %vm4275, %v4230, %v4106
      %v4399 = vsel %vm4275, %v4232, %v4108
      %v4402 = vsel %vm4275, %v4234, %v4110
      %v4405 = vsel %vm4275, %v4236, %v4112
      %v4408 = vsel %vm4275, %v4238, %v4114
      %v4411 = vsel %vm4275, %v4240, %v4116
      %v4413 = vsel %vm4275, %v4242, %v4046
      %v4416 = vsel %vm4275, %v4244, %v4118
      %v4419 = vsel %vm4275, %v4246, %v4120
      %v4422 = vsel %vm4275, %v4248, %v4122
      %v4425 = vsel %vm4275, %v4250, %v4124
      %v4428 = vsel %vm4275, %v4252, %v4126
      %v4431 = vsel %vm4275, %v4254, %v4128
      %v4434 = vsel %vm4275, %v4256, %v4130
      %v4436 = vsel %vm4275, %v4258, %v4046
      %v4439 = vsel %vm4275, %v4260, %v4132
      %v4442 = vsel %vm4275, %v4262, %v4134
      %v4445 = vsel %vm4275, %v4264, %v4136
      %v4448 = vsel %vm4275, %v4266, %v4138
      %v4451 = vsel %vm4275, %v4268, %v4140
      %v4454 = vsel %vm4275, %v4270, %v4142
      %v4457 = vsel %vm4275, %v4272, %v4144
      %v4459 = vsel %vm4275, %v4274, %v4046
      %vm4461 = vcmask 584704
      %4462 = vst.msk [vmem:[#allocation3] sm:$0xf] %vm4461, 0
      %4463 = vst.msk [vmem:[#allocation3 + $0x4] sm:$0xf] %vm4461, 0
      %4464 = vst.msk [vmem:[#allocation3 + $0x8] sm:$0xf] %vm4461, 0
      %4465 = vst.msk [vmem:[#allocation3 + $0xc] sm:$0xf] %vm4461, 0
      %4466 = vst.msk [vmem:[#allocation3 + $0x10] sm:$0xf] %vm4461, 0
      %4467 = vst.msk [vmem:[#allocation3 + $0x14] sm:$0xf] %vm4461, 0
      %4468 = vst.msk [vmem:[#allocation3 + $0x18] sm:$0xf] %vm4461, 0
      %4469 = vst.msk [vmem:[#allocation3 + $0x1c] sm:$0xf] %vm4461, 0
      %4470 = vst.msk [vmem:[#allocation3 + $0x120] sm:$0xf] %vm4461, 0
      %4471 = vst.msk [vmem:[#allocation3 + $0x124] sm:$0xf] %vm4461, 0
      %4472 = vst.msk [vmem:[#allocation3 + $0x128] sm:$0xf] %vm4461, 0
      %4473 = vst.msk [vmem:[#allocation3 + $0x12c] sm:$0xf] %vm4461, 0
      %4474 = vst.msk [vmem:[#allocation3 + $0x130] sm:$0xf] %vm4461, 0
      %4475 = vst.msk [vmem:[#allocation3 + $0x134] sm:$0xf] %vm4461, 0
      %4476 = vst.msk [vmem:[#allocation3 + $0x138] sm:$0xf] %vm4461, 0
      %4477 = vst.msk [vmem:[#allocation3 + $0x13c] sm:$0xf] %vm4461, 0
      %4478 = vst.msk [vmem:[#allocation3 + $0x20] sm:$0xf] %vm4461, %v4277
      %4479 = vst.msk [vmem:[#allocation3 + $0x24] sm:$0xf] %vm4461, %v4280
      %4480 = vst.msk [vmem:[#allocation3 + $0x28] sm:$0xf] %vm4461, %v4283
      %4481 = vst.msk [vmem:[#allocation3 + $0x2c] sm:$0xf] %vm4461, %v4286
      %4482 = vst.msk [vmem:[#allocation3 + $0x30] sm:$0xf] %vm4461, %v4289
      %4483 = vst.msk [vmem:[#allocation3 + $0x34] sm:$0xf] %vm4461, %v4292
      %4484 = vst.msk [vmem:[#allocation3 + $0x38] sm:$0xf] %vm4461, %v4295
      %4485 = vst.msk [vmem:[#allocation3 + $0x3c] sm:$0xf] %vm4461, %v4298
      %4486 = vst.msk [vmem:[#allocation3 + $0x40] sm:$0xf] %vm4461, %v4301
      %4487 = vst.msk [vmem:[#allocation3 + $0x44] sm:$0xf] %vm4461, %v4304
      %4488 = vst.msk [vmem:[#allocation3 + $0x48] sm:$0xf] %vm4461, %v4307
      %4489 = vst.msk [vmem:[#allocation3 + $0x4c] sm:$0xf] %vm4461, %v4310
      %4490 = vst.msk [vmem:[#allocation3 + $0x50] sm:$0xf] %vm4461, %v4313
      %4491 = vst.msk [vmem:[#allocation3 + $0x54] sm:$0xf] %vm4461, %v4316
      %4492 = vst.msk [vmem:[#allocation3 + $0x58] sm:$0xf] %vm4461, %v4319
      %4493 = vst.msk [vmem:[#allocation3 + $0x5c] sm:$0xf] %vm4461, %v4321
      %4494 = vst.msk [vmem:[#allocation3 + $0x60] sm:$0xf] %vm4461, %v4324
      %4495 = vst.msk [vmem:[#allocation3 + $0x64] sm:$0xf] %vm4461, %v4327
      %4496 = vst.msk [vmem:[#allocation3 + $0x68] sm:$0xf] %vm4461, %v4330
      %4497 = vst.msk [vmem:[#allocation3 + $0x6c] sm:$0xf] %vm4461, %v4333
      %4498 = vst.msk [vmem:[#allocation3 + $0x70] sm:$0xf] %vm4461, %v4336
      %4499 = vst.msk [vmem:[#allocation3 + $0x74] sm:$0xf] %vm4461, %v4339
      %4500 = vst.msk [vmem:[#allocation3 + $0x78] sm:$0xf] %vm4461, %v4342
      %4501 = vst.msk [vmem:[#allocation3 + $0x7c] sm:$0xf] %vm4461, %v4344
      %4502 = vst.msk [vmem:[#allocation3 + $0x80] sm:$0xf] %vm4461, %v4347
      %4503 = vst.msk [vmem:[#allocation3 + $0x84] sm:$0xf] %vm4461, %v4350
      %4504 = vst.msk [vmem:[#allocation3 + $0x88] sm:$0xf] %vm4461, %v4353
      %4505 = vst.msk [vmem:[#allocation3 + $0x8c] sm:$0xf] %vm4461, %v4356
      %4506 = vst.msk [vmem:[#allocation3 + $0x90] sm:$0xf] %vm4461, %v4359
      %4507 = vst.msk [vmem:[#allocation3 + $0x94] sm:$0xf] %vm4461, %v4362
      %4508 = vst.msk [vmem:[#allocation3 + $0x98] sm:$0xf] %vm4461, %v4365
      %4509 = vst.msk [vmem:[#allocation3 + $0x9c] sm:$0xf] %vm4461, %v4367
      %4510 = vst.msk [vmem:[#allocation3 + $0xa0] sm:$0xf] %vm4461, %v4370
      %4511 = vst.msk [vmem:[#allocation3 + $0xa4] sm:$0xf] %vm4461, %v4373
      %4512 = vst.msk [vmem:[#allocation3 + $0xa8] sm:$0xf] %vm4461, %v4376
      %4513 = vst.msk [vmem:[#allocation3 + $0xac] sm:$0xf] %vm4461, %v4379
      %4514 = vst.msk [vmem:[#allocation3 + $0xb0] sm:$0xf] %vm4461, %v4382
      %4515 = vst.msk [vmem:[#allocation3 + $0xb4] sm:$0xf] %vm4461, %v4385
      %4516 = vst.msk [vmem:[#allocation3 + $0xb8] sm:$0xf] %vm4461, %v4388
      %4517 = vst.msk [vmem:[#allocation3 + $0xbc] sm:$0xf] %vm4461, %v4390
      %4518 = vst.msk [vmem:[#allocation3 + $0xc0] sm:$0xf] %vm4461, %v4393
      %4519 = vst.msk [vmem:[#allocation3 + $0xc4] sm:$0xf] %vm4461, %v4396
      %4520 = vst.msk [vmem:[#allocation3 + $0xc8] sm:$0xf] %vm4461, %v4399
      %4521 = vst.msk [vmem:[#allocation3 + $0xcc] sm:$0xf] %vm4461, %v4402
      %4522 = vst.msk [vmem:[#allocation3 + $0xd0] sm:$0xf] %vm4461, %v4405
      %4523 = vst.msk [vmem:[#allocation3 + $0xd4] sm:$0xf] %vm4461, %v4408
      %4524 = vst.msk [vmem:[#allocation3 + $0xd8] sm:$0xf] %vm4461, %v4411
      %4525 = vst.msk [vmem:[#allocation3 + $0xdc] sm:$0xf] %vm4461, %v4413
      %4526 = vst.msk [vmem:[#allocation3 + $0xe0] sm:$0xf] %vm4461, %v4416
      %4527 = vst.msk [vmem:[#allocation3 + $0xe4] sm:$0xf] %vm4461, %v4419
      %4528 = vst.msk [vmem:[#allocation3 + $0xe8] sm:$0xf] %vm4461, %v4422
      %4529 = vst.msk [vmem:[#allocation3 + $0xec] sm:$0xf] %vm4461, %v4425
      %4530 = vst.msk [vmem:[#allocation3 + $0xf0] sm:$0xf] %vm4461, %v4428
      %4531 = vst.msk [vmem:[#allocation3 + $0xf4] sm:$0xf] %vm4461, %v4431
      %4532 = vst.msk [vmem:[#allocation3 + $0xf8] sm:$0xf] %vm4461, %v4434
      %4533 = vst.msk [vmem:[#allocation3 + $0xfc] sm:$0xf] %vm4461, %v4436
      %4534 = vst.msk [vmem:[#allocation3 + $0x100] sm:$0xf] %vm4461, %v4439
      %4535 = vst.msk [vmem:[#allocation3 + $0x104] sm:$0xf] %vm4461, %v4442
      %4536 = vst.msk [vmem:[#allocation3 + $0x108] sm:$0xf] %vm4461, %v4445
      %4537 = vst.msk [vmem:[#allocation3 + $0x10c] sm:$0xf] %vm4461, %v4448
      %4538 = vst.msk [vmem:[#allocation3 + $0x110] sm:$0xf] %vm4461, %v4451
      %4539 = vst.msk [vmem:[#allocation3 + $0x114] sm:$0xf] %vm4461, %v4454
      %4540 = vst.msk [vmem:[#allocation3 + $0x118] sm:$0xf] %vm4461, %v4457
      %4541 = vst.msk [vmem:[#allocation3 + $0x11c] sm:$0xf] %vm4461, %v4459
      %v4542 = vld [vmem:[#allocation3] sm:$0xf]
      %v4543 = vld [vmem:[#allocation3 + $0x4] sm:$0xf]
      %v4544 = vld [vmem:[#allocation3 + $0x8] sm:$0xf]
      %v4545 = vld [vmem:[#allocation3 + $0xc] sm:$0xf]
      %v4546 = vld [vmem:[#allocation3 + $0x10] sm:$0xf]
      %v4547 = vld [vmem:[#allocation3 + $0x14] sm:$0xf]
      %v4548 = vld [vmem:[#allocation3 + $0x18] sm:$0xf]
      %v4549 = vld [vmem:[#allocation3 + $0x1c] sm:$0xf]
      %v4550 = vld [vmem:[#allocation3 + $0x20] sm:$0xf]
      %v4551 = vld [vmem:[#allocation3 + $0x24] sm:$0xf]
      %v4552 = vld [vmem:[#allocation3 + $0x28] sm:$0xf]
      %v4553 = vld [vmem:[#allocation3 + $0x2c] sm:$0xf]
      %v4554 = vld [vmem:[#allocation3 + $0x30] sm:$0xf]
      %v4555 = vld [vmem:[#allocation3 + $0x34] sm:$0xf]
      %v4556 = vld [vmem:[#allocation3 + $0x38] sm:$0xf]
      %v4557 = vld [vmem:[#allocation3 + $0x3c] sm:$0xf]
      %v4558 = vld [vmem:[#allocation3 + $0x40] sm:$0xf]
      %v4559 = vld [vmem:[#allocation3 + $0x44] sm:$0xf]
      %v4560 = vld [vmem:[#allocation3 + $0x48] sm:$0xf]
      %v4561 = vld [vmem:[#allocation3 + $0x4c] sm:$0xf]
      %v4562 = vld [vmem:[#allocation3 + $0x50] sm:$0xf]
      %v4563 = vld [vmem:[#allocation3 + $0x54] sm:$0xf]
      %v4564 = vld [vmem:[#allocation3 + $0x58] sm:$0xf]
      %v4565 = vld [vmem:[#allocation3 + $0x5c] sm:$0xf]
      %v4566 = vld [vmem:[#allocation3 + $0x60] sm:$0xf]
      %v4567 = vld [vmem:[#allocation3 + $0x64] sm:$0xf]
      %v4568 = vld [vmem:[#allocation3 + $0x68] sm:$0xf]
      %v4569 = vld [vmem:[#allocation3 + $0x6c] sm:$0xf]
      %v4570 = vld [vmem:[#allocation3 + $0x70] sm:$0xf]
      %v4571 = vld [vmem:[#allocation3 + $0x74] sm:$0xf]
      %v4572 = vld [vmem:[#allocation3 + $0x78] sm:$0xf]
      %v4573 = vld [vmem:[#allocation3 + $0x7c] sm:$0xf]
      %v4574 = vld [vmem:[#allocation3 + $0x80] sm:$0xf]
      %v4575 = vld [vmem:[#allocation3 + $0x84] sm:$0xf]
      %v4576 = vld [vmem:[#allocation3 + $0x88] sm:$0xf]
      %v4577 = vld [vmem:[#allocation3 + $0x8c] sm:$0xf]
      %v4578 = vld [vmem:[#allocation3 + $0x90] sm:$0xf]
      %v4579 = vld [vmem:[#allocation3 + $0x94] sm:$0xf]
      %v4580 = vld [vmem:[#allocation3 + $0x98] sm:$0xf]
      %v4581 = vld [vmem:[#allocation3 + $0x9c] sm:$0xf]
      %v4582 = vld [vmem:[#allocation3 + $0xa0] sm:$0xf]
      %v4583 = vld [vmem:[#allocation3 + $0xa4] sm:$0xf]
      %v4584 = vld [vmem:[#allocation3 + $0xa8] sm:$0xf]
      %v4585 = vld [vmem:[#allocation3 + $0xac] sm:$0xf]
      %v4586 = vld [vmem:[#allocation3 + $0xb0] sm:$0xf]
      %v4587 = vld [vmem:[#allocation3 + $0xb4] sm:$0xf]
      %v4588 = vld [vmem:[#allocation3 + $0xb8] sm:$0xf]
      %v4589 = vld [vmem:[#allocation3 + $0xbc] sm:$0xf]
      %v4590 = vld [vmem:[#allocation3 + $0xc0] sm:$0xf]
      %v4591 = vld [vmem:[#allocation3 + $0xc4] sm:$0xf]
      %v4592 = vld [vmem:[#allocation3 + $0xc8] sm:$0xf]
      %v4593 = vld [vmem:[#allocation3 + $0xcc] sm:$0xf]
      %v4594 = vld [vmem:[#allocation3 + $0xd0] sm:$0xf]
      %v4595 = vld [vmem:[#allocation3 + $0xd4] sm:$0xf]
      %v4596 = vld [vmem:[#allocation3 + $0xd8] sm:$0xf]
      %v4597 = vld [vmem:[#allocation3 + $0xdc] sm:$0xf]
      %v4598 = vld [vmem:[#allocation3 + $0xe0] sm:$0xf]
      %v4599 = vld [vmem:[#allocation3 + $0xe4] sm:$0xf]
      %v4600 = vld [vmem:[#allocation3 + $0xe8] sm:$0xf]
      %v4601 = vld [vmem:[#allocation3 + $0xec] sm:$0xf]
      %v4602 = vld [vmem:[#allocation3 + $0xf0] sm:$0xf]
      %v4603 = vld [vmem:[#allocation3 + $0xf4] sm:$0xf]
      %v4604 = vld [vmem:[#allocation3 + $0xf8] sm:$0xf]
      %v4605 = vld [vmem:[#allocation3 + $0xfc] sm:$0xf]
      %v4606 = vld [vmem:[%s3] sm:$0xf]
      %v4607 = vld [vmem:[%s3 + $0x4] sm:$0xf]
      %v4608 = vld [vmem:[%s3 + $0x8] sm:$0xf]
      %v4609 = vld [vmem:[%s3 + $0xc] sm:$0xf]
      %v4610 = vld [vmem:[%s3 + $0x10] sm:$0xf]
      %v4611 = vld [vmem:[%s3 + $0x14] sm:$0xf]
      %v4612 = vld [vmem:[%s3 + $0x18] sm:$0xf]
      %v4613 = vld [vmem:[%s3 + $0x1c] sm:$0xf]
      %v4614 = vld [vmem:[%s3 + $0x20] sm:$0xf]
      %v4615 = vld [vmem:[#allocation3 + $0x100] sm:$0xf]
      %v4616 = vld [vmem:[#allocation3 + $0x104] sm:$0xf]
      %v4617 = vld [vmem:[#allocation3 + $0x108] sm:$0xf]
      %v4618 = vld [vmem:[#allocation3 + $0x10c] sm:$0xf]
      %v4619 = vld [vmem:[#allocation3 + $0x110] sm:$0xf]
      %v4620 = vld [vmem:[#allocation3 + $0x114] sm:$0xf]
      %v4621 = vld [vmem:[#allocation3 + $0x118] sm:$0xf]
      %v4622 = vld [vmem:[#allocation3 + $0x11c] sm:$0xf]
      %s4623 = scalar_lea.vmem %s3, 36
      %v4624 = vld [vmem:[%s4623] sm:$0xf]
      %v4625 = vld [vmem:[%s4623 + $0x4] sm:$0xf]
      %v4626 = vld [vmem:[%s4623 + $0x8] sm:$0xf]
      %v4627 = vld [vmem:[%s4623 + $0xc] sm:$0xf]
      %v4628 = vld [vmem:[%s4623 + $0x10] sm:$0xf]
      %v4629 = vld [vmem:[%s4623 + $0x14] sm:$0xf]
      %v4630 = vld [vmem:[%s4623 + $0x18] sm:$0xf]
      %v4631 = vld [vmem:[%s4623 + $0x1c] sm:$0xf]
      %v4632 = vld [vmem:[%s4623 + $0x20] sm:$0xf]
      %v4697 = vunpack.c.l.b16 %v4550
      %v4698 = vunpack.c.l.b16 %v4551
      %v4699 = vunpack.c.l.b16 %v4552
      %v4700 = vunpack.c.l.b16 %v4553
      %v4701 = vunpack.c.l.b16 %v4554
      %v4702 = vunpack.c.l.b16 %v4555
      %v4703 = vunpack.c.l.b16 %v4556
      %v4704 = vunpack.c.l.b16 %v4557
      %v4705 = vunpack.c.l.b16 %v4558
      %v4706 = vunpack.c.l.b16 %v4559
      %v4707 = vunpack.c.l.b16 %v4560
      %v4708 = vunpack.c.l.b16 %v4561
      %v4709 = vunpack.c.l.b16 %v4562
      %v4710 = vunpack.c.l.b16 %v4563
      %v4711 = vunpack.c.l.b16 %v4564
      %v4712 = vunpack.c.l.b16 %v4565
      %v4713 = vunpack.c.l.b16 %v4566
      %v4714 = vunpack.c.l.b16 %v4567
      %v4715 = vunpack.c.l.b16 %v4568
      %v4716 = vunpack.c.l.b16 %v4569
      %v4717 = vunpack.c.l.b16 %v4570
      %v4718 = vunpack.c.l.b16 %v4571
      %v4719 = vunpack.c.l.b16 %v4572
      %v4720 = vunpack.c.l.b16 %v4573
      %v4721 = vunpack.c.l.b16 %v4574
      %v4722 = vunpack.c.l.b16 %v4575
      %v4723 = vunpack.c.l.b16 %v4576
      %v4724 = vunpack.c.l.b16 %v4577
      %v4725 = vunpack.c.l.b16 %v4578
      %v4726 = vunpack.c.l.b16 %v4579
      %v4727 = vunpack.c.l.b16 %v4580
      %v4728 = vunpack.c.l.b16 %v4581
      %v4729 = vunpack.c.l.b16 %v4582
      %v4730 = vunpack.c.l.b16 %v4583
      %v4731 = vunpack.c.l.b16 %v4584
      %v4732 = vunpack.c.l.b16 %v4585
      %v4733 = vunpack.c.l.b16 %v4586
      %v4734 = vunpack.c.l.b16 %v4587
      %v4735 = vunpack.c.l.b16 %v4588
      %v4736 = vunpack.c.l.b16 %v4589
      %v4737 = vunpack.c.l.b16 %v4590
      %v4738 = vunpack.c.l.b16 %v4591
      %v4739 = vunpack.c.l.b16 %v4592
      %v4740 = vunpack.c.l.b16 %v4593
      %v4741 = vunpack.c.l.b16 %v4594
      %v4742 = vunpack.c.l.b16 %v4595
      %v4743 = vunpack.c.l.b16 %v4596
      %v4744 = vunpack.c.l.b16 %v4597
      %v4745 = vunpack.c.l.b16 %v4598
      %v4746 = vunpack.c.l.b16 %v4599
      %v4747 = vunpack.c.l.b16 %v4600
      %v4748 = vunpack.c.l.b16 %v4601
      %v4749 = vunpack.c.l.b16 %v4602
      %v4750 = vunpack.c.l.b16 %v4603
      %v4751 = vunpack.c.l.b16 %v4604
      %v4752 = vunpack.c.l.b16 %v4605
      %v4753 = vunpack.c.l.b16 %v4615
      %v4754 = vunpack.c.l.b16 %v4616
      %v4755 = vunpack.c.l.b16 %v4617
      %v4756 = vunpack.c.l.b16 %v4618
      %v4757 = vunpack.c.l.b16 %v4619
      %v4758 = vunpack.c.l.b16 %v4620
      %v4759 = vunpack.c.l.b16 %v4621
      %v4760 = vunpack.c.l.b16 %v4622
      %v4761 = vpack.c.b16 %v4698, %v4697
      %v4762 = vpack.c.b16 %v4700, %v4699
      %v4763 = vpack.c.b16 %v4702, %v4701
      %v4764 = vpack.c.b16 %v4704, %v4703
      %v4765 = vpack.c.b16 %v4706, %v4705
      %v4766 = vpack.c.b16 %v4708, %v4707
      %v4767 = vpack.c.b16 %v4710, %v4709
      %v4768 = vpack.c.b16 %v4712, %v4711
      %v4769 = vpack.c.b16 %v4714, %v4713
      %v4770 = vpack.c.b16 %v4716, %v4715
      %v4771 = vpack.c.b16 %v4718, %v4717
      %v4772 = vpack.c.b16 %v4720, %v4719
      %v4773 = vpack.c.b16 %v4722, %v4721
      %v4774 = vpack.c.b16 %v4724, %v4723
      %v4775 = vpack.c.b16 %v4726, %v4725
      %v4776 = vpack.c.b16 %v4728, %v4727
      %v4777 = vpack.c.b16 %v4730, %v4729
      %v4778 = vpack.c.b16 %v4732, %v4731
      %v4779 = vpack.c.b16 %v4734, %v4733
      %v4780 = vpack.c.b16 %v4736, %v4735
      %v4781 = vpack.c.b16 %v4738, %v4737
      %v4782 = vpack.c.b16 %v4740, %v4739
      %v4783 = vpack.c.b16 %v4742, %v4741
      %v4784 = vpack.c.b16 %v4744, %v4743
      %v4785 = vpack.c.b16 %v4746, %v4745
      %v4786 = vpack.c.b16 %v4748, %v4747
      %v4787 = vpack.c.b16 %v4750, %v4749
      %v4788 = vpack.c.b16 %v4752, %v4751
      %v4789 = vpack.c.b16 %v4754, %v4753
      %v4790 = vpack.c.b16 %v4756, %v4755
      %v4791 = vpack.c.b16 %v4758, %v4757
      %v4792 = vpack.c.b16 %v4760, %v4759
      %v4802 = vunpack.c.l.b16 %v4624
      %v4803 = vunpack.c.l.b16 %v4625
      %v4804 = vunpack.c.l.b16 %v4626
      %v4805 = vunpack.c.l.b16 %v4627
      %v4806 = vunpack.c.l.b16 %v4628
      %v4807 = vunpack.c.l.b16 %v4629
      %v4808 = vunpack.c.l.b16 %v4630
      %v4809 = vunpack.c.l.b16 %v4631
      %v4810 = vunpack.c.l.b16 %v4632
      %v4811 = vpack.c.b16 %v4803, %v4802
      %v4812 = vpack.c.b16 %v4805, %v4804
      %v4813 = vpack.c.b16 %v4807, %v4806
      %v4814 = vpack.c.b16 %v4809, %v4808
      %v4815 = vpack.c.b16 %v4810, %v4810
      %vm4820 = vcmask 588800
      %v4822 = vsel %vm4820, %v4761, 0
      %v4825 = vsel %vm4820, %v4762, 0
      %v4828 = vsel %vm4820, %v4763, 0
      %v4831 = vsel %vm4820, %v4764, 0
      %v4834 = vsel %vm4820, %v4765, 0
      %v4837 = vsel %vm4820, %v4766, 0
      %v4840 = vsel %vm4820, %v4767, 0
      %v4843 = vsel %vm4820, %v4768, 0
      %v4846 = vsel %vm4820, %v4769, 0
      %v4849 = vsel %vm4820, %v4770, 0
      %v4852 = vsel %vm4820, %v4771, 0
      %v4855 = vsel %vm4820, %v4772, 0
      %v4858 = vsel %vm4820, %v4773, 0
      %v4861 = vsel %vm4820, %v4774, 0
      %v4864 = vsel %vm4820, %v4775, 0
      %v4867 = vsel %vm4820, %v4776, 0
      %v4870 = vsel %vm4820, %v4777, 0
      %v4873 = vsel %vm4820, %v4778, 0
      %v4876 = vsel %vm4820, %v4779, 0
      %v4879 = vsel %vm4820, %v4780, 0
      %v4882 = vsel %vm4820, %v4781, 0
      %v4885 = vsel %vm4820, %v4782, 0
      %v4888 = vsel %vm4820, %v4783, 0
      %v4891 = vsel %vm4820, %v4784, 0
      %v4894 = vsel %vm4820, %v4785, 0
      %v4897 = vsel %vm4820, %v4786, 0
      %v4900 = vsel %vm4820, %v4787, 0
      %v4903 = vsel %vm4820, %v4788, 0
      %v4906 = vsel %vm4820, %v4789, 0
      %v4909 = vsel %vm4820, %v4790, 0
      %v4912 = vsel %vm4820, %v4791, 0
      %v4915 = vsel %vm4820, %v4792, 0
      %vm4917 = vcmask 1043456
      %v4919 = vsel %vm4917, %v4815, 0
      %4921 = vmatpush.bf16.msra.mxu0 0
      %4922 = vmatpush.bf16.msra.mxu0 0
      %4923 = vmatpush.bf16.msra.mxu0 0
      %4924 = vmatpush.bf16.msra.mxu0 %v4919
      %4925 = vmatpush.bf16.msra.mxu0 %v4814
      %4926 = vmatpush.bf16.msra.mxu0 %v4813
      %4927 = vmatpush.bf16.msra.mxu0 %v4812
      %4928 = vmatpush.bf16.msra.mxu0 %v4811
      %4929 = vmatmul.bf16.gmra.mxu0 %v4822
      %v4930 = vpop.f32.mrf.mxu0
      %v4931 = vadd.f32 0.0, %v4930
      %v4932 = vpop.f32.mrf.mxu0
      %v4933 = vadd.f32 0.0, %v4932
      %4934 = vmatmul.bf16.gmra.mxu0 %v4825
      %v4935 = vpop.f32.mrf.mxu0
      %v4936 = vadd.f32 0.0, %v4935
      %v4937 = vpop.f32.mrf.mxu0
      %v4938 = vadd.f32 0.0, %v4937
      %4939 = vmatmul.bf16.gmra.mxu0 %v4828
      %v4940 = vpop.f32.mrf.mxu0
      %v4941 = vadd.f32 0.0, %v4940
      %v4942 = vpop.f32.mrf.mxu0
      %v4943 = vadd.f32 0.0, %v4942
      %4944 = vmatmul.bf16.gmra.mxu0 %v4831
      %v4945 = vpop.f32.mrf.mxu0
      %v4946 = vadd.f32 0.0, %v4945
      %v4947 = vpop.f32.mrf.mxu0
      %v4948 = vadd.f32 0.0, %v4947
      %4949 = vmatmul.bf16.gmra.mxu0 %v4834
      %v4950 = vpop.f32.mrf.mxu0
      %v4951 = vadd.f32 0.0, %v4950
      %v4952 = vpop.f32.mrf.mxu0
      %v4953 = vadd.f32 0.0, %v4952
      %4954 = vmatmul.bf16.gmra.mxu0 %v4837
      %v4955 = vpop.f32.mrf.mxu0
      %v4956 = vadd.f32 0.0, %v4955
      %v4957 = vpop.f32.mrf.mxu0
      %v4958 = vadd.f32 0.0, %v4957
      %4959 = vmatmul.bf16.gmra.mxu0 %v4840
      %v4960 = vpop.f32.mrf.mxu0
      %v4961 = vadd.f32 0.0, %v4960
      %v4962 = vpop.f32.mrf.mxu0
      %v4963 = vadd.f32 0.0, %v4962
      %4964 = vmatmul.bf16.gmra.mxu0 %v4843
      %v4965 = vpop.f32.mrf.mxu0
      %v4966 = vadd.f32 0.0, %v4965
      %v4967 = vpop.f32.mrf.mxu0
      %v4968 = vadd.f32 0.0, %v4967
      %4969 = vmatmul.bf16.gmra.mxu0 %v4846
      %v4970 = vpop.f32.mrf.mxu0
      %v4971 = vadd.f32 0.0, %v4970
      %v4972 = vpop.f32.mrf.mxu0
      %v4973 = vadd.f32 0.0, %v4972
      %4974 = vmatmul.bf16.gmra.mxu0 %v4849
      %v4975 = vpop.f32.mrf.mxu0
      %v4976 = vadd.f32 0.0, %v4975
      %v4977 = vpop.f32.mrf.mxu0
      %v4978 = vadd.f32 0.0, %v4977
      %4979 = vmatmul.bf16.gmra.mxu0 %v4852
      %v4980 = vpop.f32.mrf.mxu0
      %v4981 = vadd.f32 0.0, %v4980
      %v4982 = vpop.f32.mrf.mxu0
      %v4983 = vadd.f32 0.0, %v4982
      %4984 = vmatmul.bf16.gmra.mxu0 %v4855
      %v4985 = vpop.f32.mrf.mxu0
      %v4986 = vadd.f32 0.0, %v4985
      %v4987 = vpop.f32.mrf.mxu0
      %v4988 = vadd.f32 0.0, %v4987
      %4989 = vmatmul.bf16.gmra.mxu0 %v4858
      %v4990 = vpop.f32.mrf.mxu0
      %v4991 = vadd.f32 0.0, %v4990
      %v4992 = vpop.f32.mrf.mxu0
      %v4993 = vadd.f32 0.0, %v4992
      %4994 = vmatmul.bf16.gmra.mxu0 %v4861
      %v4995 = vpop.f32.mrf.mxu0
      %v4996 = vadd.f32 0.0, %v4995
      %v4997 = vpop.f32.mrf.mxu0
      %v4998 = vadd.f32 0.0, %v4997
      %4999 = vmatmul.bf16.gmra.mxu0 %v4864
      %v5000 = vpop.f32.mrf.mxu0
      %v5001 = vadd.f32 0.0, %v5000
      %v5002 = vpop.f32.mrf.mxu0
      %v5003 = vadd.f32 0.0, %v5002
      %5004 = vmatmul.bf16.gmra.mxu0 %v4867
      %v5005 = vpop.f32.mrf.mxu0
      %v5006 = vadd.f32 0.0, %v5005
      %v5007 = vpop.f32.mrf.mxu0
      %v5008 = vadd.f32 0.0, %v5007
      %5009 = vmatmul.bf16.gmra.mxu0 %v4870
      %v5010 = vpop.f32.mrf.mxu0
      %v5011 = vadd.f32 0.0, %v5010
      %v5012 = vpop.f32.mrf.mxu0
      %v5013 = vadd.f32 0.0, %v5012
      %5014 = vmatmul.bf16.gmra.mxu0 %v4873
      %v5015 = vpop.f32.mrf.mxu0
      %v5016 = vadd.f32 0.0, %v5015
      %v5017 = vpop.f32.mrf.mxu0
      %v5018 = vadd.f32 0.0, %v5017
      %5019 = vmatmul.bf16.gmra.mxu0 %v4876
      %v5020 = vpop.f32.mrf.mxu0
      %v5021 = vadd.f32 0.0, %v5020
      %v5022 = vpop.f32.mrf.mxu0
      %v5023 = vadd.f32 0.0, %v5022
      %5024 = vmatmul.bf16.gmra.mxu0 %v4879
      %v5025 = vpop.f32.mrf.mxu0
      %v5026 = vadd.f32 0.0, %v5025
      %v5027 = vpop.f32.mrf.mxu0
      %v5028 = vadd.f32 0.0, %v5027
      %5029 = vmatmul.bf16.gmra.mxu0 %v4882
      %v5030 = vpop.f32.mrf.mxu0
      %v5031 = vadd.f32 0.0, %v5030
      %v5032 = vpop.f32.mrf.mxu0
      %v5033 = vadd.f32 0.0, %v5032
      %5034 = vmatmul.bf16.gmra.mxu0 %v4885
      %v5035 = vpop.f32.mrf.mxu0
      %v5036 = vadd.f32 0.0, %v5035
      %v5037 = vpop.f32.mrf.mxu0
      %v5038 = vadd.f32 0.0, %v5037
      %5039 = vmatmul.bf16.gmra.mxu0 %v4888
      %v5040 = vpop.f32.mrf.mxu0
      %v5041 = vadd.f32 0.0, %v5040
      %v5042 = vpop.f32.mrf.mxu0
      %v5043 = vadd.f32 0.0, %v5042
      %5044 = vmatmul.bf16.gmra.mxu0 %v4891
      %v5045 = vpop.f32.mrf.mxu0
      %v5046 = vadd.f32 0.0, %v5045
      %v5047 = vpop.f32.mrf.mxu0
      %v5048 = vadd.f32 0.0, %v5047
      %5049 = vmatmul.bf16.gmra.mxu0 %v4894
      %v5050 = vpop.f32.mrf.mxu0
      %v5051 = vadd.f32 0.0, %v5050
      %v5052 = vpop.f32.mrf.mxu0
      %v5053 = vadd.f32 0.0, %v5052
      %5054 = vmatmul.bf16.gmra.mxu0 %v4897
      %v5055 = vpop.f32.mrf.mxu0
      %v5056 = vadd.f32 0.0, %v5055
      %v5057 = vpop.f32.mrf.mxu0
      %v5058 = vadd.f32 0.0, %v5057
      %5059 = vmatmul.bf16.gmra.mxu0 %v4900
      %v5060 = vpop.f32.mrf.mxu0
      %v5061 = vadd.f32 0.0, %v5060
      %v5062 = vpop.f32.mrf.mxu0
      %v5063 = vadd.f32 0.0, %v5062
      %5064 = vmatmul.bf16.gmra.mxu0 %v4903
      %v5065 = vpop.f32.mrf.mxu0
      %v5066 = vadd.f32 0.0, %v5065
      %v5067 = vpop.f32.mrf.mxu0
      %v5068 = vadd.f32 0.0, %v5067
      %5069 = vmatmul.bf16.gmra.mxu0 %v4906
      %v5070 = vpop.f32.mrf.mxu0
      %v5071 = vadd.f32 0.0, %v5070
      %v5072 = vpop.f32.mrf.mxu0
      %v5073 = vadd.f32 0.0, %v5072
      %5074 = vmatmul.bf16.gmra.mxu0 %v4909
      %v5075 = vpop.f32.mrf.mxu0
      %v5076 = vadd.f32 0.0, %v5075
      %v5077 = vpop.f32.mrf.mxu0
      %v5078 = vadd.f32 0.0, %v5077
      %5079 = vmatmul.bf16.gmra.mxu0 %v4912
      %v5080 = vpop.f32.mrf.mxu0
      %v5081 = vadd.f32 0.0, %v5080
      %v5082 = vpop.f32.mrf.mxu0
      %v5083 = vadd.f32 0.0, %v5082
      %5084 = vmatmul.bf16.gmra.mxu0 %v4915
      %v5085 = vpop.f32.mrf.mxu0
      %v5086 = vadd.f32 0.0, %v5085
      %v5087 = vpop.f32.mrf.mxu0
      %v5088 = vadd.f32 0.0, %v5087
      %5089 = vdwg.mxu0
      %v5098 = vunpack.c.l.b16 %v4542
      %v5099 = vunpack.c.l.b16 %v4543
      %v5100 = vunpack.c.l.b16 %v4544
      %v5101 = vunpack.c.l.b16 %v4545
      %v5102 = vunpack.c.l.b16 %v4546
      %v5103 = vunpack.c.l.b16 %v4547
      %v5104 = vunpack.c.l.b16 %v4548
      %v5105 = vunpack.c.l.b16 %v4549
      %v5106 = vpack.c.b16 %v5099, %v5098
      %v5107 = vpack.c.b16 %v5101, %v5100
      %v5108 = vpack.c.b16 %v5103, %v5102
      %v5109 = vpack.c.b16 %v5105, %v5104
      %v5119 = vunpack.c.l.b16 %v4606
      %v5120 = vunpack.c.l.b16 %v4607
      %v5121 = vunpack.c.l.b16 %v4608
      %v5122 = vunpack.c.l.b16 %v4609
      %v5123 = vunpack.c.l.b16 %v4610
      %v5124 = vunpack.c.l.b16 %v4611
      %v5125 = vunpack.c.l.b16 %v4612
      %v5126 = vunpack.c.l.b16 %v4613
      %v5127 = vunpack.c.l.b16 %v4614
      %v5128 = vpack.c.b16 %v5120, %v5119
      %v5129 = vpack.c.b16 %v5122, %v5121
      %v5130 = vpack.c.b16 %v5124, %v5123
      %v5131 = vpack.c.b16 %v5126, %v5125
      %v5132 = vpack.c.b16 %v5127, %v5127
      %v5138 = vsel %vm4820, %v5106, 0
      %v5141 = vsel %vm4820, %v5107, 0
      %v5144 = vsel %vm4820, %v5108, 0
      %v5147 = vsel %vm4820, %v5109, 0
      %v5150 = vsel %vm4917, %v5132, 0
      %5152 = vmatpush.bf16.msra.mxu0 0
      %5153 = vmatpush.bf16.msra.mxu0 0
      %5154 = vmatpush.bf16.msra.mxu0 0
      %5155 = vmatpush.bf16.msra.mxu0 %v5150
      %5156 = vmatpush.bf16.msra.mxu0 %v5131
      %5157 = vmatpush.bf16.msra.mxu0 %v5130
      %5158 = vmatpush.bf16.msra.mxu0 %v5129
      %5159 = vmatpush.bf16.msra.mxu0 %v5128
      %5160 = vmatmul.bf16.gmra.mxu0 %v5138
      %v5161 = vpop.f32.mrf.mxu0
      %v5162 = vadd.f32 %v4931, %v5161
      %v5163 = vpop.f32.mrf.mxu0
      %v5164 = vadd.f32 %v4933, %v5163
      %5165 = vmatmul.bf16.gmra.mxu0 %v5141
      %v5166 = vpop.f32.mrf.mxu0
      %v5167 = vadd.f32 %v4936, %v5166
      %v5168 = vpop.f32.mrf.mxu0
      %v5169 = vadd.f32 %v4938, %v5168
      %5170 = vmatmul.bf16.gmra.mxu0 %v5144
      %v5171 = vpop.f32.mrf.mxu0
      %v5172 = vadd.f32 %v4941, %v5171
      %v5173 = vpop.f32.mrf.mxu0
      %v5174 = vadd.f32 %v4943, %v5173
      %5175 = vmatmul.bf16.gmra.mxu0 %v5147
      %v5176 = vpop.f32.mrf.mxu0
      %v5177 = vadd.f32 %v4946, %v5176
      %v5178 = vpop.f32.mrf.mxu0
      %v5179 = vadd.f32 %v4948, %v5178
      %5180 = vmatmul.bf16.gmra.mxu0 %v4822
      %v5181 = vpop.f32.mrf.mxu0
      %v5182 = vadd.f32 %v4951, %v5181
      %v5183 = vpop.f32.mrf.mxu0
      %v5184 = vadd.f32 %v4953, %v5183
      %5185 = vmatmul.bf16.gmra.mxu0 %v4825
      %v5186 = vpop.f32.mrf.mxu0
      %v5187 = vadd.f32 %v4956, %v5186
      %v5188 = vpop.f32.mrf.mxu0
      %v5189 = vadd.f32 %v4958, %v5188
      %5190 = vmatmul.bf16.gmra.mxu0 %v4828
      %v5191 = vpop.f32.mrf.mxu0
      %v5192 = vadd.f32 %v4961, %v5191
      %v5193 = vpop.f32.mrf.mxu0
      %v5194 = vadd.f32 %v4963, %v5193
      %5195 = vmatmul.bf16.gmra.mxu0 %v4831
      %v5196 = vpop.f32.mrf.mxu0
      %v5197 = vadd.f32 %v4966, %v5196
      %v5198 = vpop.f32.mrf.mxu0
      %v5199 = vadd.f32 %v4968, %v5198
      %5200 = vmatmul.bf16.gmra.mxu0 %v4834
      %v5201 = vpop.f32.mrf.mxu0
      %v5202 = vadd.f32 %v4971, %v5201
      %v5203 = vpop.f32.mrf.mxu0
      %v5204 = vadd.f32 %v4973, %v5203
      %5205 = vmatmul.bf16.gmra.mxu0 %v4837
      %v5206 = vpop.f32.mrf.mxu0
      %v5207 = vadd.f32 %v4976, %v5206
      %v5208 = vpop.f32.mrf.mxu0
      %v5209 = vadd.f32 %v4978, %v5208
      %5210 = vmatmul.bf16.gmra.mxu0 %v4840
      %v5211 = vpop.f32.mrf.mxu0
      %v5212 = vadd.f32 %v4981, %v5211
      %v5213 = vpop.f32.mrf.mxu0
      %v5214 = vadd.f32 %v4983, %v5213
      %5215 = vmatmul.bf16.gmra.mxu0 %v4843
      %v5216 = vpop.f32.mrf.mxu0
      %v5217 = vadd.f32 %v4986, %v5216
      %v5218 = vpop.f32.mrf.mxu0
      %v5219 = vadd.f32 %v4988, %v5218
      %5220 = vmatmul.bf16.gmra.mxu0 %v4846
      %v5221 = vpop.f32.mrf.mxu0
      %v5222 = vadd.f32 %v4991, %v5221
      %v5223 = vpop.f32.mrf.mxu0
      %v5224 = vadd.f32 %v4993, %v5223
      %5225 = vmatmul.bf16.gmra.mxu0 %v4849
      %v5226 = vpop.f32.mrf.mxu0
      %v5227 = vadd.f32 %v4996, %v5226
      %v5228 = vpop.f32.mrf.mxu0
      %v5229 = vadd.f32 %v4998, %v5228
      %5230 = vmatmul.bf16.gmra.mxu0 %v4852
      %v5231 = vpop.f32.mrf.mxu0
      %v5232 = vadd.f32 %v5001, %v5231
      %v5233 = vpop.f32.mrf.mxu0
      %v5234 = vadd.f32 %v5003, %v5233
      %5235 = vmatmul.bf16.gmra.mxu0 %v4855
      %v5236 = vpop.f32.mrf.mxu0
      %v5237 = vadd.f32 %v5006, %v5236
      %v5238 = vpop.f32.mrf.mxu0
      %v5239 = vadd.f32 %v5008, %v5238
      %5240 = vmatmul.bf16.gmra.mxu0 %v4858
      %v5241 = vpop.f32.mrf.mxu0
      %v5242 = vadd.f32 %v5011, %v5241
      %v5243 = vpop.f32.mrf.mxu0
      %v5244 = vadd.f32 %v5013, %v5243
      %5245 = vmatmul.bf16.gmra.mxu0 %v4861
      %v5246 = vpop.f32.mrf.mxu0
      %v5247 = vadd.f32 %v5016, %v5246
      %v5248 = vpop.f32.mrf.mxu0
      %v5249 = vadd.f32 %v5018, %v5248
      %5250 = vmatmul.bf16.gmra.mxu0 %v4864
      %v5251 = vpop.f32.mrf.mxu0
      %v5252 = vadd.f32 %v5021, %v5251
      %v5253 = vpop.f32.mrf.mxu0
      %v5254 = vadd.f32 %v5023, %v5253
      %5255 = vmatmul.bf16.gmra.mxu0 %v4867
      %v5256 = vpop.f32.mrf.mxu0
      %v5257 = vadd.f32 %v5026, %v5256
      %v5258 = vpop.f32.mrf.mxu0
      %v5259 = vadd.f32 %v5028, %v5258
      %5260 = vmatmul.bf16.gmra.mxu0 %v4870
      %v5261 = vpop.f32.mrf.mxu0
      %v5262 = vadd.f32 %v5031, %v5261
      %v5263 = vpop.f32.mrf.mxu0
      %v5264 = vadd.f32 %v5033, %v5263
      %5265 = vmatmul.bf16.gmra.mxu0 %v4873
      %v5266 = vpop.f32.mrf.mxu0
      %v5267 = vadd.f32 %v5036, %v5266
      %v5268 = vpop.f32.mrf.mxu0
      %v5269 = vadd.f32 %v5038, %v5268
      %5270 = vmatmul.bf16.gmra.mxu0 %v4876
      %v5271 = vpop.f32.mrf.mxu0
      %v5272 = vadd.f32 %v5041, %v5271
      %v5273 = vpop.f32.mrf.mxu0
      %v5274 = vadd.f32 %v5043, %v5273
      %5275 = vmatmul.bf16.gmra.mxu0 %v4879
      %v5276 = vpop.f32.mrf.mxu0
      %v5277 = vadd.f32 %v5046, %v5276
      %v5278 = vpop.f32.mrf.mxu0
      %v5279 = vadd.f32 %v5048, %v5278
      %5280 = vmatmul.bf16.gmra.mxu0 %v4882
      %v5281 = vpop.f32.mrf.mxu0
      %v5282 = vadd.f32 %v5051, %v5281
      %v5283 = vpop.f32.mrf.mxu0
      %v5284 = vadd.f32 %v5053, %v5283
      %5285 = vmatmul.bf16.gmra.mxu0 %v4885
      %v5286 = vpop.f32.mrf.mxu0
      %v5287 = vadd.f32 %v5056, %v5286
      %v5288 = vpop.f32.mrf.mxu0
      %v5289 = vadd.f32 %v5058, %v5288
      %5290 = vmatmul.bf16.gmra.mxu0 %v4888
      %v5291 = vpop.f32.mrf.mxu0
      %v5292 = vadd.f32 %v5061, %v5291
      %v5293 = vpop.f32.mrf.mxu0
      %v5294 = vadd.f32 %v5063, %v5293
      %5295 = vmatmul.bf16.gmra.mxu0 %v4891
      %v5296 = vpop.f32.mrf.mxu0
      %v5297 = vadd.f32 %v5066, %v5296
      %v5298 = vpop.f32.mrf.mxu0
      %v5299 = vadd.f32 %v5068, %v5298
      %5300 = vmatmul.bf16.gmra.mxu0 %v4894
      %v5301 = vpop.f32.mrf.mxu0
      %v5302 = vadd.f32 %v5071, %v5301
      %v5303 = vpop.f32.mrf.mxu0
      %v5304 = vadd.f32 %v5073, %v5303
      %5305 = vmatmul.bf16.gmra.mxu0 %v4897
      %v5306 = vpop.f32.mrf.mxu0
      %v5307 = vadd.f32 %v5076, %v5306
      %v5308 = vpop.f32.mrf.mxu0
      %v5309 = vadd.f32 %v5078, %v5308
      %5310 = vmatmul.bf16.gmra.mxu0 %v4900
      %v5311 = vpop.f32.mrf.mxu0
      %v5312 = vadd.f32 %v5081, %v5311
      %v5313 = vpop.f32.mrf.mxu0
      %v5314 = vadd.f32 %v5083, %v5313
      %5315 = vmatmul.bf16.gmra.mxu0 %v4903
      %v5316 = vpop.f32.mrf.mxu0
      %v5317 = vadd.f32 %v5086, %v5316
      %v5318 = vpop.f32.mrf.mxu0
      %v5319 = vadd.f32 %v5088, %v5318
      %5320 = vdwg.mxu0
      %v5321 = vld [vmem:[#allocation3 + $0x40] sm:$0xf]
      %v5322 = vld [vmem:[#allocation3 + $0x44] sm:$0xf]
      %v5323 = vld [vmem:[#allocation3 + $0x48] sm:$0xf]
      %v5324 = vld [vmem:[#allocation3 + $0x4c] sm:$0xf]
      %v5325 = vld [vmem:[#allocation3 + $0x50] sm:$0xf]
      %v5326 = vld [vmem:[#allocation3 + $0x54] sm:$0xf]
      %v5327 = vld [vmem:[#allocation3 + $0x58] sm:$0xf]
      %v5328 = vld [vmem:[#allocation3 + $0x5c] sm:$0xf]
      %v5329 = vld [vmem:[#allocation3 + $0x60] sm:$0xf]
      %v5330 = vld [vmem:[#allocation3 + $0x64] sm:$0xf]
      %v5331 = vld [vmem:[#allocation3 + $0x68] sm:$0xf]
      %v5332 = vld [vmem:[#allocation3 + $0x6c] sm:$0xf]
      %v5333 = vld [vmem:[#allocation3 + $0x70] sm:$0xf]
      %v5334 = vld [vmem:[#allocation3 + $0x74] sm:$0xf]
      %v5335 = vld [vmem:[#allocation3 + $0x78] sm:$0xf]
      %v5336 = vld [vmem:[#allocation3 + $0x7c] sm:$0xf]
      %v5337 = vld [vmem:[#allocation3 + $0x80] sm:$0xf]
      %v5338 = vld [vmem:[#allocation3 + $0x84] sm:$0xf]
      %v5339 = vld [vmem:[#allocation3 + $0x88] sm:$0xf]
      %v5340 = vld [vmem:[#allocation3 + $0x8c] sm:$0xf]
      %v5341 = vld [vmem:[#allocation3 + $0x90] sm:$0xf]
      %v5342 = vld [vmem:[#allocation3 + $0x94] sm:$0xf]
      %v5343 = vld [vmem:[#allocation3 + $0x98] sm:$0xf]
      %v5344 = vld [vmem:[#allocation3 + $0x9c] sm:$0xf]
      %v5345 = vld [vmem:[#allocation3 + $0xa0] sm:$0xf]
      %v5346 = vld [vmem:[#allocation3 + $0xa4] sm:$0xf]
      %v5347 = vld [vmem:[#allocation3 + $0xa8] sm:$0xf]
      %v5348 = vld [vmem:[#allocation3 + $0xac] sm:$0xf]
      %v5349 = vld [vmem:[#allocation3 + $0xb0] sm:$0xf]
      %v5350 = vld [vmem:[#allocation3 + $0xb4] sm:$0xf]
      %v5351 = vld [vmem:[#allocation3 + $0xb8] sm:$0xf]
      %v5352 = vld [vmem:[#allocation3 + $0xbc] sm:$0xf]
      %v5353 = vld [vmem:[#allocation3 + $0xc0] sm:$0xf]
      %v5354 = vld [vmem:[#allocation3 + $0xc4] sm:$0xf]
      %v5355 = vld [vmem:[#allocation3 + $0xc8] sm:$0xf]
      %v5356 = vld [vmem:[#allocation3 + $0xcc] sm:$0xf]
      %v5357 = vld [vmem:[#allocation3 + $0xd0] sm:$0xf]
      %v5358 = vld [vmem:[#allocation3 + $0xd4] sm:$0xf]
      %v5359 = vld [vmem:[#allocation3 + $0xd8] sm:$0xf]
      %v5360 = vld [vmem:[#allocation3 + $0xdc] sm:$0xf]
      %v5361 = vld [vmem:[#allocation3 + $0xe0] sm:$0xf]
      %v5362 = vld [vmem:[#allocation3 + $0xe4] sm:$0xf]
      %v5363 = vld [vmem:[#allocation3 + $0xe8] sm:$0xf]
      %v5364 = vld [vmem:[#allocation3 + $0xec] sm:$0xf]
      %v5365 = vld [vmem:[#allocation3 + $0xf0] sm:$0xf]
      %v5366 = vld [vmem:[#allocation3 + $0xf4] sm:$0xf]
      %v5367 = vld [vmem:[#allocation3 + $0xf8] sm:$0xf]
      %v5368 = vld [vmem:[#allocation3 + $0xfc] sm:$0xf]
      %v5369 = vld [vmem:[#allocation3 + $0x100] sm:$0xf]
      %v5370 = vld [vmem:[#allocation3 + $0x104] sm:$0xf]
      %v5371 = vld [vmem:[#allocation3 + $0x108] sm:$0xf]
      %v5372 = vld [vmem:[#allocation3 + $0x10c] sm:$0xf]
      %v5373 = vld [vmem:[#allocation3 + $0x110] sm:$0xf]
      %v5374 = vld [vmem:[#allocation3 + $0x114] sm:$0xf]
      %v5375 = vld [vmem:[#allocation3 + $0x118] sm:$0xf]
      %v5376 = vld [vmem:[#allocation3 + $0x11c] sm:$0xf]
      %v5377 = vld [vmem:[#allocation3 + $0x120] sm:$0xf]
      %v5378 = vld [vmem:[#allocation3 + $0x124] sm:$0xf]
      %v5379 = vld [vmem:[#allocation3 + $0x128] sm:$0xf]
      %v5380 = vld [vmem:[#allocation3 + $0x12c] sm:$0xf]
      %v5381 = vld [vmem:[#allocation3 + $0x130] sm:$0xf]
      %v5382 = vld [vmem:[#allocation3 + $0x134] sm:$0xf]
      %v5383 = vld [vmem:[#allocation3 + $0x138] sm:$0xf]
      %v5384 = vld [vmem:[#allocation3 + $0x13c] sm:$0xf]
      %s5385 = scalar_lea.vmem %s3, 72
      %v5386 = vld [vmem:[%s5385] sm:$0xf]
      %v5387 = vld [vmem:[%s5385 + $0x4] sm:$0xf]
      %v5388 = vld [vmem:[%s5385 + $0x8] sm:$0xf]
      %v5389 = vld [vmem:[%s5385 + $0xc] sm:$0xf]
      %v5390 = vld [vmem:[%s5385 + $0x10] sm:$0xf]
      %v5391 = vld [vmem:[%s5385 + $0x14] sm:$0xf]
      %v5392 = vld [vmem:[%s5385 + $0x18] sm:$0xf]
      %v5393 = vld [vmem:[%s5385 + $0x1c] sm:$0xf]
      %v5394 = vld [vmem:[%s5385 + $0x20] sm:$0xf]
      %v5459 = vunpack.c.l.b16 %v5321
      %v5460 = vunpack.c.l.b16 %v5322
      %v5461 = vunpack.c.l.b16 %v5323
      %v5462 = vunpack.c.l.b16 %v5324
      %v5463 = vunpack.c.l.b16 %v5325
      %v5464 = vunpack.c.l.b16 %v5326
      %v5465 = vunpack.c.l.b16 %v5327
      %v5466 = vunpack.c.l.b16 %v5328
      %v5467 = vunpack.c.l.b16 %v5329
      %v5468 = vunpack.c.l.b16 %v5330
      %v5469 = vunpack.c.l.b16 %v5331
      %v5470 = vunpack.c.l.b16 %v5332
      %v5471 = vunpack.c.l.b16 %v5333
      %v5472 = vunpack.c.l.b16 %v5334
      %v5473 = vunpack.c.l.b16 %v5335
      %v5474 = vunpack.c.l.b16 %v5336
      %v5475 = vunpack.c.l.b16 %v5337
      %v5476 = vunpack.c.l.b16 %v5338
      %v5477 = vunpack.c.l.b16 %v5339
      %v5478 = vunpack.c.l.b16 %v5340
      %v5479 = vunpack.c.l.b16 %v5341
      %v5480 = vunpack.c.l.b16 %v5342
      %v5481 = vunpack.c.l.b16 %v5343
      %v5482 = vunpack.c.l.b16 %v5344
      %v5483 = vunpack.c.l.b16 %v5345
      %v5484 = vunpack.c.l.b16 %v5346
      %v5485 = vunpack.c.l.b16 %v5347
      %v5486 = vunpack.c.l.b16 %v5348
      %v5487 = vunpack.c.l.b16 %v5349
      %v5488 = vunpack.c.l.b16 %v5350
      %v5489 = vunpack.c.l.b16 %v5351
      %v5490 = vunpack.c.l.b16 %v5352
      %v5491 = vunpack.c.l.b16 %v5353
      %v5492 = vunpack.c.l.b16 %v5354
      %v5493 = vunpack.c.l.b16 %v5355
      %v5494 = vunpack.c.l.b16 %v5356
      %v5495 = vunpack.c.l.b16 %v5357
      %v5496 = vunpack.c.l.b16 %v5358
      %v5497 = vunpack.c.l.b16 %v5359
      %v5498 = vunpack.c.l.b16 %v5360
      %v5499 = vunpack.c.l.b16 %v5361
      %v5500 = vunpack.c.l.b16 %v5362
      %v5501 = vunpack.c.l.b16 %v5363
      %v5502 = vunpack.c.l.b16 %v5364
      %v5503 = vunpack.c.l.b16 %v5365
      %v5504 = vunpack.c.l.b16 %v5366
      %v5505 = vunpack.c.l.b16 %v5367
      %v5506 = vunpack.c.l.b16 %v5368
      %v5507 = vunpack.c.l.b16 %v5369
      %v5508 = vunpack.c.l.b16 %v5370
      %v5509 = vunpack.c.l.b16 %v5371
      %v5510 = vunpack.c.l.b16 %v5372
      %v5511 = vunpack.c.l.b16 %v5373
      %v5512 = vunpack.c.l.b16 %v5374
      %v5513 = vunpack.c.l.b16 %v5375
      %v5514 = vunpack.c.l.b16 %v5376
      %v5515 = vunpack.c.l.b16 %v5377
      %v5516 = vunpack.c.l.b16 %v5378
      %v5517 = vunpack.c.l.b16 %v5379
      %v5518 = vunpack.c.l.b16 %v5380
      %v5519 = vunpack.c.l.b16 %v5381
      %v5520 = vunpack.c.l.b16 %v5382
      %v5521 = vunpack.c.l.b16 %v5383
      %v5522 = vunpack.c.l.b16 %v5384
      %v5523 = vpack.c.b16 %v5460, %v5459
      %v5524 = vpack.c.b16 %v5462, %v5461
      %v5525 = vpack.c.b16 %v5464, %v5463
      %v5526 = vpack.c.b16 %v5466, %v5465
      %v5527 = vpack.c.b16 %v5468, %v5467
      %v5528 = vpack.c.b16 %v5470, %v5469
      %v5529 = vpack.c.b16 %v5472, %v5471
      %v5530 = vpack.c.b16 %v5474, %v5473
      %v5531 = vpack.c.b16 %v5476, %v5475
      %v5532 = vpack.c.b16 %v5478, %v5477
      %v5533 = vpack.c.b16 %v5480, %v5479
      %v5534 = vpack.c.b16 %v5482, %v5481
      %v5535 = vpack.c.b16 %v5484, %v5483
      %v5536 = vpack.c.b16 %v5486, %v5485
      %v5537 = vpack.c.b16 %v5488, %v5487
      %v5538 = vpack.c.b16 %v5490, %v5489
      %v5539 = vpack.c.b16 %v5492, %v5491
      %v5540 = vpack.c.b16 %v5494, %v5493
      %v5541 = vpack.c.b16 %v5496, %v5495
      %v5542 = vpack.c.b16 %v5498, %v5497
      %v5543 = vpack.c.b16 %v5500, %v5499
      %v5544 = vpack.c.b16 %v5502, %v5501
      %v5545 = vpack.c.b16 %v5504, %v5503
      %v5546 = vpack.c.b16 %v5506, %v5505
      %v5547 = vpack.c.b16 %v5508, %v5507
      %v5548 = vpack.c.b16 %v5510, %v5509
      %v5549 = vpack.c.b16 %v5512, %v5511
      %v5550 = vpack.c.b16 %v5514, %v5513
      %v5551 = vpack.c.b16 %v5516, %v5515
      %v5552 = vpack.c.b16 %v5518, %v5517
      %v5553 = vpack.c.b16 %v5520, %v5519
      %v5554 = vpack.c.b16 %v5522, %v5521
      %v5564 = vunpack.c.l.b16 %v5386
      %v5565 = vunpack.c.l.b16 %v5387
      %v5566 = vunpack.c.l.b16 %v5388
      %v5567 = vunpack.c.l.b16 %v5389
      %v5568 = vunpack.c.l.b16 %v5390
      %v5569 = vunpack.c.l.b16 %v5391
      %v5570 = vunpack.c.l.b16 %v5392
      %v5571 = vunpack.c.l.b16 %v5393
      %v5572 = vunpack.c.l.b16 %v5394
      %v5573 = vpack.c.b16 %v5565, %v5564
      %v5574 = vpack.c.b16 %v5567, %v5566
      %v5575 = vpack.c.b16 %v5569, %v5568
      %v5576 = vpack.c.b16 %v5571, %v5570
      %v5577 = vpack.c.b16 %v5572, %v5572
      %v5583 = vsel %vm4820, %v5523, 0
      %v5586 = vsel %vm4820, %v5524, 0
      %v5589 = vsel %vm4820, %v5525, 0
      %v5592 = vsel %vm4820, %v5526, 0
      %v5595 = vsel %vm4820, %v5527, 0
      %v5598 = vsel %vm4820, %v5528, 0
      %v5601 = vsel %vm4820, %v5529, 0
      %v5604 = vsel %vm4820, %v5530, 0
      %v5607 = vsel %vm4820, %v5531, 0
      %v5610 = vsel %vm4820, %v5532, 0
      %v5613 = vsel %vm4820, %v5533, 0
      %v5616 = vsel %vm4820, %v5534, 0
      %v5619 = vsel %vm4820, %v5535, 0
      %v5622 = vsel %vm4820, %v5536, 0
      %v5625 = vsel %vm4820, %v5537, 0
      %v5628 = vsel %vm4820, %v5538, 0
      %v5631 = vsel %vm4820, %v5539, 0
      %v5634 = vsel %vm4820, %v5540, 0
      %v5637 = vsel %vm4820, %v5541, 0
      %v5640 = vsel %vm4820, %v5542, 0
      %v5643 = vsel %vm4820, %v5543, 0
      %v5646 = vsel %vm4820, %v5544, 0
      %v5649 = vsel %vm4820, %v5545, 0
      %v5652 = vsel %vm4820, %v5546, 0
      %v5655 = vsel %vm4820, %v5547, 0
      %v5658 = vsel %vm4820, %v5548, 0
      %v5661 = vsel %vm4820, %v5549, 0
      %v5664 = vsel %vm4820, %v5550, 0
      %v5667 = vsel %vm4820, %v5551, 0
      %v5670 = vsel %vm4820, %v5552, 0
      %v5673 = vsel %vm4820, %v5553, 0
      %v5676 = vsel %vm4820, %v5554, 0
      %v5679 = vsel %vm4917, %v5577, 0
      %5681 = vmatpush.bf16.msra.mxu0 0
      %5682 = vmatpush.bf16.msra.mxu0 0
      %5683 = vmatpush.bf16.msra.mxu0 0
      %5684 = vmatpush.bf16.msra.mxu0 %v5679
      %5685 = vmatpush.bf16.msra.mxu0 %v5576
      %5686 = vmatpush.bf16.msra.mxu0 %v5575
      %5687 = vmatpush.bf16.msra.mxu0 %v5574
      %5688 = vmatpush.bf16.msra.mxu0 %v5573
      %5689 = vmatmul.bf16.gmra.mxu0 %v5583
      %v5690 = vpop.f32.mrf.mxu0
      %v5691 = vadd.f32 0.0, %v5690
      %v5692 = vpop.f32.mrf.mxu0
      %v5693 = vadd.f32 0.0, %v5692
      %5694 = vmatmul.bf16.gmra.mxu0 %v5586
      %v5695 = vpop.f32.mrf.mxu0
      %v5696 = vadd.f32 0.0, %v5695
      %v5697 = vpop.f32.mrf.mxu0
      %v5698 = vadd.f32 0.0, %v5697
      %5699 = vmatmul.bf16.gmra.mxu0 %v5589
      %v5700 = vpop.f32.mrf.mxu0
      %v5701 = vadd.f32 0.0, %v5700
      %v5702 = vpop.f32.mrf.mxu0
      %v5703 = vadd.f32 0.0, %v5702
      %5704 = vmatmul.bf16.gmra.mxu0 %v5592
      %v5705 = vpop.f32.mrf.mxu0
      %v5706 = vadd.f32 0.0, %v5705
      %v5707 = vpop.f32.mrf.mxu0
      %v5708 = vadd.f32 0.0, %v5707
      %5709 = vmatmul.bf16.gmra.mxu0 %v5595
      %v5710 = vpop.f32.mrf.mxu0
      %v5711 = vadd.f32 0.0, %v5710
      %v5712 = vpop.f32.mrf.mxu0
      %v5713 = vadd.f32 0.0, %v5712
      %5714 = vmatmul.bf16.gmra.mxu0 %v5598
      %v5715 = vpop.f32.mrf.mxu0
      %v5716 = vadd.f32 0.0, %v5715
      %v5717 = vpop.f32.mrf.mxu0
      %v5718 = vadd.f32 0.0, %v5717
      %5719 = vmatmul.bf16.gmra.mxu0 %v5601
      %v5720 = vpop.f32.mrf.mxu0
      %v5721 = vadd.f32 0.0, %v5720
      %v5722 = vpop.f32.mrf.mxu0
      %v5723 = vadd.f32 0.0, %v5722
      %5724 = vmatmul.bf16.gmra.mxu0 %v5604
      %v5725 = vpop.f32.mrf.mxu0
      %v5726 = vadd.f32 0.0, %v5725
      %v5727 = vpop.f32.mrf.mxu0
      %v5728 = vadd.f32 0.0, %v5727
      %5729 = vmatmul.bf16.gmra.mxu0 %v5607
      %v5730 = vpop.f32.mrf.mxu0
      %v5731 = vadd.f32 0.0, %v5730
      %v5732 = vpop.f32.mrf.mxu0
      %v5733 = vadd.f32 0.0, %v5732
      %5734 = vmatmul.bf16.gmra.mxu0 %v5610
      %v5735 = vpop.f32.mrf.mxu0
      %v5736 = vadd.f32 0.0, %v5735
      %v5737 = vpop.f32.mrf.mxu0
      %v5738 = vadd.f32 0.0, %v5737
      %5739 = vmatmul.bf16.gmra.mxu0 %v5613
      %v5740 = vpop.f32.mrf.mxu0
      %v5741 = vadd.f32 0.0, %v5740
      %v5742 = vpop.f32.mrf.mxu0
      %v5743 = vadd.f32 0.0, %v5742
      %5744 = vmatmul.bf16.gmra.mxu0 %v5616
      %v5745 = vpop.f32.mrf.mxu0
      %v5746 = vadd.f32 0.0, %v5745
      %v5747 = vpop.f32.mrf.mxu0
      %v5748 = vadd.f32 0.0, %v5747
      %5749 = vmatmul.bf16.gmra.mxu0 %v5619
      %v5750 = vpop.f32.mrf.mxu0
      %v5751 = vadd.f32 0.0, %v5750
      %v5752 = vpop.f32.mrf.mxu0
      %v5753 = vadd.f32 0.0, %v5752
      %5754 = vmatmul.bf16.gmra.mxu0 %v5622
      %v5755 = vpop.f32.mrf.mxu0
      %v5756 = vadd.f32 0.0, %v5755
      %v5757 = vpop.f32.mrf.mxu0
      %v5758 = vadd.f32 0.0, %v5757
      %5759 = vmatmul.bf16.gmra.mxu0 %v5625
      %v5760 = vpop.f32.mrf.mxu0
      %v5761 = vadd.f32 0.0, %v5760
      %v5762 = vpop.f32.mrf.mxu0
      %v5763 = vadd.f32 0.0, %v5762
      %5764 = vmatmul.bf16.gmra.mxu0 %v5628
      %v5765 = vpop.f32.mrf.mxu0
      %v5766 = vadd.f32 0.0, %v5765
      %v5767 = vpop.f32.mrf.mxu0
      %v5768 = vadd.f32 0.0, %v5767
      %5769 = vmatmul.bf16.gmra.mxu0 %v5631
      %v5770 = vpop.f32.mrf.mxu0
      %v5771 = vadd.f32 0.0, %v5770
      %v5772 = vpop.f32.mrf.mxu0
      %v5773 = vadd.f32 0.0, %v5772
      %5774 = vmatmul.bf16.gmra.mxu0 %v5634
      %v5775 = vpop.f32.mrf.mxu0
      %v5776 = vadd.f32 0.0, %v5775
      %v5777 = vpop.f32.mrf.mxu0
      %v5778 = vadd.f32 0.0, %v5777
      %5779 = vmatmul.bf16.gmra.mxu0 %v5637
      %v5780 = vpop.f32.mrf.mxu0
      %v5781 = vadd.f32 0.0, %v5780
      %v5782 = vpop.f32.mrf.mxu0
      %v5783 = vadd.f32 0.0, %v5782
      %5784 = vmatmul.bf16.gmra.mxu0 %v5640
      %v5785 = vpop.f32.mrf.mxu0
      %v5786 = vadd.f32 0.0, %v5785
      %v5787 = vpop.f32.mrf.mxu0
      %v5788 = vadd.f32 0.0, %v5787
      %5789 = vmatmul.bf16.gmra.mxu0 %v5643
      %v5790 = vpop.f32.mrf.mxu0
      %v5791 = vadd.f32 0.0, %v5790
      %v5792 = vpop.f32.mrf.mxu0
      %v5793 = vadd.f32 0.0, %v5792
      %5794 = vmatmul.bf16.gmra.mxu0 %v5646
      %v5795 = vpop.f32.mrf.mxu0
      %v5796 = vadd.f32 0.0, %v5795
      %v5797 = vpop.f32.mrf.mxu0
      %v5798 = vadd.f32 0.0, %v5797
      %5799 = vmatmul.bf16.gmra.mxu0 %v5649
      %v5800 = vpop.f32.mrf.mxu0
      %v5801 = vadd.f32 0.0, %v5800
      %v5802 = vpop.f32.mrf.mxu0
      %v5803 = vadd.f32 0.0, %v5802
      %5804 = vmatmul.bf16.gmra.mxu0 %v5652
      %v5805 = vpop.f32.mrf.mxu0
      %v5806 = vadd.f32 0.0, %v5805
      %v5807 = vpop.f32.mrf.mxu0
      %v5808 = vadd.f32 0.0, %v5807
      %5809 = vmatmul.bf16.gmra.mxu0 %v5655
      %v5810 = vpop.f32.mrf.mxu0
      %v5811 = vadd.f32 0.0, %v5810
      %v5812 = vpop.f32.mrf.mxu0
      %v5813 = vadd.f32 0.0, %v5812
      %5814 = vmatmul.bf16.gmra.mxu0 %v5658
      %v5815 = vpop.f32.mrf.mxu0
      %v5816 = vadd.f32 0.0, %v5815
      %v5817 = vpop.f32.mrf.mxu0
      %v5818 = vadd.f32 0.0, %v5817
      %5819 = vmatmul.bf16.gmra.mxu0 %v5661
      %v5820 = vpop.f32.mrf.mxu0
      %v5821 = vadd.f32 0.0, %v5820
      %v5822 = vpop.f32.mrf.mxu0
      %v5823 = vadd.f32 0.0, %v5822
      %5824 = vmatmul.bf16.gmra.mxu0 %v5664
      %v5825 = vpop.f32.mrf.mxu0
      %v5826 = vadd.f32 0.0, %v5825
      %v5827 = vpop.f32.mrf.mxu0
      %v5828 = vadd.f32 0.0, %v5827
      %5829 = vmatmul.bf16.gmra.mxu0 %v5667
      %v5830 = vpop.f32.mrf.mxu0
      %v5831 = vadd.f32 0.0, %v5830
      %v5832 = vpop.f32.mrf.mxu0
      %v5833 = vadd.f32 0.0, %v5832
      %5834 = vmatmul.bf16.gmra.mxu0 %v5670
      %v5835 = vpop.f32.mrf.mxu0
      %v5836 = vadd.f32 0.0, %v5835
      %v5837 = vpop.f32.mrf.mxu0
      %v5838 = vadd.f32 0.0, %v5837
      %5839 = vmatmul.bf16.gmra.mxu0 %v5673
      %v5840 = vpop.f32.mrf.mxu0
      %v5841 = vadd.f32 0.0, %v5840
      %v5842 = vpop.f32.mrf.mxu0
      %v5843 = vadd.f32 0.0, %v5842
      %5844 = vmatmul.bf16.gmra.mxu0 %v5676
      %v5845 = vpop.f32.mrf.mxu0
      %v5846 = vadd.f32 0.0, %v5845
      %v5847 = vpop.f32.mrf.mxu0
      %v5848 = vadd.f32 0.0, %v5847
      %5849 = vdwg.mxu0
      %v5850 = vadd.f32 %v5162, %v5691
      %v5851 = vadd.f32 %v5164, %v5693
      %v5852 = vadd.f32 %v5167, %v5696
      %v5853 = vadd.f32 %v5169, %v5698
      %v5854 = vadd.f32 %v5172, %v5701
      %v5855 = vadd.f32 %v5174, %v5703
      %v5856 = vadd.f32 %v5177, %v5706
      %v5857 = vadd.f32 %v5179, %v5708
      %v5858 = vadd.f32 %v5182, %v5711
      %v5859 = vadd.f32 %v5184, %v5713
      %v5860 = vadd.f32 %v5187, %v5716
      %v5861 = vadd.f32 %v5189, %v5718
      %v5862 = vadd.f32 %v5192, %v5721
      %v5863 = vadd.f32 %v5194, %v5723
      %v5864 = vadd.f32 %v5197, %v5726
      %v5865 = vadd.f32 %v5199, %v5728
      %v5866 = vadd.f32 %v5202, %v5731
      %v5867 = vadd.f32 %v5204, %v5733
      %v5868 = vadd.f32 %v5207, %v5736
      %v5869 = vadd.f32 %v5209, %v5738
      %v5870 = vadd.f32 %v5212, %v5741
      %v5871 = vadd.f32 %v5214, %v5743
      %v5872 = vadd.f32 %v5217, %v5746
      %v5873 = vadd.f32 %v5219, %v5748
      %v5874 = vadd.f32 %v5222, %v5751
      %v5875 = vadd.f32 %v5224, %v5753
      %v5876 = vadd.f32 %v5227, %v5756
      %v5877 = vadd.f32 %v5229, %v5758
      %v5878 = vadd.f32 %v5232, %v5761
      %v5879 = vadd.f32 %v5234, %v5763
      %v5880 = vadd.f32 %v5237, %v5766
      %v5881 = vadd.f32 %v5239, %v5768
      %v5882 = vadd.f32 %v5242, %v5771
      %v5883 = vadd.f32 %v5244, %v5773
      %v5884 = vadd.f32 %v5247, %v5776
      %v5885 = vadd.f32 %v5249, %v5778
      %v5886 = vadd.f32 %v5252, %v5781
      %v5887 = vadd.f32 %v5254, %v5783
      %v5888 = vadd.f32 %v5257, %v5786
      %v5889 = vadd.f32 %v5259, %v5788
      %v5890 = vadd.f32 %v5262, %v5791
      %v5891 = vadd.f32 %v5264, %v5793
      %v5892 = vadd.f32 %v5267, %v5796
      %v5893 = vadd.f32 %v5269, %v5798
      %v5894 = vadd.f32 %v5272, %v5801
      %v5895 = vadd.f32 %v5274, %v5803
      %v5896 = vadd.f32 %v5277, %v5806
      %v5897 = vadd.f32 %v5279, %v5808
      %v5898 = vadd.f32 %v5282, %v5811
      %v5899 = vadd.f32 %v5284, %v5813
      %v5900 = vadd.f32 %v5287, %v5816
      %v5901 = vadd.f32 %v5289, %v5818
      %v5902 = vadd.f32 %v5292, %v5821
      %v5903 = vadd.f32 %v5294, %v5823
      %v5904 = vadd.f32 %v5297, %v5826
      %v5905 = vadd.f32 %v5299, %v5828
      %v5906 = vadd.f32 %v5302, %v5831
      %v5907 = vadd.f32 %v5304, %v5833
      %v5908 = vadd.f32 %v5307, %v5836
      %v5909 = vadd.f32 %v5309, %v5838
      %v5910 = vadd.f32 %v5312, %v5841
      %v5911 = vadd.f32 %v5314, %v5843
      %v5912 = vadd.f32 %v5317, %v5846
      %v5913 = vadd.f32 %v5319, %v5848
      %v5914 = vsel %vm3516, %v5850, 0.0
      %v5915 = vsel %vm3516, %v5851, 0.0
      %v5916 = vadd.f32 %v5914, %v5915
      %v5917 = vsel %vm3516, %v5852, 0.0
      %v5918 = vadd.f32 %v5916, %v5917
      %v5919 = vsel %vm3516, %v5853, 0.0
      %v5920 = vadd.f32 %v5918, %v5919
      %v5921 = vsel %vm3516, %v5854, 0.0
      %v5922 = vadd.f32 %v5920, %v5921
      %v5923 = vsel %vm3516, %v5855, 0.0
      %v5924 = vadd.f32 %v5922, %v5923
      %v5925 = vsel %vm3516, %v5856, 0.0
      %v5926 = vadd.f32 %v5924, %v5925
      %v5927 = vsel %vm3516, %v5857, 0.0
      %v5928 = vadd.f32 %v5926, %v5927
      %v5929 = vsel %vm3516, %v5858, 0.0
      %v5930 = vadd.f32 %v5928, %v5929
      %v5931 = vsel %vm3516, %v5859, 0.0
      %v5932 = vadd.f32 %v5930, %v5931
      %v5933 = vsel %vm3516, %v5860, 0.0
      %v5934 = vadd.f32 %v5932, %v5933
      %v5935 = vsel %vm3516, %v5861, 0.0
      %v5936 = vadd.f32 %v5934, %v5935
      %v5937 = vsel %vm3516, %v5862, 0.0
      %v5938 = vadd.f32 %v5936, %v5937
      %v5939 = vsel %vm3516, %v5863, 0.0
      %v5940 = vadd.f32 %v5938, %v5939
      %v5941 = vsel %vm3516, %v5864, 0.0
      %v5942 = vadd.f32 %v5940, %v5941
      %v5943 = vsel %vm3516, %v5865, 0.0
      %v5944 = vadd.f32 %v5942, %v5943
      %v5945 = vsel %vm3516, %v5866, 0.0
      %v5946 = vadd.f32 %v5944, %v5945
      %v5947 = vsel %vm3516, %v5867, 0.0
      %v5948 = vadd.f32 %v5946, %v5947
      %v5949 = vsel %vm3516, %v5868, 0.0
      %v5950 = vadd.f32 %v5948, %v5949
      %v5951 = vsel %vm3516, %v5869, 0.0
      %v5952 = vadd.f32 %v5950, %v5951
      %v5953 = vsel %vm3516, %v5870, 0.0
      %v5954 = vadd.f32 %v5952, %v5953
      %v5955 = vsel %vm3516, %v5871, 0.0
      %v5956 = vadd.f32 %v5954, %v5955
      %v5957 = vsel %vm3516, %v5872, 0.0
      %v5958 = vadd.f32 %v5956, %v5957
      %v5959 = vsel %vm3516, %v5873, 0.0
      %v5960 = vadd.f32 %v5958, %v5959
      %v5961 = vsel %vm3516, %v5874, 0.0
      %v5962 = vadd.f32 %v5960, %v5961
      %v5963 = vsel %vm3516, %v5875, 0.0
      %v5964 = vadd.f32 %v5962, %v5963
      %v5965 = vsel %vm3516, %v5876, 0.0
      %v5966 = vadd.f32 %v5964, %v5965
      %v5967 = vsel %vm3516, %v5877, 0.0
      %v5968 = vadd.f32 %v5966, %v5967
      %v5969 = vsel %vm3516, %v5878, 0.0
      %v5970 = vadd.f32 %v5968, %v5969
      %v5971 = vsel %vm3516, %v5879, 0.0
      %v5972 = vadd.f32 %v5970, %v5971
      %v5973 = vsel %vm3516, %v5880, 0.0
      %v5974 = vadd.f32 %v5972, %v5973
      %v5975 = vsel %vm3516, %v5881, 0.0
      %v5976 = vadd.f32 %v5974, %v5975
      %v5977 = vsel %vm3516, %v5882, 0.0
      %v5978 = vadd.f32 %v5976, %v5977
      %v5979 = vsel %vm3516, %v5883, 0.0
      %v5980 = vadd.f32 %v5978, %v5979
      %v5981 = vsel %vm3516, %v5884, 0.0
      %v5982 = vadd.f32 %v5980, %v5981
      %v5983 = vsel %vm3516, %v5885, 0.0
      %v5984 = vadd.f32 %v5982, %v5983
      %v5985 = vsel %vm3516, %v5886, 0.0
      %v5986 = vadd.f32 %v5984, %v5985
      %v5987 = vsel %vm3516, %v5887, 0.0
      %v5988 = vadd.f32 %v5986, %v5987
      %v5989 = vsel %vm3516, %v5888, 0.0
      %v5990 = vadd.f32 %v5988, %v5989
      %v5991 = vsel %vm3516, %v5889, 0.0
      %v5992 = vadd.f32 %v5990, %v5991
      %v5993 = vsel %vm3516, %v5890, 0.0
      %v5994 = vadd.f32 %v5992, %v5993
      %v5995 = vsel %vm3516, %v5891, 0.0
      %v5996 = vadd.f32 %v5994, %v5995
      %v5997 = vsel %vm3516, %v5892, 0.0
      %v5998 = vadd.f32 %v5996, %v5997
      %v5999 = vsel %vm3516, %v5893, 0.0
      %v6000 = vadd.f32 %v5998, %v5999
      %v6001 = vsel %vm3516, %v5894, 0.0
      %v6002 = vadd.f32 %v6000, %v6001
      %v6003 = vsel %vm3516, %v5895, 0.0
      %v6004 = vadd.f32 %v6002, %v6003
      %v6005 = vsel %vm3516, %v5896, 0.0
      %v6006 = vadd.f32 %v6004, %v6005
      %v6007 = vsel %vm3516, %v5897, 0.0
      %v6008 = vadd.f32 %v6006, %v6007
      %v6009 = vsel %vm3516, %v5898, 0.0
      %v6010 = vadd.f32 %v6008, %v6009
      %v6011 = vsel %vm3516, %v5899, 0.0
      %v6012 = vadd.f32 %v6010, %v6011
      %v6013 = vsel %vm3516, %v5900, 0.0
      %v6014 = vadd.f32 %v6012, %v6013
      %v6015 = vsel %vm3516, %v5901, 0.0
      %v6016 = vadd.f32 %v6014, %v6015
      %v6017 = vsel %vm3516, %v5902, 0.0
      %v6018 = vadd.f32 %v6016, %v6017
      %v6019 = vsel %vm3516, %v5903, 0.0
      %v6020 = vadd.f32 %v6018, %v6019
      %v6021 = vsel %vm3516, %v5904, 0.0
      %v6022 = vadd.f32 %v6020, %v6021
      %v6023 = vsel %vm3516, %v5905, 0.0
      %v6024 = vadd.f32 %v6022, %v6023
      %v6025 = vsel %vm3516, %v5906, 0.0
      %v6026 = vadd.f32 %v6024, %v6025
      %v6027 = vsel %vm3516, %v5907, 0.0
      %v6028 = vadd.f32 %v6026, %v6027
      %v6029 = vsel %vm3516, %v5908, 0.0
      %v6030 = vadd.f32 %v6028, %v6029
      %v6031 = vsel %vm3516, %v5909, 0.0
      %v6032 = vadd.f32 %v6030, %v6031
      %v6033 = vsel %vm3516, %v5910, 0.0
      %v6034 = vadd.f32 %v6032, %v6033
      %v6035 = vsel %vm3516, %v5911, 0.0
      %v6036 = vadd.f32 %v6034, %v6035
      %v6037 = vsel %vm3516, %v5912, 0.0
      %v6038 = vadd.f32 %v6036, %v6037
      %v6039 = vsel %vm3516, %v5913, 0.0
      %v6040 = vadd.f32 %v6038, %v6039
      %v6041 = vrot.slane %v6040, 4
      %v6042 = vadd.f32 %v6040, %v6041
      %v6043 = vrot.slane %v6042, 2
      %v6044 = vadd.f32 %v6042, %v6043
      %v6045 = vrot.slane %v6044, 1
      %v6046 = vadd.f32 %v6044, %v6045
      %v6047 = vmul.f32 %v5850, %v5850
      %v6048 = vmul.f32 %v5851, %v5851
      %v6049 = vmul.f32 %v5852, %v5852
      %v6050 = vmul.f32 %v5853, %v5853
      %v6051 = vmul.f32 %v5854, %v5854
      %v6052 = vmul.f32 %v5855, %v5855
      %v6053 = vmul.f32 %v5856, %v5856
      %v6054 = vmul.f32 %v5857, %v5857
      %v6055 = vmul.f32 %v5858, %v5858
      %v6056 = vmul.f32 %v5859, %v5859
      %v6057 = vmul.f32 %v5860, %v5860
      %v6058 = vmul.f32 %v5861, %v5861
      %v6059 = vmul.f32 %v5862, %v5862
      %v6060 = vmul.f32 %v5863, %v5863
      %v6061 = vmul.f32 %v5864, %v5864
      %v6062 = vmul.f32 %v5865, %v5865
      %v6063 = vmul.f32 %v5866, %v5866
      %v6064 = vmul.f32 %v5867, %v5867
      %v6065 = vmul.f32 %v5868, %v5868
      %v6066 = vmul.f32 %v5869, %v5869
      %v6067 = vmul.f32 %v5870, %v5870
      %v6068 = vmul.f32 %v5871, %v5871
      %v6069 = vmul.f32 %v5872, %v5872
      %v6070 = vmul.f32 %v5873, %v5873
      %v6071 = vmul.f32 %v5874, %v5874
      %v6072 = vmul.f32 %v5875, %v5875
      %v6073 = vmul.f32 %v5876, %v5876
      %v6074 = vmul.f32 %v5877, %v5877
      %v6075 = vmul.f32 %v5878, %v5878
      %v6076 = vmul.f32 %v5879, %v5879
      %v6077 = vmul.f32 %v5880, %v5880
      %v6078 = vmul.f32 %v5881, %v5881
      %v6079 = vmul.f32 %v5882, %v5882
      %v6080 = vmul.f32 %v5883, %v5883
      %v6081 = vmul.f32 %v5884, %v5884
      %v6082 = vmul.f32 %v5885, %v5885
      %v6083 = vmul.f32 %v5886, %v5886
      %v6084 = vmul.f32 %v5887, %v5887
      %v6085 = vmul.f32 %v5888, %v5888
      %v6086 = vmul.f32 %v5889, %v5889
      %v6087 = vmul.f32 %v5890, %v5890
      %v6088 = vmul.f32 %v5891, %v5891
      %v6089 = vmul.f32 %v5892, %v5892
      %v6090 = vmul.f32 %v5893, %v5893
      %v6091 = vmul.f32 %v5894, %v5894
      %v6092 = vmul.f32 %v5895, %v5895
      %v6093 = vmul.f32 %v5896, %v5896
      %v6094 = vmul.f32 %v5897, %v5897
      %v6095 = vmul.f32 %v5898, %v5898
      %v6096 = vmul.f32 %v5899, %v5899
      %v6097 = vmul.f32 %v5900, %v5900
      %v6098 = vmul.f32 %v5901, %v5901
      %v6099 = vmul.f32 %v5902, %v5902
      %v6100 = vmul.f32 %v5903, %v5903
      %v6101 = vmul.f32 %v5904, %v5904
      %v6102 = vmul.f32 %v5905, %v5905
      %v6103 = vmul.f32 %v5906, %v5906
      %v6104 = vmul.f32 %v5907, %v5907
      %v6105 = vmul.f32 %v5908, %v5908
      %v6106 = vmul.f32 %v5909, %v5909
      %v6107 = vmul.f32 %v5910, %v5910
      %v6108 = vmul.f32 %v5911, %v5911
      %v6109 = vmul.f32 %v5912, %v5912
      %v6110 = vmul.f32 %v5913, %v5913
      %v6111 = vsel %vm3516, %v6047, 0.0
      %v6112 = vsel %vm3516, %v6048, 0.0
      %v6113 = vadd.f32 %v6111, %v6112
      %v6114 = vsel %vm3516, %v6049, 0.0
      %v6115 = vadd.f32 %v6113, %v6114
      %v6116 = vsel %vm3516, %v6050, 0.0
      %v6117 = vadd.f32 %v6115, %v6116
      %v6118 = vsel %vm3516, %v6051, 0.0
      %v6119 = vadd.f32 %v6117, %v6118
      %v6120 = vsel %vm3516, %v6052, 0.0
      %v6121 = vadd.f32 %v6119, %v6120
      %v6122 = vsel %vm3516, %v6053, 0.0
      %v6123 = vadd.f32 %v6121, %v6122
      %v6124 = vsel %vm3516, %v6054, 0.0
      %v6125 = vadd.f32 %v6123, %v6124
      %v6126 = vsel %vm3516, %v6055, 0.0
      %v6127 = vadd.f32 %v6125, %v6126
      %v6128 = vsel %vm3516, %v6056, 0.0
      %v6129 = vadd.f32 %v6127, %v6128
      %v6130 = vsel %vm3516, %v6057, 0.0
      %v6131 = vadd.f32 %v6129, %v6130
      %v6132 = vsel %vm3516, %v6058, 0.0
      %v6133 = vadd.f32 %v6131, %v6132
      %v6134 = vsel %vm3516, %v6059, 0.0
      %v6135 = vadd.f32 %v6133, %v6134
      %v6136 = vsel %vm3516, %v6060, 0.0
      %v6137 = vadd.f32 %v6135, %v6136
      %v6138 = vsel %vm3516, %v6061, 0.0
      %v6139 = vadd.f32 %v6137, %v6138
      %v6140 = vsel %vm3516, %v6062, 0.0
      %v6141 = vadd.f32 %v6139, %v6140
      %v6142 = vsel %vm3516, %v6063, 0.0
      %v6143 = vadd.f32 %v6141, %v6142
      %v6144 = vsel %vm3516, %v6064, 0.0
      %v6145 = vadd.f32 %v6143, %v6144
      %v6146 = vsel %vm3516, %v6065, 0.0
      %v6147 = vadd.f32 %v6145, %v6146
      %v6148 = vsel %vm3516, %v6066, 0.0
      %v6149 = vadd.f32 %v6147, %v6148
      %v6150 = vsel %vm3516, %v6067, 0.0
      %v6151 = vadd.f32 %v6149, %v6150
      %v6152 = vsel %vm3516, %v6068, 0.0
      %v6153 = vadd.f32 %v6151, %v6152
      %v6154 = vsel %vm3516, %v6069, 0.0
      %v6155 = vadd.f32 %v6153, %v6154
      %v6156 = vsel %vm3516, %v6070, 0.0
      %v6157 = vadd.f32 %v6155, %v6156
      %v6158 = vsel %vm3516, %v6071, 0.0
      %v6159 = vadd.f32 %v6157, %v6158
      %v6160 = vsel %vm3516, %v6072, 0.0
      %v6161 = vadd.f32 %v6159, %v6160
      %v6162 = vsel %vm3516, %v6073, 0.0
      %v6163 = vadd.f32 %v6161, %v6162
      %v6164 = vsel %vm3516, %v6074, 0.0
      %v6165 = vadd.f32 %v6163, %v6164
      %v6166 = vsel %vm3516, %v6075, 0.0
      %v6167 = vadd.f32 %v6165, %v6166
      %v6168 = vsel %vm3516, %v6076, 0.0
      %v6169 = vadd.f32 %v6167, %v6168
      %v6170 = vsel %vm3516, %v6077, 0.0
      %v6171 = vadd.f32 %v6169, %v6170
      %v6172 = vsel %vm3516, %v6078, 0.0
      %v6173 = vadd.f32 %v6171, %v6172
      %v6174 = vsel %vm3516, %v6079, 0.0
      %v6175 = vadd.f32 %v6173, %v6174
      %v6176 = vsel %vm3516, %v6080, 0.0
      %v6177 = vadd.f32 %v6175, %v6176
      %v6178 = vsel %vm3516, %v6081, 0.0
      %v6179 = vadd.f32 %v6177, %v6178
      %v6180 = vsel %vm3516, %v6082, 0.0
      %v6181 = vadd.f32 %v6179, %v6180
      %v6182 = vsel %vm3516, %v6083, 0.0
      %v6183 = vadd.f32 %v6181, %v6182
      %v6184 = vsel %vm3516, %v6084, 0.0
      %v6185 = vadd.f32 %v6183, %v6184
      %v6186 = vsel %vm3516, %v6085, 0.0
      %v6187 = vadd.f32 %v6185, %v6186
      %v6188 = vsel %vm3516, %v6086, 0.0
      %v6189 = vadd.f32 %v6187, %v6188
      %v6190 = vsel %vm3516, %v6087, 0.0
      %v6191 = vadd.f32 %v6189, %v6190
      %v6192 = vsel %vm3516, %v6088, 0.0
      %v6193 = vadd.f32 %v6191, %v6192
      %v6194 = vsel %vm3516, %v6089, 0.0
      %v6195 = vadd.f32 %v6193, %v6194
      %v6196 = vsel %vm3516, %v6090, 0.0
      %v6197 = vadd.f32 %v6195, %v6196
      %v6198 = vsel %vm3516, %v6091, 0.0
      %v6199 = vadd.f32 %v6197, %v6198
      %v6200 = vsel %vm3516, %v6092, 0.0
      %v6201 = vadd.f32 %v6199, %v6200
      %v6202 = vsel %vm3516, %v6093, 0.0
      %v6203 = vadd.f32 %v6201, %v6202
      %v6204 = vsel %vm3516, %v6094, 0.0
      %v6205 = vadd.f32 %v6203, %v6204
      %v6206 = vsel %vm3516, %v6095, 0.0
      %v6207 = vadd.f32 %v6205, %v6206
      %v6208 = vsel %vm3516, %v6096, 0.0
      %v6209 = vadd.f32 %v6207, %v6208
      %v6210 = vsel %vm3516, %v6097, 0.0
      %v6211 = vadd.f32 %v6209, %v6210
      %v6212 = vsel %vm3516, %v6098, 0.0
      %v6213 = vadd.f32 %v6211, %v6212
      %v6214 = vsel %vm3516, %v6099, 0.0
      %v6215 = vadd.f32 %v6213, %v6214
      %v6216 = vsel %vm3516, %v6100, 0.0
      %v6217 = vadd.f32 %v6215, %v6216
      %v6218 = vsel %vm3516, %v6101, 0.0
      %v6219 = vadd.f32 %v6217, %v6218
      %v6220 = vsel %vm3516, %v6102, 0.0
      %v6221 = vadd.f32 %v6219, %v6220
      %v6222 = vsel %vm3516, %v6103, 0.0
      %v6223 = vadd.f32 %v6221, %v6222
      %v6224 = vsel %vm3516, %v6104, 0.0
      %v6225 = vadd.f32 %v6223, %v6224
      %v6226 = vsel %vm3516, %v6105, 0.0
      %v6227 = vadd.f32 %v6225, %v6226
      %v6228 = vsel %vm3516, %v6106, 0.0
      %v6229 = vadd.f32 %v6227, %v6228
      %v6230 = vsel %vm3516, %v6107, 0.0
      %v6231 = vadd.f32 %v6229, %v6230
      %v6232 = vsel %vm3516, %v6108, 0.0
      %v6233 = vadd.f32 %v6231, %v6232
      %v6234 = vsel %vm3516, %v6109, 0.0
      %v6235 = vadd.f32 %v6233, %v6234
      %v6236 = vsel %vm3516, %v6110, 0.0
      %v6237 = vadd.f32 %v6235, %v6236
      %v6238 = vrot.slane %v6237, 4
      %v6239 = vadd.f32 %v6237, %v6238
      %v6240 = vrot.slane %v6239, 2
      %v6241 = vadd.f32 %v6239, %v6240
      %v6242 = vrot.slane %v6241, 1
      %v6243 = vadd.f32 %v6241, %v6242
      %vm6244 = vcmask 1040384
      %v6245 = vsel %vm6244, %v6046, %v6243
      %vm6246 = vcmask 58368
      %6247 = vst.msk [vmem:[%s235] sm:$0x3] %vm6246, %v6245
      %v6248 = vpack.c.bf16 %v5850, %v5850
      %v6249 = vpack.c.bf16 %v5851, %v5851
      %v6250 = vpack.c.bf16 %v5852, %v5852
      %v6251 = vpack.c.bf16 %v5853, %v5853
      %v6252 = vpack.c.bf16 %v5854, %v5854
      %v6253 = vpack.c.bf16 %v5855, %v5855
      %v6254 = vpack.c.bf16 %v5856, %v5856
      %v6255 = vpack.c.bf16 %v5857, %v5857
      %v6256 = vpack.c.bf16 %v5858, %v5858
      %v6257 = vpack.c.bf16 %v5859, %v5859
      %v6258 = vpack.c.bf16 %v5860, %v5860
      %v6259 = vpack.c.bf16 %v5861, %v5861
      %v6260 = vpack.c.bf16 %v5862, %v5862
      %v6261 = vpack.c.bf16 %v5863, %v5863
      %v6262 = vpack.c.bf16 %v5864, %v5864
      %v6263 = vpack.c.bf16 %v5865, %v5865
      %v6264 = vpack.c.bf16 %v5866, %v5866
      %v6265 = vpack.c.bf16 %v5867, %v5867
      %v6266 = vpack.c.bf16 %v5868, %v5868
      %v6267 = vpack.c.bf16 %v5869, %v5869
      %v6268 = vpack.c.bf16 %v5870, %v5870
      %v6269 = vpack.c.bf16 %v5871, %v5871
      %v6270 = vpack.c.bf16 %v5872, %v5872
      %v6271 = vpack.c.bf16 %v5873, %v5873
      %v6272 = vpack.c.bf16 %v5874, %v5874
      %v6273 = vpack.c.bf16 %v5875, %v5875
      %v6274 = vpack.c.bf16 %v5876, %v5876
      %v6275 = vpack.c.bf16 %v5877, %v5877
      %v6276 = vpack.c.bf16 %v5878, %v5878
      %v6277 = vpack.c.bf16 %v5879, %v5879
      %v6278 = vpack.c.bf16 %v5880, %v5880
      %v6279 = vpack.c.bf16 %v5881, %v5881
      %v6280 = vpack.c.bf16 %v5882, %v5882
      %v6281 = vpack.c.bf16 %v5883, %v5883
      %v6282 = vpack.c.bf16 %v5884, %v5884
      %v6283 = vpack.c.bf16 %v5885, %v5885
      %v6284 = vpack.c.bf16 %v5886, %v5886
      %v6285 = vpack.c.bf16 %v5887, %v5887
      %v6286 = vpack.c.bf16 %v5888, %v5888
      %v6287 = vpack.c.bf16 %v5889, %v5889
      %v6288 = vpack.c.bf16 %v5890, %v5890
      %v6289 = vpack.c.bf16 %v5891, %v5891
      %v6290 = vpack.c.bf16 %v5892, %v5892
      %v6291 = vpack.c.bf16 %v5893, %v5893
      %v6292 = vpack.c.bf16 %v5894, %v5894
      %v6293 = vpack.c.bf16 %v5895, %v5895
      %v6294 = vpack.c.bf16 %v5896, %v5896
      %v6295 = vpack.c.bf16 %v5897, %v5897
      %v6296 = vpack.c.bf16 %v5898, %v5898
      %v6297 = vpack.c.bf16 %v5899, %v5899
      %v6298 = vpack.c.bf16 %v5900, %v5900
      %v6299 = vpack.c.bf16 %v5901, %v5901
      %v6300 = vpack.c.bf16 %v5902, %v5902
      %v6301 = vpack.c.bf16 %v5903, %v5903
      %v6302 = vpack.c.bf16 %v5904, %v5904
      %v6303 = vpack.c.bf16 %v5905, %v5905
      %v6304 = vpack.c.bf16 %v5906, %v5906
      %v6305 = vpack.c.bf16 %v5907, %v5907
      %v6306 = vpack.c.bf16 %v5908, %v5908
      %v6307 = vpack.c.bf16 %v5909, %v5909
      %v6308 = vpack.c.bf16 %v5910, %v5910
      %v6309 = vpack.c.bf16 %v5911, %v5911
      %v6310 = vpack.c.bf16 %v5912, %v5912
      %v6311 = vpack.c.bf16 %v5913, %v5913
      %vm6312 = vcmask 60416
      %6313 = vst.msk [vmem:[%s231] sm:$0xf] %vm6312, %v6248
      %6314 = vst.msk [vmem:[%s231 + $0x4] sm:$0xf] %vm6312, %v6249
      %6315 = vst.msk [vmem:[%s231 + $0x8] sm:$0xf] %vm6312, %v6250
      %6316 = vst.msk [vmem:[%s231 + $0xc] sm:$0xf] %vm6312, %v6251
      %6317 = vst.msk [vmem:[%s231 + $0x10] sm:$0xf] %vm6312, %v6252
      %6318 = vst.msk [vmem:[%s231 + $0x14] sm:$0xf] %vm6312, %v6253
      %6319 = vst.msk [vmem:[%s231 + $0x18] sm:$0xf] %vm6312, %v6254
      %6320 = vst.msk [vmem:[%s231 + $0x1c] sm:$0xf] %vm6312, %v6255
      %6321 = vst.msk [vmem:[%s231 + $0x20] sm:$0xf] %vm6312, %v6256
      %6322 = vst.msk [vmem:[%s231 + $0x24] sm:$0xf] %vm6312, %v6257
      %6323 = vst.msk [vmem:[%s231 + $0x28] sm:$0xf] %vm6312, %v6258
      %6324 = vst.msk [vmem:[%s231 + $0x2c] sm:$0xf] %vm6312, %v6259
      %6325 = vst.msk [vmem:[%s231 + $0x30] sm:$0xf] %vm6312, %v6260
      %6326 = vst.msk [vmem:[%s231 + $0x34] sm:$0xf] %vm6312, %v6261
      %6327 = vst.msk [vmem:[%s231 + $0x38] sm:$0xf] %vm6312, %v6262
      %6328 = vst.msk [vmem:[%s231 + $0x3c] sm:$0xf] %vm6312, %v6263
      %6329 = vst.msk [vmem:[%s231 + $0x40] sm:$0xf] %vm6312, %v6264
      %6330 = vst.msk [vmem:[%s231 + $0x44] sm:$0xf] %vm6312, %v6265
      %6331 = vst.msk [vmem:[%s231 + $0x48] sm:$0xf] %vm6312, %v6266
      %6332 = vst.msk [vmem:[%s231 + $0x4c] sm:$0xf] %vm6312, %v6267
      %6333 = vst.msk [vmem:[%s231 + $0x50] sm:$0xf] %vm6312, %v6268
      %6334 = vst.msk [vmem:[%s231 + $0x54] sm:$0xf] %vm6312, %v6269
      %6335 = vst.msk [vmem:[%s231 + $0x58] sm:$0xf] %vm6312, %v6270
      %6336 = vst.msk [vmem:[%s231 + $0x5c] sm:$0xf] %vm6312, %v6271
      %6337 = vst.msk [vmem:[%s231 + $0x60] sm:$0xf] %vm6312, %v6272
      %6338 = vst.msk [vmem:[%s231 + $0x64] sm:$0xf] %vm6312, %v6273
      %6339 = vst.msk [vmem:[%s231 + $0x68] sm:$0xf] %vm6312, %v6274
      %6340 = vst.msk [vmem:[%s231 + $0x6c] sm:$0xf] %vm6312, %v6275
      %6341 = vst.msk [vmem:[%s231 + $0x70] sm:$0xf] %vm6312, %v6276
      %6342 = vst.msk [vmem:[%s231 + $0x74] sm:$0xf] %vm6312, %v6277
      %6343 = vst.msk [vmem:[%s231 + $0x78] sm:$0xf] %vm6312, %v6278
      %6344 = vst.msk [vmem:[%s231 + $0x7c] sm:$0xf] %vm6312, %v6279
      %6345 = vst.msk [vmem:[%s231 + $0x80] sm:$0xf] %vm6312, %v6280
      %6346 = vst.msk [vmem:[%s231 + $0x84] sm:$0xf] %vm6312, %v6281
      %6347 = vst.msk [vmem:[%s231 + $0x88] sm:$0xf] %vm6312, %v6282
      %6348 = vst.msk [vmem:[%s231 + $0x8c] sm:$0xf] %vm6312, %v6283
      %6349 = vst.msk [vmem:[%s231 + $0x90] sm:$0xf] %vm6312, %v6284
      %6350 = vst.msk [vmem:[%s231 + $0x94] sm:$0xf] %vm6312, %v6285
      %6351 = vst.msk [vmem:[%s231 + $0x98] sm:$0xf] %vm6312, %v6286
      %6352 = vst.msk [vmem:[%s231 + $0x9c] sm:$0xf] %vm6312, %v6287
      %6353 = vst.msk [vmem:[%s231 + $0xa0] sm:$0xf] %vm6312, %v6288
      %6354 = vst.msk [vmem:[%s231 + $0xa4] sm:$0xf] %vm6312, %v6289
      %6355 = vst.msk [vmem:[%s231 + $0xa8] sm:$0xf] %vm6312, %v6290
      %6356 = vst.msk [vmem:[%s231 + $0xac] sm:$0xf] %vm6312, %v6291
      %6357 = vst.msk [vmem:[%s231 + $0xb0] sm:$0xf] %vm6312, %v6292
      %6358 = vst.msk [vmem:[%s231 + $0xb4] sm:$0xf] %vm6312, %v6293
      %6359 = vst.msk [vmem:[%s231 + $0xb8] sm:$0xf] %vm6312, %v6294
      %6360 = vst.msk [vmem:[%s231 + $0xbc] sm:$0xf] %vm6312, %v6295
      %6361 = vst.msk [vmem:[%s231 + $0xc0] sm:$0xf] %vm6312, %v6296
      %6362 = vst.msk [vmem:[%s231 + $0xc4] sm:$0xf] %vm6312, %v6297
      %6363 = vst.msk [vmem:[%s231 + $0xc8] sm:$0xf] %vm6312, %v6298
      %6364 = vst.msk [vmem:[%s231 + $0xcc] sm:$0xf] %vm6312, %v6299
      %6365 = vst.msk [vmem:[%s231 + $0xd0] sm:$0xf] %vm6312, %v6300
      %6366 = vst.msk [vmem:[%s231 + $0xd4] sm:$0xf] %vm6312, %v6301
      %6367 = vst.msk [vmem:[%s231 + $0xd8] sm:$0xf] %vm6312, %v6302
      %6368 = vst.msk [vmem:[%s231 + $0xdc] sm:$0xf] %vm6312, %v6303
      %6369 = vst.msk [vmem:[%s231 + $0xe0] sm:$0xf] %vm6312, %v6304
      %6370 = vst.msk [vmem:[%s231 + $0xe4] sm:$0xf] %vm6312, %v6305
      %6371 = vst.msk [vmem:[%s231 + $0xe8] sm:$0xf] %vm6312, %v6306
      %6372 = vst.msk [vmem:[%s231 + $0xec] sm:$0xf] %vm6312, %v6307
      %6373 = vst.msk [vmem:[%s231 + $0xf0] sm:$0xf] %vm6312, %v6308
      %6374 = vst.msk [vmem:[%s231 + $0xf4] sm:$0xf] %vm6312, %v6309
      %6375 = vst.msk [vmem:[%s231 + $0xf8] sm:$0xf] %vm6312, %v6310
      %6376 = vst.msk [vmem:[%s231 + $0xfc] sm:$0xf] %vm6312, %v6311
      %p6377 = scmp.lt.s32.totalorder %s17, 1
      %s6378 = scalar_select %p6377, %s17, 1
      %s6379 = smul.addr %s6378, 64
      %s6380 = smul.addr %s6379, 4
      %s6381 = scalar_lea.vmem %s4, %s6380
      %p6382 = scmp.lt.s32.totalorder %s17, 1
      %s6383 = scalar_select %p6382, %s17, 1
      %s6384 = smul.addr %s6383, 2
      %s6385 = scalar_lea.vmem %s5, %s6384
      // Predicated region
      $region37: #{basic_block.4} parent=35 // pred_check
        %p6386 = pneg %p124
      $region38: #{basic_block.4} parent=35 // pred_check_branch
        %6388 = sbr.rel (%p6386) target = $region40
      $region39: #{basic_block.4} parent=35 // pred_region
        _
      $region40: #{basic_block.4} parent=35 // pred_fallthru
        _
      // Predicated region
      $region41: #{basic_block.4} parent=35 // pred_check
        %p6389 = pneg %p150
      $region42: #{basic_block.4} parent=35 // pred_check_branch
        %6391 = sbr.rel (%p6389) target = $region44
      $region43: #{basic_block.4} parent=35 // pred_region
        _
      $region44: #{basic_block.4} parent=35 // pred_fallthru
        _
    $region36: #{basic_block.4} parent=5 // pred_fallthru
      _
    %p6392 = scmp.le.s32.totalorder 2, %s12
    // Predicated region
    $region45: #{basic_block.4} parent=5 // pred_check
      %p6393 = pneg %p6392
    $region46: #{basic_block.4} parent=5 // pred_check_branch
      %6395 = sbr.rel (%p6393) target = $region48
    $region47: #{basic_block.4} parent=5 // pred_region
      %s6396 = ssub.s32 %s12, 2
      // Predicated region
      $region49: #{basic_block.4} parent=47 // pred_check
        %p6397 = pneg %p130
      $region50: #{basic_block.4} parent=47 // pred_check_branch
        %6399 = sbr.rel (%p6397) target = $region52
      $region51: #{basic_block.4} parent=47 // pred_region
        %p6400 = scmp.lt.s32.totalorder %s18, 1
        %s6401 = scalar_select %p6400, %s18, 1
        %s6402 = smul.addr %s6401, 64
        %s6403 = smul.addr %s6402, 4
        %s6404 = scalar_lea.vmem %s4, %s6403
      $region52: #{basic_block.4} parent=47 // pred_fallthru
        _
      // Predicated region
      $region53: #{basic_block.4} parent=47 // pred_check
        %p6405 = pneg %p156
      $region54: #{basic_block.4} parent=47 // pred_check_branch
        %6407 = sbr.rel (%p6405) target = $region56
      $region55: #{basic_block.4} parent=47 // pred_region
        %p6408 = scmp.lt.s32.totalorder %s18, 1
        %s6409 = scalar_select %p6408, %s18, 1
        %s6410 = smul.addr %s6409, 2
        %s6411 = scalar_lea.vmem %s5, %s6410
      $region56: #{basic_block.4} parent=47 // pred_fallthru
        _
    $region48: #{basic_block.4} parent=5 // pred_fallthru
      _
  $region6: #{basic_block.4} parent=0 // loop_footer
    %s16 = sadd.s32 1, %s12
  $region7: #{basic_block.4} parent=0 // loop_footer_branch
    %11 = sbr.rel target = $region3
  $region8: #{basic_block.4} parent=0 // loop_exit
    _

</llo_original>
